<compile_context>
chip_gen: v6e
topology: v6e:2x2x1
jax: 0.10.0
libtpu: 0.0.40
codegen_flags: <defaults>
</compile_context>

<pallas_src>
import functools

import jax
import jax.numpy as jnp
from jax.experimental import pallas as pl
from jax.experimental.pallas import tpu as pltpu

# ----------------------------- config ---------------------------------------
PATCH = 4            # patch size of the (synthetic) CLIP visual stem
EMBED = 128          # visual embed_dim   (lane-dense, per perf review)
PROJ = 128           # clip_proj / text-embedding output dim (lane-dense)
HEADS = 4            # projector n_heads  -> head dim 32
LAYERS = 2           # projector n_layers
MLP_RATIO = 4        # projector mlp_ratio
NUM_CLASSES = 20     # rows of label_embedding
VOCAB = 64           # synthetic text vocab
CTX = 8              # text context length
CL_W = 1.0
CE_W = 1.0
TEMPERATURE = 0.07   # InfoNCE temperature
MCL_SCALE = 20.0     # cosine-logit scale for the multi-label loss


# ------------------------- in-kernel math helpers ----------------------------
def _layernorm(x, gamma, beta, eps=1e-5):
    mu = jnp.mean(x, axis=-1, keepdims=True)
    var = jnp.mean((x - mu) * (x - mu), axis=-1, keepdims=True)
    return (x - mu) * jax.lax.rsqrt(var + eps) * gamma + beta


def _gelu(y):
    # TODO(synk): PyTorch nn.GELU defaults to exact erf-GELU; tanh approximation
    # used here for robust Mosaic lowering (EUP tanh).
    c = jnp.float32(0.7978845608028654)  # sqrt(2/pi)
    return 0.5 * y * (1.0 + jnp.tanh(c * (y + 0.044715 * y * y * y)))


def _l2norm(x, eps=1e-12):
    return x * jax.lax.rsqrt(jnp.sum(x * x, axis=-1, keepdims=True) + eps)


def _block_body(x, ln1g, ln1b, qkvw, qkvb, prw, prb, ln2g, ln2b, f1w, f1b, f2w, f2b):
    """timm-style ViT Block on one image's tokens: x + Attn(LN(x)); x + MLP(LN(x)).
    x: [N, C].  All operands are VMEM-resident values; everything stays on-chip."""
    N, C = x.shape
    dh = C // HEADS
    scale = 1.0 / float(dh) ** 0.5

    # --- attention ---
    h = _layernorm(x, ln1g, ln1b)
    qkv = jnp.dot(h, qkvw, preferred_element_type=jnp.float32) + qkvb        # [N, 3C]

    attn = None
    for hd in range(HEADS):                                  # static unroll, one launch
        qh = qkv[:, hd * dh:(hd + 1) * dh]                   # [N, dh]
        kh = qkv[:, C + hd * dh:C + (hd + 1) * dh]
        vh = qkv[:, 2 * C + hd * dh:2 * C + (hd + 1) * dh]
        # contract last dims (no explicit transpose -> MXU directly)
        s = jax.lax.dot_general(qh, kh, (((1,), (1,)), ((), ())),
                                preferred_element_type=jnp.float32) * scale  # [N, N]
        m = jnp.max(s, axis=-1, keepdims=True)
        e = jnp.exp(s - m)
        p = e * pl.reciprocal(jnp.sum(e, axis=-1, keepdims=True), approx=True)
        o = jnp.dot(p, vh, preferred_element_type=jnp.float32)               # [N, dh]
        # fold concat + output projection: concat_h(o_h) @ Wp == sum_h o_h @ Wp[h*dh:(h+1)*dh]
        c = jnp.dot(o, prw[hd * dh:(hd + 1) * dh, :],
                    preferred_element_type=jnp.float32)                      # [N, C]
        attn = c if attn is None else attn + c
    x = x + attn + prb

    # --- MLP ---
    h2 = _layernorm(x, ln2g, ln2b)
    h2 = _gelu(jnp.dot(h2, f1w, preferred_element_type=jnp.float32) + f1b)
    h2 = jnp.dot(h2, f2w, preferred_element_type=jnp.float32) + f2b
    return x + h2


# --------------------- fused image-tower kernel (1 launch) -------------------
def _image_tower_kernel(patch_ref, pw, pb, pos,
                        ln1g, ln1b, qkvw, qkvb, prw, prb,
                        ln2g, ln2b, f1w, f1b, f2w, f2b,
                        cpw, cpb, feat_ref):
    """Per image (grid over batch): patch-embed + pos -> LAYERS x Block ->
    clip_proj -> mean pool.  All intermediates stay in VMEM/vregs."""
    # Synthetic frozen CLIP visual stem (patch embed + positional embedding).
    # TODO(synk): full pretrained CLIP ViT tower is external and not reproduced.
    # NOTE: real CLIP dims would warrant bf16 matmul operands (f32 accum); kept
    # f32 here to preserve reference numerics at toy sizes.
    x = jnp.dot(patch_ref[0].astype(jnp.float32), pw[...].astype(jnp.float32),
                preferred_element_type=jnp.float32)
    x = x + pb[...] + pos[...]                                               # [N, C]

    for l in range(LAYERS):                                  # static unroll over blocks
        x = _block_body(
            x,
            ln1g[l:l + 1], ln1b[l:l + 1], qkvw[l], qkvb[l:l + 1], prw[l], prb[l:l + 1],
            ln2g[l:l + 1], ln2b[l:l + 1], f1w[l], f1b[l:l + 1], f2w[l], f2b[l:l + 1],
        )

    # clip_proj then mean over tokens (mean(dim=1) in the reference)
    y = jnp.dot(x, cpw[...], preferred_element_type=jnp.float32) + cpb[...]  # [N, P]
    feat_ref[...] = jnp.mean(y, axis=0, keepdims=True).reshape(1, 1, -1).astype(feat_ref.dtype)


def image_tower(params, patches):
    """patches: [B, N, 3*ps*ps]  ->  image_feat [B, PROJ]."""
    B, N, PD = patches.shape
    C, P = EMBED, PROJ
    pos = params["pos_emb"][0, 1:, :]                  # CLS position unused (CLS is dropped)
    patch_b = params["patch_b"].reshape(1, C)
    cp_b = params["clip_proj_b"].reshape(1, P)

    def rspec(a):  # full-array block, same block every grid step (stays resident)
        nd = a.ndim
        return pl.BlockSpec(a.shape, lambda b, _nd=nd: (0,) * _nd)

    weights = (
        params["patch_w"], patch_b, pos,
        params["blk_ln1_g"], params["blk_ln1_b"],
        params["blk_qkv_w"], params["blk_qkv_b"],
        params["blk_proj_w"], params["blk_proj_b"],
        params["blk_ln2_g"], params["blk_ln2_b"],
        params["blk_fc1_w"], params["blk_fc1_b"],
        params["blk_fc2_w"], params["blk_fc2_b"],
        params["clip_proj_w"], cp_b,
    )
    in_specs = [pl.BlockSpec((1, N, PD), lambda b: (b, 0, 0))] + [rspec(w) for w in weights]

    out = pl.pallas_call(
        _image_tower_kernel,
        out_shape=jax.ShapeDtypeStruct((B, 1, P), jnp.float32),
        grid=(B,),
        in_specs=in_specs,
        out_specs=pl.BlockSpec((1, 1, P), lambda b: (b, 0, 0)),
        compiler_params=pltpu.CompilerParams(dimension_semantics=("parallel",)),
    )(patches, *weights)
    return out.reshape(B, P)


# ------------------------ fused loss kernel (1 launch) -----------------------
def _loss_kernel(img_ref, temb_ref, tw_ref, tb_ref, lbl_ref, tag_ref,
                 cl_ref, ce_ref, *, inv_temp, mcl_scale, cl_w, ce_w):
    img = _l2norm(img_ref[...].astype(jnp.float32))                          # [B, P]

    # Synthetic frozen CLIP text encoder tail: mean-pool token embeds + projection.
    # TODO(synk): full pretrained CLIP text transformer is external.
    pooled = jnp.mean(temb_ref[...].astype(jnp.float32), axis=1)             # [B, EMBED]
    txt = jnp.dot(pooled, tw_ref[...], preferred_element_type=jnp.float32) + tb_ref[...]
    txt = _l2norm(txt)                                                       # [B, P]

    # ---- InfoNCE (symmetric CE with diagonal targets) ----
    # TODO(synk): exact InfoNCE implementation is external; standard CLIP-style
    # symmetric cross-entropy is used.
    logits = jax.lax.dot_general(img, txt, (((1,), (1,)), ((), ())),
                                 preferred_element_type=jnp.float32) * inv_temp   # [B, B]
    n = logits.shape[0]
    eye = (jax.lax.broadcasted_iota(jnp.int32, (n, n), 0) ==
           jax.lax.broadcasted_iota(jnp.int32, (n, n), 1)).astype(jnp.float32)
    # image -> text (reduce along axis 1)
    m1 = jnp.max(logits, axis=1, keepdims=True)
    lse1 = m1 + jnp.log(jnp.sum(jnp.exp(logits - m1), axis=1, keepdims=True))
    d1 = jnp.sum(logits * eye, axis=1, keepdims=True)
    # text -> image (reduce along axis 0; avoids materializing logits.T)
    m0 = jnp.max(logits, axis=0, keepdims=True)
    lse0 = m0 + jnp.log(jnp.sum(jnp.exp(logits - m0), axis=0, keepdims=True))
    d0 = jnp.sum(logits * eye, axis=0, keepdims=True)
    cl = 0.5 * (jnp.mean(lse1 - d1) + jnp.mean(lse0 - d0))

    # ---- multi-label classification loss (cosine-logit BCE-with-logits) ----
    # TODO(synk): MultiClassificationLoss definition is external; standard
    # multi-label BCE-with-logits on cosine logits, uniform class weights.
    lbl = _l2norm(lbl_ref[...].astype(jnp.float32))                          # [K, P]
    z = jax.lax.dot_general(img, lbl, (((1,), (1,)), ((), ())),
                            preferred_element_type=jnp.float32) * mcl_scale  # [B, K]
    t = tag_ref[...].astype(jnp.float32)
    # numerically-stable BCE-with-logits (max/abs formulation)
    bce = jnp.maximum(z, 0.0) - z * t + jnp.log(1.0 + jnp.exp(-jnp.abs(z)))
    ce = jnp.mean(bce)

    cl_ref[...] = jnp.reshape(cl * cl_w, (1, 1))
    ce_ref[...] = jnp.reshape(ce * ce_w, (1, 1))


def fused_losses(image_feat, text_tok_emb, txt_proj_w, txt_proj_b, label_embedding, tag):
    B, P = image_feat.shape
    _, L, C = text_tok_emb.shape
    K = label_embedding.shape[0]
    tb = txt_proj_b.reshape(1, P)
    kernel = functools.partial(_loss_kernel, inv_temp=1.0 / TEMPERATURE,
                               mcl_scale=MCL_SCALE, cl_w=CL_W, ce_w=CE_W)
    cl, ce = pl.pallas_call(
        kernel,
        out_shape=(jax.ShapeDtypeStruct((1, 1), jnp.float32),
                   jax.ShapeDtypeStruct((1, 1), jnp.float32)),
        grid=(1,),
        in_specs=[
            pl.BlockSpec((B, P), lambda i: (0, 0)),
            pl.BlockSpec((B, L, C), lambda i: (0, 0, 0)),
            pl.BlockSpec((C, P), lambda i: (0, 0)),
            pl.BlockSpec((1, P), lambda i: (0, 0)),
            pl.BlockSpec((K, P), lambda i: (0, 0)),
            pl.BlockSpec((B, K), lambda i: (0, 0)),
        ],
        out_specs=(pl.BlockSpec((1, 1), lambda i: (0, 0)),
                   pl.BlockSpec((1, 1), lambda i: (0, 0))),
        compiler_params=pltpu.CompilerParams(dimension_semantics=("arbitrary",)),
    )(image_feat, text_tok_emb, txt_proj_w, tb, label_embedding, tag)
    return cl[0, 0], ce[0, 0]


# ----------------------------- JAX-side glue ---------------------------------
def patchify(image, ps):
    """NCHW image -> [B, N, Cin*ps*ps] patch vectors (order matches conv-weight
    flattening conv_w.reshape(C, -1).T)."""
    B, Cc, H, W = image.shape
    h, w = H // ps, W // ps
    x = image.reshape(B, Cc, h, ps, w, ps)
    x = jnp.transpose(x, (0, 2, 4, 1, 3, 5))       # B h w Cin ps ps
    return x.reshape(B, h * w, Cc * ps * ps)


def tagalign_forward(params, image, text, tag):
    """Mirrors TagAlign.forward (non-GDecoder projector branch)."""
    patches = patchify(image, PATCH)                           # [B, N, 3*ps*ps]
    # CLS token is dropped by TagAlign.forward (clip_image_feats[:, 1:]), so the
    # fused tower only produces/uses patch tokens.
    image_feat = image_tower(params, patches)                  # [B, PROJ]

    # TODO(synk): token-embedding gather stays in plain JAX/XLA (no clean Pallas
    # gather at this scale); the text branch is frozen / no-grad in the original.
    text_tok_emb = params["tok_emb"][text]                     # [B, CTX, EMBED]

    cl, ce = fused_losses(image_feat, text_tok_emb,
                          params["txt_proj_w"], params["txt_proj_b"],
                          params["label_embedding"], tag)
    return {"cl_loss": cl, "ce_loss": ce}


# ------------------------------ params --------------------------------------
def init_params(key):
    ks = iter(jax.random.split(key, 32))

    def dense(shape, std=0.02):
        return (std * jax.random.normal(next(ks), shape)).astype(jnp.float32)

    C, P, HID = EMBED, PROJ, EMBED * MLP_RATIO
    N = (16 // PATCH) * (16 // PATCH)
    params = {
        # synthetic frozen CLIP visual stem
        "patch_w": dense((3 * PATCH * PATCH, C)),
        "patch_b": jnp.zeros((C,), jnp.float32),
        "cls_token": dense((1, 1, C)),     # dropped by TagAlign.forward; kept for parity
        "pos_emb": dense((1, 1 + N, C)),
        # clip_proj (clone of CLIP visual projection)
        "clip_proj_w": dense((C, P)),
        "clip_proj_b": jnp.zeros((P,), jnp.float32),
        # synthetic frozen CLIP text encoder
        "tok_emb": dense((VOCAB, C)),
        "txt_proj_w": dense((C, P)),
        "txt_proj_b": jnp.zeros((P,), jnp.float32),
        # TODO(synk): label_embedding is torch.load(label_file) in the original;
        # initialized synthetically here.
        "label_embedding": dense((NUM_CLASSES, P)),
        # projector ViT Blocks, stacked along a leading layer axis so the whole
        # projector is a single fused kernel.
        "blk_ln1_g": jnp.ones((LAYERS, C), jnp.float32),
        "blk_ln1_b": jnp.zeros((LAYERS, C), jnp.float32),
        "blk_qkv_w": dense((LAYERS, C, 3 * C)),
        "blk_qkv_b": jnp.zeros((LAYERS, 3 * C), jnp.float32),
        "blk_proj_w": dense((LAYERS, C, C)),
        "blk_proj_b": jnp.zeros((LAYERS, C), jnp.float32),
        "blk_ln2_g": jnp.ones((LAYERS, C), jnp.float32),
        "blk_ln2_b": jnp.zeros((LAYERS, C), jnp.float32),
        "blk_fc1_w": dense((LAYERS, C, HID)),
        "blk_fc1_b": jnp.zeros((LAYERS, HID), jnp.float32),
        "blk_fc2_w": dense((LAYERS, HID, C)),
        "blk_fc2_b": jnp.zeros((LAYERS, C), jnp.float32),
    }
    return params


# -------------------------------- main ---------------------------------------
if __name__ == "__main__":
    key = jax.random.PRNGKey(0)
    k_img, k_txt, k_tag, k_par = jax.random.split(key, 4)

    B, H, W = 2, 16, 16
    image = jax.random.normal(k_img, (B, 3, H, W), jnp.float32)          # NCHW
    text = jax.random.randint(k_txt, (B, CTX), 0, VOCAB, jnp.int32)      # token ids
    tag = jax.random.bernoulli(k_tag, 0.3, (B, NUM_CLASSES)).astype(jnp.float32)

    params = init_params(k_par)

    losses = jax.jit(tagalign_forward)(params, image, text, tag)
    losses = jax.tree_util.tree_map(jax.block_until_ready, losses)

    cl = float(losses["cl_loss"])
    ce = float(losses["ce_loss"])
    assert jnp.isfinite(cl) and jnp.isfinite(ce)
    print("KERNEL_OK")
</pallas_src>

<mosaic_0001>
module attributes {stable_mosaic.version = 11 : i64} {
  func.func @_image_tower_kernel(%arg0: i32, %arg1: memref<1x16x48xf32, #tpu.memory_space<vmem>>, %arg2: memref<48x128xf32, #tpu.memory_space<vmem>>, %arg3: memref<1x128xf32, #tpu.memory_space<vmem>>, %arg4: memref<16x128xf32, #tpu.memory_space<vmem>>, %arg5: memref<2x128xf32, #tpu.memory_space<vmem>>, %arg6: memref<2x128xf32, #tpu.memory_space<vmem>>, %arg7: memref<2x128x384xf32, #tpu.memory_space<vmem>>, %arg8: memref<2x384xf32, #tpu.memory_space<vmem>>, %arg9: memref<2x128x128xf32, #tpu.memory_space<vmem>>, %arg10: memref<2x128xf32, #tpu.memory_space<vmem>>, %arg11: memref<2x128xf32, #tpu.memory_space<vmem>>, %arg12: memref<2x128xf32, #tpu.memory_space<vmem>>, %arg13: memref<2x128x512xf32, #tpu.memory_space<vmem>>, %arg14: memref<2x512xf32, #tpu.memory_space<vmem>>, %arg15: memref<2x512x128xf32, #tpu.memory_space<vmem>>, %arg16: memref<2x128xf32, #tpu.memory_space<vmem>>, %arg17: memref<128x128xf32, #tpu.memory_space<vmem>>, %arg18: memref<1x128xf32, #tpu.memory_space<vmem>>, %arg19: memref<1x1x128xf32, #tpu.memory_space<vmem>>) attributes {dimension_semantics = [#tpu.dimension_semantics<parallel>], iteration_bounds = array<i64: 2>, scalar_prefetch = 0 : i64, scratch_operands = 0 : i64, tpu.core_type = #tpu.core_type<tc>, window_params = [{transform_indices = @transform_0, window_bounds = array<i64: 1, 16, 48>}, {pipeline_mode = #tpu.pipeline_mode<synchronous>, transform_indices = @transform_1, window_bounds = array<i64: 48, 128>}, {pipeline_mode = #tpu.pipeline_mode<synchronous>, transform_indices = @transform_2, window_bounds = array<i64: 1, 128>}, {pipeline_mode = #tpu.pipeline_mode<synchronous>, transform_indices = @transform_3, window_bounds = array<i64: 16, 128>}, {pipeline_mode = #tpu.pipeline_mode<synchronous>, transform_indices = @transform_4, window_bounds = array<i64: 2, 128>}, {pipeline_mode = #tpu.pipeline_mode<synchronous>, transform_indices = @transform_5, window_bounds = array<i64: 2, 128>}, {pipeline_mode = #tpu.pipeline_mode<synchronous>, transform_indices = @transform_6, window_bounds = array<i64: 2, 128, 384>}, {pipeline_mode = #tpu.pipeline_mode<synchronous>, transform_indices = @transform_7, window_bounds = array<i64: 2, 384>}, {pipeline_mode = #tpu.pipeline_mode<synchronous>, transform_indices = @transform_8, window_bounds = array<i64: 2, 128, 128>}, {pipeline_mode = #tpu.pipeline_mode<synchronous>, transform_indices = @transform_9, window_bounds = array<i64: 2, 128>}, {pipeline_mode = #tpu.pipeline_mode<synchronous>, transform_indices = @transform_10, window_bounds = array<i64: 2, 128>}, {pipeline_mode = #tpu.pipeline_mode<synchronous>, transform_indices = @transform_11, window_bounds = array<i64: 2, 128>}, {pipeline_mode = #tpu.pipeline_mode<synchronous>, transform_indices = @transform_12, window_bounds = array<i64: 2, 128, 512>}, {pipeline_mode = #tpu.pipeline_mode<synchronous>, transform_indices = @transform_13, window_bounds = array<i64: 2, 512>}, {pipeline_mode = #tpu.pipeline_mode<synchronous>, transform_indices = @transform_14, window_bounds = array<i64: 2, 512, 128>}, {pipeline_mode = #tpu.pipeline_mode<synchronous>, transform_indices = @transform_15, window_bounds = array<i64: 2, 128>}, {pipeline_mode = #tpu.pipeline_mode<synchronous>, transform_indices = @transform_16, window_bounds = array<i64: 128, 128>}, {pipeline_mode = #tpu.pipeline_mode<synchronous>, transform_indices = @transform_17, window_bounds = array<i64: 1, 128>}, {transform_indices = @transform_18, window_bounds = array<i64: 1, 1, 128>}]} {
    %c0 = arith.constant 0 : index
    %c0_0 = arith.constant 0 : index
    %c0_1 = arith.constant 0 : index
    %0 = vector.load %arg1[%c0, %c0_0, %c0_1] : memref<1x16x48xf32, #tpu.memory_space<vmem>>, vector<1x16x48xf32>
    %1 = vector.shape_cast %0 : vector<1x16x48xf32> to vector<16x48xf32>
    %c0_2 = arith.constant 0 : index
    %c0_3 = arith.constant 0 : index
    %2 = vector.load %arg2[%c0_2, %c0_3] : memref<48x128xf32, #tpu.memory_space<vmem>>, vector<48x128xf32>
    %cst = arith.constant dense<0.000000e+00> : vector<16x128xf32>
    %3 = tpu.matmul %1, %2, %cst {dimension_numbers = #tpu.dot_dimension_numbers<[1], [0], [0], [1], [0, 0, 1, 1], [], []>} : vector<16x48xf32>, vector<48x128xf32>, vector<16x128xf32> -> vector<16x128xf32>
    %c0_4 = arith.constant 0 : index
    %c0_5 = arith.constant 0 : index
    %4 = vector.load %arg3[%c0_4, %c0_5] : memref<1x128xf32, #tpu.memory_space<vmem>>, vector<1x128xf32>
    %5 = vector.broadcast %4 : vector<1x128xf32> to vector<16x128xf32>
    %6 = arith.addf %3, %5 : vector<16x128xf32>
    %c0_6 = arith.constant 0 : index
    %c0_7 = arith.constant 0 : index
    %7 = vector.load %arg4[%c0_6, %c0_7] : memref<16x128xf32, #tpu.memory_space<vmem>>, vector<16x128xf32>
    %8 = arith.addf %6, %7 : vector<16x128xf32>
    %c0_8 = arith.constant 0 : index
    %c0_9 = arith.constant 0 : index
    %9 = vector.load %arg5[%c0_8, %c0_9] : memref<2x128xf32, #tpu.memory_space<vmem>>, vector<1x128xf32>
    %c0_10 = arith.constant 0 : index
    %c0_11 = arith.constant 0 : index
    %10 = vector.load %arg6[%c0_10, %c0_11] : memref<2x128xf32, #tpu.memory_space<vmem>>, vector<1x128xf32>
    %c0_12 = arith.constant 0 : index
    %c0_13 = arith.constant 0 : index
    %c0_14 = arith.constant 0 : index
    %11 = vector.load %arg7[%c0_12, %c0_13, %c0_14] : memref<2x128x384xf32, #tpu.memory_space<vmem>>, vector<1x128x384xf32>
    %12 = vector.shape_cast %11 : vector<1x128x384xf32> to vector<128x384xf32>
    %c0_15 = arith.constant 0 : index
    %c0_16 = arith.constant 0 : index
    %13 = vector.load %arg8[%c0_15, %c0_16] : memref<2x384xf32, #tpu.memory_space<vmem>>, vector<1x384xf32>
    %c0_17 = arith.constant 0 : index
    %c0_18 = arith.constant 0 : index
    %c0_19 = arith.constant 0 : index
    %14 = vector.load %arg9[%c0_17, %c0_18, %c0_19] : memref<2x128x128xf32, #tpu.memory_space<vmem>>, vector<1x128x128xf32>
    %15 = vector.shape_cast %14 : vector<1x128x128xf32> to vector<128x128xf32>
    %c0_20 = arith.constant 0 : index
    %c0_21 = arith.constant 0 : index
    %16 = vector.load %arg10[%c0_20, %c0_21] : memref<2x128xf32, #tpu.memory_space<vmem>>, vector<1x128xf32>
    %c0_22 = arith.constant 0 : index
    %c0_23 = arith.constant 0 : index
    %17 = vector.load %arg11[%c0_22, %c0_23] : memref<2x128xf32, #tpu.memory_space<vmem>>, vector<1x128xf32>
    %c0_24 = arith.constant 0 : index
    %c0_25 = arith.constant 0 : index
    %18 = vector.load %arg12[%c0_24, %c0_25] : memref<2x128xf32, #tpu.memory_space<vmem>>, vector<1x128xf32>
    %c0_26 = arith.constant 0 : index
    %c0_27 = arith.constant 0 : index
    %c0_28 = arith.constant 0 : index
    %19 = vector.load %arg13[%c0_26, %c0_27, %c0_28] : memref<2x128x512xf32, #tpu.memory_space<vmem>>, vector<1x128x512xf32>
    %20 = vector.shape_cast %19 : vector<1x128x512xf32> to vector<128x512xf32>
    %c0_29 = arith.constant 0 : index
    %c0_30 = arith.constant 0 : index
    %21 = vector.load %arg14[%c0_29, %c0_30] : memref<2x512xf32, #tpu.memory_space<vmem>>, vector<1x512xf32>
    %c0_31 = arith.constant 0 : index
    %c0_32 = arith.constant 0 : index
    %c0_33 = arith.constant 0 : index
    %22 = vector.load %arg15[%c0_31, %c0_32, %c0_33] : memref<2x512x128xf32, #tpu.memory_space<vmem>>, vector<1x512x128xf32>
    %23 = vector.shape_cast %22 : vector<1x512x128xf32> to vector<512x128xf32>
    %c0_34 = arith.constant 0 : index
    %c0_35 = arith.constant 0 : index
    %24 = vector.load %arg16[%c0_34, %c0_35] : memref<2x128xf32, #tpu.memory_space<vmem>>, vector<1x128xf32>
    %cst_36 = arith.constant dense<0.000000e+00> : vector<16xf32>
    %25 = vector.multi_reduction <add>, %8, %cst_36 [1] : vector<16x128xf32> to vector<16xf32>
    %26 = vector.shape_cast %25 : vector<16xf32> to vector<16x1xf32>
    %cst_37 = arith.constant 1.280000e+02 : f32
    %27 = vector.broadcast %cst_37 : f32 to vector<16x1xf32>
    %28 = arith.divf %26, %27 : vector<16x1xf32>
    %29 = vector.broadcast %28 : vector<16x1xf32> to vector<16x128xf32>
    %30 = arith.subf %8, %29 : vector<16x128xf32>
    %31 = vector.broadcast %28 : vector<16x1xf32> to vector<16x128xf32>
    %32 = arith.subf %8, %31 : vector<16x128xf32>
    %33 = arith.mulf %30, %32 : vector<16x128xf32>
    %cst_38 = arith.constant dense<0.000000e+00> : vector<16xf32>
    %34 = vector.multi_reduction <add>, %33, %cst_38 [1] : vector<16x128xf32> to vector<16xf32>
    %35 = vector.shape_cast %34 : vector<16xf32> to vector<16x1xf32>
    %cst_39 = arith.constant 1.280000e+02 : f32
    %36 = vector.broadcast %cst_39 : f32 to vector<16x1xf32>
    %37 = arith.divf %35, %36 : vector<16x1xf32>
    %38 = vector.broadcast %28 : vector<16x1xf32> to vector<16x128xf32>
    %39 = arith.subf %8, %38 : vector<16x128xf32>
    %cst_40 = arith.constant 9.99999974E-6 : f32
    %40 = vector.broadcast %cst_40 : f32 to vector<16x1xf32>
    %41 = arith.addf %37, %40 : vector<16x1xf32>
    %42 = math.rsqrt %41 : vector<16x1xf32>
    %43 = vector.broadcast %42 : vector<16x1xf32> to vector<16x128xf32>
    %44 = arith.mulf %39, %43 : vector<16x128xf32>
    %45 = vector.broadcast %9 : vector<1x128xf32> to vector<16x128xf32>
    %46 = arith.mulf %44, %45 : vector<16x128xf32>
    %47 = vector.broadcast %10 : vector<1x128xf32> to vector<16x128xf32>
    %48 = arith.addf %46, %47 : vector<16x128xf32>
    %cst_41 = arith.constant dense<0.000000e+00> : vector<16x384xf32>
    %49 = tpu.matmul %48, %12, %cst_41 {dimension_numbers = #tpu.dot_dimension_numbers<[1], [0], [0], [1], [0, 0, 1, 1], [], []>} : vector<16x128xf32>, vector<128x384xf32>, vector<16x384xf32> -> vector<16x384xf32>
    %50 = vector.broadcast %13 : vector<1x384xf32> to vector<16x384xf32>
    %51 = arith.addf %49, %50 : vector<16x384xf32>
    %52 = vector.extract_strided_slice %51 {offsets = [0, 0], sizes = [16, 32], strides = [1, 1]} : vector<16x384xf32> to vector<16x32xf32>
    %53 = vector.extract_strided_slice %51 {offsets = [0, 128], sizes = [16, 32], strides = [1, 1]} : vector<16x384xf32> to vector<16x32xf32>
    %54 = vector.extract_strided_slice %51 {offsets = [0, 256], sizes = [16, 32], strides = [1, 1]} : vector<16x384xf32> to vector<16x32xf32>
    %cst_42 = arith.constant dense<0.000000e+00> : vector<16x16xf32>
    %55 = tpu.matmul %52, %53, %cst_42 {dimension_numbers = #tpu.dot_dimension_numbers<[1], [1], [0], [0], [0, 0, 1, 0], [], []>} : vector<16x32xf32>, vector<16x32xf32>, vector<16x16xf32> -> vector<16x16xf32>
    %cst_43 = arith.constant 0.176776692 : f32
    %56 = vector.broadcast %cst_43 : f32 to vector<16x16xf32>
    %57 = arith.mulf %55, %56 : vector<16x16xf32>
    %cst_44 = arith.constant dense<0xFF800000> : vector<16xf32>
    %58 = vector.multi_reduction <maximumf>, %57, %cst_44 [1] : vector<16x16xf32> to vector<16xf32>
    %59 = vector.shape_cast %58 : vector<16xf32> to vector<16x1xf32>
    %60 = vector.broadcast %59 : vector<16x1xf32> to vector<16x16xf32>
    %61 = arith.subf %57, %60 : vector<16x16xf32>
    %62 = math.exp %61 : vector<16x16xf32>
    %cst_45 = arith.constant dense<0.000000e+00> : vector<16xf32>
    %63 = vector.multi_reduction <add>, %62, %cst_45 [1] : vector<16x16xf32> to vector<16xf32>
    %64 = vector.shape_cast %63 : vector<16xf32> to vector<16x1xf32>
    %65 = tpu.reciprocal %64 {approx = true} : vector<16x1xf32> -> vector<16x1xf32>
    %66 = vector.broadcast %65 : vector<16x1xf32> to vector<16x16xf32>
    %67 = arith.mulf %62, %66 : vector<16x16xf32>
    %cst_46 = arith.constant dense<0.000000e+00> : vector<16x32xf32>
    %68 = tpu.matmul %67, %54, %cst_46 {dimension_numbers = #tpu.dot_dimension_numbers<[1], [0], [0], [1], [0, 0, 1, 1], [], []>} : vector<16x16xf32>, vector<16x32xf32>, vector<16x32xf32> -> vector<16x32xf32>
    %69 = vector.extract_strided_slice %15 {offsets = [0, 0], sizes = [32, 128], strides = [1, 1]} : vector<128x128xf32> to vector<32x128xf32>
    %cst_47 = arith.constant dense<0.000000e+00> : vector<16x128xf32>
    %70 = tpu.matmul %68, %69, %cst_47 {dimension_numbers = #tpu.dot_dimension_numbers<[1], [0], [0], [1], [0, 0, 1, 1], [], []>} : vector<16x32xf32>, vector<32x128xf32>, vector<16x128xf32> -> vector<16x128xf32>
    %71 = vector.extract_strided_slice %51 {offsets = [0, 32], sizes = [16, 32], strides = [1, 1]} : vector<16x384xf32> to vector<16x32xf32>
    %72 = vector.extract_strided_slice %51 {offsets = [0, 160], sizes = [16, 32], strides = [1, 1]} : vector<16x384xf32> to vector<16x32xf32>
    %73 = vector.extract_strided_slice %51 {offsets = [0, 288], sizes = [16, 32], strides = [1, 1]} : vector<16x384xf32> to vector<16x32xf32>
    %cst_48 = arith.constant dense<0.000000e+00> : vector<16x16xf32>
    %74 = tpu.matmul %71, %72, %cst_48 {dimension_numbers = #tpu.dot_dimension_numbers<[1], [1], [0], [0], [0, 0, 1, 0], [], []>} : vector<16x32xf32>, vector<16x32xf32>, vector<16x16xf32> -> vector<16x16xf32>
    %cst_49 = arith.constant 0.176776692 : f32
    %75 = vector.broadcast %cst_49 : f32 to vector<16x16xf32>
    %76 = arith.mulf %74, %75 : vector<16x16xf32>
    %cst_50 = arith.constant dense<0xFF800000> : vector<16xf32>
    %77 = vector.multi_reduction <maximumf>, %76, %cst_50 [1] : vector<16x16xf32> to vector<16xf32>
    %78 = vector.shape_cast %77 : vector<16xf32> to vector<16x1xf32>
    %79 = vector.broadcast %78 : vector<16x1xf32> to vector<16x16xf32>
    %80 = arith.subf %76, %79 : vector<16x16xf32>
    %81 = math.exp %80 : vector<16x16xf32>
    %cst_51 = arith.constant dense<0.000000e+00> : vector<16xf32>
    %82 = vector.multi_reduction <add>, %81, %cst_51 [1] : vector<16x16xf32> to vector<16xf32>
    %83 = vector.shape_cast %82 : vector<16xf32> to vector<16x1xf32>
    %84 = tpu.reciprocal %83 {approx = true} : vector<16x1xf32> -> vector<16x1xf32>
    %85 = vector.broadcast %84 : vector<16x1xf32> to vector<16x16xf32>
    %86 = arith.mulf %81, %85 : vector<16x16xf32>
    %cst_52 = arith.constant dense<0.000000e+00> : vector<16x32xf32>
    %87 = tpu.matmul %86, %73, %cst_52 {dimension_numbers = #tpu.dot_dimension_numbers<[1], [0], [0], [1], [0, 0, 1, 1], [], []>} : vector<16x16xf32>, vector<16x32xf32>, vector<16x32xf32> -> vector<16x32xf32>
    %88 = vector.extract_strided_slice %15 {offsets = [32, 0], sizes = [32, 128], strides = [1, 1]} : vector<128x128xf32> to vector<32x128xf32>
    %cst_53 = arith.constant dense<0.000000e+00> : vector<16x128xf32>
    %89 = tpu.matmul %87, %88, %cst_53 {dimension_numbers = #tpu.dot_dimension_numbers<[1], [0], [0], [1], [0, 0, 1, 1], [], []>} : vector<16x32xf32>, vector<32x128xf32>, vector<16x128xf32> -> vector<16x128xf32>
    %90 = arith.addf %70, %89 : vector<16x128xf32>
    %91 = vector.extract_strided_slice %51 {offsets = [0, 64], sizes = [16, 32], strides = [1, 1]} : vector<16x384xf32> to vector<16x32xf32>
    %92 = vector.extract_strided_slice %51 {offsets = [0, 192], sizes = [16, 32], strides = [1, 1]} : vector<16x384xf32> to vector<16x32xf32>
    %93 = vector.extract_strided_slice %51 {offsets = [0, 320], sizes = [16, 32], strides = [1, 1]} : vector<16x384xf32> to vector<16x32xf32>
    %cst_54 = arith.constant dense<0.000000e+00> : vector<16x16xf32>
    %94 = tpu.matmul %91, %92, %cst_54 {dimension_numbers = #tpu.dot_dimension_numbers<[1], [1], [0], [0], [0, 0, 1, 0], [], []>} : vector<16x32xf32>, vector<16x32xf32>, vector<16x16xf32> -> vector<16x16xf32>
    %cst_55 = arith.constant 0.176776692 : f32
    %95 = vector.broadcast %cst_55 : f32 to vector<16x16xf32>
    %96 = arith.mulf %94, %95 : vector<16x16xf32>
    %cst_56 = arith.constant dense<0xFF800000> : vector<16xf32>
    %97 = vector.multi_reduction <maximumf>, %96, %cst_56 [1] : vector<16x16xf32> to vector<16xf32>
    %98 = vector.shape_cast %97 : vector<16xf32> to vector<16x1xf32>
    %99 = vector.broadcast %98 : vector<16x1xf32> to vector<16x16xf32>
    %100 = arith.subf %96, %99 : vector<16x16xf32>
    %101 = math.exp %100 : vector<16x16xf32>
    %cst_57 = arith.constant dense<0.000000e+00> : vector<16xf32>
    %102 = vector.multi_reduction <add>, %101, %cst_57 [1] : vector<16x16xf32> to vector<16xf32>
    %103 = vector.shape_cast %102 : vector<16xf32> to vector<16x1xf32>
    %104 = tpu.reciprocal %103 {approx = true} : vector<16x1xf32> -> vector<16x1xf32>
    %105 = vector.broadcast %104 : vector<16x1xf32> to vector<16x16xf32>
    %106 = arith.mulf %101, %105 : vector<16x16xf32>
    %cst_58 = arith.constant dense<0.000000e+00> : vector<16x32xf32>
    %107 = tpu.matmul %106, %93, %cst_58 {dimension_numbers = #tpu.dot_dimension_numbers<[1], [0], [0], [1], [0, 0, 1, 1], [], []>} : vector<16x16xf32>, vector<16x32xf32>, vector<16x32xf32> -> vector<16x32xf32>
    %108 = vector.extract_strided_slice %15 {offsets = [64, 0], sizes = [32, 128], strides = [1, 1]} : vector<128x128xf32> to vector<32x128xf32>
    %cst_59 = arith.constant dense<0.000000e+00> : vector<16x128xf32>
    %109 = tpu.matmul %107, %108, %cst_59 {dimension_numbers = #tpu.dot_dimension_numbers<[1], [0], [0], [1], [0, 0, 1, 1], [], []>} : vector<16x32xf32>, vector<32x128xf32>, vector<16x128xf32> -> vector<16x128xf32>
    %110 = arith.addf %90, %109 : vector<16x128xf32>
    %111 = vector.extract_strided_slice %51 {offsets = [0, 96], sizes = [16, 32], strides = [1, 1]} : vector<16x384xf32> to vector<16x32xf32>
    %112 = vector.extract_strided_slice %51 {offsets = [0, 224], sizes = [16, 32], strides = [1, 1]} : vector<16x384xf32> to vector<16x32xf32>
    %113 = vector.extract_strided_slice %51 {offsets = [0, 352], sizes = [16, 32], strides = [1, 1]} : vector<16x384xf32> to vector<16x32xf32>
    %cst_60 = arith.constant dense<0.000000e+00> : vector<16x16xf32>
    %114 = tpu.matmul %111, %112, %cst_60 {dimension_numbers = #tpu.dot_dimension_numbers<[1], [1], [0], [0], [0, 0, 1, 0], [], []>} : vector<16x32xf32>, vector<16x32xf32>, vector<16x16xf32> -> vector<16x16xf32>
    %cst_61 = arith.constant 0.176776692 : f32
    %115 = vector.broadcast %cst_61 : f32 to vector<16x16xf32>
    %116 = arith.mulf %114, %115 : vector<16x16xf32>
    %cst_62 = arith.constant dense<0xFF800000> : vector<16xf32>
    %117 = vector.multi_reduction <maximumf>, %116, %cst_62 [1] : vector<16x16xf32> to vector<16xf32>
    %118 = vector.shape_cast %117 : vector<16xf32> to vector<16x1xf32>
    %119 = vector.broadcast %118 : vector<16x1xf32> to vector<16x16xf32>
    %120 = arith.subf %116, %119 : vector<16x16xf32>
    %121 = math.exp %120 : vector<16x16xf32>
    %cst_63 = arith.constant dense<0.000000e+00> : vector<16xf32>
    %122 = vector.multi_reduction <add>, %121, %cst_63 [1] : vector<16x16xf32> to vector<16xf32>
    %123 = vector.shape_cast %122 : vector<16xf32> to vector<16x1xf32>
    %124 = tpu.reciprocal %123 {approx = true} : vector<16x1xf32> -> vector<16x1xf32>
    %125 = vector.broadcast %124 : vector<16x1xf32> to vector<16x16xf32>
    %126 = arith.mulf %121, %125 : vector<16x16xf32>
    %cst_64 = arith.constant dense<0.000000e+00> : vector<16x32xf32>
    %127 = tpu.matmul %126, %113, %cst_64 {dimension_numbers = #tpu.dot_dimension_numbers<[1], [0], [0], [1], [0, 0, 1, 1], [], []>} : vector<16x16xf32>, vector<16x32xf32>, vector<16x32xf32> -> vector<16x32xf32>
    %128 = vector.extract_strided_slice %15 {offsets = [96, 0], sizes = [32, 128], strides = [1, 1]} : vector<128x128xf32> to vector<32x128xf32>
    %cst_65 = arith.constant dense<0.000000e+00> : vector<16x128xf32>
    %129 = tpu.matmul %127, %128, %cst_65 {dimension_numbers = #tpu.dot_dimension_numbers<[1], [0], [0], [1], [0, 0, 1, 1], [], []>} : vector<16x32xf32>, vector<32x128xf32>, vector<16x128xf32> -> vector<16x128xf32>
    %130 = arith.addf %110, %129 : vector<16x128xf32>
    %131 = arith.addf %8, %130 : vector<16x128xf32>
    %132 = vector.broadcast %16 : vector<1x128xf32> to vector<16x128xf32>
    %133 = arith.addf %131, %132 : vector<16x128xf32>
    %cst_66 = arith.constant dense<0.000000e+00> : vector<16xf32>
    %134 = vector.multi_reduction <add>, %133, %cst_66 [1] : vector<16x128xf32> to vector<16xf32>
    %135 = vector.shape_cast %134 : vector<16xf32> to vector<16x1xf32>
    %cst_67 = arith.constant 1.280000e+02 : f32
    %136 = vector.broadcast %cst_67 : f32 to vector<16x1xf32>
    %137 = arith.divf %135, %136 : vector<16x1xf32>
    %138 = vector.broadcast %137 : vector<16x1xf32> to vector<16x128xf32>
    %139 = arith.subf %133, %138 : vector<16x128xf32>
    %140 = vector.broadcast %137 : vector<16x1xf32> to vector<16x128xf32>
    %141 = arith.subf %133, %140 : vector<16x128xf32>
    %142 = arith.mulf %139, %141 : vector<16x128xf32>
    %cst_68 = arith.constant dense<0.000000e+00> : vector<16xf32>
    %143 = vector.multi_reduction <add>, %142, %cst_68 [1] : vector<16x128xf32> to vector<16xf32>
    %144 = vector.shape_cast %143 : vector<16xf32> to vector<16x1xf32>
    %cst_69 = arith.constant 1.280000e+02 : f32
    %145 = vector.broadcast %cst_69 : f32 to vector<16x1xf32>
    %146 = arith.divf %144, %145 : vector<16x1xf32>
    %147 = vector.broadcast %137 : vector<16x1xf32> to vector<16x128xf32>
    %148 = arith.subf %133, %147 : vector<16x128xf32>
    %cst_70 = arith.constant 9.99999974E-6 : f32
    %149 = vector.broadcast %cst_70 : f32 to vector<16x1xf32>
    %150 = arith.addf %146, %149 : vector<16x1xf32>
    %151 = math.rsqrt %150 : vector<16x1xf32>
    %152 = vector.broadcast %151 : vector<16x1xf32> to vector<16x128xf32>
    %153 = arith.mulf %148, %152 : vector<16x128xf32>
    %154 = vector.broadcast %17 : vector<1x128xf32> to vector<16x128xf32>
    %155 = arith.mulf %153, %154 : vector<16x128xf32>
    %156 = vector.broadcast %18 : vector<1x128xf32> to vector<16x128xf32>
    %157 = arith.addf %155, %156 : vector<16x128xf32>
    %cst_71 = arith.constant dense<0.000000e+00> : vector<16x512xf32>
    %158 = tpu.matmul %157, %20, %cst_71 {dimension_numbers = #tpu.dot_dimension_numbers<[1], [0], [0], [1], [0, 0, 1, 1], [], []>} : vector<16x128xf32>, vector<128x512xf32>, vector<16x512xf32> -> vector<16x512xf32>
    %159 = vector.broadcast %21 : vector<1x512xf32> to vector<16x512xf32>
    %160 = arith.addf %158, %159 : vector<16x512xf32>
    %cst_72 = arith.constant 5.000000e-01 : f32
    %161 = vector.broadcast %cst_72 : f32 to vector<16x512xf32>
    %162 = arith.mulf %161, %160 : vector<16x512xf32>
    %cst_73 = arith.constant 4.471500e-02 : f32
    %163 = vector.broadcast %cst_73 : f32 to vector<16x512xf32>
    %164 = arith.mulf %163, %160 : vector<16x512xf32>
    %165 = arith.mulf %164, %160 : vector<16x512xf32>
    %166 = arith.mulf %165, %160 : vector<16x512xf32>
    %167 = arith.addf %160, %166 : vector<16x512xf32>
    %cst_74 = arith.constant 0.797884583 : f32
    %168 = vector.broadcast %cst_74 : f32 to vector<16x512xf32>
    %169 = arith.mulf %168, %167 : vector<16x512xf32>
    %170 = math.tanh %169 : vector<16x512xf32>
    %cst_75 = arith.constant 1.000000e+00 : f32
    %171 = vector.broadcast %cst_75 : f32 to vector<16x512xf32>
    %172 = arith.addf %171, %170 : vector<16x512xf32>
    %173 = arith.mulf %162, %172 : vector<16x512xf32>
    %cst_76 = arith.constant dense<0.000000e+00> : vector<16x128xf32>
    %174 = tpu.matmul %173, %23, %cst_76 {dimension_numbers = #tpu.dot_dimension_numbers<[1], [0], [0], [1], [0, 0, 1, 1], [], []>} : vector<16x512xf32>, vector<512x128xf32>, vector<16x128xf32> -> vector<16x128xf32>
    %175 = vector.broadcast %24 : vector<1x128xf32> to vector<16x128xf32>
    %176 = arith.addf %174, %175 : vector<16x128xf32>
    %177 = arith.addf %133, %176 : vector<16x128xf32>
    %c1 = arith.constant 1 : index
    %c0_77 = arith.constant 0 : index
    %178 = vector.load %arg5[%c1, %c0_77] : memref<2x128xf32, #tpu.memory_space<vmem>>, vector<1x128xf32>
    %c1_78 = arith.constant 1 : index
    %c0_79 = arith.constant 0 : index
    %179 = vector.load %arg6[%c1_78, %c0_79] : memref<2x128xf32, #tpu.memory_space<vmem>>, vector<1x128xf32>
    %c1_80 = arith.constant 1 : index
    %c0_81 = arith.constant 0 : index
    %c0_82 = arith.constant 0 : index
    %180 = vector.load %arg7[%c1_80, %c0_81, %c0_82] : memref<2x128x384xf32, #tpu.memory_space<vmem>>, vector<1x128x384xf32>
    %181 = vector.shape_cast %180 : vector<1x128x384xf32> to vector<128x384xf32>
    %c1_83 = arith.constant 1 : index
    %c0_84 = arith.constant 0 : index
    %182 = vector.load %arg8[%c1_83, %c0_84] : memref<2x384xf32, #tpu.memory_space<vmem>>, vector<1x384xf32>
    %c1_85 = arith.constant 1 : index
    %c0_86 = arith.constant 0 : index
    %c0_87 = arith.constant 0 : index
    %183 = vector.load %arg9[%c1_85, %c0_86, %c0_87] : memref<2x128x128xf32, #tpu.memory_space<vmem>>, vector<1x128x128xf32>
    %184 = vector.shape_cast %183 : vector<1x128x128xf32> to vector<128x128xf32>
    %c1_88 = arith.constant 1 : index
    %c0_89 = arith.constant 0 : index
    %185 = vector.load %arg10[%c1_88, %c0_89] : memref<2x128xf32, #tpu.memory_space<vmem>>, vector<1x128xf32>
    %c1_90 = arith.constant 1 : index
    %c0_91 = arith.constant 0 : index
    %186 = vector.load %arg11[%c1_90, %c0_91] : memref<2x128xf32, #tpu.memory_space<vmem>>, vector<1x128xf32>
    %c1_92 = arith.constant 1 : index
    %c0_93 = arith.constant 0 : index
    %187 = vector.load %arg12[%c1_92, %c0_93] : memref<2x128xf32, #tpu.memory_space<vmem>>, vector<1x128xf32>
    %c1_94 = arith.constant 1 : index
    %c0_95 = arith.constant 0 : index
    %c0_96 = arith.constant 0 : index
    %188 = vector.load %arg13[%c1_94, %c0_95, %c0_96] : memref<2x128x512xf32, #tpu.memory_space<vmem>>, vector<1x128x512xf32>
    %189 = vector.shape_cast %188 : vector<1x128x512xf32> to vector<128x512xf32>
    %c1_97 = arith.constant 1 : index
    %c0_98 = arith.constant 0 : index
    %190 = vector.load %arg14[%c1_97, %c0_98] : memref<2x512xf32, #tpu.memory_space<vmem>>, vector<1x512xf32>
    %c1_99 = arith.constant 1 : index
    %c0_100 = arith.constant 0 : index
    %c0_101 = arith.constant 0 : index
    %191 = vector.load %arg15[%c1_99, %c0_100, %c0_101] : memref<2x512x128xf32, #tpu.memory_space<vmem>>, vector<1x512x128xf32>
    %192 = vector.shape_cast %191 : vector<1x512x128xf32> to vector<512x128xf32>
    %c1_102 = arith.constant 1 : index
    %c0_103 = arith.constant 0 : index
    %193 = vector.load %arg16[%c1_102, %c0_103] : memref<2x128xf32, #tpu.memory_space<vmem>>, vector<1x128xf32>
    %cst_104 = arith.constant dense<0.000000e+00> : vector<16xf32>
    %194 = vector.multi_reduction <add>, %177, %cst_104 [1] : vector<16x128xf32> to vector<16xf32>
    %195 = vector.shape_cast %194 : vector<16xf32> to vector<16x1xf32>
    %cst_105 = arith.constant 1.280000e+02 : f32
    %196 = vector.broadcast %cst_105 : f32 to vector<16x1xf32>
    %197 = arith.divf %195, %196 : vector<16x1xf32>
    %198 = vector.broadcast %197 : vector<16x1xf32> to vector<16x128xf32>
    %199 = arith.subf %177, %198 : vector<16x128xf32>
    %200 = vector.broadcast %197 : vector<16x1xf32> to vector<16x128xf32>
    %201 = arith.subf %177, %200 : vector<16x128xf32>
    %202 = arith.mulf %199, %201 : vector<16x128xf32>
    %cst_106 = arith.constant dense<0.000000e+00> : vector<16xf32>
    %203 = vector.multi_reduction <add>, %202, %cst_106 [1] : vector<16x128xf32> to vector<16xf32>
    %204 = vector.shape_cast %203 : vector<16xf32> to vector<16x1xf32>
    %cst_107 = arith.constant 1.280000e+02 : f32
    %205 = vector.broadcast %cst_107 : f32 to vector<16x1xf32>
    %206 = arith.divf %204, %205 : vector<16x1xf32>
    %207 = vector.broadcast %197 : vector<16x1xf32> to vector<16x128xf32>
    %208 = arith.subf %177, %207 : vector<16x128xf32>
    %cst_108 = arith.constant 9.99999974E-6 : f32
    %209 = vector.broadcast %cst_108 : f32 to vector<16x1xf32>
    %210 = arith.addf %206, %209 : vector<16x1xf32>
    %211 = math.rsqrt %210 : vector<16x1xf32>
    %212 = vector.broadcast %211 : vector<16x1xf32> to vector<16x128xf32>
    %213 = arith.mulf %208, %212 : vector<16x128xf32>
    %214 = vector.broadcast %178 : vector<1x128xf32> to vector<16x128xf32>
    %215 = arith.mulf %213, %214 : vector<16x128xf32>
    %216 = vector.broadcast %179 : vector<1x128xf32> to vector<16x128xf32>
    %217 = arith.addf %215, %216 : vector<16x128xf32>
    %cst_109 = arith.constant dense<0.000000e+00> : vector<16x384xf32>
    %218 = tpu.matmul %217, %181, %cst_109 {dimension_numbers = #tpu.dot_dimension_numbers<[1], [0], [0], [1], [0, 0, 1, 1], [], []>} : vector<16x128xf32>, vector<128x384xf32>, vector<16x384xf32> -> vector<16x384xf32>
    %219 = vector.broadcast %182 : vector<1x384xf32> to vector<16x384xf32>
    %220 = arith.addf %218, %219 : vector<16x384xf32>
    %221 = vector.extract_strided_slice %220 {offsets = [0, 0], sizes = [16, 32], strides = [1, 1]} : vector<16x384xf32> to vector<16x32xf32>
    %222 = vector.extract_strided_slice %220 {offsets = [0, 128], sizes = [16, 32], strides = [1, 1]} : vector<16x384xf32> to vector<16x32xf32>
    %223 = vector.extract_strided_slice %220 {offsets = [0, 256], sizes = [16, 32], strides = [1, 1]} : vector<16x384xf32> to vector<16x32xf32>
    %cst_110 = arith.constant dense<0.000000e+00> : vector<16x16xf32>
    %224 = tpu.matmul %221, %222, %cst_110 {dimension_numbers = #tpu.dot_dimension_numbers<[1], [1], [0], [0], [0, 0, 1, 0], [], []>} : vector<16x32xf32>, vector<16x32xf32>, vector<16x16xf32> -> vector<16x16xf32>
    %cst_111 = arith.constant 0.176776692 : f32
    %225 = vector.broadcast %cst_111 : f32 to vector<16x16xf32>
    %226 = arith.mulf %224, %225 : vector<16x16xf32>
    %cst_112 = arith.constant dense<0xFF800000> : vector<16xf32>
    %227 = vector.multi_reduction <maximumf>, %226, %cst_112 [1] : vector<16x16xf32> to vector<16xf32>
    %228 = vector.shape_cast %227 : vector<16xf32> to vector<16x1xf32>
    %229 = vector.broadcast %228 : vector<16x1xf32> to vector<16x16xf32>
    %230 = arith.subf %226, %229 : vector<16x16xf32>
    %231 = math.exp %230 : vector<16x16xf32>
    %cst_113 = arith.constant dense<0.000000e+00> : vector<16xf32>
    %232 = vector.multi_reduction <add>, %231, %cst_113 [1] : vector<16x16xf32> to vector<16xf32>
    %233 = vector.shape_cast %232 : vector<16xf32> to vector<16x1xf32>
    %234 = tpu.reciprocal %233 {approx = true} : vector<16x1xf32> -> vector<16x1xf32>
    %235 = vector.broadcast %234 : vector<16x1xf32> to vector<16x16xf32>
    %236 = arith.mulf %231, %235 : vector<16x16xf32>
    %cst_114 = arith.constant dense<0.000000e+00> : vector<16x32xf32>
    %237 = tpu.matmul %236, %223, %cst_114 {dimension_numbers = #tpu.dot_dimension_numbers<[1], [0], [0], [1], [0, 0, 1, 1], [], []>} : vector<16x16xf32>, vector<16x32xf32>, vector<16x32xf32> -> vector<16x32xf32>
    %238 = vector.extract_strided_slice %184 {offsets = [0, 0], sizes = [32, 128], strides = [1, 1]} : vector<128x128xf32> to vector<32x128xf32>
    %cst_115 = arith.constant dense<0.000000e+00> : vector<16x128xf32>
    %239 = tpu.matmul %237, %238, %cst_115 {dimension_numbers = #tpu.dot_dimension_numbers<[1], [0], [0], [1], [0, 0, 1, 1], [], []>} : vector<16x32xf32>, vector<32x128xf32>, vector<16x128xf32> -> vector<16x128xf32>
    %240 = vector.extract_strided_slice %220 {offsets = [0, 32], sizes = [16, 32], strides = [1, 1]} : vector<16x384xf32> to vector<16x32xf32>
    %241 = vector.extract_strided_slice %220 {offsets = [0, 160], sizes = [16, 32], strides = [1, 1]} : vector<16x384xf32> to vector<16x32xf32>
    %242 = vector.extract_strided_slice %220 {offsets = [0, 288], sizes = [16, 32], strides = [1, 1]} : vector<16x384xf32> to vector<16x32xf32>
    %cst_116 = arith.constant dense<0.000000e+00> : vector<16x16xf32>
    %243 = tpu.matmul %240, %241, %cst_116 {dimension_numbers = #tpu.dot_dimension_numbers<[1], [1], [0], [0], [0, 0, 1, 0], [], []>} : vector<16x32xf32>, vector<16x32xf32>, vector<16x16xf32> -> vector<16x16xf32>
    %cst_117 = arith.constant 0.176776692 : f32
    %244 = vector.broadcast %cst_117 : f32 to vector<16x16xf32>
    %245 = arith.mulf %243, %244 : vector<16x16xf32>
    %cst_118 = arith.constant dense<0xFF800000> : vector<16xf32>
    %246 = vector.multi_reduction <maximumf>, %245, %cst_118 [1] : vector<16x16xf32> to vector<16xf32>
    %247 = vector.shape_cast %246 : vector<16xf32> to vector<16x1xf32>
    %248 = vector.broadcast %247 : vector<16x1xf32> to vector<16x16xf32>
    %249 = arith.subf %245, %248 : vector<16x16xf32>
    %250 = math.exp %249 : vector<16x16xf32>
    %cst_119 = arith.constant dense<0.000000e+00> : vector<16xf32>
    %251 = vector.multi_reduction <add>, %250, %cst_119 [1] : vector<16x16xf32> to vector<16xf32>
    %252 = vector.shape_cast %251 : vector<16xf32> to vector<16x1xf32>
    %253 = tpu.reciprocal %252 {approx = true} : vector<16x1xf32> -> vector<16x1xf32>
    %254 = vector.broadcast %253 : vector<16x1xf32> to vector<16x16xf32>
    %255 = arith.mulf %250, %254 : vector<16x16xf32>
    %cst_120 = arith.constant dense<0.000000e+00> : vector<16x32xf32>
    %256 = tpu.matmul %255, %242, %cst_120 {dimension_numbers = #tpu.dot_dimension_numbers<[1], [0], [0], [1], [0, 0, 1, 1], [], []>} : vector<16x16xf32>, vector<16x32xf32>, vector<16x32xf32> -> vector<16x32xf32>
    %257 = vector.extract_strided_slice %184 {offsets = [32, 0], sizes = [32, 128], strides = [1, 1]} : vector<128x128xf32> to vector<32x128xf32>
    %cst_121 = arith.constant dense<0.000000e+00> : vector<16x128xf32>
    %258 = tpu.matmul %256, %257, %cst_121 {dimension_numbers = #tpu.dot_dimension_numbers<[1], [0], [0], [1], [0, 0, 1, 1], [], []>} : vector<16x32xf32>, vector<32x128xf32>, vector<16x128xf32> -> vector<16x128xf32>
    %259 = arith.addf %239, %258 : vector<16x128xf32>
    %260 = vector.extract_strided_slice %220 {offsets = [0, 64], sizes = [16, 32], strides = [1, 1]} : vector<16x384xf32> to vector<16x32xf32>
    %261 = vector.extract_strided_slice %220 {offsets = [0, 192], sizes = [16, 32], strides = [1, 1]} : vector<16x384xf32> to vector<16x32xf32>
    %262 = vector.extract_strided_slice %220 {offsets = [0, 320], sizes = [16, 32], strides = [1, 1]} : vector<16x384xf32> to vector<16x32xf32>
    %cst_122 = arith.constant dense<0.000000e+00> : vector<16x16xf32>
    %263 = tpu.matmul %260, %261, %cst_122 {dimension_numbers = #tpu.dot_dimension_numbers<[1], [1], [0], [0], [0, 0, 1, 0], [], []>} : vector<16x32xf32>, vector<16x32xf32>, vector<16x16xf32> -> vector<16x16xf32>
    %cst_123 = arith.constant 0.176776692 : f32
    %264 = vector.broadcast %cst_123 : f32 to vector<16x16xf32>
    %265 = arith.mulf %263, %264 : vector<16x16xf32>
    %cst_124 = arith.constant dense<0xFF800000> : vector<16xf32>
    %266 = vector.multi_reduction <maximumf>, %265, %cst_124 [1] : vector<16x16xf32> to vector<16xf32>
    %267 = vector.shape_cast %266 : vector<16xf32> to vector<16x1xf32>
    %268 = vector.broadcast %267 : vector<16x1xf32> to vector<16x16xf32>
    %269 = arith.subf %265, %268 : vector<16x16xf32>
    %270 = math.exp %269 : vector<16x16xf32>
    %cst_125 = arith.constant dense<0.000000e+00> : vector<16xf32>
    %271 = vector.multi_reduction <add>, %270, %cst_125 [1] : vector<16x16xf32> to vector<16xf32>
    %272 = vector.shape_cast %271 : vector<16xf32> to vector<16x1xf32>
    %273 = tpu.reciprocal %272 {approx = true} : vector<16x1xf32> -> vector<16x1xf32>
    %274 = vector.broadcast %273 : vector<16x1xf32> to vector<16x16xf32>
    %275 = arith.mulf %270, %274 : vector<16x16xf32>
    %cst_126 = arith.constant dense<0.000000e+00> : vector<16x32xf32>
    %276 = tpu.matmul %275, %262, %cst_126 {dimension_numbers = #tpu.dot_dimension_numbers<[1], [0], [0], [1], [0, 0, 1, 1], [], []>} : vector<16x16xf32>, vector<16x32xf32>, vector<16x32xf32> -> vector<16x32xf32>
    %277 = vector.extract_strided_slice %184 {offsets = [64, 0], sizes = [32, 128], strides = [1, 1]} : vector<128x128xf32> to vector<32x128xf32>
    %cst_127 = arith.constant dense<0.000000e+00> : vector<16x128xf32>
    %278 = tpu.matmul %276, %277, %cst_127 {dimension_numbers = #tpu.dot_dimension_numbers<[1], [0], [0], [1], [0, 0, 1, 1], [], []>} : vector<16x32xf32>, vector<32x128xf32>, vector<16x128xf32> -> vector<16x128xf32>
    %279 = arith.addf %259, %278 : vector<16x128xf32>
    %280 = vector.extract_strided_slice %220 {offsets = [0, 96], sizes = [16, 32], strides = [1, 1]} : vector<16x384xf32> to vector<16x32xf32>
    %281 = vector.extract_strided_slice %220 {offsets = [0, 224], sizes = [16, 32], strides = [1, 1]} : vector<16x384xf32> to vector<16x32xf32>
    %282 = vector.extract_strided_slice %220 {offsets = [0, 352], sizes = [16, 32], strides = [1, 1]} : vector<16x384xf32> to vector<16x32xf32>
    %cst_128 = arith.constant dense<0.000000e+00> : vector<16x16xf32>
    %283 = tpu.matmul %280, %281, %cst_128 {dimension_numbers = #tpu.dot_dimension_numbers<[1], [1], [0], [0], [0, 0, 1, 0], [], []>} : vector<16x32xf32>, vector<16x32xf32>, vector<16x16xf32> -> vector<16x16xf32>
    %cst_129 = arith.constant 0.176776692 : f32
    %284 = vector.broadcast %cst_129 : f32 to vector<16x16xf32>
    %285 = arith.mulf %283, %284 : vector<16x16xf32>
    %cst_130 = arith.constant dense<0xFF800000> : vector<16xf32>
    %286 = vector.multi_reduction <maximumf>, %285, %cst_130 [1] : vector<16x16xf32> to vector<16xf32>
    %287 = vector.shape_cast %286 : vector<16xf32> to vector<16x1xf32>
    %288 = vector.broadcast %287 : vector<16x1xf32> to vector<16x16xf32>
    %289 = arith.subf %285, %288 : vector<16x16xf32>
    %290 = math.exp %289 : vector<16x16xf32>
    %cst_131 = arith.constant dense<0.000000e+00> : vector<16xf32>
    %291 = vector.multi_reduction <add>, %290, %cst_131 [1] : vector<16x16xf32> to vector<16xf32>
    %292 = vector.shape_cast %291 : vector<16xf32> to vector<16x1xf32>
    %293 = tpu.reciprocal %292 {approx = true} : vector<16x1xf32> -> vector<16x1xf32>
    %294 = vector.broadcast %293 : vector<16x1xf32> to vector<16x16xf32>
    %295 = arith.mulf %290, %294 : vector<16x16xf32>
    %cst_132 = arith.constant dense<0.000000e+00> : vector<16x32xf32>
    %296 = tpu.matmul %295, %282, %cst_132 {dimension_numbers = #tpu.dot_dimension_numbers<[1], [0], [0], [1], [0, 0, 1, 1], [], []>} : vector<16x16xf32>, vector<16x32xf32>, vector<16x32xf32> -> vector<16x32xf32>
    %297 = vector.extract_strided_slice %184 {offsets = [96, 0], sizes = [32, 128], strides = [1, 1]} : vector<128x128xf32> to vector<32x128xf32>
    %cst_133 = arith.constant dense<0.000000e+00> : vector<16x128xf32>
    %298 = tpu.matmul %296, %297, %cst_133 {dimension_numbers = #tpu.dot_dimension_numbers<[1], [0], [0], [1], [0, 0, 1, 1], [], []>} : vector<16x32xf32>, vector<32x128xf32>, vector<16x128xf32> -> vector<16x128xf32>
    %299 = arith.addf %279, %298 : vector<16x128xf32>
    %300 = arith.addf %177, %299 : vector<16x128xf32>
    %301 = vector.broadcast %185 : vector<1x128xf32> to vector<16x128xf32>
    %302 = arith.addf %300, %301 : vector<16x128xf32>
    %cst_134 = arith.constant dense<0.000000e+00> : vector<16xf32>
    %303 = vector.multi_reduction <add>, %302, %cst_134 [1] : vector<16x128xf32> to vector<16xf32>
    %304 = vector.shape_cast %303 : vector<16xf32> to vector<16x1xf32>
    %cst_135 = arith.constant 1.280000e+02 : f32
    %305 = vector.broadcast %cst_135 : f32 to vector<16x1xf32>
    %306 = arith.divf %304, %305 : vector<16x1xf32>
    %307 = vector.broadcast %306 : vector<16x1xf32> to vector<16x128xf32>
    %308 = arith.subf %302, %307 : vector<16x128xf32>
    %309 = vector.broadcast %306 : vector<16x1xf32> to vector<16x128xf32>
    %310 = arith.subf %302, %309 : vector<16x128xf32>
    %311 = arith.mulf %308, %310 : vector<16x128xf32>
    %cst_136 = arith.constant dense<0.000000e+00> : vector<16xf32>
    %312 = vector.multi_reduction <add>, %311, %cst_136 [1] : vector<16x128xf32> to vector<16xf32>
    %313 = vector.shape_cast %312 : vector<16xf32> to vector<16x1xf32>
    %cst_137 = arith.constant 1.280000e+02 : f32
    %314 = vector.broadcast %cst_137 : f32 to vector<16x1xf32>
    %315 = arith.divf %313, %314 : vector<16x1xf32>
    %316 = vector.broadcast %306 : vector<16x1xf32> to vector<16x128xf32>
    %317 = arith.subf %302, %316 : vector<16x128xf32>
    %cst_138 = arith.constant 9.99999974E-6 : f32
    %318 = vector.broadcast %cst_138 : f32 to vector<16x1xf32>
    %319 = arith.addf %315, %318 : vector<16x1xf32>
    %320 = math.rsqrt %319 : vector<16x1xf32>
    %321 = vector.broadcast %320 : vector<16x1xf32> to vector<16x128xf32>
    %322 = arith.mulf %317, %321 : vector<16x128xf32>
    %323 = vector.broadcast %186 : vector<1x128xf32> to vector<16x128xf32>
    %324 = arith.mulf %322, %323 : vector<16x128xf32>
    %325 = vector.broadcast %187 : vector<1x128xf32> to vector<16x128xf32>
    %326 = arith.addf %324, %325 : vector<16x128xf32>
    %cst_139 = arith.constant dense<0.000000e+00> : vector<16x512xf32>
    %327 = tpu.matmul %326, %189, %cst_139 {dimension_numbers = #tpu.dot_dimension_numbers<[1], [0], [0], [1], [0, 0, 1, 1], [], []>} : vector<16x128xf32>, vector<128x512xf32>, vector<16x512xf32> -> vector<16x512xf32>
    %328 = vector.broadcast %190 : vector<1x512xf32> to vector<16x512xf32>
    %329 = arith.addf %327, %328 : vector<16x512xf32>
    %cst_140 = arith.constant 5.000000e-01 : f32
    %330 = vector.broadcast %cst_140 : f32 to vector<16x512xf32>
    %331 = arith.mulf %330, %329 : vector<16x512xf32>
    %cst_141 = arith.constant 4.471500e-02 : f32
    %332 = vector.broadcast %cst_141 : f32 to vector<16x512xf32>
    %333 = arith.mulf %332, %329 : vector<16x512xf32>
    %334 = arith.mulf %333, %329 : vector<16x512xf32>
    %335 = arith.mulf %334, %329 : vector<16x512xf32>
    %336 = arith.addf %329, %335 : vector<16x512xf32>
    %cst_142 = arith.constant 0.797884583 : f32
    %337 = vector.broadcast %cst_142 : f32 to vector<16x512xf32>
    %338 = arith.mulf %337, %336 : vector<16x512xf32>
    %339 = math.tanh %338 : vector<16x512xf32>
    %cst_143 = arith.constant 1.000000e+00 : f32
    %340 = vector.broadcast %cst_143 : f32 to vector<16x512xf32>
    %341 = arith.addf %340, %339 : vector<16x512xf32>
    %342 = arith.mulf %331, %341 : vector<16x512xf32>
    %cst_144 = arith.constant dense<0.000000e+00> : vector<16x128xf32>
    %343 = tpu.matmul %342, %192, %cst_144 {dimension_numbers = #tpu.dot_dimension_numbers<[1], [0], [0], [1], [0, 0, 1, 1], [], []>} : vector<16x512xf32>, vector<512x128xf32>, vector<16x128xf32> -> vector<16x128xf32>
    %344 = vector.broadcast %193 : vector<1x128xf32> to vector<16x128xf32>
    %345 = arith.addf %343, %344 : vector<16x128xf32>
    %346 = arith.addf %302, %345 : vector<16x128xf32>
    %c0_145 = arith.constant 0 : index
    %c0_146 = arith.constant 0 : index
    %347 = vector.load %arg17[%c0_145, %c0_146] : memref<128x128xf32, #tpu.memory_space<vmem>>, vector<128x128xf32>
    %cst_147 = arith.constant dense<0.000000e+00> : vector<16x128xf32>
    %348 = tpu.matmul %346, %347, %cst_147 {dimension_numbers = #tpu.dot_dimension_numbers<[1], [0], [0], [1], [0, 0, 1, 1], [], []>} : vector<16x128xf32>, vector<128x128xf32>, vector<16x128xf32> -> vector<16x128xf32>
    %c0_148 = arith.constant 0 : index
    %c0_149 = arith.constant 0 : index
    %349 = vector.load %arg18[%c0_148, %c0_149] : memref<1x128xf32, #tpu.memory_space<vmem>>, vector<1x128xf32>
    %350 = vector.broadcast %349 : vector<1x128xf32> to vector<16x128xf32>
    %351 = arith.addf %348, %350 : vector<16x128xf32>
    %cst_150 = arith.constant dense<0.000000e+00> : vector<128xf32>
    %352 = vector.multi_reduction <add>, %351, %cst_150 [0] : vector<16x128xf32> to vector<128xf32>
    %353 = vector.shape_cast %352 : vector<128xf32> to vector<1x128xf32>
    %cst_151 = arith.constant 1.600000e+01 : f32
    %354 = vector.broadcast %cst_151 : f32 to vector<1x128xf32>
    %355 = arith.divf %353, %354 : vector<1x128xf32>
    %356 = vector.shape_cast %355 : vector<1x128xf32> to vector<1x1x128xf32>
    %c0_152 = arith.constant 0 : index
    %c0_153 = arith.constant 0 : index
    %c0_154 = arith.constant 0 : index
    %357 = vector.load %arg19[%c0_152, %c0_153, %c0_154] : memref<1x1x128xf32, #tpu.memory_space<vmem>>, vector<1x1x128xf32>
    tpu.vector_store %arg19[%c0_152, %c0_153, %c0_154], %356 {strides = array<i32>} : memref<1x1x128xf32, #tpu.memory_space<vmem>>, vector<1x1x128xf32>,
    return
  }
  func.func @transform_0(%arg0: i32) -> (i32, i32, i32) {
    %c0_i32 = arith.constant 0 : i32
    %c0_i32_0 = arith.constant 0 : i32
    %c0_i32_1 = arith.constant 0 : i32
    return %arg0, %c0_i32, %c0_i32_0 : i32, i32, i32
  }
  func.func @transform_1(%arg0: i32) -> (i32, i32) {
    %c0_i32 = arith.constant 0 : i32
    %c0_i32_0 = arith.constant 0 : i32
    %c0_i32_1 = arith.constant 0 : i32
    return %c0_i32, %c0_i32_0 : i32, i32
  }
  func.func @transform_2(%arg0: i32) -> (i32, i32) {
    %c0_i32 = arith.constant 0 : i32
    %c0_i32_0 = arith.constant 0 : i32
    %c0_i32_1 = arith.constant 0 : i32
    return %c0_i32, %c0_i32_0 : i32, i32
  }
  func.func @transform_3(%arg0: i32) -> (i32, i32) {
    %c0_i32 = arith.constant 0 : i32
    %c0_i32_0 = arith.constant 0 : i32
    %c0_i32_1 = arith.constant 0 : i32
    return %c0_i32, %c0_i32_0 : i32, i32
  }
  func.func @transform_4(%arg0: i32) -> (i32, i32) {
    %c0_i32 = arith.constant 0 : i32
    %c0_i32_0 = arith.constant 0 : i32
    %c0_i32_1 = arith.constant 0 : i32
    return %c0_i32, %c0_i32_0 : i32, i32
  }
  func.func @transform_5(%arg0: i32) -> (i32, i32) {
    %c0_i32 = arith.constant 0 : i32
    %c0_i32_0 = arith.constant 0 : i32
    %c0_i32_1 = arith.constant 0 : i32
    return %c0_i32, %c0_i32_0 : i32, i32
  }
  func.func @transform_6(%arg0: i32) -> (i32, i32, i32) {
    %c0_i32 = arith.constant 0 : i32
    %c0_i32_0 = arith.constant 0 : i32
    %c0_i32_1 = arith.constant 0 : i32
    %c0_i32_2 = arith.constant 0 : i32
    return %c0_i32, %c0_i32_0, %c0_i32_1 : i32, i32, i32
  }
  func.func @transform_7(%arg0: i32) -> (i32, i32) {
    %c0_i32 = arith.constant 0 : i32
    %c0_i32_0 = arith.constant 0 : i32
    %c0_i32_1 = arith.constant 0 : i32
    return %c0_i32, %c0_i32_0 : i32, i32
  }
  func.func @transform_8(%arg0: i32) -> (i32, i32, i32) {
    %c0_i32 = arith.constant 0 : i32
    %c0_i32_0 = arith.constant 0 : i32
    %c0_i32_1 = arith.constant 0 : i32
    %c0_i32_2 = arith.constant 0 : i32
    return %c0_i32, %c0_i32_0, %c0_i32_1 : i32, i32, i32
  }
  func.func @transform_9(%arg0: i32) -> (i32, i32) {
    %c0_i32 = arith.constant 0 : i32
    %c0_i32_0 = arith.constant 0 : i32
    %c0_i32_1 = arith.constant 0 : i32
    return %c0_i32, %c0_i32_0 : i32, i32
  }
  func.func @transform_10(%arg0: i32) -> (i32, i32) {
    %c0_i32 = arith.constant 0 : i32
    %c0_i32_0 = arith.constant 0 : i32
    %c0_i32_1 = arith.constant 0 : i32
    return %c0_i32, %c0_i32_0 : i32, i32
  }
  func.func @transform_11(%arg0: i32) -> (i32, i32) {
    %c0_i32 = arith.constant 0 : i32
    %c0_i32_0 = arith.constant 0 : i32
    %c0_i32_1 = arith.constant 0 : i32
    return %c0_i32, %c0_i32_0 : i32, i32
  }
  func.func @transform_12(%arg0: i32) -> (i32, i32, i32) {
    %c0_i32 = arith.constant 0 : i32
    %c0_i32_0 = arith.constant 0 : i32
    %c0_i32_1 = arith.constant 0 : i32
    %c0_i32_2 = arith.constant 0 : i32
    return %c0_i32, %c0_i32_0, %c0_i32_1 : i32, i32, i32
  }
  func.func @transform_13(%arg0: i32) -> (i32, i32) {
    %c0_i32 = arith.constant 0 : i32
    %c0_i32_0 = arith.constant 0 : i32
    %c0_i32_1 = arith.constant 0 : i32
    return %c0_i32, %c0_i32_0 : i32, i32
  }
  func.func @transform_14(%arg0: i32) -> (i32, i32, i32) {
    %c0_i32 = arith.constant 0 : i32
    %c0_i32_0 = arith.constant 0 : i32
    %c0_i32_1 = arith.constant 0 : i32
    %c0_i32_2 = arith.constant 0 : i32
    return %c0_i32, %c0_i32_0, %c0_i32_1 : i32, i32, i32
  }
  func.func @transform_15(%arg0: i32) -> (i32, i32) {
    %c0_i32 = arith.constant 0 : i32
    %c0_i32_0 = arith.constant 0 : i32
    %c0_i32_1 = arith.constant 0 : i32
    return %c0_i32, %c0_i32_0 : i32, i32
  }
  func.func @transform_16(%arg0: i32) -> (i32, i32) {
    %c0_i32 = arith.constant 0 : i32
    %c0_i32_0 = arith.constant 0 : i32
    %c0_i32_1 = arith.constant 0 : i32
    return %c0_i32, %c0_i32_0 : i32, i32
  }
  func.func @transform_17(%arg0: i32) -> (i32, i32) {
    %c0_i32 = arith.constant 0 : i32
    %c0_i32_0 = arith.constant 0 : i32
    %c0_i32_1 = arith.constant 0 : i32
    return %c0_i32, %c0_i32_0 : i32, i32
  }
  func.func @transform_18(%arg0: i32) -> (i32, i32, i32) {
    %c0_i32 = arith.constant 0 : i32
    %c0_i32_0 = arith.constant 0 : i32
    %c0_i32_1 = arith.constant 0 : i32
    return %arg0, %c0_i32, %c0_i32_0 : i32, i32, i32
  }
}

module attributes {stable_mosaic.version = 11 : i64} {
  func.func @_loss_kernel(%arg0: i32, %arg1: memref<2x128xf32, #tpu.memory_space<vmem>>, %arg2: memref<2x8x128xf32, #tpu.memory_space<vmem>>, %arg3: memref<128x128xf32, #tpu.memory_space<vmem>>, %arg4: memref<1x128xf32, #tpu.memory_space<vmem>>, %arg5: memref<20x128xf32, #tpu.memory_space<vmem>>, %arg6: memref<2x20xf32, #tpu.memory_space<vmem>>, %arg7: memref<1x1xf32, #tpu.memory_space<vmem>>, %arg8: memref<1x1xf32, #tpu.memory_space<vmem>>) attributes {dimension_semantics = [#tpu.dimension_semantics<arbitrary>], iteration_bounds = array<i64: 1>, scalar_prefetch = 0 : i64, scratch_operands = 0 : i64, tpu.core_type = #tpu.core_type<tc>, window_params = [{pipeline_mode = #tpu.pipeline_mode<synchronous>, transform_indices = @transform_0, window_bounds = array<i64: 2, 128>}, {pipeline_mode = #tpu.pipeline_mode<synchronous>, transform_indices = @transform_1, window_bounds = array<i64: 2, 8, 128>}, {pipeline_mode = #tpu.pipeline_mode<synchronous>, transform_indices = @transform_2, window_bounds = array<i64: 128, 128>}, {pipeline_mode = #tpu.pipeline_mode<synchronous>, transform_indices = @transform_3, window_bounds = array<i64: 1, 128>}, {pipeline_mode = #tpu.pipeline_mode<synchronous>, transform_indices = @transform_4, window_bounds = array<i64: 20, 128>}, {pipeline_mode = #tpu.pipeline_mode<synchronous>, transform_indices = @transform_5, window_bounds = array<i64: 2, 20>}, {pipeline_mode = #tpu.pipeline_mode<synchronous>, transform_indices = @transform_6, window_bounds = array<i64: 1, 1>}, {pipeline_mode = #tpu.pipeline_mode<synchronous>, transform_indices = @transform_7, window_bounds = array<i64: 1, 1>}]} {
    %c0 = arith.constant 0 : index
    %c0_0 = arith.constant 0 : index
    %0 = vector.load %arg1[%c0, %c0_0] : memref<2x128xf32, #tpu.memory_space<vmem>>, vector<2x128xf32>
    %1 = arith.mulf %0, %0 : vector<2x128xf32>
    %cst = arith.constant dense<0.000000e+00> : vector<2xf32>
    %2 = vector.multi_reduction <add>, %1, %cst [1] : vector<2x128xf32> to vector<2xf32>
    %3 = vector.shape_cast %2 : vector<2xf32> to vector<2x1xf32>
    %cst_1 = arith.constant 9.99999996E-13 : f32
    %4 = vector.broadcast %cst_1 : f32 to vector<2x1xf32>
    %5 = arith.addf %3, %4 : vector<2x1xf32>
    %6 = math.rsqrt %5 : vector<2x1xf32>
    %7 = vector.broadcast %6 : vector<2x1xf32> to vector<2x128xf32>
    %8 = arith.mulf %0, %7 : vector<2x128xf32>
    %c0_2 = arith.constant 0 : index
    %c0_3 = arith.constant 0 : index
    %c0_4 = arith.constant 0 : index
    %9 = vector.load %arg2[%c0_2, %c0_3, %c0_4] : memref<2x8x128xf32, #tpu.memory_space<vmem>>, vector<2x8x128xf32>
    %cst_5 = arith.constant dense<0.000000e+00> : vector<2x128xf32>
    %10 = vector.multi_reduction <add>, %9, %cst_5 [1] : vector<2x8x128xf32> to vector<2x128xf32>
    %cst_6 = arith.constant 8.000000e+00 : f32
    %11 = vector.broadcast %cst_6 : f32 to vector<2x128xf32>
    %12 = arith.divf %10, %11 : vector<2x128xf32>
    %c0_7 = arith.constant 0 : index
    %c0_8 = arith.constant 0 : index
    %13 = vector.load %arg3[%c0_7, %c0_8] : memref<128x128xf32, #tpu.memory_space<vmem>>, vector<128x128xf32>
    %cst_9 = arith.constant dense<0.000000e+00> : vector<2x128xf32>
    %14 = tpu.matmul %12, %13, %cst_9 {dimension_numbers = #tpu.dot_dimension_numbers<[1], [0], [0], [1], [0, 0, 1, 1], [], []>} : vector<2x128xf32>, vector<128x128xf32>, vector<2x128xf32> -> vector<2x128xf32>
    %c0_10 = arith.constant 0 : index
    %c0_11 = arith.constant 0 : index
    %15 = vector.load %arg4[%c0_10, %c0_11] : memref<1x128xf32, #tpu.memory_space<vmem>>, vector<1x128xf32>
    %16 = vector.broadcast %15 : vector<1x128xf32> to vector<2x128xf32>
    %17 = arith.addf %14, %16 : vector<2x128xf32>
    %18 = arith.mulf %17, %17 : vector<2x128xf32>
    %cst_12 = arith.constant dense<0.000000e+00> : vector<2xf32>
    %19 = vector.multi_reduction <add>, %18, %cst_12 [1] : vector<2x128xf32> to vector<2xf32>
    %20 = vector.shape_cast %19 : vector<2xf32> to vector<2x1xf32>
    %cst_13 = arith.constant 9.99999996E-13 : f32
    %21 = vector.broadcast %cst_13 : f32 to vector<2x1xf32>
    %22 = arith.addf %20, %21 : vector<2x1xf32>
    %23 = math.rsqrt %22 : vector<2x1xf32>
    %24 = vector.broadcast %23 : vector<2x1xf32> to vector<2x128xf32>
    %25 = arith.mulf %17, %24 : vector<2x128xf32>
    %cst_14 = arith.constant dense<0.000000e+00> : vector<2x2xf32>
    %26 = tpu.matmul %8, %25, %cst_14 {dimension_numbers = #tpu.dot_dimension_numbers<[1], [1], [0], [0], [0, 0, 1, 0], [], []>} : vector<2x128xf32>, vector<2x128xf32>, vector<2x2xf32> -> vector<2x2xf32>
    %cst_15 = arith.constant 14.2857141 : f32
    %27 = vector.broadcast %cst_15 : f32 to vector<2x2xf32>
    %28 = arith.mulf %26, %27 : vector<2x2xf32>
    %29 = tpu.iota {dimensions = array<i32: 0>} : vector<2x2xi32>
    %30 = tpu.iota {dimensions = array<i32: 1>} : vector<2x2xi32>
    %31 = arith.cmpi eq, %29, %30 : vector<2x2xi32>
    %32 = arith.extui %31 : vector<2x2xi1> to vector<2x2xi32>
    %33 = arith.sitofp %32 : vector<2x2xi32> to vector<2x2xf32>
    %cst_16 = arith.constant dense<0xFF800000> : vector<2xf32>
    %34 = vector.multi_reduction <maximumf>, %28, %cst_16 [1] : vector<2x2xf32> to vector<2xf32>
    %35 = vector.shape_cast %34 : vector<2xf32> to vector<2x1xf32>
    %36 = vector.broadcast %35 : vector<2x1xf32> to vector<2x2xf32>
    %37 = arith.subf %28, %36 : vector<2x2xf32>
    %38 = math.exp %37 : vector<2x2xf32>
    %cst_17 = arith.constant dense<0.000000e+00> : vector<2xf32>
    %39 = vector.multi_reduction <add>, %38, %cst_17 [1] : vector<2x2xf32> to vector<2xf32>
    %40 = vector.shape_cast %39 : vector<2xf32> to vector<2x1xf32>
    %41 = math.log %40 : vector<2x1xf32>
    %42 = arith.addf %35, %41 : vector<2x1xf32>
    %43 = arith.mulf %28, %33 : vector<2x2xf32>
    %cst_18 = arith.constant dense<0.000000e+00> : vector<2xf32>
    %44 = vector.multi_reduction <add>, %43, %cst_18 [1] : vector<2x2xf32> to vector<2xf32>
    %45 = vector.shape_cast %44 : vector<2xf32> to vector<2x1xf32>
    %cst_19 = arith.constant dense<0xFF800000> : vector<2xf32>
    %46 = vector.multi_reduction <maximumf>, %28, %cst_19 [0] : vector<2x2xf32> to vector<2xf32>
    %47 = vector.shape_cast %46 : vector<2xf32> to vector<1x2xf32>
    %48 = vector.broadcast %47 : vector<1x2xf32> to vector<2x2xf32>
    %49 = arith.subf %28, %48 : vector<2x2xf32>
    %50 = math.exp %49 : vector<2x2xf32>
    %cst_20 = arith.constant dense<0.000000e+00> : vector<2xf32>
    %51 = vector.multi_reduction <add>, %50, %cst_20 [0] : vector<2x2xf32> to vector<2xf32>
    %52 = vector.shape_cast %51 : vector<2xf32> to vector<1x2xf32>
    %53 = math.log %52 : vector<1x2xf32>
    %54 = arith.addf %47, %53 : vector<1x2xf32>
    %55 = arith.mulf %28, %33 : vector<2x2xf32>
    %cst_21 = arith.constant dense<0.000000e+00> : vector<2xf32>
    %56 = vector.multi_reduction <add>, %55, %cst_21 [0] : vector<2x2xf32> to vector<2xf32>
    %57 = vector.shape_cast %56 : vector<2xf32> to vector<1x2xf32>
    %58 = arith.subf %42, %45 : vector<2x1xf32>
    %59 = vector.shape_cast %58 : vector<2x1xf32> to vector<1x2x1xf32>
    %cst_22 = arith.constant dense<0.000000e+00> : vector<1xf32>
    %60 = vector.multi_reduction <add>, %59, %cst_22 [1, 2] : vector<1x2x1xf32> to vector<1xf32>
    %61 = vector.shape_cast %60 : vector<1xf32> to vector<1x1x1xf32>
    %62 = vector.extract %61[0, 0, 0] : f32 from vector<1x1x1xf32>
    %cst_23 = arith.constant 2.000000e+00 : f32
    %63 = arith.divf %62, %cst_23 : f32
    %64 = arith.subf %54, %57 : vector<1x2xf32>
    %65 = vector.shape_cast %64 : vector<1x2xf32> to vector<1x1x2xf32>
    %cst_24 = arith.constant dense<0.000000e+00> : vector<1xf32>
    %66 = vector.multi_reduction <add>, %65, %cst_24 [1, 2] : vector<1x1x2xf32> to vector<1xf32>
    %67 = vector.shape_cast %66 : vector<1xf32> to vector<1x1x1xf32>
    %68 = vector.extract %67[0, 0, 0] : f32 from vector<1x1x1xf32>
    %cst_25 = arith.constant 2.000000e+00 : f32
    %69 = arith.divf %68, %cst_25 : f32
    %70 = arith.addf %63, %69 : f32
    %cst_26 = arith.constant 5.000000e-01 : f32
    %71 = arith.mulf %cst_26, %70 : f32
    %c0_27 = arith.constant 0 : index
    %c0_28 = arith.constant 0 : index
    %72 = vector.load %arg5[%c0_27, %c0_28] : memref<20x128xf32, #tpu.memory_space<vmem>>, vector<20x128xf32>
    %73 = arith.mulf %72, %72 : vector<20x128xf32>
    %cst_29 = arith.constant dense<0.000000e+00> : vector<20xf32>
    %74 = vector.multi_reduction <add>, %73, %cst_29 [1] : vector<20x128xf32> to vector<20xf32>
    %75 = vector.shape_cast %74 : vector<20xf32> to vector<20x1xf32>
    %cst_30 = arith.constant 9.99999996E-13 : f32
    %76 = vector.broadcast %cst_30 : f32 to vector<20x1xf32>
    %77 = arith.addf %75, %76 : vector<20x1xf32>
    %78 = math.rsqrt %77 : vector<20x1xf32>
    %79 = vector.broadcast %78 : vector<20x1xf32> to vector<20x128xf32>
    %80 = arith.mulf %72, %79 : vector<20x128xf32>
    %cst_31 = arith.constant dense<0.000000e+00> : vector<2x20xf32>
    %81 = tpu.matmul %8, %80, %cst_31 {dimension_numbers = #tpu.dot_dimension_numbers<[1], [1], [0], [0], [0, 0, 1, 0], [], []>} : vector<2x128xf32>, vector<20x128xf32>, vector<2x20xf32> -> vector<2x20xf32>
    %cst_32 = arith.constant 2.000000e+01 : f32
    %82 = vector.broadcast %cst_32 : f32 to vector<2x20xf32>
    %83 = arith.mulf %81, %82 : vector<2x20xf32>
    %c0_33 = arith.constant 0 : index
    %c0_34 = arith.constant 0 : index
    %84 = vector.load %arg6[%c0_33, %c0_34] : memref<2x20xf32, #tpu.memory_space<vmem>>, vector<2x20xf32>
    %cst_35 = arith.constant 0.000000e+00 : f32
    %85 = vector.broadcast %cst_35 : f32 to vector<2x20xf32>
    %86 = arith.maximumf %83, %85 : vector<2x20xf32>
    %87 = arith.mulf %83, %84 : vector<2x20xf32>
    %88 = arith.subf %86, %87 : vector<2x20xf32>
    %89 = math.absf %83 : vector<2x20xf32>
    %cst_36 = arith.constant 0.000000e+00 : f32
    %90 = vector.broadcast %cst_36 : f32 to vector<2x20xf32>
    %91 = arith.subf %90, %89 : vector<2x20xf32>
    %92 = math.exp %91 : vector<2x20xf32>
    %cst_37 = arith.constant 1.000000e+00 : f32
    %93 = vector.broadcast %cst_37 : f32 to vector<2x20xf32>
    %94 = arith.addf %93, %92 : vector<2x20xf32>
    %95 = math.log %94 : vector<2x20xf32>
    %96 = arith.addf %88, %95 : vector<2x20xf32>
    %97 = vector.shape_cast %96 : vector<2x20xf32> to vector<1x2x20xf32>
    %cst_38 = arith.constant dense<0.000000e+00> : vector<1xf32>
    %98 = vector.multi_reduction <add>, %97, %cst_38 [1, 2] : vector<1x2x20xf32> to vector<1xf32>
    %99 = vector.shape_cast %98 : vector<1xf32> to vector<1x1x1xf32>
    %100 = vector.extract %99[0, 0, 0] : f32 from vector<1x1x1xf32>
    %cst_39 = arith.constant 4.000000e+01 : f32
    %101 = arith.divf %100, %cst_39 : f32
    %cst_40 = arith.constant 1.000000e+00 : f32
    %102 = arith.mulf %71, %cst_40 : f32
    %103 = vector.broadcast %102 : f32 to vector<1x1xf32>
    %c0_41 = arith.constant 0 : index
    %c0_42 = arith.constant 0 : index
    %104 = vector.load %arg7[%c0_41, %c0_42] : memref<1x1xf32, #tpu.memory_space<vmem>>, vector<1x1xf32>
    tpu.vector_store %arg7[%c0_41, %c0_42], %103 {strides = array<i32>} : memref<1x1xf32, #tpu.memory_space<vmem>>, vector<1x1xf32>,
    %cst_43 = arith.constant 1.000000e+00 : f32
    %105 = arith.mulf %101, %cst_43 : f32
    %106 = vector.broadcast %105 : f32 to vector<1x1xf32>
    %c0_44 = arith.constant 0 : index
    %c0_45 = arith.constant 0 : index
    %107 = vector.load %arg8[%c0_44, %c0_45] : memref<1x1xf32, #tpu.memory_space<vmem>>, vector<1x1xf32>
    tpu.vector_store %arg8[%c0_44, %c0_45], %106 {strides = array<i32>} : memref<1x1xf32, #tpu.memory_space<vmem>>, vector<1x1xf32>,
    return
  }
  func.func @transform_0(%arg0: i32) -> (i32, i32) {
    %c0_i32 = arith.constant 0 : i32
    %c0_i32_0 = arith.constant 0 : i32
    %c0_i32_1 = arith.constant 0 : i32
    return %c0_i32, %c0_i32_0 : i32, i32
  }
  func.func @transform_1(%arg0: i32) -> (i32, i32, i32) {
    %c0_i32 = arith.constant 0 : i32
    %c0_i32_0 = arith.constant 0 : i32
    %c0_i32_1 = arith.constant 0 : i32
    %c0_i32_2 = arith.constant 0 : i32
    return %c0_i32, %c0_i32_0, %c0_i32_1 : i32, i32, i32
  }
  func.func @transform_2(%arg0: i32) -> (i32, i32) {
    %c0_i32 = arith.constant 0 : i32
    %c0_i32_0 = arith.constant 0 : i32
    %c0_i32_1 = arith.constant 0 : i32
    return %c0_i32, %c0_i32_0 : i32, i32
  }
  func.func @transform_3(%arg0: i32) -> (i32, i32) {
    %c0_i32 = arith.constant 0 : i32
    %c0_i32_0 = arith.constant 0 : i32
    %c0_i32_1 = arith.constant 0 : i32
    return %c0_i32, %c0_i32_0 : i32, i32
  }
  func.func @transform_4(%arg0: i32) -> (i32, i32) {
    %c0_i32 = arith.constant 0 : i32
    %c0_i32_0 = arith.constant 0 : i32
    %c0_i32_1 = arith.constant 0 : i32
    return %c0_i32, %c0_i32_0 : i32, i32
  }
  func.func @transform_5(%arg0: i32) -> (i32, i32) {
    %c0_i32 = arith.constant 0 : i32
    %c0_i32_0 = arith.constant 0 : i32
    %c0_i32_1 = arith.constant 0 : i32
    return %c0_i32, %c0_i32_0 : i32, i32
  }
  func.func @transform_6(%arg0: i32) -> (i32, i32) {
    %c0_i32 = arith.constant 0 : i32
    %c0_i32_0 = arith.constant 0 : i32
    %c0_i32_1 = arith.constant 0 : i32
    return %c0_i32, %c0_i32_0 : i32, i32
  }
  func.func @transform_7(%arg0: i32) -> (i32, i32) {
    %c0_i32 = arith.constant 0 : i32
    %c0_i32_0 = arith.constant 0 : i32
    %c0_i32_1 = arith.constant 0 : i32
    return %c0_i32, %c0_i32_0 : i32, i32
  }
}

</mosaic_0001>

<llo_original>
// kernel: tagalign_forward.3
$region0: #{tagalign_forward.3}
  #allocation0 [shape = 'u32[]', space=smem, size = 0x4, offset = 0x4, fixed_abs, tag = 'smem constant byte address 0x4 - core index']
  #allocation1 [shape = 'u32[144,128]{1,0:T(1,128)}', space=vmem, size = 0x12000, scoped, tag = 'internal scratch']
  %s0 = inlined_call_operand.vmem [shape: f32[2,128], index: 0, kind: input, shape index: {}]
  %s1 = inlined_call_operand.vmem [shape: f32[2,8,128], index: 1, kind: input, shape index: {}]
  %s2 = inlined_call_operand.vmem [shape: f32[128,128], index: 2, kind: input, shape index: {}]
  %s3 = inlined_call_operand.vmem [shape: f32[1,128], index: 3, kind: input, shape index: {}]
  %s4 = inlined_call_operand.vmem [shape: f32[20,128], index: 4, kind: input, shape index: {}]
  %s5 = inlined_call_operand.vmem [shape: f32[2,20], index: 5, kind: input, shape index: {}]
  %s6 = inlined_call_operand.hbm [shape: f32[1,1], index: 6, kind: output, shape index: {0}]
  %s7 = inlined_call_operand.hbm [shape: f32[1,1], index: 7, kind: output, shape index: {1}]
  %8 = xla_tuple %s6, %s7
  %s9 = sld [smem:[#allocation0]]
  $region42: #{tagalign_forward.3} parent=0
    _
  %s11 = ssub.s32 1, %s9
  %s12 = scalar_select 0, %s11, %s9
  $region1: #{tagalign_forward.3} parent=0
    #allocation2 [shape = 'u8[512]{0}', space=vmem, size = 0x400, scoped, tag = 'output window, operand 0, single buffered']
    #allocation3 [shape = 's32[1]{0}', space=sflag, size = 0x4, scoped, tag = 'scoped memory for tagalign_forward.3']
    #allocation4 [shape = 'u8[512]{0}', space=vmem, size = 0x400, scoped, tag = 'output window, operand 1, single buffered']
    #allocation5 [shape = 's32[1]{0}', space=sflag, size = 0x4, scoped, tag = 'scoped memory for tagalign_forward.3']
    %13 = vsyncpa [#allocation3], 0
    %14 = vsyncpa [#allocation5], 0
    // Predicated region
    $region2: #{tagalign_forward.3} parent=1 // pred_check
      _
    $region3: #{tagalign_forward.3} parent=1 // pred_check_branch
      %16 = sbr.rel (0) target = $region5
    $region4: #{tagalign_forward.3} parent=1 // pred_region
      _
    $region5: #{tagalign_forward.3} parent=1 // pred_fallthru
      _
    // Predicated region
    $region6: #{tagalign_forward.3} parent=1 // pred_check
      _
    $region7: #{tagalign_forward.3} parent=1 // pred_check_branch
      %18 = sbr.rel (0) target = $region9
    $region8: #{tagalign_forward.3} parent=1 // pred_region
      _
    $region9: #{tagalign_forward.3} parent=1 // pred_fallthru
      _
    // Predicated region
    $region10: #{tagalign_forward.3} parent=1 // pred_check
      _
    $region11: #{tagalign_forward.3} parent=1 // pred_check_branch
      %20 = sbr.rel (0) target = $region13
    $region12: #{tagalign_forward.3} parent=1 // pred_region
      _
    $region13: #{tagalign_forward.3} parent=1 // pred_fallthru
      _
    // Predicated region
    $region14: #{tagalign_forward.3} parent=1 // pred_check
      _
    $region15: #{tagalign_forward.3} parent=1 // pred_check_branch
      %22 = sbr.rel (0) target = $region17
    $region16: #{tagalign_forward.3} parent=1 // pred_region
      _
    $region17: #{tagalign_forward.3} parent=1 // pred_fallthru
      _
    // Predicated region
    $region18: #{tagalign_forward.3} parent=1 // pred_check
      _
    $region19: #{tagalign_forward.3} parent=1 // pred_check_branch
      %24 = sbr.rel (0) target = $region21
    $region20: #{tagalign_forward.3} parent=1 // pred_region
      _
    $region21: #{tagalign_forward.3} parent=1 // pred_fallthru
      _
    // Predicated region
    $region22: #{tagalign_forward.3} parent=1 // pred_check
      _
    $region23: #{tagalign_forward.3} parent=1 // pred_check_branch
      %26 = sbr.rel (0) target = $region25
    $region24: #{tagalign_forward.3} parent=1 // pred_region
      _
    $region25: #{tagalign_forward.3} parent=1 // pred_fallthru
      _
    %v27 = vld [vmem:[%s0] sm:$0x3]
    %v28 = vmul.f32 %v27, %v27
    %vm29 = vcmask 1041408
    %v30 = vsel %vm29, %v28, 0.0
    %31 = vadd.xlane.f32.xlu0 %v30
    %v32 = vpop.xlane.xlu0 %31
    %v33 = vadd.f32 %v32, 1e-12
    %v34 = vrsqrt.pop %v33
    %v35 = vmul.f32 %v27, %v34
    %v36 = vld [vmem:[%s1] sm:$0xff]
    %v37 = vld [vmem:[%s1 + $0x8] sm:$0xff]
    %v38 = vrot.slane %v36, 4
    %v39 = vadd.f32 %v36, %v38
    %v40 = vrot.slane %v39, 2
    %v41 = vadd.f32 %v39, %v40
    %v42 = vrot.slane %v41, 1
    %v43 = vadd.f32 %v41, %v42
    %v44 = vrot.slane %v37, 4
    %v45 = vadd.f32 %v37, %v44
    %v46 = vrot.slane %v45, 2
    %v47 = vadd.f32 %v45, %v46
    %v48 = vrot.slane %v47, 1
    %v49 = vadd.f32 %v47, %v48
    %v50 = vrcp.pop 8.0
    %v51 = vmul.f32 %v43, %v50
    %v52 = vmul.f32 %v49, %v50
    %v53 = vld [vmem:[%s2] sm:$0xff]
    %v54 = vld [vmem:[%s2 + $0x8] sm:$0xff]
    %v55 = vld [vmem:[%s2 + $0x10] sm:$0xff]
    %v56 = vld [vmem:[%s2 + $0x18] sm:$0xff]
    %v57 = vld [vmem:[%s2 + $0x20] sm:$0xff]
    %v58 = vld [vmem:[%s2 + $0x28] sm:$0xff]
    %v59 = vld [vmem:[%s2 + $0x30] sm:$0xff]
    %v60 = vld [vmem:[%s2 + $0x38] sm:$0xff]
    %v61 = vld [vmem:[%s2 + $0x40] sm:$0xff]
    %v62 = vld [vmem:[%s2 + $0x48] sm:$0xff]
    %v63 = vld [vmem:[%s2 + $0x50] sm:$0xff]
    %v64 = vld [vmem:[%s2 + $0x58] sm:$0xff]
    %v65 = vld [vmem:[%s2 + $0x60] sm:$0xff]
    %v66 = vld [vmem:[%s2 + $0x68] sm:$0xff]
    %v67 = vld [vmem:[%s2 + $0x70] sm:$0xff]
    %v68 = vld [vmem:[%s2 + $0x78] sm:$0xff]
    %v69 = vld [vmem:[%s3] sm:$0x1]
    %v71 = vlaneseq
    %v72 = vshrl.u32 %v71, 7
    %v73 = vsub.s32 0, %v72
    %v74 = vrot.slane %v69, %v73
    %vm78 = vcmask 1041409
    %v79 = vsel %vm78, %v52, %v51
    %81 = vmatprep.subr.mxu0 0.0
    %82 = vmatpush1.msra.mxu0 %v68
    %83 = vmatprep.subr.mxu0 0.0
    %84 = vmatpush1.msra.mxu0 %v67
    %85 = vmatprep.subr.mxu0 0.0
    %86 = vmatpush1.msra.mxu0 %v66
    %87 = vmatprep.subr.mxu0 0.0
    %88 = vmatpush1.msra.mxu0 %v65
    %89 = vmatprep.subr.mxu0 0.0
    %90 = vmatpush1.msra.mxu0 %v64
    %91 = vmatprep.subr.mxu0 0.0
    %92 = vmatpush1.msra.mxu0 %v63
    %93 = vmatprep.subr.mxu0 0.0
    %94 = vmatpush1.msra.mxu0 %v62
    %95 = vmatprep.subr.mxu0 0.0
    %96 = vmatpush1.msra.mxu0 %v61
    %97 = vmatprep.subr.mxu0 0.0
    %98 = vmatpush1.msra.mxu0 %v60
    %99 = vmatprep.subr.mxu0 0.0
    %100 = vmatpush1.msra.mxu0 %v59
    %101 = vmatprep.subr.mxu0 0.0
    %102 = vmatpush1.msra.mxu0 %v58
    %103 = vmatprep.subr.mxu0 0.0
    %104 = vmatpush1.msra.mxu0 %v57
    %105 = vmatprep.subr.mxu0 0.0
    %106 = vmatpush1.msra.mxu0 %v56
    %107 = vmatprep.subr.mxu0 0.0
    %108 = vmatpush1.msra.mxu0 %v55
    %109 = vmatprep.subr.mxu0 0.0
    %110 = vmatpush1.msra.mxu0 %v54
    %111 = vmatprep.subr.mxu0 0.0
    %112 = vmatpush1.msra.mxu0 %v53
    %113 = vmatprep.subr.mxu0 0.0
    %114 = vmatpush2.msra.mxu0 0.0
    %115 = vmatprep.subr.mxu0 0.0
    %116 = vmatpush2.msra.mxu0 0.0
    %117 = vmatprep.subr.mxu0 0.0
    %118 = vmatpush2.msra.mxu0 0.0
    %119 = vmatprep.subr.mxu0 0.0
    %120 = vmatpush2.msra.mxu0 0.0
    %121 = vmatprep.subr.mxu0 0.0
    %122 = vmatpush2.msra.mxu0 0.0
    %123 = vmatprep.subr.mxu0 0.0
    %124 = vmatpush2.msra.mxu0 0.0
    %125 = vmatprep.subr.mxu0 0.0
    %126 = vmatpush2.msra.mxu0 0.0
    %127 = vmatprep.subr.mxu0 0.0
    %128 = vmatpush2.msra.mxu0 0.0
    %129 = vmatprep.subr.mxu0 0.0
    %130 = vmatpush2.msra.mxu0 0.0
    %131 = vmatprep.subr.mxu0 0.0
    %132 = vmatpush2.msra.mxu0 0.0
    %133 = vmatprep.subr.mxu0 0.0
    %134 = vmatpush2.msra.mxu0 0.0
    %135 = vmatprep.subr.mxu0 0.0
    %136 = vmatpush2.msra.mxu0 0.0
    %137 = vmatprep.subr.mxu0 0.0
    %138 = vmatpush2.msra.mxu0 0.0
    %139 = vmatprep.subr.mxu0 0.0
    %140 = vmatpush2.msra.mxu0 0.0
    %141 = vmatprep.subr.mxu0 0.0
    %142 = vmatpush2.msra.mxu0 0.0
    %143 = vmatprep.subr.mxu0 0.0
    %144 = vmatpush2.msra.mxu0 0.0
    %145 = vmatprep.mubr.f32.mxu0 0.0
    %146 = vmatmul.mubr.f32.gmra.mxu0 %v79
    %v147 = vpop.f32.mrf.mxu0
    %v148 = vadd.f32 %v74, %v147
    %v149 = vpop.f32.mrf.mxu0
    %150 = vdwg.mxu0
    %v151 = vmul.f32 %v148, %v148
    %v152 = vsel %vm29, %v151, 0.0
    %153 = vadd.xlane.f32.xlu0 %v152
    %v154 = vpop.xlane.xlu0 %153
    %v155 = vadd.f32 %v154, 1e-12
    %v156 = vrsqrt.pop %v155
    %v157 = vmul.f32 %v148, %v156
    %158 = vmatprep.subr.mxu0 0.0
    %159 = vmatpush1.xpose.msra.mxu0 0.0
    %160 = vmatprep.subr.mxu0 0.0
    %161 = vmatpush1.xpose.msra.mxu0 0.0
    %162 = vmatprep.subr.mxu0 0.0
    %163 = vmatpush1.xpose.msra.mxu0 0.0
    %164 = vmatprep.subr.mxu0 0.0
    %165 = vmatpush1.xpose.msra.mxu0 0.0
    %166 = vmatprep.subr.mxu0 0.0
    %167 = vmatpush1.xpose.msra.mxu0 0.0
    %168 = vmatprep.subr.mxu0 0.0
    %169 = vmatpush1.xpose.msra.mxu0 0.0
    %170 = vmatprep.subr.mxu0 0.0
    %171 = vmatpush1.xpose.msra.mxu0 0.0
    %172 = vmatprep.subr.mxu0 0.0
    %173 = vmatpush1.xpose.msra.mxu0 0.0
    %174 = vmatprep.subr.mxu0 0.0
    %175 = vmatpush1.xpose.msra.mxu0 0.0
    %176 = vmatprep.subr.mxu0 0.0
    %177 = vmatpush1.xpose.msra.mxu0 0.0
    %178 = vmatprep.subr.mxu0 0.0
    %179 = vmatpush1.xpose.msra.mxu0 0.0
    %180 = vmatprep.subr.mxu0 0.0
    %181 = vmatpush1.xpose.msra.mxu0 0.0
    %182 = vmatprep.subr.mxu0 0.0
    %183 = vmatpush1.xpose.msra.mxu0 0.0
    %184 = vmatprep.subr.mxu0 0.0
    %185 = vmatpush1.xpose.msra.mxu0 0.0
    %186 = vmatprep.subr.mxu0 0.0
    %187 = vmatpush1.xpose.msra.mxu0 0.0
    %188 = vmatprep.subr.mxu0 0.0
    %189 = vmatpush1.xpose.msra.mxu0 %v157
    %190 = vmatprep.subr.mxu0 0.0
    %191 = vmatpush2.xpose.msra.mxu0 0.0
    %192 = vmatprep.subr.mxu0 0.0
    %193 = vmatpush2.xpose.msra.mxu0 0.0
    %194 = vmatprep.subr.mxu0 0.0
    %195 = vmatpush2.xpose.msra.mxu0 0.0
    %196 = vmatprep.subr.mxu0 0.0
    %197 = vmatpush2.xpose.msra.mxu0 0.0
    %198 = vmatprep.subr.mxu0 0.0
    %199 = vmatpush2.xpose.msra.mxu0 0.0
    %200 = vmatprep.subr.mxu0 0.0
    %201 = vmatpush2.xpose.msra.mxu0 0.0
    %202 = vmatprep.subr.mxu0 0.0
    %203 = vmatpush2.xpose.msra.mxu0 0.0
    %204 = vmatprep.subr.mxu0 0.0
    %205 = vmatpush2.xpose.msra.mxu0 0.0
    %206 = vmatprep.subr.mxu0 0.0
    %207 = vmatpush2.xpose.msra.mxu0 0.0
    %208 = vmatprep.subr.mxu0 0.0
    %209 = vmatpush2.xpose.msra.mxu0 0.0
    %210 = vmatprep.subr.mxu0 0.0
    %211 = vmatpush2.xpose.msra.mxu0 0.0
    %212 = vmatprep.subr.mxu0 0.0
    %213 = vmatpush2.xpose.msra.mxu0 0.0
    %214 = vmatprep.subr.mxu0 0.0
    %215 = vmatpush2.xpose.msra.mxu0 0.0
    %216 = vmatprep.subr.mxu0 0.0
    %217 = vmatpush2.xpose.msra.mxu0 0.0
    %218 = vmatprep.subr.mxu0 0.0
    %219 = vmatpush2.xpose.msra.mxu0 0.0
    %220 = vmatprep.subr.mxu0 0.0
    %221 = vmatpush2.xpose.msra.mxu0 0.0
    %222 = vmatprep.mubr.f32.mxu0 0.0
    %223 = vmatmul.mubr.f32.gmra.mxu0 %v35
    %v224 = vpop.f32.mrf.mxu0
    %v225 = vadd.f32 0.0, %v224
    %v226 = vpop.f32.mrf.mxu0
    %227 = vdwg.mxu0
    %v228 = vmul.f32 %v225, 14.285714
    %v229 = vlaneseq
    %v230 = vshrl.u32 %v229, 7
    %v231 = vlaneseq
    %v232 = vand.u32 %v231, 127
    %vm233 = vcmp.eq.s32.totalorder %v230, %v232
    %v234 = vsel %vm233, 1, 0
    %v235 = vcvt.s32.f32 %v234
    %vm236 = vcmask 9216
    %v237 = vsel %vm236, %v228, -inf
    %238 = vmax.xlane.f32.xlu0 %v237
    %v239 = vpop.xlane.xlu0 %238
    %v240 = vsub.f32 %v228, %v239
    %v241 = vmul.f32 %v240, 1.442695
    %v242 = vpow.pop %v241
    %v243 = vsel %vm236, %v242, 0.0
    %244 = vadd.xlane.f32.xlu0 %v243
    %v245 = vpop.xlane.xlu0 %244
    %v246 = vlog2.pop %v245
    %v247 = vmul.f32 %v246, 0.6931472
    %v248 = vadd.f32 %v239, %v247
    %v249 = vmul.f32 %v228, %v235
    %v250 = vsel %vm236, %v249, 0.0
    %251 = vadd.xlane.f32.xlu0 %v250
    %v252 = vpop.xlane.xlu0 %251
    %v253 = vrot.slane %v237, 4
    %v254 = vmax.f32 %v237, %v253
    %v255 = vrot.slane %v254, 2
    %v256 = vmax.f32 %v254, %v255
    %v257 = vrot.slane %v256, 1
    %v258 = vmax.f32 %v256, %v257
    %v259 = vsub.f32 %v228, %v258
    %v260 = vmul.f32 %v259, 1.442695
    %v261 = vpow.pop %v260
    %v262 = vsel %vm236, %v261, 0.0
    %v263 = vrot.slane %v262, 4
    %v264 = vadd.f32 %v262, %v263
    %v265 = vrot.slane %v264, 2
    %v266 = vadd.f32 %v264, %v265
    %v267 = vrot.slane %v266, 1
    %v268 = vadd.f32 %v266, %v267
    %v269 = vlog2.pop %v268
    %v270 = vmul.f32 %v269, 0.6931472
    %v271 = vadd.f32 %v258, %v270
    %v272 = vrot.slane %v250, 4
    %v273 = vadd.f32 %v250, %v272
    %v274 = vrot.slane %v273, 2
    %v275 = vadd.f32 %v273, %v274
    %v276 = vrot.slane %v275, 1
    %v277 = vadd.f32 %v275, %v276
    %v278 = vsub.f32 %v248, %v252
    %vm279 = vcmask 1024
    %v280 = vsel %vm279, %v278, 0.0
    %281 = vadd.xlane.f32.xlu0 %v280
    %v282 = vpop.xlane.xlu0 %281
    %v283 = vrot.slane %v282, 4
    %v284 = vadd.f32 %v282, %v283
    %v285 = vrot.slane %v284, 2
    %v286 = vadd.f32 %v284, %v285
    %v287 = vrot.slane %v286, 1
    %v288 = vadd.f32 %v286, %v287
    %s289 = vtos %v288
    %v290 = vrcp.pop 2.0
    %s291 = vtos %v290
    %s292 = smul.f32 %s289, %s291
    %v293 = vsub.f32 %v271, %v277
    %vm294 = vcmask 8192
    %v295 = vsel %vm294, %v293, 0.0
    %296 = vadd.xlane.f32.xlu0 %v295
    %v297 = vpop.xlane.xlu0 %296
    %v298 = vrot.slane %v297, 4
    %v299 = vadd.f32 %v297, %v298
    %v300 = vrot.slane %v299, 2
    %v301 = vadd.f32 %v299, %v300
    %v302 = vrot.slane %v301, 1
    %v303 = vadd.f32 %v301, %v302
    %s304 = vtos %v303
    %v305 = vrcp.pop 2.0
    %s306 = vtos %v305
    %s307 = smul.f32 %s304, %s306
    %s308 = sadd.f32 %s292, %s307
    %s309 = smul.f32 %s308, 0.5
    %v310 = vld [vmem:[%s4] sm:$0xff]
    %v311 = vld [vmem:[%s4 + $0x8] sm:$0xff]
    %v312 = vld [vmem:[%s4 + $0x10] sm:$0xf]
    %v313 = vmul.f32 %v310, %v310
    %v314 = vmul.f32 %v311, %v311
    %v315 = vmul.f32 %v312, %v312
    %316 = vadd.xlane.f32.xlu0 %v313
    %v317 = vpop.xlane.xlu0 %316
    %318 = vadd.xlane.f32.xlu0 %v314
    %v319 = vpop.xlane.xlu0 %318
    %vm320 = vcmask 1043456
    %v321 = vsel %vm320, %v315, 0.0
    %322 = vadd.xlane.f32.xlu0 %v321
    %v323 = vpop.xlane.xlu0 %322
    %v324 = vadd.f32 %v317, 1e-12
    %v325 = vadd.f32 %v319, 1e-12
    %v326 = vadd.f32 %v323, 1e-12
    %v327 = vrsqrt.pop %v324
    %v328 = vrsqrt.pop %v325
    %v329 = vrsqrt.pop %v326
    %v330 = vmul.f32 %v310, %v327
    %v331 = vmul.f32 %v311, %v328
    %v332 = vmul.f32 %v312, %v329
    %333 = vmatprep.subr.mxu0 0.0
    %334 = vmatpush1.xpose.msra.mxu0 0.0
    %335 = vmatprep.subr.mxu0 0.0
    %336 = vmatpush1.xpose.msra.mxu0 0.0
    %337 = vmatprep.subr.mxu0 0.0
    %338 = vmatpush1.xpose.msra.mxu0 0.0
    %339 = vmatprep.subr.mxu0 0.0
    %340 = vmatpush1.xpose.msra.mxu0 0.0
    %341 = vmatprep.subr.mxu0 0.0
    %342 = vmatpush1.xpose.msra.mxu0 0.0
    %343 = vmatprep.subr.mxu0 0.0
    %344 = vmatpush1.xpose.msra.mxu0 0.0
    %345 = vmatprep.subr.mxu0 0.0
    %346 = vmatpush1.xpose.msra.mxu0 0.0
    %347 = vmatprep.subr.mxu0 0.0
    %348 = vmatpush1.xpose.msra.mxu0 0.0
    %349 = vmatprep.subr.mxu0 0.0
    %350 = vmatpush1.xpose.msra.mxu0 0.0
    %351 = vmatprep.subr.mxu0 0.0
    %352 = vmatpush1.xpose.msra.mxu0 0.0
    %353 = vmatprep.subr.mxu0 0.0
    %354 = vmatpush1.xpose.msra.mxu0 0.0
    %355 = vmatprep.subr.mxu0 0.0
    %356 = vmatpush1.xpose.msra.mxu0 0.0
    %357 = vmatprep.subr.mxu0 0.0
    %358 = vmatpush1.xpose.msra.mxu0 0.0
    %359 = vmatprep.subr.mxu0 0.0
    %360 = vmatpush1.xpose.msra.mxu0 %v332
    %361 = vmatprep.subr.mxu0 0.0
    %362 = vmatpush1.xpose.msra.mxu0 %v331
    %363 = vmatprep.subr.mxu0 0.0
    %364 = vmatpush1.xpose.msra.mxu0 %v330
    %365 = vmatprep.subr.mxu0 0.0
    %366 = vmatpush2.xpose.msra.mxu0 0.0
    %367 = vmatprep.subr.mxu0 0.0
    %368 = vmatpush2.xpose.msra.mxu0 0.0
    %369 = vmatprep.subr.mxu0 0.0
    %370 = vmatpush2.xpose.msra.mxu0 0.0
    %371 = vmatprep.subr.mxu0 0.0
    %372 = vmatpush2.xpose.msra.mxu0 0.0
    %373 = vmatprep.subr.mxu0 0.0
    %374 = vmatpush2.xpose.msra.mxu0 0.0
    %375 = vmatprep.subr.mxu0 0.0
    %376 = vmatpush2.xpose.msra.mxu0 0.0
    %377 = vmatprep.subr.mxu0 0.0
    %378 = vmatpush2.xpose.msra.mxu0 0.0
    %379 = vmatprep.subr.mxu0 0.0
    %380 = vmatpush2.xpose.msra.mxu0 0.0
    %381 = vmatprep.subr.mxu0 0.0
    %382 = vmatpush2.xpose.msra.mxu0 0.0
    %383 = vmatprep.subr.mxu0 0.0
    %384 = vmatpush2.xpose.msra.mxu0 0.0
    %385 = vmatprep.subr.mxu0 0.0
    %386 = vmatpush2.xpose.msra.mxu0 0.0
    %387 = vmatprep.subr.mxu0 0.0
    %388 = vmatpush2.xpose.msra.mxu0 0.0
    %389 = vmatprep.subr.mxu0 0.0
    %390 = vmatpush2.xpose.msra.mxu0 0.0
    %391 = vmatprep.subr.mxu0 0.0
    %392 = vmatpush2.xpose.msra.mxu0 0.0
    %393 = vmatprep.subr.mxu0 0.0
    %394 = vmatpush2.xpose.msra.mxu0 0.0
    %395 = vmatprep.subr.mxu0 0.0
    %396 = vmatpush2.xpose.msra.mxu0 0.0
    %397 = vmatprep.mubr.f32.mxu0 0.0
    %398 = vmatmul.mubr.f32.gmra.mxu0 %v35
    %v399 = vpop.f32.mrf.mxu0
    %v400 = vadd.f32 0.0, %v399
    %v401 = vpop.f32.mrf.mxu0
    %402 = vdwg.mxu0
    %v403 = vmul.f32 %v400, 20.0
    %v404 = vld [vmem:[%s5] sm:$0x3]
    %v405 = vmax.f32 %v403, 0.0
    %v406 = vmul.f32 %v403, %v404
    %v407 = vsub.f32 %v405, %v406
    %v408 = vand.u32 2147483647, %v403
    %v409 = vsub.f32 0.0, %v408
    %v410 = vmul.f32 %v409, 1.442695
    %v411 = vpow.pop %v410
    %v412 = vadd.f32 %v411, 1.0
    %v413 = vlog2.pop %v412
    %v414 = vmul.f32 %v413, 0.6931472
    %v415 = vadd.f32 %v407, %v414
    %vm416 = vcmask 156672
    %v417 = vsel %vm416, %v415, 0.0
    %418 = vadd.xlane.f32.xlu0 %v417
    %v419 = vpop.xlane.xlu0 %418
    %v420 = vrot.slane %v419, 4
    %v421 = vadd.f32 %v419, %v420
    %v422 = vrot.slane %v421, 2
    %v423 = vadd.f32 %v421, %v422
    %v424 = vrot.slane %v423, 1
    %v425 = vadd.f32 %v423, %v424
    %s426 = vtos %v425
    %v427 = vrcp.pop 40.0
    %s428 = vtos %v427
    %s429 = smul.f32 %s426, %s428
    %v430 = vstv %s309
    %vm431 = vcmask 0
    %432 = vst.msk [vmem:[#allocation2] sm:$0x1] %vm431, %v430
    %v433 = vstv %s429
    %434 = vst.msk [vmem:[#allocation4] sm:$0x1] %vm431, %v433
    // Predicated region
    $region26: #{tagalign_forward.3} parent=1 // pred_check
      _
    $region27: #{tagalign_forward.3} parent=1 // pred_check_branch
      %436 = sbr.rel (0) target = $region29
    $region28: #{tagalign_forward.3} parent=1 // pred_region
      %s438 = ssub.s32 16, 16
      %439 = vsyncadd [#allocation3], %s438
      %s441 = sshll.u32 [#allocation2], 4
      %s442 = int_to_ptr.vmem [resolvable:$true] %s441
      %444 = dma.vmem_to_hbm [thread:$0]  %s442, 16, %s6, [#allocation3]
    $region29: #{tagalign_forward.3} parent=1 // pred_fallthru
      _
    // Predicated region
    $region30: #{tagalign_forward.3} parent=1 // pred_check
      _
    $region31: #{tagalign_forward.3} parent=1 // pred_check_branch
      %446 = sbr.rel (0) target = $region33
    $region32: #{tagalign_forward.3} parent=1 // pred_region
      %s448 = ssub.s32 16, 16
      %449 = vsyncadd [#allocation5], %s448
      %s451 = sshll.u32 [#allocation4], 4
      %s452 = int_to_ptr.vmem [resolvable:$true] %s451
      %454 = dma.vmem_to_hbm [thread:$0]  %s452, 16, %s7, [#allocation5]
    $region33: #{tagalign_forward.3} parent=1 // pred_fallthru
      _
    // Predicated region
    $region34: #{tagalign_forward.3} parent=1 // pred_check
      _
    $region35: #{tagalign_forward.3} parent=1 // pred_check_branch
      %456 = sbr.rel (0) target = $region37
    $region36: #{tagalign_forward.3} parent=1 // pred_region
      %457 = dma.done [#allocation3], 16
    $region37: #{tagalign_forward.3} parent=1 // pred_fallthru
      _
    // Predicated region
    $region38: #{tagalign_forward.3} parent=1 // pred_check
      _
    $region39: #{tagalign_forward.3} parent=1 // pred_check_branch
      %459 = sbr.rel (0) target = $region41
    $region40: #{tagalign_forward.3} parent=1 // pred_region
      %460 = dma.done [#allocation5], 16
    $region41: #{tagalign_forward.3} parent=1 // pred_fallthru
      _
    %461 = vsyncpa [#allocation3], 1
    %462 = vsyncpa [#allocation5], 1

// kernel: tagalign_forward.2
$region0: #{tagalign_forward.2}
  #allocation0 [shape = 'u32[]', space=smem, size = 0x4, offset = 0x4, fixed_abs, tag = 'smem constant byte address 0x4 - core index']
  #allocation1 [shape = 'u32[144,128]{1,0:T(1,128)}', space=vmem, size = 0x12000, scoped, tag = 'internal scratch']
  %s0 = inlined_call_operand.vmem [shape: f32[2,16,48], index: 0, kind: input, shape index: {}]
  %s1 = inlined_call_operand.vmem [shape: f32[48,128], index: 1, kind: input, shape index: {}]
  %s2 = inlined_call_operand.vmem [shape: f32[1,128], index: 2, kind: input, shape index: {}]
  %s3 = inlined_call_operand.vmem [shape: f32[16,128], index: 3, kind: input, shape index: {}]
  %s4 = inlined_call_operand.vmem [shape: f32[2,128], index: 4, kind: input, shape index: {}]
  %s5 = inlined_call_operand.vmem [shape: f32[2,128], index: 5, kind: input, shape index: {}]
  %s6 = inlined_call_operand.hbm [shape: f32[2,128,384], index: 6, kind: input, shape index: {}]
  %s7 = inlined_call_operand.vmem [shape: f32[2,384], index: 7, kind: input, shape index: {}]
  %s8 = inlined_call_operand.vmem [shape: f32[2,128,128], index: 8, kind: input, shape index: {}]
  %s9 = inlined_call_operand.vmem [shape: f32[2,128], index: 9, kind: input, shape index: {}]
  %s10 = inlined_call_operand.vmem [shape: f32[2,128], index: 10, kind: input, shape index: {}]
  %s11 = inlined_call_operand.vmem [shape: f32[2,128], index: 11, kind: input, shape index: {}]
  %s12 = inlined_call_operand.vmem [shape: f32[2,128,512], index: 12, kind: input, shape index: {}]
  %s13 = inlined_call_operand.vmem [shape: f32[2,512], index: 13, kind: input, shape index: {}]
  %s14 = inlined_call_operand.hbm [shape: f32[2,512,128], index: 14, kind: input, shape index: {}]
  %s15 = inlined_call_operand.vmem [shape: f32[2,128], index: 15, kind: input, shape index: {}]
  %s16 = inlined_call_operand.vmem [shape: f32[128,128], index: 16, kind: input, shape index: {}]
  %s17 = inlined_call_operand.vmem [shape: f32[1,128], index: 17, kind: input, shape index: {}]
  %s18 = inlined_call_operand.vmem [shape: f32[2,1,128], index: 18, kind: output, shape index: {}]
  %s19 = sld [smem:[#allocation0]]
  $region113: #{tagalign_forward.2} parent=0
    _
  %s21 = ssub.s32 1, %s19
  %s22 = scalar_select 0, %s21, %s19
  $region1: #{tagalign_forward.2} parent=0
    #allocation2 [shape = 'u8[393216]{0}', space=vmem, size = 0x60000, scoped, tag = 'input window, operand 6, single buffered']
    #allocation3 [shape = 's32[2]{0}', space=sflag, size = 0x8, scoped, tag = 'scoped memory for tagalign_forward.2']
    #allocation4 [shape = 'u8[524288]{0}', space=vmem, size = 0x80000, scoped, tag = 'input window, operand 14, single buffered']
    #allocation5 [shape = 's32[1]{0}', space=sflag, size = 0x4, scoped, tag = 'scoped memory for tagalign_forward.2']
    %23 = vsyncpa [#allocation3], 0
    %24 = vsyncpa [#allocation5], 0
    loop: start=0, step=1, limit=4
    $region2: #{tagalign_forward.2} parent=1 // loop_pre_header
      _
    $region3: #{tagalign_forward.2} parent=1 // loop_header
      %s26 = sphi 0, %s30
      %p27 = scmp.ge.s32.totalorder %s26, 4
      %s36 = sphi 0, %s38
      %s39 = sphi 0, %s36
      %s40 = sphi 0, %s39
      %s56 = sphi 0, %s40
      %s60 = sphi 0, %s60
      %s62 = sphi 0, %s60
      %s63 = sphi 0, %s62
      %s77 = sphi 0, %s63
      %s81 = sphi 0, %s81
      %s83 = sphi 0, %s81
      %s84 = sphi 0, %s83
      %s98 = sphi 0, %s84
      %s102 = sphi 0, %s102
      %s104 = sphi 0, %s102
      %s105 = sphi 0, %s104
      %s119 = sphi 0, %s105
      %s123 = sphi 0, %s123
      %s125 = sphi 0, %s123
      %s126 = sphi 0, %s125
      %s140 = sphi 0, %s126
      %s144 = sphi 0, %s144
      %s146 = sphi 0, %s144
      %s147 = sphi 0, %s146
      %s161 = sphi 0, %s147
      %s165 = sphi 0, %s165
      %s167 = sphi 0, %s165
      %s168 = sphi 0, %s167
      %s182 = sphi 0, %s168
      %s186 = sphi 0, %s186
      %s188 = sphi 0, %s186
      %s189 = sphi 0, %s188
      %s203 = sphi 0, %s189
      %s207 = sphi 0, %s207
      %s209 = sphi 0, %s207
      %s210 = sphi 0, %s209
      %s224 = sphi 0, %s210
      %s228 = sphi 0, %s228
      %s230 = sphi 0, %s228
      %s231 = sphi 0, %s230
      %s245 = sphi 0, %s231
      %s249 = sphi 0, %s249
      %s251 = sphi 0, %s249
      %s252 = sphi 0, %s251
      %s266 = sphi 0, %s252
      %s270 = sphi 0, %s270
      %s272 = sphi 0, %s270
      %s273 = sphi 0, %s272
      %s287 = sphi 0, %s273
      %s291 = sphi 0, %s291
      %s293 = sphi 0, %s291
      %s294 = sphi 0, %s293
      %s308 = sphi 0, %s294
      %s312 = sphi 0, %s312
      %s314 = sphi 0, %s312
      %s315 = sphi 0, %s314
      %s329 = sphi 0, %s315
      %s333 = sphi 0, %s333
      %s335 = sphi 0, %s333
      %s336 = sphi 0, %s335
      %s350 = sphi 0, %s336
      %s354 = sphi 0, %s354
      %s356 = sphi 0, %s354
      %s357 = sphi 0, %s356
      %s371 = sphi 0, %s357
      %s375 = sphi 0, %s375
      %s377 = sphi 0, %s375
      %s378 = sphi 0, %s377
      %s392 = sphi 0, %s378
      %s396 = sphi 0, %s396
      %s398 = sphi 0, %s396
      %s399 = sphi 0, %s398
      %s413 = sphi 0, %s399
      %s419 = sphi 0, %s421
      %s422 = sphi 0, %s419
      %s423 = sphi 0, %s422
      %s439 = sphi 0, %s423
    $region4: #{tagalign_forward.2} parent=1 // loop_header_branch
      %29 = sbr.rel (%p27) target = $region8
    $region5: #{tagalign_forward.2} parent=1 // loop_body
      %s31 = ssub.s32 %s26, 1
      %s32 = ssub.s32 %s26, 2
      %s33 = sadd.s32 %s26, 1
      %s34 = ssub.s32 %s26, %s33
      %p35 = scmp.eq.s32.totalorder %s34, 0
      %s37 = sadd.s32 %s36, 1
      %s38 = scalar_select %p35, %s36, %s37
      %p41 = pneg %p35
      %p42 = scmp.eq.s32.totalorder %s26, 1
      %p43 = por %p41, %p42
      %p44 = scmp.ne.s32.totalorder %s36, %s39
      %p45 = scmp.eq.s32.totalorder %s26, 0
      %p46 = por %p44, %p45
      %p47 = scmp.ne.s32.totalorder %s36, %s39
      %p48 = scmp.eq.s32.totalorder %s31, 1
      %p49 = por %p47, %p48
      %p50 = scmp.ne.s32.totalorder %s39, %s40
      %p51 = scmp.eq.s32.totalorder %s31, 0
      %p52 = por %p50, %p51
      %p53 = scmp.ne.s32.totalorder %s39, %s40
      %p54 = scmp.eq.s32.totalorder %s32, 1
      %p55 = por %p53, %p54
      %p57 = scmp.ne.s32.totalorder %s40, %s56
      %p58 = scmp.eq.s32.totalorder %s32, 0
      %p59 = por %p57, %p58
      %s61 = sadd.s32 %s60, 1
      %p64 = scmp.eq.s32.totalorder %s26, 1
      %p65 = scmp.ne.s32.totalorder %s60, %s62
      %p66 = scmp.eq.s32.totalorder %s26, 0
      %p67 = por %p65, %p66
      %p68 = scmp.ne.s32.totalorder %s60, %s62
      %p69 = scmp.eq.s32.totalorder %s31, 1
      %p70 = por %p68, %p69
      %p71 = scmp.ne.s32.totalorder %s62, %s63
      %p72 = scmp.eq.s32.totalorder %s31, 0
      %p73 = por %p71, %p72
      %p74 = scmp.ne.s32.totalorder %s62, %s63
      %p75 = scmp.eq.s32.totalorder %s32, 1
      %p76 = por %p74, %p75
      %p78 = scmp.ne.s32.totalorder %s63, %s77
      %p79 = scmp.eq.s32.totalorder %s32, 0
      %p80 = por %p78, %p79
      %s82 = sadd.s32 %s81, 1
      %p85 = scmp.eq.s32.totalorder %s26, 1
      %p86 = scmp.ne.s32.totalorder %s81, %s83
      %p87 = scmp.eq.s32.totalorder %s26, 0
      %p88 = por %p86, %p87
      %p89 = scmp.ne.s32.totalorder %s81, %s83
      %p90 = scmp.eq.s32.totalorder %s31, 1
      %p91 = por %p89, %p90
      %p92 = scmp.ne.s32.totalorder %s83, %s84
      %p93 = scmp.eq.s32.totalorder %s31, 0
      %p94 = por %p92, %p93
      %p95 = scmp.ne.s32.totalorder %s83, %s84
      %p96 = scmp.eq.s32.totalorder %s32, 1
      %p97 = por %p95, %p96
      %p99 = scmp.ne.s32.totalorder %s84, %s98
      %p100 = scmp.eq.s32.totalorder %s32, 0
      %p101 = por %p99, %p100
      %s103 = sadd.s32 %s102, 1
      %p106 = scmp.eq.s32.totalorder %s26, 1
      %p107 = scmp.ne.s32.totalorder %s102, %s104
      %p108 = scmp.eq.s32.totalorder %s26, 0
      %p109 = por %p107, %p108
      %p110 = scmp.ne.s32.totalorder %s102, %s104
      %p111 = scmp.eq.s32.totalorder %s31, 1
      %p112 = por %p110, %p111
      %p113 = scmp.ne.s32.totalorder %s104, %s105
      %p114 = scmp.eq.s32.totalorder %s31, 0
      %p115 = por %p113, %p114
      %p116 = scmp.ne.s32.totalorder %s104, %s105
      %p117 = scmp.eq.s32.totalorder %s32, 1
      %p118 = por %p116, %p117
      %p120 = scmp.ne.s32.totalorder %s105, %s119
      %p121 = scmp.eq.s32.totalorder %s32, 0
      %p122 = por %p120, %p121
      %s124 = sadd.s32 %s123, 1
      %p127 = scmp.eq.s32.totalorder %s26, 1
      %p128 = scmp.ne.s32.totalorder %s123, %s125
      %p129 = scmp.eq.s32.totalorder %s26, 0
      %p130 = por %p128, %p129
      %p131 = scmp.ne.s32.totalorder %s123, %s125
      %p132 = scmp.eq.s32.totalorder %s31, 1
      %p133 = por %p131, %p132
      %p134 = scmp.ne.s32.totalorder %s125, %s126
      %p135 = scmp.eq.s32.totalorder %s31, 0
      %p136 = por %p134, %p135
      %p137 = scmp.ne.s32.totalorder %s125, %s126
      %p138 = scmp.eq.s32.totalorder %s32, 1
      %p139 = por %p137, %p138
      %p141 = scmp.ne.s32.totalorder %s126, %s140
      %p142 = scmp.eq.s32.totalorder %s32, 0
      %p143 = por %p141, %p142
      %s145 = sadd.s32 %s144, 1
      %p148 = scmp.eq.s32.totalorder %s26, 1
      %p149 = scmp.ne.s32.totalorder %s144, %s146
      %p150 = scmp.eq.s32.totalorder %s26, 0
      %p151 = por %p149, %p150
      %p152 = scmp.ne.s32.totalorder %s144, %s146
      %p153 = scmp.eq.s32.totalorder %s31, 1
      %p154 = por %p152, %p153
      %p155 = scmp.ne.s32.totalorder %s146, %s147
      %p156 = scmp.eq.s32.totalorder %s31, 0
      %p157 = por %p155, %p156
      %p158 = scmp.ne.s32.totalorder %s146, %s147
      %p159 = scmp.eq.s32.totalorder %s32, 1
      %p160 = por %p158, %p159
      %p162 = scmp.ne.s32.totalorder %s147, %s161
      %p163 = scmp.eq.s32.totalorder %s32, 0
      %p164 = por %p162, %p163
      %s166 = sadd.s32 %s165, 1
      %p169 = scmp.eq.s32.totalorder %s26, 1
      %p170 = scmp.ne.s32.totalorder %s165, %s167
      %p171 = scmp.eq.s32.totalorder %s26, 0
      %p172 = por %p170, %p171
      %p173 = scmp.ne.s32.totalorder %s165, %s167
      %p174 = scmp.eq.s32.totalorder %s31, 1
      %p175 = por %p173, %p174
      %p176 = scmp.ne.s32.totalorder %s167, %s168
      %p177 = scmp.eq.s32.totalorder %s31, 0
      %p178 = por %p176, %p177
      %p179 = scmp.ne.s32.totalorder %s167, %s168
      %p180 = scmp.eq.s32.totalorder %s32, 1
      %p181 = por %p179, %p180
      %p183 = scmp.ne.s32.totalorder %s168, %s182
      %p184 = scmp.eq.s32.totalorder %s32, 0
      %p185 = por %p183, %p184
      %s187 = sadd.s32 %s186, 1
      %p190 = scmp.eq.s32.totalorder %s26, 1
      %p191 = scmp.ne.s32.totalorder %s186, %s188
      %p192 = scmp.eq.s32.totalorder %s26, 0
      %p193 = por %p191, %p192
      %p194 = scmp.ne.s32.totalorder %s186, %s188
      %p195 = scmp.eq.s32.totalorder %s31, 1
      %p196 = por %p194, %p195
      %p197 = scmp.ne.s32.totalorder %s188, %s189
      %p198 = scmp.eq.s32.totalorder %s31, 0
      %p199 = por %p197, %p198
      %p200 = scmp.ne.s32.totalorder %s188, %s189
      %p201 = scmp.eq.s32.totalorder %s32, 1
      %p202 = por %p200, %p201
      %p204 = scmp.ne.s32.totalorder %s189, %s203
      %p205 = scmp.eq.s32.totalorder %s32, 0
      %p206 = por %p204, %p205
      %s208 = sadd.s32 %s207, 1
      %p211 = scmp.eq.s32.totalorder %s26, 1
      %p212 = scmp.ne.s32.totalorder %s207, %s209
      %p213 = scmp.eq.s32.totalorder %s26, 0
      %p214 = por %p212, %p213
      %p215 = scmp.ne.s32.totalorder %s207, %s209
      %p216 = scmp.eq.s32.totalorder %s31, 1
      %p217 = por %p215, %p216
      %p218 = scmp.ne.s32.totalorder %s209, %s210
      %p219 = scmp.eq.s32.totalorder %s31, 0
      %p220 = por %p218, %p219
      %p221 = scmp.ne.s32.totalorder %s209, %s210
      %p222 = scmp.eq.s32.totalorder %s32, 1
      %p223 = por %p221, %p222
      %p225 = scmp.ne.s32.totalorder %s210, %s224
      %p226 = scmp.eq.s32.totalorder %s32, 0
      %p227 = por %p225, %p226
      %s229 = sadd.s32 %s228, 1
      %p232 = scmp.eq.s32.totalorder %s26, 1
      %p233 = scmp.ne.s32.totalorder %s228, %s230
      %p234 = scmp.eq.s32.totalorder %s26, 0
      %p235 = por %p233, %p234
      %p236 = scmp.ne.s32.totalorder %s228, %s230
      %p237 = scmp.eq.s32.totalorder %s31, 1
      %p238 = por %p236, %p237
      %p239 = scmp.ne.s32.totalorder %s230, %s231
      %p240 = scmp.eq.s32.totalorder %s31, 0
      %p241 = por %p239, %p240
      %p242 = scmp.ne.s32.totalorder %s230, %s231
      %p243 = scmp.eq.s32.totalorder %s32, 1
      %p244 = por %p242, %p243
      %p246 = scmp.ne.s32.totalorder %s231, %s245
      %p247 = scmp.eq.s32.totalorder %s32, 0
      %p248 = por %p246, %p247
      %s250 = sadd.s32 %s249, 1
      %p253 = scmp.eq.s32.totalorder %s26, 1
      %p254 = scmp.ne.s32.totalorder %s249, %s251
      %p255 = scmp.eq.s32.totalorder %s26, 0
      %p256 = por %p254, %p255
      %p257 = scmp.ne.s32.totalorder %s249, %s251
      %p258 = scmp.eq.s32.totalorder %s31, 1
      %p259 = por %p257, %p258
      %p260 = scmp.ne.s32.totalorder %s251, %s252
      %p261 = scmp.eq.s32.totalorder %s31, 0
      %p262 = por %p260, %p261
      %p263 = scmp.ne.s32.totalorder %s251, %s252
      %p264 = scmp.eq.s32.totalorder %s32, 1
      %p265 = por %p263, %p264
      %p267 = scmp.ne.s32.totalorder %s252, %s266
      %p268 = scmp.eq.s32.totalorder %s32, 0
      %p269 = por %p267, %p268
      %s271 = sadd.s32 %s270, 1
      %p274 = scmp.eq.s32.totalorder %s26, 1
      %p275 = scmp.ne.s32.totalorder %s270, %s272
      %p276 = scmp.eq.s32.totalorder %s26, 0
      %p277 = por %p275, %p276
      %p278 = scmp.ne.s32.totalorder %s270, %s272
      %p279 = scmp.eq.s32.totalorder %s31, 1
      %p280 = por %p278, %p279
      %p281 = scmp.ne.s32.totalorder %s272, %s273
      %p282 = scmp.eq.s32.totalorder %s31, 0
      %p283 = por %p281, %p282
      %p284 = scmp.ne.s32.totalorder %s272, %s273
      %p285 = scmp.eq.s32.totalorder %s32, 1
      %p286 = por %p284, %p285
      %p288 = scmp.ne.s32.totalorder %s273, %s287
      %p289 = scmp.eq.s32.totalorder %s32, 0
      %p290 = por %p288, %p289
      %s292 = sadd.s32 %s291, 1
      %p295 = scmp.eq.s32.totalorder %s26, 1
      %p296 = scmp.ne.s32.totalorder %s291, %s293
      %p297 = scmp.eq.s32.totalorder %s26, 0
      %p298 = por %p296, %p297
      %p299 = scmp.ne.s32.totalorder %s291, %s293
      %p300 = scmp.eq.s32.totalorder %s31, 1
      %p301 = por %p299, %p300
      %p302 = scmp.ne.s32.totalorder %s293, %s294
      %p303 = scmp.eq.s32.totalorder %s31, 0
      %p304 = por %p302, %p303
      %p305 = scmp.ne.s32.totalorder %s293, %s294
      %p306 = scmp.eq.s32.totalorder %s32, 1
      %p307 = por %p305, %p306
      %p309 = scmp.ne.s32.totalorder %s294, %s308
      %p310 = scmp.eq.s32.totalorder %s32, 0
      %p311 = por %p309, %p310
      %s313 = sadd.s32 %s312, 1
      %p316 = scmp.eq.s32.totalorder %s26, 1
      %p317 = scmp.ne.s32.totalorder %s312, %s314
      %p318 = scmp.eq.s32.totalorder %s26, 0
      %p319 = por %p317, %p318
      %p320 = scmp.ne.s32.totalorder %s312, %s314
      %p321 = scmp.eq.s32.totalorder %s31, 1
      %p322 = por %p320, %p321
      %p323 = scmp.ne.s32.totalorder %s314, %s315
      %p324 = scmp.eq.s32.totalorder %s31, 0
      %p325 = por %p323, %p324
      %p326 = scmp.ne.s32.totalorder %s314, %s315
      %p327 = scmp.eq.s32.totalorder %s32, 1
      %p328 = por %p326, %p327
      %p330 = scmp.ne.s32.totalorder %s315, %s329
      %p331 = scmp.eq.s32.totalorder %s32, 0
      %p332 = por %p330, %p331
      %s334 = sadd.s32 %s333, 1
      %p337 = scmp.eq.s32.totalorder %s26, 1
      %p338 = scmp.ne.s32.totalorder %s333, %s335
      %p339 = scmp.eq.s32.totalorder %s26, 0
      %p340 = por %p338, %p339
      %p341 = scmp.ne.s32.totalorder %s333, %s335
      %p342 = scmp.eq.s32.totalorder %s31, 1
      %p343 = por %p341, %p342
      %p344 = scmp.ne.s32.totalorder %s335, %s336
      %p345 = scmp.eq.s32.totalorder %s31, 0
      %p346 = por %p344, %p345
      %p347 = scmp.ne.s32.totalorder %s335, %s336
      %p348 = scmp.eq.s32.totalorder %s32, 1
      %p349 = por %p347, %p348
      %p351 = scmp.ne.s32.totalorder %s336, %s350
      %p352 = scmp.eq.s32.totalorder %s32, 0
      %p353 = por %p351, %p352
      %s355 = sadd.s32 %s354, 1
      %p358 = scmp.eq.s32.totalorder %s26, 1
      %p359 = scmp.ne.s32.totalorder %s354, %s356
      %p360 = scmp.eq.s32.totalorder %s26, 0
      %p361 = por %p359, %p360
      %p362 = scmp.ne.s32.totalorder %s354, %s356
      %p363 = scmp.eq.s32.totalorder %s31, 1
      %p364 = por %p362, %p363
      %p365 = scmp.ne.s32.totalorder %s356, %s357
      %p366 = scmp.eq.s32.totalorder %s31, 0
      %p367 = por %p365, %p366
      %p368 = scmp.ne.s32.totalorder %s356, %s357
      %p369 = scmp.eq.s32.totalorder %s32, 1
      %p370 = por %p368, %p369
      %p372 = scmp.ne.s32.totalorder %s357, %s371
      %p373 = scmp.eq.s32.totalorder %s32, 0
      %p374 = por %p372, %p373
      %s376 = sadd.s32 %s375, 1
      %p379 = scmp.eq.s32.totalorder %s26, 1
      %p380 = scmp.ne.s32.totalorder %s375, %s377
      %p381 = scmp.eq.s32.totalorder %s26, 0
      %p382 = por %p380, %p381
      %p383 = scmp.ne.s32.totalorder %s375, %s377
      %p384 = scmp.eq.s32.totalorder %s31, 1
      %p385 = por %p383, %p384
      %p386 = scmp.ne.s32.totalorder %s377, %s378
      %p387 = scmp.eq.s32.totalorder %s31, 0
      %p388 = por %p386, %p387
      %p389 = scmp.ne.s32.totalorder %s377, %s378
      %p390 = scmp.eq.s32.totalorder %s32, 1
      %p391 = por %p389, %p390
      %p393 = scmp.ne.s32.totalorder %s378, %s392
      %p394 = scmp.eq.s32.totalorder %s32, 0
      %p395 = por %p393, %p394
      %s397 = sadd.s32 %s396, 1
      %p400 = scmp.eq.s32.totalorder %s26, 1
      %p401 = scmp.ne.s32.totalorder %s396, %s398
      %p402 = scmp.eq.s32.totalorder %s26, 0
      %p403 = por %p401, %p402
      %p404 = scmp.ne.s32.totalorder %s396, %s398
      %p405 = scmp.eq.s32.totalorder %s31, 1
      %p406 = por %p404, %p405
      %p407 = scmp.ne.s32.totalorder %s398, %s399
      %p408 = scmp.eq.s32.totalorder %s31, 0
      %p409 = por %p407, %p408
      %p410 = scmp.ne.s32.totalorder %s398, %s399
      %p411 = scmp.eq.s32.totalorder %s32, 1
      %p412 = por %p410, %p411
      %p414 = scmp.ne.s32.totalorder %s399, %s413
      %p415 = scmp.eq.s32.totalorder %s32, 0
      %p416 = por %p414, %p415
      %s417 = ssub.s32 %s26, %s33
      %p418 = scmp.eq.s32.totalorder %s417, 0
      %s420 = sadd.s32 %s419, 1
      %s421 = scalar_select %p418, %s419, %s420
      %p424 = pneg %p418
      %p425 = scmp.eq.s32.totalorder %s26, 1
      %p426 = por %p424, %p425
      %p427 = scmp.ne.s32.totalorder %s419, %s422
      %p428 = scmp.eq.s32.totalorder %s26, 0
      %p429 = por %p427, %p428
      %p430 = scmp.ne.s32.totalorder %s419, %s422
      %p431 = scmp.eq.s32.totalorder %s31, 1
      %p432 = por %p430, %p431
      %p433 = scmp.ne.s32.totalorder %s422, %s423
      %p434 = scmp.eq.s32.totalorder %s31, 0
      %p435 = por %p433, %p434
      %p436 = scmp.ne.s32.totalorder %s422, %s423
      %p437 = scmp.eq.s32.totalorder %s32, 1
      %p438 = por %p436, %p437
      %p440 = scmp.ne.s32.totalorder %s423, %s439
      %p441 = scmp.eq.s32.totalorder %s32, 0
      %p442 = por %p440, %p441
      %p443 = scmp.le.s32.totalorder 1, %s26
      %p444 = scmp.lt.s32.totalorder %s26, 3
      %p445 = pnand %p443, %p444
      %p446 = pneg %p445
      // Predicated region
      $region9: #{tagalign_forward.2} parent=5 // pred_check
        _
      $region10: #{tagalign_forward.2} parent=5 // pred_check_branch
        %448 = sbr.rel (%p445) target = $region12
      $region11: #{tagalign_forward.2} parent=5 // pred_region
        %s449 = ssub.s32 %s26, 1
        // Predicated region
        $region13: #{tagalign_forward.2} parent=11 // pred_check
          %p450 = pneg %p73
        $region14: #{tagalign_forward.2} parent=11 // pred_check_branch
          %452 = sbr.rel (%p450) target = $region16
        $region15: #{tagalign_forward.2} parent=11 // pred_region
          _
        $region16: #{tagalign_forward.2} parent=11 // pred_fallthru
          _
        // Predicated region
        $region17: #{tagalign_forward.2} parent=11 // pred_check
          %p453 = pneg %p94
        $region18: #{tagalign_forward.2} parent=11 // pred_check_branch
          %455 = sbr.rel (%p453) target = $region20
        $region19: #{tagalign_forward.2} parent=11 // pred_region
          _
        $region20: #{tagalign_forward.2} parent=11 // pred_fallthru
          _
        // Predicated region
        $region21: #{tagalign_forward.2} parent=11 // pred_check
          %p456 = pneg %p115
        $region22: #{tagalign_forward.2} parent=11 // pred_check_branch
          %458 = sbr.rel (%p456) target = $region24
        $region23: #{tagalign_forward.2} parent=11 // pred_region
          _
        $region24: #{tagalign_forward.2} parent=11 // pred_fallthru
          _
        // Predicated region
        $region25: #{tagalign_forward.2} parent=11 // pred_check
          %p459 = pneg %p136
        $region26: #{tagalign_forward.2} parent=11 // pred_check_branch
          %461 = sbr.rel (%p459) target = $region28
        $region27: #{tagalign_forward.2} parent=11 // pred_region
          _
        $region28: #{tagalign_forward.2} parent=11 // pred_fallthru
          _
        // Predicated region
        $region29: #{tagalign_forward.2} parent=11 // pred_check
          %p462 = pneg %p157
        $region30: #{tagalign_forward.2} parent=11 // pred_check_branch
          %464 = sbr.rel (%p462) target = $region32
        $region31: #{tagalign_forward.2} parent=11 // pred_region
          _
        $region32: #{tagalign_forward.2} parent=11 // pred_fallthru
          _
        // Predicated region
        $region33: #{tagalign_forward.2} parent=11 // pred_check
          %p465 = pneg %p178
        $region34: #{tagalign_forward.2} parent=11 // pred_check_branch
          %467 = sbr.rel (%p465) target = $region36
        $region35: #{tagalign_forward.2} parent=11 // pred_region
          %s469 = ssub.s32 12288, 12288
          %470 = vsyncadd [#allocation3], %s469
          %s471 = sshll.u32 [#allocation2], 4
          %s472 = int_to_ptr.vmem [resolvable:$true] %s471
          %477 = dma.hbm_to_vmem [thread:$0]  %s6, 12288, %s472, [#allocation3], 384, 384, 24
        $region36: #{tagalign_forward.2} parent=11 // pred_fallthru
          _
        // Predicated region
        $region37: #{tagalign_forward.2} parent=11 // pred_check
          %p478 = pneg %p199
        $region38: #{tagalign_forward.2} parent=11 // pred_check_branch
          %480 = sbr.rel (%p478) target = $region40
        $region39: #{tagalign_forward.2} parent=11 // pred_region
          _
        $region40: #{tagalign_forward.2} parent=11 // pred_fallthru
          _
        // Predicated region
        $region41: #{tagalign_forward.2} parent=11 // pred_check
          %p481 = pneg %p220
        $region42: #{tagalign_forward.2} parent=11 // pred_check_branch
          %483 = sbr.rel (%p481) target = $region44
        $region43: #{tagalign_forward.2} parent=11 // pred_region
          _
        $region44: #{tagalign_forward.2} parent=11 // pred_fallthru
          _
        // Predicated region
        $region45: #{tagalign_forward.2} parent=11 // pred_check
          %p484 = pneg %p241
        $region46: #{tagalign_forward.2} parent=11 // pred_check_branch
          %486 = sbr.rel (%p484) target = $region48
        $region47: #{tagalign_forward.2} parent=11 // pred_region
          _
        $region48: #{tagalign_forward.2} parent=11 // pred_fallthru
          _
        // Predicated region
        $region49: #{tagalign_forward.2} parent=11 // pred_check
          %p487 = pneg %p262
        $region50: #{tagalign_forward.2} parent=11 // pred_check_branch
          %489 = sbr.rel (%p487) target = $region52
        $region51: #{tagalign_forward.2} parent=11 // pred_region
          _
        $region52: #{tagalign_forward.2} parent=11 // pred_fallthru
          _
        // Predicated region
        $region53: #{tagalign_forward.2} parent=11 // pred_check
          %p490 = pneg %p283
        $region54: #{tagalign_forward.2} parent=11 // pred_check_branch
          %492 = sbr.rel (%p490) target = $region56
        $region55: #{tagalign_forward.2} parent=11 // pred_region
          _
        $region56: #{tagalign_forward.2} parent=11 // pred_fallthru
          _
        // Predicated region
        $region57: #{tagalign_forward.2} parent=11 // pred_check
          %p493 = pneg %p304
        $region58: #{tagalign_forward.2} parent=11 // pred_check_branch
          %495 = sbr.rel (%p493) target = $region60
        $region59: #{tagalign_forward.2} parent=11 // pred_region
          _
        $region60: #{tagalign_forward.2} parent=11 // pred_fallthru
          _
        // Predicated region
        $region61: #{tagalign_forward.2} parent=11 // pred_check
          %p496 = pneg %p325
        $region62: #{tagalign_forward.2} parent=11 // pred_check_branch
          %498 = sbr.rel (%p496) target = $region64
        $region63: #{tagalign_forward.2} parent=11 // pred_region
          _
        $region64: #{tagalign_forward.2} parent=11 // pred_fallthru
          _
        // Predicated region
        $region65: #{tagalign_forward.2} parent=11 // pred_check
          %p499 = pneg %p346
        $region66: #{tagalign_forward.2} parent=11 // pred_check_branch
          %501 = sbr.rel (%p499) target = $region68
        $region67: #{tagalign_forward.2} parent=11 // pred_region
          %s503 = ssub.s32 16384, 16384
          %504 = vsyncadd [#allocation5], %s503
          %s505 = sshll.u32 [#allocation4], 4
          %s506 = int_to_ptr.vmem [resolvable:$true] %s505
          %511 = dma.hbm_to_vmem [thread:$0]  %s14, 16384, %s506, [#allocation5], 128, 128, 8
        $region68: #{tagalign_forward.2} parent=11 // pred_fallthru
          _
        // Predicated region
        $region69: #{tagalign_forward.2} parent=11 // pred_check
          %p512 = pneg %p367
        $region70: #{tagalign_forward.2} parent=11 // pred_check_branch
          %514 = sbr.rel (%p512) target = $region72
        $region71: #{tagalign_forward.2} parent=11 // pred_region
          _
        $region72: #{tagalign_forward.2} parent=11 // pred_fallthru
          _
        // Predicated region
        $region73: #{tagalign_forward.2} parent=11 // pred_check
          %p515 = pneg %p388
        $region74: #{tagalign_forward.2} parent=11 // pred_check_branch
          %517 = sbr.rel (%p515) target = $region76
        $region75: #{tagalign_forward.2} parent=11 // pred_region
          _
        $region76: #{tagalign_forward.2} parent=11 // pred_fallthru
          _
        // Predicated region
        $region77: #{tagalign_forward.2} parent=11 // pred_check
          %p518 = pneg %p409
        $region78: #{tagalign_forward.2} parent=11 // pred_check_branch
          %520 = sbr.rel (%p518) target = $region80
        $region79: #{tagalign_forward.2} parent=11 // pred_region
          _
        $region80: #{tagalign_forward.2} parent=11 // pred_fallthru
          _
      $region12: #{tagalign_forward.2} parent=5 // pred_fallthru
        _
      %p521 = scmp.lt.s32.totalorder %s26, 2
      // Predicated region
      $region81: #{tagalign_forward.2} parent=5 // pred_check
        %p522 = pneg %p521
      $region82: #{tagalign_forward.2} parent=5 // pred_check_branch
        %524 = sbr.rel (%p522) target = $region84
      $region83: #{tagalign_forward.2} parent=5 // pred_region
        // Predicated region
        $region85: #{tagalign_forward.2} parent=83 // pred_check
          %p525 = pneg %p46
        $region86: #{tagalign_forward.2} parent=83 // pred_check_branch
          %527 = sbr.rel (%p525) target = $region88
        $region87: #{tagalign_forward.2} parent=83 // pred_region
          %p528 = scmp.lt.s32.totalorder %s26, 1
          %s529 = scalar_select %p528, %s26, 1
          %s530 = smul.addr %s529, 2
          %s531 = smul.addr %s530, 8
          %s532 = scalar_lea.vmem %s0, %s531
        $region88: #{tagalign_forward.2} parent=83 // pred_fallthru
          _
      $region84: #{tagalign_forward.2} parent=5 // pred_fallthru
        _
      %p533 = scmp.le.s32.totalorder 1, %s26
      %p534 = scmp.lt.s32.totalorder %s26, 3
      %p535 = pnand %p533, %p534
      %p536 = pneg %p535
      // Predicated region
      $region89: #{tagalign_forward.2} parent=5 // pred_check
        _
      $region90: #{tagalign_forward.2} parent=5 // pred_check_branch
        %538 = sbr.rel (%p535) target = $region92
      $region91: #{tagalign_forward.2} parent=5 // pred_region
        %s539 = ssub.s32 %s26, 1
        // Predicated region
        $region93: #{tagalign_forward.2} parent=91 // pred_check
          %p540 = pneg %p178
        $region94: #{tagalign_forward.2} parent=91 // pred_check_branch
          %542 = sbr.rel (%p540) target = $region96
        $region95: #{tagalign_forward.2} parent=91 // pred_region
          %543 = dma.done [#allocation3], 12288
        $region96: #{tagalign_forward.2} parent=91 // pred_fallthru
          _
        // Predicated region
        $region97: #{tagalign_forward.2} parent=91 // pred_check
          %p544 = pneg %p346
        $region98: #{tagalign_forward.2} parent=91 // pred_check_branch
          %546 = sbr.rel (%p544) target = $region100
        $region99: #{tagalign_forward.2} parent=91 // pred_region
          %547 = dma.done [#allocation5], 16384
        $region100: #{tagalign_forward.2} parent=91 // pred_fallthru
          _
        %p548 = scmp.lt.s32.totalorder %s31, 1
        %s549 = scalar_select %p548, %s31, 1
        %s550 = smul.addr %s549, 2
        %s551 = smul.addr %s550, 8
        %s552 = scalar_lea.vmem %s0, %s551
        %p553 = pneg %p52
        %p554 = pneg %p49
        %p555 = pneg %p73
        %p556 = pneg %p70
        %p557 = pneg %p94
        %p558 = pneg %p91
        %p559 = pneg %p115
        %p560 = pneg %p112
        %p561 = pneg %p136
        %p562 = pneg %p133
        %p563 = pneg %p157
        %p564 = pneg %p154
        %p565 = pneg %p178
        %p566 = pneg %p175
        %p567 = pneg %p199
        %p568 = pneg %p196
        %p569 = pneg %p220
        %p570 = pneg %p217
        %p571 = pneg %p241
        %p572 = pneg %p238
        %p573 = pneg %p262
        %p574 = pneg %p259
        %p575 = pneg %p283
        %p576 = pneg %p280
        %p577 = pneg %p304
        %p578 = pneg %p301
        %p579 = pneg %p325
        %p580 = pneg %p322
        %p581 = pneg %p346
        %p582 = pneg %p343
        %p583 = pneg %p367
        %p584 = pneg %p364
        %p585 = pneg %p388
        %p586 = pneg %p385
        %p587 = pneg %p409
        %p588 = pneg %p406
        %p589 = pneg %p435
        %p590 = pneg %p432
        %p591 = scmp.lt.s32.totalorder %s31, 1
        %s592 = scalar_select %p591, %s31, 1
        %s593 = scalar_lea.vmem %s18, %s592
        %p594 = scmp.lt.s32.totalorder %s31, 1
        %s595 = scalar_select %p594, %s31, 1
        %s596 = smul.addr %s595, 2
        %s597 = smul.addr %s596, 8
        %s598 = scalar_lea.vmem %s0, %s597
        %p599 = scmp.lt.s32.totalorder %s31, 1
        %s600 = scalar_select %p599, %s31, 1
        %s601 = scalar_lea.vmem %s18, %s600
        %v602 = vld [vmem:[%s598] sm:$0xff]
        %v603 = vld [vmem:[%s598 + $0x8] sm:$0xff]
        %v604 = vld [vmem:[%s1] sm:$0xff]
        %v605 = vld [vmem:[%s1 + $0x8] sm:$0xff]
        %v606 = vld [vmem:[%s1 + $0x10] sm:$0xff]
        %v607 = vld [vmem:[%s1 + $0x18] sm:$0xff]
        %v608 = vld [vmem:[%s1 + $0x20] sm:$0xff]
        %v609 = vld [vmem:[%s1 + $0x28] sm:$0xff]
        %v610 = vld [vmem:[%s2] sm:$0x1]
        %v612 = vlaneseq
        %v613 = vshrl.u32 %v612, 7
        %v614 = vsub.s32 0, %v613
        %v615 = vrot.slane %v610, %v614
        %vm617 = vcmask 392192
        %v619 = vsel %vm617, %v602, 0
        %v622 = vsel %vm617, %v603, 0
        %624 = vmatprep.subr.mxu0 0.0
        %625 = vmatpush1.msra.mxu0 0.0
        %626 = vmatprep.subr.mxu0 0.0
        %627 = vmatpush1.msra.mxu0 0.0
        %628 = vmatprep.subr.mxu0 0.0
        %629 = vmatpush1.msra.mxu0 0.0
        %630 = vmatprep.subr.mxu0 0.0
        %631 = vmatpush1.msra.mxu0 0.0
        %632 = vmatprep.subr.mxu0 0.0
        %633 = vmatpush1.msra.mxu0 0.0
        %634 = vmatprep.subr.mxu0 0.0
        %635 = vmatpush1.msra.mxu0 0.0
        %636 = vmatprep.subr.mxu0 0.0
        %637 = vmatpush1.msra.mxu0 0.0
        %638 = vmatprep.subr.mxu0 0.0
        %639 = vmatpush1.msra.mxu0 0.0
        %640 = vmatprep.subr.mxu0 0.0
        %641 = vmatpush1.msra.mxu0 0.0
        %642 = vmatprep.subr.mxu0 0.0
        %643 = vmatpush1.msra.mxu0 0.0
        %644 = vmatprep.subr.mxu0 0.0
        %645 = vmatpush1.msra.mxu0 %v609
        %646 = vmatprep.subr.mxu0 0.0
        %647 = vmatpush1.msra.mxu0 %v608
        %648 = vmatprep.subr.mxu0 0.0
        %649 = vmatpush1.msra.mxu0 %v607
        %650 = vmatprep.subr.mxu0 0.0
        %651 = vmatpush1.msra.mxu0 %v606
        %652 = vmatprep.subr.mxu0 0.0
        %653 = vmatpush1.msra.mxu0 %v605
        %654 = vmatprep.subr.mxu0 0.0
        %655 = vmatpush1.msra.mxu0 %v604
        %656 = vmatprep.subr.mxu0 0.0
        %657 = vmatpush2.msra.mxu0 0.0
        %658 = vmatprep.subr.mxu0 0.0
        %659 = vmatpush2.msra.mxu0 0.0
        %660 = vmatprep.subr.mxu0 0.0
        %661 = vmatpush2.msra.mxu0 0.0
        %662 = vmatprep.subr.mxu0 0.0
        %663 = vmatpush2.msra.mxu0 0.0
        %664 = vmatprep.subr.mxu0 0.0
        %665 = vmatpush2.msra.mxu0 0.0
        %666 = vmatprep.subr.mxu0 0.0
        %667 = vmatpush2.msra.mxu0 0.0
        %668 = vmatprep.subr.mxu0 0.0
        %669 = vmatpush2.msra.mxu0 0.0
        %670 = vmatprep.subr.mxu0 0.0
        %671 = vmatpush2.msra.mxu0 0.0
        %672 = vmatprep.subr.mxu0 0.0
        %673 = vmatpush2.msra.mxu0 0.0
        %674 = vmatprep.subr.mxu0 0.0
        %675 = vmatpush2.msra.mxu0 0.0
        %676 = vmatprep.subr.mxu0 0.0
        %677 = vmatpush2.msra.mxu0 0.0
        %678 = vmatprep.subr.mxu0 0.0
        %679 = vmatpush2.msra.mxu0 0.0
        %680 = vmatprep.subr.mxu0 0.0
        %681 = vmatpush2.msra.mxu0 0.0
        %682 = vmatprep.subr.mxu0 0.0
        %683 = vmatpush2.msra.mxu0 0.0
        %684 = vmatprep.subr.mxu0 0.0
        %685 = vmatpush2.msra.mxu0 0.0
        %686 = vmatprep.subr.mxu0 0.0
        %687 = vmatpush2.msra.mxu0 0.0
        %688 = vmatprep.mubr.f32.mxu0 0.0
        %689 = vmatmul.mubr.f32.gmra.mxu0 %v619
        %v690 = vpop.f32.mrf.mxu0
        %v691 = vadd.f32 %v615, %v690
        %v692 = vpop.f32.mrf.mxu0
        %693 = vmatprep.mubr.f32.mxu0 0.0
        %694 = vmatmul.mubr.f32.gmra.mxu0 %v622
        %v695 = vpop.f32.mrf.mxu0
        %v696 = vadd.f32 %v615, %v695
        %v697 = vpop.f32.mrf.mxu0
        %698 = vdwg.mxu0
        %v699 = vld [vmem:[%s3] sm:$0xff]
        %v700 = vld [vmem:[%s3 + $0x8] sm:$0xff]
        %v701 = vadd.f32 %v691, %v699
        %v702 = vadd.f32 %v696, %v700
        %v703 = vld [vmem:[%s4] sm:$0x1]
        %v704 = vld [vmem:[%s5] sm:$0x1]
        %v705 = vld [vmem:[#allocation2] sm:$0xff]
        %v706 = vld [vmem:[#allocation2 + $0x8] sm:$0xff]
        %v707 = vld [vmem:[#allocation2 + $0x10] sm:$0xff]
        %v708 = vld [vmem:[#allocation2 + $0x18] sm:$0xff]
        %v709 = vld [vmem:[#allocation2 + $0x20] sm:$0xff]
        %v710 = vld [vmem:[#allocation2 + $0x28] sm:$0xff]
        %v711 = vld [vmem:[#allocation2 + $0x30] sm:$0xff]
        %v712 = vld [vmem:[#allocation2 + $0x38] sm:$0xff]
        %v713 = vld [vmem:[#allocation2 + $0x40] sm:$0xff]
        %v714 = vld [vmem:[#allocation2 + $0x48] sm:$0xff]
        %v715 = vld [vmem:[#allocation2 + $0x50] sm:$0xff]
        %v716 = vld [vmem:[#allocation2 + $0x58] sm:$0xff]
        %v717 = vld [vmem:[#allocation2 + $0x60] sm:$0xff]
        %v718 = vld [vmem:[#allocation2 + $0x68] sm:$0xff]
        %v719 = vld [vmem:[#allocation2 + $0x70] sm:$0xff]
        %v720 = vld [vmem:[#allocation2 + $0x78] sm:$0xff]
        %v721 = vld [vmem:[#allocation2 + $0x80] sm:$0xff]
        %v722 = vld [vmem:[#allocation2 + $0x88] sm:$0xff]
        %v723 = vld [vmem:[#allocation2 + $0x90] sm:$0xff]
        %v724 = vld [vmem:[#allocation2 + $0x98] sm:$0xff]
        %v725 = vld [vmem:[#allocation2 + $0xa0] sm:$0xff]
        %v726 = vld [vmem:[#allocation2 + $0xa8] sm:$0xff]
        %v727 = vld [vmem:[#allocation2 + $0xb0] sm:$0xff]
        %v728 = vld [vmem:[#allocation2 + $0xb8] sm:$0xff]
        %v729 = vld [vmem:[#allocation2 + $0xc0] sm:$0xff]
        %v730 = vld [vmem:[#allocation2 + $0xc8] sm:$0xff]
        %v731 = vld [vmem:[#allocation2 + $0xd0] sm:$0xff]
        %v732 = vld [vmem:[#allocation2 + $0xd8] sm:$0xff]
        %v733 = vld [vmem:[#allocation2 + $0xe0] sm:$0xff]
        %v734 = vld [vmem:[#allocation2 + $0xe8] sm:$0xff]
        %v735 = vld [vmem:[#allocation2 + $0xf0] sm:$0xff]
        %v736 = vld [vmem:[#allocation2 + $0xf8] sm:$0xff]
        %v737 = vld [vmem:[#allocation2 + $0x100] sm:$0xff]
        %v738 = vld [vmem:[#allocation2 + $0x108] sm:$0xff]
        %v739 = vld [vmem:[#allocation2 + $0x110] sm:$0xff]
        %v740 = vld [vmem:[#allocation2 + $0x118] sm:$0xff]
        %v741 = vld [vmem:[#allocation2 + $0x120] sm:$0xff]
        %v742 = vld [vmem:[#allocation2 + $0x128] sm:$0xff]
        %v743 = vld [vmem:[#allocation2 + $0x130] sm:$0xff]
        %v744 = vld [vmem:[#allocation2 + $0x138] sm:$0xff]
        %v745 = vld [vmem:[#allocation2 + $0x140] sm:$0xff]
        %v746 = vld [vmem:[#allocation2 + $0x148] sm:$0xff]
        %v747 = vld [vmem:[#allocation2 + $0x150] sm:$0xff]
        %v748 = vld [vmem:[#allocation2 + $0x158] sm:$0xff]
        %v749 = vld [vmem:[#allocation2 + $0x160] sm:$0xff]
        %v750 = vld [vmem:[#allocation2 + $0x168] sm:$0xff]
        %v751 = vld [vmem:[#allocation2 + $0x170] sm:$0xff]
        %v752 = vld [vmem:[#allocation2 + $0x178] sm:$0xff]
        %v753 = vld [vmem:[%s7] ss:$2 sm:$0x7]
        %v754 = vld [vmem:[%s8] sm:$0xff]
        %v755 = vld [vmem:[%s8 + $0x8] sm:$0xff]
        %v756 = vld [vmem:[%s8 + $0x10] sm:$0xff]
        %v757 = vld [vmem:[%s8 + $0x18] sm:$0xff]
        %v758 = vld [vmem:[%s8 + $0x20] sm:$0xff]
        %v759 = vld [vmem:[%s8 + $0x28] sm:$0xff]
        %v760 = vld [vmem:[%s8 + $0x30] sm:$0xff]
        %v761 = vld [vmem:[%s8 + $0x38] sm:$0xff]
        %v762 = vld [vmem:[%s8 + $0x40] sm:$0xff]
        %v763 = vld [vmem:[%s8 + $0x48] sm:$0xff]
        %v764 = vld [vmem:[%s8 + $0x50] sm:$0xff]
        %v765 = vld [vmem:[%s8 + $0x58] sm:$0xff]
        %v766 = vld [vmem:[%s8 + $0x60] sm:$0xff]
        %v767 = vld [vmem:[%s8 + $0x68] sm:$0xff]
        %v768 = vld [vmem:[%s8 + $0x70] sm:$0xff]
        %v769 = vld [vmem:[%s8 + $0x78] sm:$0xff]
        %v770 = vld [vmem:[%s9] sm:$0x1]
        %v771 = vld [vmem:[%s10] sm:$0x1]
        %v772 = vld [vmem:[%s11] sm:$0x1]
        %v773 = vld [vmem:[%s12] sm:$0xff]
        %v774 = vld [vmem:[%s12 + $0x8] sm:$0xff]
        %v775 = vld [vmem:[%s12 + $0x10] sm:$0xff]
        %v776 = vld [vmem:[%s12 + $0x18] sm:$0xff]
        %v777 = vld [vmem:[%s12 + $0x20] sm:$0xff]
        %v778 = vld [vmem:[%s12 + $0x28] sm:$0xff]
        %v779 = vld [vmem:[%s12 + $0x30] sm:$0xff]
        %v780 = vld [vmem:[%s12 + $0x38] sm:$0xff]
        %v781 = vld [vmem:[%s12 + $0x40] sm:$0xff]
        %v782 = vld [vmem:[%s12 + $0x48] sm:$0xff]
        %v783 = vld [vmem:[%s12 + $0x50] sm:$0xff]
        %v784 = vld [vmem:[%s12 + $0x58] sm:$0xff]
        %v785 = vld [vmem:[%s12 + $0x60] sm:$0xff]
        %v786 = vld [vmem:[%s12 + $0x68] sm:$0xff]
        %v787 = vld [vmem:[%s12 + $0x70] sm:$0xff]
        %v788 = vld [vmem:[%s12 + $0x78] sm:$0xff]
        %v789 = vld [vmem:[%s12 + $0x80] sm:$0xff]
        %v790 = vld [vmem:[%s12 + $0x88] sm:$0xff]
        %v791 = vld [vmem:[%s12 + $0x90] sm:$0xff]
        %v792 = vld [vmem:[%s12 + $0x98] sm:$0xff]
        %v793 = vld [vmem:[%s12 + $0xa0] sm:$0xff]
        %v794 = vld [vmem:[%s12 + $0xa8] sm:$0xff]
        %v795 = vld [vmem:[%s12 + $0xb0] sm:$0xff]
        %v796 = vld [vmem:[%s12 + $0xb8] sm:$0xff]
        %v797 = vld [vmem:[%s12 + $0xc0] sm:$0xff]
        %v798 = vld [vmem:[%s12 + $0xc8] sm:$0xff]
        %v799 = vld [vmem:[%s12 + $0xd0] sm:$0xff]
        %v800 = vld [vmem:[%s12 + $0xd8] sm:$0xff]
        %v801 = vld [vmem:[%s12 + $0xe0] sm:$0xff]
        %v802 = vld [vmem:[%s12 + $0xe8] sm:$0xff]
        %v803 = vld [vmem:[%s12 + $0xf0] sm:$0xff]
        %v804 = vld [vmem:[%s12 + $0xf8] sm:$0xff]
        %v805 = vld [vmem:[%s12 + $0x100] sm:$0xff]
        %v806 = vld [vmem:[%s12 + $0x108] sm:$0xff]
        %v807 = vld [vmem:[%s12 + $0x110] sm:$0xff]
        %v808 = vld [vmem:[%s12 + $0x118] sm:$0xff]
        %v809 = vld [vmem:[%s12 + $0x120] sm:$0xff]
        %v810 = vld [vmem:[%s12 + $0x128] sm:$0xff]
        %v811 = vld [vmem:[%s12 + $0x130] sm:$0xff]
        %v812 = vld [vmem:[%s12 + $0x138] sm:$0xff]
        %v813 = vld [vmem:[%s12 + $0x140] sm:$0xff]
        %v814 = vld [vmem:[%s12 + $0x148] sm:$0xff]
        %v815 = vld [vmem:[%s12 + $0x150] sm:$0xff]
        %v816 = vld [vmem:[%s12 + $0x158] sm:$0xff]
        %v817 = vld [vmem:[%s12 + $0x160] sm:$0xff]
        %v818 = vld [vmem:[%s12 + $0x168] sm:$0xff]
        %v819 = vld [vmem:[%s12 + $0x170] sm:$0xff]
        %v820 = vld [vmem:[%s12 + $0x178] sm:$0xff]
        %v821 = vld [vmem:[%s12 + $0x180] sm:$0xff]
        %v822 = vld [vmem:[%s12 + $0x188] sm:$0xff]
        %v823 = vld [vmem:[%s12 + $0x190] sm:$0xff]
        %v824 = vld [vmem:[%s12 + $0x198] sm:$0xff]
        %v825 = vld [vmem:[%s12 + $0x1a0] sm:$0xff]
        %v826 = vld [vmem:[%s12 + $0x1a8] sm:$0xff]
        %v827 = vld [vmem:[%s12 + $0x1b0] sm:$0xff]
        %v828 = vld [vmem:[%s12 + $0x1b8] sm:$0xff]
        %v829 = vld [vmem:[%s12 + $0x1c0] sm:$0xff]
        %v830 = vld [vmem:[%s12 + $0x1c8] sm:$0xff]
        %v831 = vld [vmem:[%s12 + $0x1d0] sm:$0xff]
        %v832 = vld [vmem:[%s12 + $0x1d8] sm:$0xff]
        %v833 = vld [vmem:[%s12 + $0x1e0] sm:$0xff]
        %v834 = vld [vmem:[%s12 + $0x1e8] sm:$0xff]
        %v835 = vld [vmem:[%s12 + $0x1f0] sm:$0xff]
        %v836 = vld [vmem:[%s12 + $0x1f8] sm:$0xff]
        %v837 = vld [vmem:[%s13] ss:$2 sm:$0xf]
        %v838 = vld [vmem:[#allocation4] sm:$0xff]
        %v839 = vld [vmem:[#allocation4 + $0x8] sm:$0xff]
        %v840 = vld [vmem:[#allocation4 + $0x10] sm:$0xff]
        %v841 = vld [vmem:[#allocation4 + $0x18] sm:$0xff]
        %v842 = vld [vmem:[#allocation4 + $0x20] sm:$0xff]
        %v843 = vld [vmem:[#allocation4 + $0x28] sm:$0xff]
        %v844 = vld [vmem:[#allocation4 + $0x30] sm:$0xff]
        %v845 = vld [vmem:[#allocation4 + $0x38] sm:$0xff]
        %v846 = vld [vmem:[#allocation4 + $0x40] sm:$0xff]
        %v847 = vld [vmem:[#allocation4 + $0x48] sm:$0xff]
        %v848 = vld [vmem:[#allocation4 + $0x50] sm:$0xff]
        %v849 = vld [vmem:[#allocation4 + $0x58] sm:$0xff]
        %v850 = vld [vmem:[#allocation4 + $0x60] sm:$0xff]
        %v851 = vld [vmem:[#allocation4 + $0x68] sm:$0xff]
        %v852 = vld [vmem:[#allocation4 + $0x70] sm:$0xff]
        %v853 = vld [vmem:[#allocation4 + $0x78] sm:$0xff]
        %v854 = vld [vmem:[#allocation4 + $0x80] sm:$0xff]
        %v855 = vld [vmem:[#allocation4 + $0x88] sm:$0xff]
        %v856 = vld [vmem:[#allocation4 + $0x90] sm:$0xff]
        %v857 = vld [vmem:[#allocation4 + $0x98] sm:$0xff]
        %v858 = vld [vmem:[#allocation4 + $0xa0] sm:$0xff]
        %v859 = vld [vmem:[#allocation4 + $0xa8] sm:$0xff]
        %v860 = vld [vmem:[#allocation4 + $0xb0] sm:$0xff]
        %v861 = vld [vmem:[#allocation4 + $0xb8] sm:$0xff]
        %v862 = vld [vmem:[#allocation4 + $0xc0] sm:$0xff]
        %v863 = vld [vmem:[#allocation4 + $0xc8] sm:$0xff]
        %v864 = vld [vmem:[#allocation4 + $0xd0] sm:$0xff]
        %v865 = vld [vmem:[#allocation4 + $0xd8] sm:$0xff]
        %v866 = vld [vmem:[#allocation4 + $0xe0] sm:$0xff]
        %v867 = vld [vmem:[#allocation4 + $0xe8] sm:$0xff]
        %v868 = vld [vmem:[#allocation4 + $0xf0] sm:$0xff]
        %v869 = vld [vmem:[#allocation4 + $0xf8] sm:$0xff]
        %v870 = vld [vmem:[#allocation4 + $0x100] sm:$0xff]
        %v871 = vld [vmem:[#allocation4 + $0x108] sm:$0xff]
        %v872 = vld [vmem:[#allocation4 + $0x110] sm:$0xff]
        %v873 = vld [vmem:[#allocation4 + $0x118] sm:$0xff]
        %v874 = vld [vmem:[#allocation4 + $0x120] sm:$0xff]
        %v875 = vld [vmem:[#allocation4 + $0x128] sm:$0xff]
        %v876 = vld [vmem:[#allocation4 + $0x130] sm:$0xff]
        %v877 = vld [vmem:[#allocation4 + $0x138] sm:$0xff]
        %v878 = vld [vmem:[#allocation4 + $0x140] sm:$0xff]
        %v879 = vld [vmem:[#allocation4 + $0x148] sm:$0xff]
        %v880 = vld [vmem:[#allocation4 + $0x150] sm:$0xff]
        %v881 = vld [vmem:[#allocation4 + $0x158] sm:$0xff]
        %v882 = vld [vmem:[#allocation4 + $0x160] sm:$0xff]
        %v883 = vld [vmem:[#allocation4 + $0x168] sm:$0xff]
        %v884 = vld [vmem:[#allocation4 + $0x170] sm:$0xff]
        %v885 = vld [vmem:[#allocation4 + $0x178] sm:$0xff]
        %v886 = vld [vmem:[#allocation4 + $0x180] sm:$0xff]
        %v887 = vld [vmem:[#allocation4 + $0x188] sm:$0xff]
        %v888 = vld [vmem:[#allocation4 + $0x190] sm:$0xff]
        %v889 = vld [vmem:[#allocation4 + $0x198] sm:$0xff]
        %v890 = vld [vmem:[#allocation4 + $0x1a0] sm:$0xff]
        %v891 = vld [vmem:[#allocation4 + $0x1a8] sm:$0xff]
        %v892 = vld [vmem:[#allocation4 + $0x1b0] sm:$0xff]
        %v893 = vld [vmem:[#allocation4 + $0x1b8] sm:$0xff]
        %v894 = vld [vmem:[#allocation4 + $0x1c0] sm:$0xff]
        %v895 = vld [vmem:[#allocation4 + $0x1c8] sm:$0xff]
        %v896 = vld [vmem:[#allocation4 + $0x1d0] sm:$0xff]
        %v897 = vld [vmem:[#allocation4 + $0x1d8] sm:$0xff]
        %v898 = vld [vmem:[#allocation4 + $0x1e0] sm:$0xff]
        %v899 = vld [vmem:[#allocation4 + $0x1e8] sm:$0xff]
        %v900 = vld [vmem:[#allocation4 + $0x1f0] sm:$0xff]
        %v901 = vld [vmem:[#allocation4 + $0x1f8] sm:$0xff]
        %v902 = vld [vmem:[%s15] sm:$0x1]
        %903 = vadd.xlane.f32.xlu0 %v701
        %v904 = vpop.xlane.xlu0 %903
        %905 = vadd.xlane.f32.xlu0 %v702
        %v906 = vpop.xlane.xlu0 %905
        %v907 = vrcp.pop 128.0
        %v908 = vmul.f32 %v904, %v907
        %v909 = vmul.f32 %v906, %v907
        %v910 = vsub.f32 %v701, %v908
        %v911 = vsub.f32 %v702, %v909
        %v912 = vmul.f32 %v910, %v910
        %v913 = vmul.f32 %v911, %v911
        %914 = vadd.xlane.f32.xlu0 %v912
        %v915 = vpop.xlane.xlu0 %914
        %916 = vadd.xlane.f32.xlu0 %v913
        %v917 = vpop.xlane.xlu0 %916
        %v918 = vmul.f32 %v915, %v907
        %v919 = vmul.f32 %v917, %v907
        %v920 = vadd.f32 %v918, 1e-05
        %v921 = vadd.f32 %v919, 1e-05
        %v922 = vrsqrt.pop %v920
        %v923 = vrsqrt.pop %v921
        %v924 = vmul.f32 %v910, %v922
        %v925 = vmul.f32 %v911, %v923
        %v926 = vlaneseq
        %v927 = vshrl.u32 %v926, 7
        %v928 = vsub.s32 0, %v927
        %v929 = vrot.slane %v703, %v928
        %v930 = vmul.f32 %v924, %v929
        %v931 = vmul.f32 %v925, %v929
        %v932 = vlaneseq
        %v933 = vshrl.u32 %v932, 7
        %v934 = vsub.s32 0, %v933
        %v935 = vrot.slane %v704, %v934
        %v936 = vadd.f32 %v930, %v935
        %v937 = vadd.f32 %v931, %v935
        %v939 = vlaneseq
        %v940 = vshrl.u32 %v939, 7
        %v941 = vsub.s32 0, %v940
        %v942 = vrot.slane %v753, %v941
        %v943 = vlaneseq
        %v944 = vshrl.u32 %v943, 7
        %v945 = vsub.s32 1, %v944
        %v946 = vrot.slane %v753, %v945
        %v947 = vlaneseq
        %v948 = vshrl.u32 %v947, 7
        %v949 = vsub.s32 2, %v948
        %v950 = vrot.slane %v753, %v949
        %954 = vmatprep.subr.mxu0 %v751
        %955 = vmatpush1.msra.mxu0 %v750
        %956 = vmatprep.subr.mxu0 %v748
        %957 = vmatpush1.msra.mxu0 %v747
        %958 = vmatprep.subr.mxu0 %v745
        %959 = vmatpush1.msra.mxu0 %v744
        %960 = vmatprep.subr.mxu0 %v742
        %961 = vmatpush1.msra.mxu0 %v741
        %962 = vmatprep.subr.mxu0 %v739
        %963 = vmatpush1.msra.mxu0 %v738
        %964 = vmatprep.subr.mxu0 %v736
        %965 = vmatpush1.msra.mxu0 %v735
        %966 = vmatprep.subr.mxu0 %v733
        %967 = vmatpush1.msra.mxu0 %v732
        %968 = vmatprep.subr.mxu0 %v730
        %969 = vmatpush1.msra.mxu0 %v729
        %970 = vmatprep.subr.mxu0 %v727
        %971 = vmatpush1.msra.mxu0 %v726
        %972 = vmatprep.subr.mxu0 %v724
        %973 = vmatpush1.msra.mxu0 %v723
        %974 = vmatprep.subr.mxu0 %v721
        %975 = vmatpush1.msra.mxu0 %v720
        %976 = vmatprep.subr.mxu0 %v718
        %977 = vmatpush1.msra.mxu0 %v717
        %978 = vmatprep.subr.mxu0 %v715
        %979 = vmatpush1.msra.mxu0 %v714
        %980 = vmatprep.subr.mxu0 %v712
        %981 = vmatpush1.msra.mxu0 %v711
        %982 = vmatprep.subr.mxu0 %v709
        %983 = vmatpush1.msra.mxu0 %v708
        %984 = vmatprep.subr.mxu0 %v706
        %985 = vmatpush1.msra.mxu0 %v705
        %986 = vmatprep.subr.mxu0 0.0
        %987 = vmatpush2.msra.mxu0 0.0
        %988 = vmatprep.subr.mxu0 0.0
        %989 = vmatpush2.msra.mxu0 0.0
        %990 = vmatprep.subr.mxu0 0.0
        %991 = vmatpush2.msra.mxu0 0.0
        %992 = vmatprep.subr.mxu0 0.0
        %993 = vmatpush2.msra.mxu0 0.0
        %994 = vmatprep.subr.mxu0 0.0
        %995 = vmatpush2.msra.mxu0 0.0
        %996 = vmatprep.subr.mxu0 0.0
        %997 = vmatpush2.msra.mxu0 0.0
        %998 = vmatprep.subr.mxu0 0.0
        %999 = vmatpush2.msra.mxu0 0.0
        %1000 = vmatprep.subr.mxu0 0.0
        %1001 = vmatpush2.msra.mxu0 0.0
        %1002 = vmatprep.subr.mxu0 0.0
        %1003 = vmatpush2.msra.mxu0 0.0
        %1004 = vmatprep.subr.mxu0 0.0
        %1005 = vmatpush2.msra.mxu0 0.0
        %1006 = vmatprep.subr.mxu0 0.0
        %1007 = vmatpush2.msra.mxu0 0.0
        %1008 = vmatprep.subr.mxu0 0.0
        %1009 = vmatpush2.msra.mxu0 0.0
        %1010 = vmatprep.subr.mxu0 0.0
        %1011 = vmatpush2.msra.mxu0 0.0
        %1012 = vmatprep.subr.mxu0 0.0
        %1013 = vmatpush2.msra.mxu0 0.0
        %1014 = vmatprep.subr.mxu0 0.0
        %1015 = vmatpush2.msra.mxu0 0.0
        %1016 = vmatprep.subr.mxu0 0.0
        %1017 = vmatpush2.msra.mxu0 0.0
        %1018 = vmatprep.mubr.f32.mxu0 0.0
        %1019 = vmatmul.mubr.f32.gmra.mxu0 %v936
        %v1020 = vpop.f32.mrf.mxu0
        %v1021 = vadd.f32 %v942, %v1020
        %v1022 = vpop.f32.mrf.mxu0
        %v1023 = vadd.f32 %v946, %v1022
        %1024 = vmatprep.mubr.f32.mxu0 0.0
        %1025 = vmatmul.mubr.f32.gmra.mxu0 %v937
        %v1026 = vpop.f32.mrf.mxu0
        %v1027 = vadd.f32 %v942, %v1026
        %v1028 = vpop.f32.mrf.mxu0
        %v1029 = vadd.f32 %v946, %v1028
        %1030 = vdwg.mxu0
        %1031 = vmatprep.subr.mxu0 0.0
        %1032 = vmatpush1.msra.mxu0 %v752
        %1033 = vmatprep.subr.mxu0 0.0
        %1034 = vmatpush1.msra.mxu0 %v749
        %1035 = vmatprep.subr.mxu0 0.0
        %1036 = vmatpush1.msra.mxu0 %v746
        %1037 = vmatprep.subr.mxu0 0.0
        %1038 = vmatpush1.msra.mxu0 %v743
        %1039 = vmatprep.subr.mxu0 0.0
        %1040 = vmatpush1.msra.mxu0 %v740
        %1041 = vmatprep.subr.mxu0 0.0
        %1042 = vmatpush1.msra.mxu0 %v737
        %1043 = vmatprep.subr.mxu0 0.0
        %1044 = vmatpush1.msra.mxu0 %v734
        %1045 = vmatprep.subr.mxu0 0.0
        %1046 = vmatpush1.msra.mxu0 %v731
        %1047 = vmatprep.subr.mxu0 0.0
        %1048 = vmatpush1.msra.mxu0 %v728
        %1049 = vmatprep.subr.mxu0 0.0
        %1050 = vmatpush1.msra.mxu0 %v725
        %1051 = vmatprep.subr.mxu0 0.0
        %1052 = vmatpush1.msra.mxu0 %v722
        %1053 = vmatprep.subr.mxu0 0.0
        %1054 = vmatpush1.msra.mxu0 %v719
        %1055 = vmatprep.subr.mxu0 0.0
        %1056 = vmatpush1.msra.mxu0 %v716
        %1057 = vmatprep.subr.mxu0 0.0
        %1058 = vmatpush1.msra.mxu0 %v713
        %1059 = vmatprep.subr.mxu0 0.0
        %1060 = vmatpush1.msra.mxu0 %v710
        %1061 = vmatprep.subr.mxu0 0.0
        %1062 = vmatpush1.msra.mxu0 %v707
        %1063 = vmatprep.subr.mxu0 0.0
        %1064 = vmatpush2.msra.mxu0 0.0
        %1065 = vmatprep.subr.mxu0 0.0
        %1066 = vmatpush2.msra.mxu0 0.0
        %1067 = vmatprep.subr.mxu0 0.0
        %1068 = vmatpush2.msra.mxu0 0.0
        %1069 = vmatprep.subr.mxu0 0.0
        %1070 = vmatpush2.msra.mxu0 0.0
        %1071 = vmatprep.subr.mxu0 0.0
        %1072 = vmatpush2.msra.mxu0 0.0
        %1073 = vmatprep.subr.mxu0 0.0
        %1074 = vmatpush2.msra.mxu0 0.0
        %1075 = vmatprep.subr.mxu0 0.0
        %1076 = vmatpush2.msra.mxu0 0.0
        %1077 = vmatprep.subr.mxu0 0.0
        %1078 = vmatpush2.msra.mxu0 0.0
        %1079 = vmatprep.subr.mxu0 0.0
        %1080 = vmatpush2.msra.mxu0 0.0
        %1081 = vmatprep.subr.mxu0 0.0
        %1082 = vmatpush2.msra.mxu0 0.0
        %1083 = vmatprep.subr.mxu0 0.0
        %1084 = vmatpush2.msra.mxu0 0.0
        %1085 = vmatprep.subr.mxu0 0.0
        %1086 = vmatpush2.msra.mxu0 0.0
        %1087 = vmatprep.subr.mxu0 0.0
        %1088 = vmatpush2.msra.mxu0 0.0
        %1089 = vmatprep.subr.mxu0 0.0
        %1090 = vmatpush2.msra.mxu0 0.0
        %1091 = vmatprep.subr.mxu0 0.0
        %1092 = vmatpush2.msra.mxu0 0.0
        %1093 = vmatprep.subr.mxu0 0.0
        %1094 = vmatpush2.msra.mxu0 0.0
        %1095 = vmatprep.mubr.f32.mxu0 0.0
        %1096 = vmatmul.mubr.f32.gmra.mxu0 %v936
        %v1097 = vpop.f32.mrf.mxu0
        %v1098 = vadd.f32 %v950, %v1097
        %v1099 = vpop.f32.mrf.mxu0
        %1100 = vmatprep.mubr.f32.mxu0 0.0
        %1101 = vmatmul.mubr.f32.gmra.mxu0 %v937
        %v1102 = vpop.f32.mrf.mxu0
        %v1103 = vadd.f32 %v950, %v1102
        %v1104 = vpop.f32.mrf.mxu0
        %1105 = vdwg.mxu0
        %vm1106 = vcmask 261120
        %v1108 = vsel %vm1106, %v1021, 0
        %v1111 = vsel %vm1106, %v1027, 0
        %v1114 = vsel %vm1106, %v1023, 0
        %v1117 = vsel %vm1106, %v1029, 0
        %1119 = vmatprep.subr.mxu0 0.0
        %1120 = vmatpush1.xpose.msra.mxu0 0.0
        %1121 = vmatprep.subr.mxu0 0.0
        %1122 = vmatpush1.xpose.msra.mxu0 0.0
        %1123 = vmatprep.subr.mxu0 0.0
        %1124 = vmatpush1.xpose.msra.mxu0 0.0
        %1125 = vmatprep.subr.mxu0 0.0
        %1126 = vmatpush1.xpose.msra.mxu0 0.0
        %1127 = vmatprep.subr.mxu0 0.0
        %1128 = vmatpush1.xpose.msra.mxu0 0.0
        %1129 = vmatprep.subr.mxu0 0.0
        %1130 = vmatpush1.xpose.msra.mxu0 0.0
        %1131 = vmatprep.subr.mxu0 0.0
        %1132 = vmatpush1.xpose.msra.mxu0 0.0
        %1133 = vmatprep.subr.mxu0 0.0
        %1134 = vmatpush1.xpose.msra.mxu0 0.0
        %1135 = vmatprep.subr.mxu0 0.0
        %1136 = vmatpush1.xpose.msra.mxu0 0.0
        %1137 = vmatprep.subr.mxu0 0.0
        %1138 = vmatpush1.xpose.msra.mxu0 0.0
        %1139 = vmatprep.subr.mxu0 0.0
        %1140 = vmatpush1.xpose.msra.mxu0 0.0
        %1141 = vmatprep.subr.mxu0 0.0
        %1142 = vmatpush1.xpose.msra.mxu0 0.0
        %1143 = vmatprep.subr.mxu0 0.0
        %1144 = vmatpush1.xpose.msra.mxu0 0.0
        %1145 = vmatprep.subr.mxu0 0.0
        %1146 = vmatpush1.xpose.msra.mxu0 0.0
        %1147 = vmatprep.subr.mxu0 0.0
        %1148 = vmatpush1.xpose.msra.mxu0 %v1117
        %1149 = vmatprep.subr.mxu0 0.0
        %1150 = vmatpush1.xpose.msra.mxu0 %v1114
        %1151 = vmatprep.subr.mxu0 0.0
        %1152 = vmatpush2.xpose.msra.mxu0 0.0
        %1153 = vmatprep.subr.mxu0 0.0
        %1154 = vmatpush2.xpose.msra.mxu0 0.0
        %1155 = vmatprep.subr.mxu0 0.0
        %1156 = vmatpush2.xpose.msra.mxu0 0.0
        %1157 = vmatprep.subr.mxu0 0.0
        %1158 = vmatpush2.xpose.msra.mxu0 0.0
        %1159 = vmatprep.subr.mxu0 0.0
        %1160 = vmatpush2.xpose.msra.mxu0 0.0
        %1161 = vmatprep.subr.mxu0 0.0
        %1162 = vmatpush2.xpose.msra.mxu0 0.0
        %1163 = vmatprep.subr.mxu0 0.0
        %1164 = vmatpush2.xpose.msra.mxu0 0.0
        %1165 = vmatprep.subr.mxu0 0.0
        %1166 = vmatpush2.xpose.msra.mxu0 0.0
        %1167 = vmatprep.subr.mxu0 0.0
        %1168 = vmatpush2.xpose.msra.mxu0 0.0
        %1169 = vmatprep.subr.mxu0 0.0
        %1170 = vmatpush2.xpose.msra.mxu0 0.0
        %1171 = vmatprep.subr.mxu0 0.0
        %1172 = vmatpush2.xpose.msra.mxu0 0.0
        %1173 = vmatprep.subr.mxu0 0.0
        %1174 = vmatpush2.xpose.msra.mxu0 0.0
        %1175 = vmatprep.subr.mxu0 0.0
        %1176 = vmatpush2.xpose.msra.mxu0 0.0
        %1177 = vmatprep.subr.mxu0 0.0
        %1178 = vmatpush2.xpose.msra.mxu0 0.0
        %1179 = vmatprep.subr.mxu0 0.0
        %1180 = vmatpush2.xpose.msra.mxu0 0.0
        %1181 = vmatprep.subr.mxu0 0.0
        %1182 = vmatpush2.xpose.msra.mxu0 0.0
        %1183 = vmatprep.mubr.f32.mxu0 0.0
        %1184 = vmatmul.mubr.f32.gmra.mxu0 %v1108
        %v1185 = vpop.f32.mrf.mxu0
        %v1186 = vadd.f32 0.0, %v1185
        %v1187 = vpop.f32.mrf.mxu0
        %1188 = vmatprep.mubr.f32.mxu0 0.0
        %1189 = vmatmul.mubr.f32.gmra.mxu0 %v1111
        %v1190 = vpop.f32.mrf.mxu0
        %v1191 = vadd.f32 0.0, %v1190
        %v1192 = vpop.f32.mrf.mxu0
        %1193 = vdwg.mxu0
        %v1194 = vmul.f32 %v1186, 0.17677669
        %v1195 = vmul.f32 %v1191, 0.17677669
        %vm1196 = vcmask 130048
        %v1197 = vsel %vm1196, %v1194, -inf
        %1198 = vmax.xlane.f32.xlu0 %v1197
        %v1199 = vpop.xlane.xlu0 %1198
        %v1200 = vsel %vm1196, %v1195, -inf
        %1201 = vmax.xlane.f32.xlu0 %v1200
        %v1202 = vpop.xlane.xlu0 %1201
        %v1203 = vsub.f32 %v1194, %v1199
        %v1204 = vsub.f32 %v1195, %v1202
        %v1205 = vmul.f32 %v1203, 1.442695
        %v1206 = vpow.pop %v1205
        %v1207 = vmul.f32 %v1204, 1.442695
        %v1208 = vpow.pop %v1207
        %v1209 = vsel %vm1196, %v1206, 0.0
        %1210 = vadd.xlane.f32.xlu0 %v1209
        %v1211 = vpop.xlane.xlu0 %1210
        %v1212 = vsel %vm1196, %v1208, 0.0
        %1213 = vadd.xlane.f32.xlu0 %v1212
        %v1214 = vpop.xlane.xlu0 %1213
        %v1215 = vrcp.pop %v1211
        %v1216 = vrcp.pop %v1214
        %v1217 = vmul.f32 %v1206, %v1215
        %v1218 = vmul.f32 %v1208, %v1216
        %v1220 = vsel %vm1196, %v1217, 0
        %v1223 = vsel %vm1196, %v1218, 0
        %1225 = vmatprep.subr.mxu0 0.0
        %1226 = vmatpush1.msra.mxu0 0.0
        %1227 = vmatprep.subr.mxu0 0.0
        %1228 = vmatpush1.msra.mxu0 0.0
        %1229 = vmatprep.subr.mxu0 0.0
        %1230 = vmatpush1.msra.mxu0 0.0
        %1231 = vmatprep.subr.mxu0 0.0
        %1232 = vmatpush1.msra.mxu0 0.0
        %1233 = vmatprep.subr.mxu0 0.0
        %1234 = vmatpush1.msra.mxu0 0.0
        %1235 = vmatprep.subr.mxu0 0.0
        %1236 = vmatpush1.msra.mxu0 0.0
        %1237 = vmatprep.subr.mxu0 0.0
        %1238 = vmatpush1.msra.mxu0 0.0
        %1239 = vmatprep.subr.mxu0 0.0
        %1240 = vmatpush1.msra.mxu0 0.0
        %1241 = vmatprep.subr.mxu0 0.0
        %1242 = vmatpush1.msra.mxu0 0.0
        %1243 = vmatprep.subr.mxu0 0.0
        %1244 = vmatpush1.msra.mxu0 0.0
        %1245 = vmatprep.subr.mxu0 0.0
        %1246 = vmatpush1.msra.mxu0 0.0
        %1247 = vmatprep.subr.mxu0 0.0
        %1248 = vmatpush1.msra.mxu0 0.0
        %1249 = vmatprep.subr.mxu0 0.0
        %1250 = vmatpush1.msra.mxu0 0.0
        %1251 = vmatprep.subr.mxu0 0.0
        %1252 = vmatpush1.msra.mxu0 0.0
        %1253 = vmatprep.subr.mxu0 0.0
        %1254 = vmatpush1.msra.mxu0 %v1103
        %1255 = vmatprep.subr.mxu0 0.0
        %1256 = vmatpush1.msra.mxu0 %v1098
        %1257 = vmatprep.subr.mxu0 0.0
        %1258 = vmatpush2.msra.mxu0 0.0
        %1259 = vmatprep.subr.mxu0 0.0
        %1260 = vmatpush2.msra.mxu0 0.0
        %1261 = vmatprep.subr.mxu0 0.0
        %1262 = vmatpush2.msra.mxu0 0.0
        %1263 = vmatprep.subr.mxu0 0.0
        %1264 = vmatpush2.msra.mxu0 0.0
        %1265 = vmatprep.subr.mxu0 0.0
        %1266 = vmatpush2.msra.mxu0 0.0
        %1267 = vmatprep.subr.mxu0 0.0
        %1268 = vmatpush2.msra.mxu0 0.0
        %1269 = vmatprep.subr.mxu0 0.0
        %1270 = vmatpush2.msra.mxu0 0.0
        %1271 = vmatprep.subr.mxu0 0.0
        %1272 = vmatpush2.msra.mxu0 0.0
        %1273 = vmatprep.subr.mxu0 0.0
        %1274 = vmatpush2.msra.mxu0 0.0
        %1275 = vmatprep.subr.mxu0 0.0
        %1276 = vmatpush2.msra.mxu0 0.0
        %1277 = vmatprep.subr.mxu0 0.0
        %1278 = vmatpush2.msra.mxu0 0.0
        %1279 = vmatprep.subr.mxu0 0.0
        %1280 = vmatpush2.msra.mxu0 0.0
        %1281 = vmatprep.subr.mxu0 0.0
        %1282 = vmatpush2.msra.mxu0 0.0
        %1283 = vmatprep.subr.mxu0 0.0
        %1284 = vmatpush2.msra.mxu0 0.0
        %1285 = vmatprep.subr.mxu0 0.0
        %1286 = vmatpush2.msra.mxu0 0.0
        %1287 = vmatprep.subr.mxu0 0.0
        %1288 = vmatpush2.msra.mxu0 0.0
        %1289 = vmatprep.mubr.f32.mxu0 0.0
        %1290 = vmatmul.mubr.f32.gmra.mxu0 %v1220
        %v1291 = vpop.f32.mrf.mxu0
        %v1292 = vadd.f32 0.0, %v1291
        %v1293 = vpop.f32.mrf.mxu0
        %1294 = vmatprep.mubr.f32.mxu0 0.0
        %1295 = vmatmul.mubr.f32.gmra.mxu0 %v1223
        %v1296 = vpop.f32.mrf.mxu0
        %v1297 = vadd.f32 0.0, %v1296
        %v1298 = vpop.f32.mrf.mxu0
        %1299 = vdwg.mxu0
        %1300 = vrot.lane.b32.xlu0 %v1021, 96
        %v1301 = vpop.permute.xlu0 %1300
        %1302 = vrot.lane.b32.xlu0 %v1027, 96
        %v1303 = vpop.permute.xlu0 %1302
        %1304 = vrot.lane.b32.xlu0 %v1023, 96
        %v1305 = vpop.permute.xlu0 %1304
        %1306 = vrot.lane.b32.xlu0 %v1029, 96
        %v1307 = vpop.permute.xlu0 %1306
        %v1308 = vsel %vm1106, %v1301, 0
        %v1310 = vsel %vm1106, %v1303, 0
        %v1312 = vsel %vm1106, %v1305, 0
        %v1314 = vsel %vm1106, %v1307, 0
        %1316 = vmatprep.subr.mxu0 0.0
        %1317 = vmatpush1.xpose.msra.mxu0 0.0
        %1318 = vmatprep.subr.mxu0 0.0
        %1319 = vmatpush1.xpose.msra.mxu0 0.0
        %1320 = vmatprep.subr.mxu0 0.0
        %1321 = vmatpush1.xpose.msra.mxu0 0.0
        %1322 = vmatprep.subr.mxu0 0.0
        %1323 = vmatpush1.xpose.msra.mxu0 0.0
        %1324 = vmatprep.subr.mxu0 0.0
        %1325 = vmatpush1.xpose.msra.mxu0 0.0
        %1326 = vmatprep.subr.mxu0 0.0
        %1327 = vmatpush1.xpose.msra.mxu0 0.0
        %1328 = vmatprep.subr.mxu0 0.0
        %1329 = vmatpush1.xpose.msra.mxu0 0.0
        %1330 = vmatprep.subr.mxu0 0.0
        %1331 = vmatpush1.xpose.msra.mxu0 0.0
        %1332 = vmatprep.subr.mxu0 0.0
        %1333 = vmatpush1.xpose.msra.mxu0 0.0
        %1334 = vmatprep.subr.mxu0 0.0
        %1335 = vmatpush1.xpose.msra.mxu0 0.0
        %1336 = vmatprep.subr.mxu0 0.0
        %1337 = vmatpush1.xpose.msra.mxu0 0.0
        %1338 = vmatprep.subr.mxu0 0.0
        %1339 = vmatpush1.xpose.msra.mxu0 0.0
        %1340 = vmatprep.subr.mxu0 0.0
        %1341 = vmatpush1.xpose.msra.mxu0 0.0
        %1342 = vmatprep.subr.mxu0 0.0
        %1343 = vmatpush1.xpose.msra.mxu0 0.0
        %1344 = vmatprep.subr.mxu0 0.0
        %1345 = vmatpush1.xpose.msra.mxu0 %v1314
        %1346 = vmatprep.subr.mxu0 0.0
        %1347 = vmatpush1.xpose.msra.mxu0 %v1312
        %1348 = vmatprep.subr.mxu0 0.0
        %1349 = vmatpush2.xpose.msra.mxu0 0.0
        %1350 = vmatprep.subr.mxu0 0.0
        %1351 = vmatpush2.xpose.msra.mxu0 0.0
        %1352 = vmatprep.subr.mxu0 0.0
        %1353 = vmatpush2.xpose.msra.mxu0 0.0
        %1354 = vmatprep.subr.mxu0 0.0
        %1355 = vmatpush2.xpose.msra.mxu0 0.0
        %1356 = vmatprep.subr.mxu0 0.0
        %1357 = vmatpush2.xpose.msra.mxu0 0.0
        %1358 = vmatprep.subr.mxu0 0.0
        %1359 = vmatpush2.xpose.msra.mxu0 0.0
        %1360 = vmatprep.subr.mxu0 0.0
        %1361 = vmatpush2.xpose.msra.mxu0 0.0
        %1362 = vmatprep.subr.mxu0 0.0
        %1363 = vmatpush2.xpose.msra.mxu0 0.0
        %1364 = vmatprep.subr.mxu0 0.0
        %1365 = vmatpush2.xpose.msra.mxu0 0.0
        %1366 = vmatprep.subr.mxu0 0.0
        %1367 = vmatpush2.xpose.msra.mxu0 0.0
        %1368 = vmatprep.subr.mxu0 0.0
        %1369 = vmatpush2.xpose.msra.mxu0 0.0
        %1370 = vmatprep.subr.mxu0 0.0
        %1371 = vmatpush2.xpose.msra.mxu0 0.0
        %1372 = vmatprep.subr.mxu0 0.0
        %1373 = vmatpush2.xpose.msra.mxu0 0.0
        %1374 = vmatprep.subr.mxu0 0.0
        %1375 = vmatpush2.xpose.msra.mxu0 0.0
        %1376 = vmatprep.subr.mxu0 0.0
        %1377 = vmatpush2.xpose.msra.mxu0 0.0
        %1378 = vmatprep.subr.mxu0 0.0
        %1379 = vmatpush2.xpose.msra.mxu0 0.0
        %1380 = vmatprep.mubr.f32.mxu0 0.0
        %1381 = vmatmul.mubr.f32.gmra.mxu0 %v1308
        %v1382 = vpop.f32.mrf.mxu0
        %v1383 = vadd.f32 0.0, %v1382
        %v1384 = vpop.f32.mrf.mxu0
        %1385 = vmatprep.mubr.f32.mxu0 0.0
        %1386 = vmatmul.mubr.f32.gmra.mxu0 %v1310
        %v1387 = vpop.f32.mrf.mxu0
        %v1388 = vadd.f32 0.0, %v1387
        %v1389 = vpop.f32.mrf.mxu0
        %1390 = vdwg.mxu0
        %v1391 = vmul.f32 %v1383, 0.17677669
        %v1392 = vmul.f32 %v1388, 0.17677669
        %v1393 = vsel %vm1196, %v1391, -inf
        %1394 = vmax.xlane.f32.xlu0 %v1393
        %v1395 = vpop.xlane.xlu0 %1394
        %v1396 = vsel %vm1196, %v1392, -inf
        %1397 = vmax.xlane.f32.xlu0 %v1396
        %v1398 = vpop.xlane.xlu0 %1397
        %v1399 = vsub.f32 %v1391, %v1395
        %v1400 = vsub.f32 %v1392, %v1398
        %v1401 = vmul.f32 %v1399, 1.442695
        %v1402 = vpow.pop %v1401
        %v1403 = vmul.f32 %v1400, 1.442695
        %v1404 = vpow.pop %v1403
        %v1405 = vsel %vm1196, %v1402, 0.0
        %1406 = vadd.xlane.f32.xlu0 %v1405
        %v1407 = vpop.xlane.xlu0 %1406
        %v1408 = vsel %vm1196, %v1404, 0.0
        %1409 = vadd.xlane.f32.xlu0 %v1408
        %v1410 = vpop.xlane.xlu0 %1409
        %v1411 = vrcp.pop %v1407
        %v1412 = vrcp.pop %v1410
        %v1413 = vmul.f32 %v1402, %v1411
        %v1414 = vmul.f32 %v1404, %v1412
        %1417 = vrot.lane.b32.xlu0 %v1098, 96
        %v1418 = vpop.permute.xlu0 %1417
        %1419 = vrot.lane.b32.xlu0 %v1103, 96
        %v1420 = vpop.permute.xlu0 %1419
        %v1424 = vsel %vm1196, %v1413, 0
        %v1427 = vsel %vm1196, %v1414, 0
        %1429 = vmatprep.subr.mxu0 0.0
        %1430 = vmatpush1.msra.mxu0 0.0
        %1431 = vmatprep.subr.mxu0 0.0
        %1432 = vmatpush1.msra.mxu0 0.0
        %1433 = vmatprep.subr.mxu0 0.0
        %1434 = vmatpush1.msra.mxu0 0.0
        %1435 = vmatprep.subr.mxu0 0.0
        %1436 = vmatpush1.msra.mxu0 0.0
        %1437 = vmatprep.subr.mxu0 0.0
        %1438 = vmatpush1.msra.mxu0 0.0
        %1439 = vmatprep.subr.mxu0 0.0
        %1440 = vmatpush1.msra.mxu0 0.0
        %1441 = vmatprep.subr.mxu0 0.0
        %1442 = vmatpush1.msra.mxu0 0.0
        %1443 = vmatprep.subr.mxu0 0.0
        %1444 = vmatpush1.msra.mxu0 0.0
        %1445 = vmatprep.subr.mxu0 0.0
        %1446 = vmatpush1.msra.mxu0 0.0
        %1447 = vmatprep.subr.mxu0 0.0
        %1448 = vmatpush1.msra.mxu0 0.0
        %1449 = vmatprep.subr.mxu0 0.0
        %1450 = vmatpush1.msra.mxu0 0.0
        %1451 = vmatprep.subr.mxu0 0.0
        %1452 = vmatpush1.msra.mxu0 0.0
        %1453 = vmatprep.subr.mxu0 0.0
        %1454 = vmatpush1.msra.mxu0 0.0
        %1455 = vmatprep.subr.mxu0 0.0
        %1456 = vmatpush1.msra.mxu0 0.0
        %1457 = vmatprep.subr.mxu0 0.0
        %1458 = vmatpush1.msra.mxu0 %v1420
        %1459 = vmatprep.subr.mxu0 0.0
        %1460 = vmatpush1.msra.mxu0 %v1418
        %1461 = vmatprep.subr.mxu0 0.0
        %1462 = vmatpush2.msra.mxu0 0.0
        %1463 = vmatprep.subr.mxu0 0.0
        %1464 = vmatpush2.msra.mxu0 0.0
        %1465 = vmatprep.subr.mxu0 0.0
        %1466 = vmatpush2.msra.mxu0 0.0
        %1467 = vmatprep.subr.mxu0 0.0
        %1468 = vmatpush2.msra.mxu0 0.0
        %1469 = vmatprep.subr.mxu0 0.0
        %1470 = vmatpush2.msra.mxu0 0.0
        %1471 = vmatprep.subr.mxu0 0.0
        %1472 = vmatpush2.msra.mxu0 0.0
        %1473 = vmatprep.subr.mxu0 0.0
        %1474 = vmatpush2.msra.mxu0 0.0
        %1475 = vmatprep.subr.mxu0 0.0
        %1476 = vmatpush2.msra.mxu0 0.0
        %1477 = vmatprep.subr.mxu0 0.0
        %1478 = vmatpush2.msra.mxu0 0.0
        %1479 = vmatprep.subr.mxu0 0.0
        %1480 = vmatpush2.msra.mxu0 0.0
        %1481 = vmatprep.subr.mxu0 0.0
        %1482 = vmatpush2.msra.mxu0 0.0
        %1483 = vmatprep.subr.mxu0 0.0
        %1484 = vmatpush2.msra.mxu0 0.0
        %1485 = vmatprep.subr.mxu0 0.0
        %1486 = vmatpush2.msra.mxu0 0.0
        %1487 = vmatprep.subr.mxu0 0.0
        %1488 = vmatpush2.msra.mxu0 0.0
        %1489 = vmatprep.subr.mxu0 0.0
        %1490 = vmatpush2.msra.mxu0 0.0
        %1491 = vmatprep.subr.mxu0 0.0
        %1492 = vmatpush2.msra.mxu0 0.0
        %1493 = vmatprep.mubr.f32.mxu0 0.0
        %1494 = vmatmul.mubr.f32.gmra.mxu0 %v1424
        %v1495 = vpop.f32.mrf.mxu0
        %v1496 = vadd.f32 0.0, %v1495
        %v1497 = vpop.f32.mrf.mxu0
        %1498 = vmatprep.mubr.f32.mxu0 0.0
        %1499 = vmatmul.mubr.f32.gmra.mxu0 %v1427
        %v1500 = vpop.f32.mrf.mxu0
        %v1501 = vadd.f32 0.0, %v1500
        %v1502 = vpop.f32.mrf.mxu0
        %1503 = vdwg.mxu0
        %v1505 = vsel %vm1106, %v1496, 0
        %v1508 = vsel %vm1106, %v1501, 0
        %1510 = vmatprep.subr.mxu0 0.0
        %1511 = vmatpush1.msra.mxu0 0.0
        %1512 = vmatprep.subr.mxu0 0.0
        %1513 = vmatpush1.msra.mxu0 0.0
        %1514 = vmatprep.subr.mxu0 0.0
        %1515 = vmatpush1.msra.mxu0 0.0
        %1516 = vmatprep.subr.mxu0 0.0
        %1517 = vmatpush1.msra.mxu0 0.0
        %1518 = vmatprep.subr.mxu0 0.0
        %1519 = vmatpush1.msra.mxu0 0.0
        %1520 = vmatprep.subr.mxu0 0.0
        %1521 = vmatpush1.msra.mxu0 0.0
        %1522 = vmatprep.subr.mxu0 0.0
        %1523 = vmatpush1.msra.mxu0 0.0
        %1524 = vmatprep.subr.mxu0 0.0
        %1525 = vmatpush1.msra.mxu0 0.0
        %1526 = vmatprep.subr.mxu0 0.0
        %1527 = vmatpush1.msra.mxu0 0.0
        %1528 = vmatprep.subr.mxu0 0.0
        %1529 = vmatpush1.msra.mxu0 0.0
        %1530 = vmatprep.subr.mxu0 0.0
        %1531 = vmatpush1.msra.mxu0 0.0
        %1532 = vmatprep.subr.mxu0 0.0
        %1533 = vmatpush1.msra.mxu0 0.0
        %1534 = vmatprep.subr.mxu0 0.0
        %1535 = vmatpush1.msra.mxu0 %v761
        %1536 = vmatprep.subr.mxu0 0.0
        %1537 = vmatpush1.msra.mxu0 %v760
        %1538 = vmatprep.subr.mxu0 0.0
        %1539 = vmatpush1.msra.mxu0 %v759
        %1540 = vmatprep.subr.mxu0 0.0
        %1541 = vmatpush1.msra.mxu0 %v758
        %1542 = vmatprep.subr.mxu0 0.0
        %1543 = vmatpush2.msra.mxu0 0.0
        %1544 = vmatprep.subr.mxu0 0.0
        %1545 = vmatpush2.msra.mxu0 0.0
        %1546 = vmatprep.subr.mxu0 0.0
        %1547 = vmatpush2.msra.mxu0 0.0
        %1548 = vmatprep.subr.mxu0 0.0
        %1549 = vmatpush2.msra.mxu0 0.0
        %1550 = vmatprep.subr.mxu0 0.0
        %1551 = vmatpush2.msra.mxu0 0.0
        %1552 = vmatprep.subr.mxu0 0.0
        %1553 = vmatpush2.msra.mxu0 0.0
        %1554 = vmatprep.subr.mxu0 0.0
        %1555 = vmatpush2.msra.mxu0 0.0
        %1556 = vmatprep.subr.mxu0 0.0
        %1557 = vmatpush2.msra.mxu0 0.0
        %1558 = vmatprep.subr.mxu0 0.0
        %1559 = vmatpush2.msra.mxu0 0.0
        %1560 = vmatprep.subr.mxu0 0.0
        %1561 = vmatpush2.msra.mxu0 0.0
        %1562 = vmatprep.subr.mxu0 0.0
        %1563 = vmatpush2.msra.mxu0 0.0
        %1564 = vmatprep.subr.mxu0 0.0
        %1565 = vmatpush2.msra.mxu0 0.0
        %1566 = vmatprep.subr.mxu0 0.0
        %1567 = vmatpush2.msra.mxu0 0.0
        %1568 = vmatprep.subr.mxu0 0.0
        %1569 = vmatpush2.msra.mxu0 0.0
        %1570 = vmatprep.subr.mxu0 0.0
        %1571 = vmatpush2.msra.mxu0 0.0
        %1572 = vmatprep.subr.mxu0 0.0
        %1573 = vmatpush2.msra.mxu0 0.0
        %1574 = vmatprep.mubr.f32.mxu0 0.0
        %1575 = vmatmul.mubr.f32.gmra.mxu0 %v1505
        %v1576 = vpop.f32.mrf.mxu0
        %v1577 = vadd.f32 0.0, %v1576
        %v1578 = vpop.f32.mrf.mxu0
        %1579 = vmatprep.mubr.f32.mxu0 0.0
        %1580 = vmatmul.mubr.f32.gmra.mxu0 %v1508
        %v1581 = vpop.f32.mrf.mxu0
        %v1582 = vadd.f32 0.0, %v1581
        %v1583 = vpop.f32.mrf.mxu0
        %1584 = vdwg.mxu0
        %v1586 = vsel %vm1106, %v1292, 0
        %v1589 = vsel %vm1106, %v1297, 0
        %1591 = vmatprep.subr.mxu0 0.0
        %1592 = vmatpush1.msra.mxu0 0.0
        %1593 = vmatprep.subr.mxu0 0.0
        %1594 = vmatpush1.msra.mxu0 0.0
        %1595 = vmatprep.subr.mxu0 0.0
        %1596 = vmatpush1.msra.mxu0 0.0
        %1597 = vmatprep.subr.mxu0 0.0
        %1598 = vmatpush1.msra.mxu0 0.0
        %1599 = vmatprep.subr.mxu0 0.0
        %1600 = vmatpush1.msra.mxu0 0.0
        %1601 = vmatprep.subr.mxu0 0.0
        %1602 = vmatpush1.msra.mxu0 0.0
        %1603 = vmatprep.subr.mxu0 0.0
        %1604 = vmatpush1.msra.mxu0 0.0
        %1605 = vmatprep.subr.mxu0 0.0
        %1606 = vmatpush1.msra.mxu0 0.0
        %1607 = vmatprep.subr.mxu0 0.0
        %1608 = vmatpush1.msra.mxu0 0.0
        %1609 = vmatprep.subr.mxu0 0.0
        %1610 = vmatpush1.msra.mxu0 0.0
        %1611 = vmatprep.subr.mxu0 0.0
        %1612 = vmatpush1.msra.mxu0 0.0
        %1613 = vmatprep.subr.mxu0 0.0
        %1614 = vmatpush1.msra.mxu0 0.0
        %1615 = vmatprep.subr.mxu0 0.0
        %1616 = vmatpush1.msra.mxu0 %v757
        %1617 = vmatprep.subr.mxu0 0.0
        %1618 = vmatpush1.msra.mxu0 %v756
        %1619 = vmatprep.subr.mxu0 0.0
        %1620 = vmatpush1.msra.mxu0 %v755
        %1621 = vmatprep.subr.mxu0 0.0
        %1622 = vmatpush1.msra.mxu0 %v754
        %1623 = vmatprep.subr.mxu0 0.0
        %1624 = vmatpush2.msra.mxu0 0.0
        %1625 = vmatprep.subr.mxu0 0.0
        %1626 = vmatpush2.msra.mxu0 0.0
        %1627 = vmatprep.subr.mxu0 0.0
        %1628 = vmatpush2.msra.mxu0 0.0
        %1629 = vmatprep.subr.mxu0 0.0
        %1630 = vmatpush2.msra.mxu0 0.0
        %1631 = vmatprep.subr.mxu0 0.0
        %1632 = vmatpush2.msra.mxu0 0.0
        %1633 = vmatprep.subr.mxu0 0.0
        %1634 = vmatpush2.msra.mxu0 0.0
        %1635 = vmatprep.subr.mxu0 0.0
        %1636 = vmatpush2.msra.mxu0 0.0
        %1637 = vmatprep.subr.mxu0 0.0
        %1638 = vmatpush2.msra.mxu0 0.0
        %1639 = vmatprep.subr.mxu0 0.0
        %1640 = vmatpush2.msra.mxu0 0.0
        %1641 = vmatprep.subr.mxu0 0.0
        %1642 = vmatpush2.msra.mxu0 0.0
        %1643 = vmatprep.subr.mxu0 0.0
        %1644 = vmatpush2.msra.mxu0 0.0
        %1645 = vmatprep.subr.mxu0 0.0
        %1646 = vmatpush2.msra.mxu0 0.0
        %1647 = vmatprep.subr.mxu0 0.0
        %1648 = vmatpush2.msra.mxu0 0.0
        %1649 = vmatprep.subr.mxu0 0.0
        %1650 = vmatpush2.msra.mxu0 0.0
        %1651 = vmatprep.subr.mxu0 0.0
        %1652 = vmatpush2.msra.mxu0 0.0
        %1653 = vmatprep.subr.mxu0 0.0
        %1654 = vmatpush2.msra.mxu0 0.0
        %1655 = vmatprep.mubr.f32.mxu0 0.0
        %1656 = vmatmul.mubr.f32.gmra.mxu0 %v1586
        %v1657 = vpop.f32.mrf.mxu0
        %v1658 = vadd.f32 %v1577, %v1657
        %v1659 = vpop.f32.mrf.mxu0
        %1660 = vmatprep.mubr.f32.mxu0 0.0
        %1661 = vmatmul.mubr.f32.gmra.mxu0 %v1589
        %v1662 = vpop.f32.mrf.mxu0
        %v1663 = vadd.f32 %v1582, %v1662
        %v1664 = vpop.f32.mrf.mxu0
        %1665 = vdwg.mxu0
        %1666 = vrot.lane.b32.xlu0 %v1021, 64
        %v1667 = vpop.permute.xlu0 %1666
        %1668 = vrot.lane.b32.xlu0 %v1027, 64
        %v1669 = vpop.permute.xlu0 %1668
        %1670 = vrot.lane.b32.xlu0 %v1023, 64
        %v1671 = vpop.permute.xlu0 %1670
        %1672 = vrot.lane.b32.xlu0 %v1029, 64
        %v1673 = vpop.permute.xlu0 %1672
        %v1674 = vsel %vm1106, %v1667, 0
        %v1676 = vsel %vm1106, %v1669, 0
        %v1678 = vsel %vm1106, %v1671, 0
        %v1680 = vsel %vm1106, %v1673, 0
        %1682 = vmatprep.subr.mxu0 0.0
        %1683 = vmatpush1.xpose.msra.mxu0 0.0
        %1684 = vmatprep.subr.mxu0 0.0
        %1685 = vmatpush1.xpose.msra.mxu0 0.0
        %1686 = vmatprep.subr.mxu0 0.0
        %1687 = vmatpush1.xpose.msra.mxu0 0.0
        %1688 = vmatprep.subr.mxu0 0.0
        %1689 = vmatpush1.xpose.msra.mxu0 0.0
        %1690 = vmatprep.subr.mxu0 0.0
        %1691 = vmatpush1.xpose.msra.mxu0 0.0
        %1692 = vmatprep.subr.mxu0 0.0
        %1693 = vmatpush1.xpose.msra.mxu0 0.0
        %1694 = vmatprep.subr.mxu0 0.0
        %1695 = vmatpush1.xpose.msra.mxu0 0.0
        %1696 = vmatprep.subr.mxu0 0.0
        %1697 = vmatpush1.xpose.msra.mxu0 0.0
        %1698 = vmatprep.subr.mxu0 0.0
        %1699 = vmatpush1.xpose.msra.mxu0 0.0
        %1700 = vmatprep.subr.mxu0 0.0
        %1701 = vmatpush1.xpose.msra.mxu0 0.0
        %1702 = vmatprep.subr.mxu0 0.0
        %1703 = vmatpush1.xpose.msra.mxu0 0.0
        %1704 = vmatprep.subr.mxu0 0.0
        %1705 = vmatpush1.xpose.msra.mxu0 0.0
        %1706 = vmatprep.subr.mxu0 0.0
        %1707 = vmatpush1.xpose.msra.mxu0 0.0
        %1708 = vmatprep.subr.mxu0 0.0
        %1709 = vmatpush1.xpose.msra.mxu0 0.0
        %1710 = vmatprep.subr.mxu0 0.0
        %1711 = vmatpush1.xpose.msra.mxu0 %v1680
        %1712 = vmatprep.subr.mxu0 0.0
        %1713 = vmatpush1.xpose.msra.mxu0 %v1678
        %1714 = vmatprep.subr.mxu0 0.0
        %1715 = vmatpush2.xpose.msra.mxu0 0.0
        %1716 = vmatprep.subr.mxu0 0.0
        %1717 = vmatpush2.xpose.msra.mxu0 0.0
        %1718 = vmatprep.subr.mxu0 0.0
        %1719 = vmatpush2.xpose.msra.mxu0 0.0
        %1720 = vmatprep.subr.mxu0 0.0
        %1721 = vmatpush2.xpose.msra.mxu0 0.0
        %1722 = vmatprep.subr.mxu0 0.0
        %1723 = vmatpush2.xpose.msra.mxu0 0.0
        %1724 = vmatprep.subr.mxu0 0.0
        %1725 = vmatpush2.xpose.msra.mxu0 0.0
        %1726 = vmatprep.subr.mxu0 0.0
        %1727 = vmatpush2.xpose.msra.mxu0 0.0
        %1728 = vmatprep.subr.mxu0 0.0
        %1729 = vmatpush2.xpose.msra.mxu0 0.0
        %1730 = vmatprep.subr.mxu0 0.0
        %1731 = vmatpush2.xpose.msra.mxu0 0.0
        %1732 = vmatprep.subr.mxu0 0.0
        %1733 = vmatpush2.xpose.msra.mxu0 0.0
        %1734 = vmatprep.subr.mxu0 0.0
        %1735 = vmatpush2.xpose.msra.mxu0 0.0
        %1736 = vmatprep.subr.mxu0 0.0
        %1737 = vmatpush2.xpose.msra.mxu0 0.0
        %1738 = vmatprep.subr.mxu0 0.0
        %1739 = vmatpush2.xpose.msra.mxu0 0.0
        %1740 = vmatprep.subr.mxu0 0.0
        %1741 = vmatpush2.xpose.msra.mxu0 0.0
        %1742 = vmatprep.subr.mxu0 0.0
        %1743 = vmatpush2.xpose.msra.mxu0 0.0
        %1744 = vmatprep.subr.mxu0 0.0
        %1745 = vmatpush2.xpose.msra.mxu0 0.0
        %1746 = vmatprep.mubr.f32.mxu0 0.0
        %1747 = vmatmul.mubr.f32.gmra.mxu0 %v1674
        %v1748 = vpop.f32.mrf.mxu0
        %v1749 = vadd.f32 0.0, %v1748
        %v1750 = vpop.f32.mrf.mxu0
        %1751 = vmatprep.mubr.f32.mxu0 0.0
        %1752 = vmatmul.mubr.f32.gmra.mxu0 %v1676
        %v1753 = vpop.f32.mrf.mxu0
        %v1754 = vadd.f32 0.0, %v1753
        %v1755 = vpop.f32.mrf.mxu0
        %1756 = vdwg.mxu0
        %v1757 = vmul.f32 %v1749, 0.17677669
        %v1758 = vmul.f32 %v1754, 0.17677669
        %v1759 = vsel %vm1196, %v1757, -inf
        %1760 = vmax.xlane.f32.xlu0 %v1759
        %v1761 = vpop.xlane.xlu0 %1760
        %v1762 = vsel %vm1196, %v1758, -inf
        %1763 = vmax.xlane.f32.xlu0 %v1762
        %v1764 = vpop.xlane.xlu0 %1763
        %v1765 = vsub.f32 %v1757, %v1761
        %v1766 = vsub.f32 %v1758, %v1764
        %v1767 = vmul.f32 %v1765, 1.442695
        %v1768 = vpow.pop %v1767
        %v1769 = vmul.f32 %v1766, 1.442695
        %v1770 = vpow.pop %v1769
        %v1771 = vsel %vm1196, %v1768, 0.0
        %1772 = vadd.xlane.f32.xlu0 %v1771
        %v1773 = vpop.xlane.xlu0 %1772
        %v1774 = vsel %vm1196, %v1770, 0.0
        %1775 = vadd.xlane.f32.xlu0 %v1774
        %v1776 = vpop.xlane.xlu0 %1775
        %v1777 = vrcp.pop %v1773
        %v1778 = vrcp.pop %v1776
        %v1779 = vmul.f32 %v1768, %v1777
        %v1780 = vmul.f32 %v1770, %v1778
        %1781 = vrot.lane.b32.xlu0 %v1098, 64
        %v1782 = vpop.permute.xlu0 %1781
        %1783 = vrot.lane.b32.xlu0 %v1103, 64
        %v1784 = vpop.permute.xlu0 %1783
        %v1788 = vsel %vm1196, %v1779, 0
        %v1791 = vsel %vm1196, %v1780, 0
        %1793 = vmatprep.subr.mxu0 0.0
        %1794 = vmatpush1.msra.mxu0 0.0
        %1795 = vmatprep.subr.mxu0 0.0
        %1796 = vmatpush1.msra.mxu0 0.0
        %1797 = vmatprep.subr.mxu0 0.0
        %1798 = vmatpush1.msra.mxu0 0.0
        %1799 = vmatprep.subr.mxu0 0.0
        %1800 = vmatpush1.msra.mxu0 0.0
        %1801 = vmatprep.subr.mxu0 0.0
        %1802 = vmatpush1.msra.mxu0 0.0
        %1803 = vmatprep.subr.mxu0 0.0
        %1804 = vmatpush1.msra.mxu0 0.0
        %1805 = vmatprep.subr.mxu0 0.0
        %1806 = vmatpush1.msra.mxu0 0.0
        %1807 = vmatprep.subr.mxu0 0.0
        %1808 = vmatpush1.msra.mxu0 0.0
        %1809 = vmatprep.subr.mxu0 0.0
        %1810 = vmatpush1.msra.mxu0 0.0
        %1811 = vmatprep.subr.mxu0 0.0
        %1812 = vmatpush1.msra.mxu0 0.0
        %1813 = vmatprep.subr.mxu0 0.0
        %1814 = vmatpush1.msra.mxu0 0.0
        %1815 = vmatprep.subr.mxu0 0.0
        %1816 = vmatpush1.msra.mxu0 0.0
        %1817 = vmatprep.subr.mxu0 0.0
        %1818 = vmatpush1.msra.mxu0 0.0
        %1819 = vmatprep.subr.mxu0 0.0
        %1820 = vmatpush1.msra.mxu0 0.0
        %1821 = vmatprep.subr.mxu0 0.0
        %1822 = vmatpush1.msra.mxu0 %v1784
        %1823 = vmatprep.subr.mxu0 0.0
        %1824 = vmatpush1.msra.mxu0 %v1782
        %1825 = vmatprep.subr.mxu0 0.0
        %1826 = vmatpush2.msra.mxu0 0.0
        %1827 = vmatprep.subr.mxu0 0.0
        %1828 = vmatpush2.msra.mxu0 0.0
        %1829 = vmatprep.subr.mxu0 0.0
        %1830 = vmatpush2.msra.mxu0 0.0
        %1831 = vmatprep.subr.mxu0 0.0
        %1832 = vmatpush2.msra.mxu0 0.0
        %1833 = vmatprep.subr.mxu0 0.0
        %1834 = vmatpush2.msra.mxu0 0.0
        %1835 = vmatprep.subr.mxu0 0.0
        %1836 = vmatpush2.msra.mxu0 0.0
        %1837 = vmatprep.subr.mxu0 0.0
        %1838 = vmatpush2.msra.mxu0 0.0
        %1839 = vmatprep.subr.mxu0 0.0
        %1840 = vmatpush2.msra.mxu0 0.0
        %1841 = vmatprep.subr.mxu0 0.0
        %1842 = vmatpush2.msra.mxu0 0.0
        %1843 = vmatprep.subr.mxu0 0.0
        %1844 = vmatpush2.msra.mxu0 0.0
        %1845 = vmatprep.subr.mxu0 0.0
        %1846 = vmatpush2.msra.mxu0 0.0
        %1847 = vmatprep.subr.mxu0 0.0
        %1848 = vmatpush2.msra.mxu0 0.0
        %1849 = vmatprep.subr.mxu0 0.0
        %1850 = vmatpush2.msra.mxu0 0.0
        %1851 = vmatprep.subr.mxu0 0.0
        %1852 = vmatpush2.msra.mxu0 0.0
        %1853 = vmatprep.subr.mxu0 0.0
        %1854 = vmatpush2.msra.mxu0 0.0
        %1855 = vmatprep.subr.mxu0 0.0
        %1856 = vmatpush2.msra.mxu0 0.0
        %1857 = vmatprep.mubr.f32.mxu0 0.0
        %1858 = vmatmul.mubr.f32.gmra.mxu0 %v1788
        %v1859 = vpop.f32.mrf.mxu0
        %v1860 = vadd.f32 0.0, %v1859
        %v1861 = vpop.f32.mrf.mxu0
        %1862 = vmatprep.mubr.f32.mxu0 0.0
        %1863 = vmatmul.mubr.f32.gmra.mxu0 %v1791
        %v1864 = vpop.f32.mrf.mxu0
        %v1865 = vadd.f32 0.0, %v1864
        %v1866 = vpop.f32.mrf.mxu0
        %1867 = vdwg.mxu0
        %v1869 = vsel %vm1106, %v1860, 0
        %v1872 = vsel %vm1106, %v1865, 0
        %1874 = vmatprep.subr.mxu0 0.0
        %1875 = vmatpush1.msra.mxu0 0.0
        %1876 = vmatprep.subr.mxu0 0.0
        %1877 = vmatpush1.msra.mxu0 0.0
        %1878 = vmatprep.subr.mxu0 0.0
        %1879 = vmatpush1.msra.mxu0 0.0
        %1880 = vmatprep.subr.mxu0 0.0
        %1881 = vmatpush1.msra.mxu0 0.0
        %1882 = vmatprep.subr.mxu0 0.0
        %1883 = vmatpush1.msra.mxu0 0.0
        %1884 = vmatprep.subr.mxu0 0.0
        %1885 = vmatpush1.msra.mxu0 0.0
        %1886 = vmatprep.subr.mxu0 0.0
        %1887 = vmatpush1.msra.mxu0 0.0
        %1888 = vmatprep.subr.mxu0 0.0
        %1889 = vmatpush1.msra.mxu0 0.0
        %1890 = vmatprep.subr.mxu0 0.0
        %1891 = vmatpush1.msra.mxu0 0.0
        %1892 = vmatprep.subr.mxu0 0.0
        %1893 = vmatpush1.msra.mxu0 0.0
        %1894 = vmatprep.subr.mxu0 0.0
        %1895 = vmatpush1.msra.mxu0 0.0
        %1896 = vmatprep.subr.mxu0 0.0
        %1897 = vmatpush1.msra.mxu0 0.0
        %1898 = vmatprep.subr.mxu0 0.0
        %1899 = vmatpush1.msra.mxu0 %v765
        %1900 = vmatprep.subr.mxu0 0.0
        %1901 = vmatpush1.msra.mxu0 %v764
        %1902 = vmatprep.subr.mxu0 0.0
        %1903 = vmatpush1.msra.mxu0 %v763
        %1904 = vmatprep.subr.mxu0 0.0
        %1905 = vmatpush1.msra.mxu0 %v762
        %1906 = vmatprep.subr.mxu0 0.0
        %1907 = vmatpush2.msra.mxu0 0.0
        %1908 = vmatprep.subr.mxu0 0.0
        %1909 = vmatpush2.msra.mxu0 0.0
        %1910 = vmatprep.subr.mxu0 0.0
        %1911 = vmatpush2.msra.mxu0 0.0
        %1912 = vmatprep.subr.mxu0 0.0
        %1913 = vmatpush2.msra.mxu0 0.0
        %1914 = vmatprep.subr.mxu0 0.0
        %1915 = vmatpush2.msra.mxu0 0.0
        %1916 = vmatprep.subr.mxu0 0.0
        %1917 = vmatpush2.msra.mxu0 0.0
        %1918 = vmatprep.subr.mxu0 0.0
        %1919 = vmatpush2.msra.mxu0 0.0
        %1920 = vmatprep.subr.mxu0 0.0
        %1921 = vmatpush2.msra.mxu0 0.0
        %1922 = vmatprep.subr.mxu0 0.0
        %1923 = vmatpush2.msra.mxu0 0.0
        %1924 = vmatprep.subr.mxu0 0.0
        %1925 = vmatpush2.msra.mxu0 0.0
        %1926 = vmatprep.subr.mxu0 0.0
        %1927 = vmatpush2.msra.mxu0 0.0
        %1928 = vmatprep.subr.mxu0 0.0
        %1929 = vmatpush2.msra.mxu0 0.0
        %1930 = vmatprep.subr.mxu0 0.0
        %1931 = vmatpush2.msra.mxu0 0.0
        %1932 = vmatprep.subr.mxu0 0.0
        %1933 = vmatpush2.msra.mxu0 0.0
        %1934 = vmatprep.subr.mxu0 0.0
        %1935 = vmatpush2.msra.mxu0 0.0
        %1936 = vmatprep.subr.mxu0 0.0
        %1937 = vmatpush2.msra.mxu0 0.0
        %1938 = vmatprep.mubr.f32.mxu0 0.0
        %1939 = vmatmul.mubr.f32.gmra.mxu0 %v1869
        %v1940 = vpop.f32.mrf.mxu0
        %v1941 = vadd.f32 0.0, %v1940
        %v1942 = vpop.f32.mrf.mxu0
        %1943 = vmatprep.mubr.f32.mxu0 0.0
        %1944 = vmatmul.mubr.f32.gmra.mxu0 %v1872
        %v1945 = vpop.f32.mrf.mxu0
        %v1946 = vadd.f32 0.0, %v1945
        %v1947 = vpop.f32.mrf.mxu0
        %1948 = vdwg.mxu0
        %v1949 = vadd.f32 %v1658, %v1941
        %v1950 = vadd.f32 %v1663, %v1946
        %1951 = vrot.lane.b32.xlu0 %v1021, 32
        %v1952 = vpop.permute.xlu0 %1951
        %1953 = vrot.lane.b32.xlu0 %v1027, 32
        %v1954 = vpop.permute.xlu0 %1953
        %1955 = vrot.lane.b32.xlu0 %v1023, 32
        %v1956 = vpop.permute.xlu0 %1955
        %1957 = vrot.lane.b32.xlu0 %v1029, 32
        %v1958 = vpop.permute.xlu0 %1957
        %v1959 = vsel %vm1106, %v1952, 0
        %v1961 = vsel %vm1106, %v1954, 0
        %v1963 = vsel %vm1106, %v1956, 0
        %v1965 = vsel %vm1106, %v1958, 0
        %1967 = vmatprep.subr.mxu0 0.0
        %1968 = vmatpush1.xpose.msra.mxu0 0.0
        %1969 = vmatprep.subr.mxu0 0.0
        %1970 = vmatpush1.xpose.msra.mxu0 0.0
        %1971 = vmatprep.subr.mxu0 0.0
        %1972 = vmatpush1.xpose.msra.mxu0 0.0
        %1973 = vmatprep.subr.mxu0 0.0
        %1974 = vmatpush1.xpose.msra.mxu0 0.0
        %1975 = vmatprep.subr.mxu0 0.0
        %1976 = vmatpush1.xpose.msra.mxu0 0.0
        %1977 = vmatprep.subr.mxu0 0.0
        %1978 = vmatpush1.xpose.msra.mxu0 0.0
        %1979 = vmatprep.subr.mxu0 0.0
        %1980 = vmatpush1.xpose.msra.mxu0 0.0
        %1981 = vmatprep.subr.mxu0 0.0
        %1982 = vmatpush1.xpose.msra.mxu0 0.0
        %1983 = vmatprep.subr.mxu0 0.0
        %1984 = vmatpush1.xpose.msra.mxu0 0.0
        %1985 = vmatprep.subr.mxu0 0.0
        %1986 = vmatpush1.xpose.msra.mxu0 0.0
        %1987 = vmatprep.subr.mxu0 0.0
        %1988 = vmatpush1.xpose.msra.mxu0 0.0
        %1989 = vmatprep.subr.mxu0 0.0
        %1990 = vmatpush1.xpose.msra.mxu0 0.0
        %1991 = vmatprep.subr.mxu0 0.0
        %1992 = vmatpush1.xpose.msra.mxu0 0.0
        %1993 = vmatprep.subr.mxu0 0.0
        %1994 = vmatpush1.xpose.msra.mxu0 0.0
        %1995 = vmatprep.subr.mxu0 0.0
        %1996 = vmatpush1.xpose.msra.mxu0 %v1965
        %1997 = vmatprep.subr.mxu0 0.0
        %1998 = vmatpush1.xpose.msra.mxu0 %v1963
        %1999 = vmatprep.subr.mxu0 0.0
        %2000 = vmatpush2.xpose.msra.mxu0 0.0
        %2001 = vmatprep.subr.mxu0 0.0
        %2002 = vmatpush2.xpose.msra.mxu0 0.0
        %2003 = vmatprep.subr.mxu0 0.0
        %2004 = vmatpush2.xpose.msra.mxu0 0.0
        %2005 = vmatprep.subr.mxu0 0.0
        %2006 = vmatpush2.xpose.msra.mxu0 0.0
        %2007 = vmatprep.subr.mxu0 0.0
        %2008 = vmatpush2.xpose.msra.mxu0 0.0
        %2009 = vmatprep.subr.mxu0 0.0
        %2010 = vmatpush2.xpose.msra.mxu0 0.0
        %2011 = vmatprep.subr.mxu0 0.0
        %2012 = vmatpush2.xpose.msra.mxu0 0.0
        %2013 = vmatprep.subr.mxu0 0.0
        %2014 = vmatpush2.xpose.msra.mxu0 0.0
        %2015 = vmatprep.subr.mxu0 0.0
        %2016 = vmatpush2.xpose.msra.mxu0 0.0
        %2017 = vmatprep.subr.mxu0 0.0
        %2018 = vmatpush2.xpose.msra.mxu0 0.0
        %2019 = vmatprep.subr.mxu0 0.0
        %2020 = vmatpush2.xpose.msra.mxu0 0.0
        %2021 = vmatprep.subr.mxu0 0.0
        %2022 = vmatpush2.xpose.msra.mxu0 0.0
        %2023 = vmatprep.subr.mxu0 0.0
        %2024 = vmatpush2.xpose.msra.mxu0 0.0
        %2025 = vmatprep.subr.mxu0 0.0
        %2026 = vmatpush2.xpose.msra.mxu0 0.0
        %2027 = vmatprep.subr.mxu0 0.0
        %2028 = vmatpush2.xpose.msra.mxu0 0.0
        %2029 = vmatprep.subr.mxu0 0.0
        %2030 = vmatpush2.xpose.msra.mxu0 0.0
        %2031 = vmatprep.mubr.f32.mxu0 0.0
        %2032 = vmatmul.mubr.f32.gmra.mxu0 %v1959
        %v2033 = vpop.f32.mrf.mxu0
        %v2034 = vadd.f32 0.0, %v2033
        %v2035 = vpop.f32.mrf.mxu0
        %2036 = vmatprep.mubr.f32.mxu0 0.0
        %2037 = vmatmul.mubr.f32.gmra.mxu0 %v1961
        %v2038 = vpop.f32.mrf.mxu0
        %v2039 = vadd.f32 0.0, %v2038
        %v2040 = vpop.f32.mrf.mxu0
        %2041 = vdwg.mxu0
        %v2042 = vmul.f32 %v2034, 0.17677669
        %v2043 = vmul.f32 %v2039, 0.17677669
        %v2044 = vsel %vm1196, %v2042, -inf
        %2045 = vmax.xlane.f32.xlu0 %v2044
        %v2046 = vpop.xlane.xlu0 %2045
        %v2047 = vsel %vm1196, %v2043, -inf
        %2048 = vmax.xlane.f32.xlu0 %v2047
        %v2049 = vpop.xlane.xlu0 %2048
        %v2050 = vsub.f32 %v2042, %v2046
        %v2051 = vsub.f32 %v2043, %v2049
        %v2052 = vmul.f32 %v2050, 1.442695
        %v2053 = vpow.pop %v2052
        %v2054 = vmul.f32 %v2051, 1.442695
        %v2055 = vpow.pop %v2054
        %v2056 = vsel %vm1196, %v2053, 0.0
        %2057 = vadd.xlane.f32.xlu0 %v2056
        %v2058 = vpop.xlane.xlu0 %2057
        %v2059 = vsel %vm1196, %v2055, 0.0
        %2060 = vadd.xlane.f32.xlu0 %v2059
        %v2061 = vpop.xlane.xlu0 %2060
        %v2062 = vrcp.pop %v2058
        %v2063 = vrcp.pop %v2061
        %v2064 = vmul.f32 %v2053, %v2062
        %v2065 = vmul.f32 %v2055, %v2063
        %2066 = vrot.lane.b32.xlu0 %v1098, 32
        %v2067 = vpop.permute.xlu0 %2066
        %2068 = vrot.lane.b32.xlu0 %v1103, 32
        %v2069 = vpop.permute.xlu0 %2068
        %v2073 = vsel %vm1196, %v2064, 0
        %v2076 = vsel %vm1196, %v2065, 0
        %2078 = vmatprep.subr.mxu0 0.0
        %2079 = vmatpush1.msra.mxu0 0.0
        %2080 = vmatprep.subr.mxu0 0.0
        %2081 = vmatpush1.msra.mxu0 0.0
        %2082 = vmatprep.subr.mxu0 0.0
        %2083 = vmatpush1.msra.mxu0 0.0
        %2084 = vmatprep.subr.mxu0 0.0
        %2085 = vmatpush1.msra.mxu0 0.0
        %2086 = vmatprep.subr.mxu0 0.0
        %2087 = vmatpush1.msra.mxu0 0.0
        %2088 = vmatprep.subr.mxu0 0.0
        %2089 = vmatpush1.msra.mxu0 0.0
        %2090 = vmatprep.subr.mxu0 0.0
        %2091 = vmatpush1.msra.mxu0 0.0
        %2092 = vmatprep.subr.mxu0 0.0
        %2093 = vmatpush1.msra.mxu0 0.0
        %2094 = vmatprep.subr.mxu0 0.0
        %2095 = vmatpush1.msra.mxu0 0.0
        %2096 = vmatprep.subr.mxu0 0.0
        %2097 = vmatpush1.msra.mxu0 0.0
        %2098 = vmatprep.subr.mxu0 0.0
        %2099 = vmatpush1.msra.mxu0 0.0
        %2100 = vmatprep.subr.mxu0 0.0
        %2101 = vmatpush1.msra.mxu0 0.0
        %2102 = vmatprep.subr.mxu0 0.0
        %2103 = vmatpush1.msra.mxu0 0.0
        %2104 = vmatprep.subr.mxu0 0.0
        %2105 = vmatpush1.msra.mxu0 0.0
        %2106 = vmatprep.subr.mxu0 0.0
        %2107 = vmatpush1.msra.mxu0 %v2069
        %2108 = vmatprep.subr.mxu0 0.0
        %2109 = vmatpush1.msra.mxu0 %v2067
        %2110 = vmatprep.subr.mxu0 0.0
        %2111 = vmatpush2.msra.mxu0 0.0
        %2112 = vmatprep.subr.mxu0 0.0
        %2113 = vmatpush2.msra.mxu0 0.0
        %2114 = vmatprep.subr.mxu0 0.0
        %2115 = vmatpush2.msra.mxu0 0.0
        %2116 = vmatprep.subr.mxu0 0.0
        %2117 = vmatpush2.msra.mxu0 0.0
        %2118 = vmatprep.subr.mxu0 0.0
        %2119 = vmatpush2.msra.mxu0 0.0
        %2120 = vmatprep.subr.mxu0 0.0
        %2121 = vmatpush2.msra.mxu0 0.0
        %2122 = vmatprep.subr.mxu0 0.0
        %2123 = vmatpush2.msra.mxu0 0.0
        %2124 = vmatprep.subr.mxu0 0.0
        %2125 = vmatpush2.msra.mxu0 0.0
        %2126 = vmatprep.subr.mxu0 0.0
        %2127 = vmatpush2.msra.mxu0 0.0
        %2128 = vmatprep.subr.mxu0 0.0
        %2129 = vmatpush2.msra.mxu0 0.0
        %2130 = vmatprep.subr.mxu0 0.0
        %2131 = vmatpush2.msra.mxu0 0.0
        %2132 = vmatprep.subr.mxu0 0.0
        %2133 = vmatpush2.msra.mxu0 0.0
        %2134 = vmatprep.subr.mxu0 0.0
        %2135 = vmatpush2.msra.mxu0 0.0
        %2136 = vmatprep.subr.mxu0 0.0
        %2137 = vmatpush2.msra.mxu0 0.0
        %2138 = vmatprep.subr.mxu0 0.0
        %2139 = vmatpush2.msra.mxu0 0.0
        %2140 = vmatprep.subr.mxu0 0.0
        %2141 = vmatpush2.msra.mxu0 0.0
        %2142 = vmatprep.mubr.f32.mxu0 0.0
        %2143 = vmatmul.mubr.f32.gmra.mxu0 %v2073
        %v2144 = vpop.f32.mrf.mxu0
        %v2145 = vadd.f32 0.0, %v2144
        %v2146 = vpop.f32.mrf.mxu0
        %2147 = vmatprep.mubr.f32.mxu0 0.0
        %2148 = vmatmul.mubr.f32.gmra.mxu0 %v2076
        %v2149 = vpop.f32.mrf.mxu0
        %v2150 = vadd.f32 0.0, %v2149
        %v2151 = vpop.f32.mrf.mxu0
        %2152 = vdwg.mxu0
        %v2154 = vsel %vm1106, %v2145, 0
        %v2157 = vsel %vm1106, %v2150, 0
        %2159 = vmatprep.subr.mxu0 0.0
        %2160 = vmatpush1.msra.mxu0 0.0
        %2161 = vmatprep.subr.mxu0 0.0
        %2162 = vmatpush1.msra.mxu0 0.0
        %2163 = vmatprep.subr.mxu0 0.0
        %2164 = vmatpush1.msra.mxu0 0.0
        %2165 = vmatprep.subr.mxu0 0.0
        %2166 = vmatpush1.msra.mxu0 0.0
        %2167 = vmatprep.subr.mxu0 0.0
        %2168 = vmatpush1.msra.mxu0 0.0
        %2169 = vmatprep.subr.mxu0 0.0
        %2170 = vmatpush1.msra.mxu0 0.0
        %2171 = vmatprep.subr.mxu0 0.0
        %2172 = vmatpush1.msra.mxu0 0.0
        %2173 = vmatprep.subr.mxu0 0.0
        %2174 = vmatpush1.msra.mxu0 0.0
        %2175 = vmatprep.subr.mxu0 0.0
        %2176 = vmatpush1.msra.mxu0 0.0
        %2177 = vmatprep.subr.mxu0 0.0
        %2178 = vmatpush1.msra.mxu0 0.0
        %2179 = vmatprep.subr.mxu0 0.0
        %2180 = vmatpush1.msra.mxu0 0.0
        %2181 = vmatprep.subr.mxu0 0.0
        %2182 = vmatpush1.msra.mxu0 0.0
        %2183 = vmatprep.subr.mxu0 0.0
        %2184 = vmatpush1.msra.mxu0 %v769
        %2185 = vmatprep.subr.mxu0 0.0
        %2186 = vmatpush1.msra.mxu0 %v768
        %2187 = vmatprep.subr.mxu0 0.0
        %2188 = vmatpush1.msra.mxu0 %v767
        %2189 = vmatprep.subr.mxu0 0.0
        %2190 = vmatpush1.msra.mxu0 %v766
        %2191 = vmatprep.subr.mxu0 0.0
        %2192 = vmatpush2.msra.mxu0 0.0
        %2193 = vmatprep.subr.mxu0 0.0
        %2194 = vmatpush2.msra.mxu0 0.0
        %2195 = vmatprep.subr.mxu0 0.0
        %2196 = vmatpush2.msra.mxu0 0.0
        %2197 = vmatprep.subr.mxu0 0.0
        %2198 = vmatpush2.msra.mxu0 0.0
        %2199 = vmatprep.subr.mxu0 0.0
        %2200 = vmatpush2.msra.mxu0 0.0
        %2201 = vmatprep.subr.mxu0 0.0
        %2202 = vmatpush2.msra.mxu0 0.0
        %2203 = vmatprep.subr.mxu0 0.0
        %2204 = vmatpush2.msra.mxu0 0.0
        %2205 = vmatprep.subr.mxu0 0.0
        %2206 = vmatpush2.msra.mxu0 0.0
        %2207 = vmatprep.subr.mxu0 0.0
        %2208 = vmatpush2.msra.mxu0 0.0
        %2209 = vmatprep.subr.mxu0 0.0
        %2210 = vmatpush2.msra.mxu0 0.0
        %2211 = vmatprep.subr.mxu0 0.0
        %2212 = vmatpush2.msra.mxu0 0.0
        %2213 = vmatprep.subr.mxu0 0.0
        %2214 = vmatpush2.msra.mxu0 0.0
        %2215 = vmatprep.subr.mxu0 0.0
        %2216 = vmatpush2.msra.mxu0 0.0
        %2217 = vmatprep.subr.mxu0 0.0
        %2218 = vmatpush2.msra.mxu0 0.0
        %2219 = vmatprep.subr.mxu0 0.0
        %2220 = vmatpush2.msra.mxu0 0.0
        %2221 = vmatprep.subr.mxu0 0.0
        %2222 = vmatpush2.msra.mxu0 0.0
        %2223 = vmatprep.mubr.f32.mxu0 0.0
        %2224 = vmatmul.mubr.f32.gmra.mxu0 %v2154
        %v2225 = vpop.f32.mrf.mxu0
        %v2226 = vadd.f32 0.0, %v2225
        %v2227 = vpop.f32.mrf.mxu0
        %2228 = vmatprep.mubr.f32.mxu0 0.0
        %2229 = vmatmul.mubr.f32.gmra.mxu0 %v2157
        %v2230 = vpop.f32.mrf.mxu0
        %v2231 = vadd.f32 0.0, %v2230
        %v2232 = vpop.f32.mrf.mxu0
        %2233 = vdwg.mxu0
        %v2234 = vadd.f32 %v1949, %v2226
        %v2235 = vadd.f32 %v1950, %v2231
        %v2236 = vadd.f32 %v701, %v2234
        %v2237 = vadd.f32 %v702, %v2235
        %v2238 = vlaneseq
        %v2239 = vshrl.u32 %v2238, 7
        %v2240 = vsub.s32 0, %v2239
        %v2241 = vrot.slane %v770, %v2240
        %v2242 = vadd.f32 %v2236, %v2241
        %v2243 = vadd.f32 %v2237, %v2241
        %2244 = vadd.xlane.f32.xlu0 %v2242
        %v2245 = vpop.xlane.xlu0 %2244
        %2246 = vadd.xlane.f32.xlu0 %v2243
        %v2247 = vpop.xlane.xlu0 %2246
        %v2248 = vmul.f32 %v2245, %v907
        %v2249 = vmul.f32 %v2247, %v907
        %v2250 = vsub.f32 %v2242, %v2248
        %v2251 = vsub.f32 %v2243, %v2249
        %v2252 = vmul.f32 %v2250, %v2250
        %v2253 = vmul.f32 %v2251, %v2251
        %2254 = vadd.xlane.f32.xlu0 %v2252
        %v2255 = vpop.xlane.xlu0 %2254
        %2256 = vadd.xlane.f32.xlu0 %v2253
        %v2257 = vpop.xlane.xlu0 %2256
        %v2258 = vmul.f32 %v2255, %v907
        %v2259 = vmul.f32 %v2257, %v907
        %v2260 = vadd.f32 %v2258, 1e-05
        %v2261 = vadd.f32 %v2259, 1e-05
        %v2262 = vrsqrt.pop %v2260
        %v2263 = vrsqrt.pop %v2261
        %v2264 = vmul.f32 %v2250, %v2262
        %v2265 = vmul.f32 %v2251, %v2263
        %v2266 = vlaneseq
        %v2267 = vshrl.u32 %v2266, 7
        %v2268 = vsub.s32 0, %v2267
        %v2269 = vrot.slane %v771, %v2268
        %v2270 = vmul.f32 %v2264, %v2269
        %v2271 = vmul.f32 %v2265, %v2269
        %v2272 = vlaneseq
        %v2273 = vshrl.u32 %v2272, 7
        %v2274 = vsub.s32 0, %v2273
        %v2275 = vrot.slane %v772, %v2274
        %v2276 = vadd.f32 %v2270, %v2275
        %v2277 = vadd.f32 %v2271, %v2275
        %v2279 = vlaneseq
        %v2280 = vshrl.u32 %v2279, 7
        %v2281 = vsub.s32 0, %v2280
        %v2282 = vrot.slane %v837, %v2281
        %v2283 = vlaneseq
        %v2284 = vshrl.u32 %v2283, 7
        %v2285 = vsub.s32 1, %v2284
        %v2286 = vrot.slane %v837, %v2285
        %v2287 = vlaneseq
        %v2288 = vshrl.u32 %v2287, 7
        %v2289 = vsub.s32 2, %v2288
        %v2290 = vrot.slane %v837, %v2289
        %v2291 = vlaneseq
        %v2292 = vshrl.u32 %v2291, 7
        %v2293 = vsub.s32 3, %v2292
        %v2294 = vrot.slane %v837, %v2293
        %2299 = vmatprep.subr.mxu0 %v834
        %2300 = vmatpush1.msra.mxu0 %v833
        %2301 = vmatprep.subr.mxu0 %v830
        %2302 = vmatpush1.msra.mxu0 %v829
        %2303 = vmatprep.subr.mxu0 %v826
        %2304 = vmatpush1.msra.mxu0 %v825
        %2305 = vmatprep.subr.mxu0 %v822
        %2306 = vmatpush1.msra.mxu0 %v821
        %2307 = vmatprep.subr.mxu0 %v818
        %2308 = vmatpush1.msra.mxu0 %v817
        %2309 = vmatprep.subr.mxu0 %v814
        %2310 = vmatpush1.msra.mxu0 %v813
        %2311 = vmatprep.subr.mxu0 %v810
        %2312 = vmatpush1.msra.mxu0 %v809
        %2313 = vmatprep.subr.mxu0 %v806
        %2314 = vmatpush1.msra.mxu0 %v805
        %2315 = vmatprep.subr.mxu0 %v802
        %2316 = vmatpush1.msra.mxu0 %v801
        %2317 = vmatprep.subr.mxu0 %v798
        %2318 = vmatpush1.msra.mxu0 %v797
        %2319 = vmatprep.subr.mxu0 %v794
        %2320 = vmatpush1.msra.mxu0 %v793
        %2321 = vmatprep.subr.mxu0 %v790
        %2322 = vmatpush1.msra.mxu0 %v789
        %2323 = vmatprep.subr.mxu0 %v786
        %2324 = vmatpush1.msra.mxu0 %v785
        %2325 = vmatprep.subr.mxu0 %v782
        %2326 = vmatpush1.msra.mxu0 %v781
        %2327 = vmatprep.subr.mxu0 %v778
        %2328 = vmatpush1.msra.mxu0 %v777
        %2329 = vmatprep.subr.mxu0 %v774
        %2330 = vmatpush1.msra.mxu0 %v773
        %2331 = vmatprep.subr.mxu0 0.0
        %2332 = vmatpush2.msra.mxu0 0.0
        %2333 = vmatprep.subr.mxu0 0.0
        %2334 = vmatpush2.msra.mxu0 0.0
        %2335 = vmatprep.subr.mxu0 0.0
        %2336 = vmatpush2.msra.mxu0 0.0
        %2337 = vmatprep.subr.mxu0 0.0
        %2338 = vmatpush2.msra.mxu0 0.0
        %2339 = vmatprep.subr.mxu0 0.0
        %2340 = vmatpush2.msra.mxu0 0.0
        %2341 = vmatprep.subr.mxu0 0.0
        %2342 = vmatpush2.msra.mxu0 0.0
        %2343 = vmatprep.subr.mxu0 0.0
        %2344 = vmatpush2.msra.mxu0 0.0
        %2345 = vmatprep.subr.mxu0 0.0
        %2346 = vmatpush2.msra.mxu0 0.0
        %2347 = vmatprep.subr.mxu0 0.0
        %2348 = vmatpush2.msra.mxu0 0.0
        %2349 = vmatprep.subr.mxu0 0.0
        %2350 = vmatpush2.msra.mxu0 0.0
        %2351 = vmatprep.subr.mxu0 0.0
        %2352 = vmatpush2.msra.mxu0 0.0
        %2353 = vmatprep.subr.mxu0 0.0
        %2354 = vmatpush2.msra.mxu0 0.0
        %2355 = vmatprep.subr.mxu0 0.0
        %2356 = vmatpush2.msra.mxu0 0.0
        %2357 = vmatprep.subr.mxu0 0.0
        %2358 = vmatpush2.msra.mxu0 0.0
        %2359 = vmatprep.subr.mxu0 0.0
        %2360 = vmatpush2.msra.mxu0 0.0
        %2361 = vmatprep.subr.mxu0 0.0
        %2362 = vmatpush2.msra.mxu0 0.0
        %2363 = vmatprep.mubr.f32.mxu0 0.0
        %2364 = vmatmul.mubr.f32.gmra.mxu0 %v2276
        %v2365 = vpop.f32.mrf.mxu0
        %v2366 = vadd.f32 %v2282, %v2365
        %v2367 = vpop.f32.mrf.mxu0
        %v2368 = vadd.f32 %v2286, %v2367
        %2369 = vmatprep.mubr.f32.mxu0 0.0
        %2370 = vmatmul.mubr.f32.gmra.mxu0 %v2277
        %v2371 = vpop.f32.mrf.mxu0
        %v2372 = vadd.f32 %v2282, %v2371
        %v2373 = vpop.f32.mrf.mxu0
        %v2374 = vadd.f32 %v2286, %v2373
        %2375 = vdwg.mxu0
        %2376 = vmatprep.subr.mxu0 %v836
        %2377 = vmatpush1.msra.mxu0 %v835
        %2378 = vmatprep.subr.mxu0 %v832
        %2379 = vmatpush1.msra.mxu0 %v831
        %2380 = vmatprep.subr.mxu0 %v828
        %2381 = vmatpush1.msra.mxu0 %v827
        %2382 = vmatprep.subr.mxu0 %v824
        %2383 = vmatpush1.msra.mxu0 %v823
        %2384 = vmatprep.subr.mxu0 %v820
        %2385 = vmatpush1.msra.mxu0 %v819
        %2386 = vmatprep.subr.mxu0 %v816
        %2387 = vmatpush1.msra.mxu0 %v815
        %2388 = vmatprep.subr.mxu0 %v812
        %2389 = vmatpush1.msra.mxu0 %v811
        %2390 = vmatprep.subr.mxu0 %v808
        %2391 = vmatpush1.msra.mxu0 %v807
        %2392 = vmatprep.subr.mxu0 %v804
        %2393 = vmatpush1.msra.mxu0 %v803
        %2394 = vmatprep.subr.mxu0 %v800
        %2395 = vmatpush1.msra.mxu0 %v799
        %2396 = vmatprep.subr.mxu0 %v796
        %2397 = vmatpush1.msra.mxu0 %v795
        %2398 = vmatprep.subr.mxu0 %v792
        %2399 = vmatpush1.msra.mxu0 %v791
        %2400 = vmatprep.subr.mxu0 %v788
        %2401 = vmatpush1.msra.mxu0 %v787
        %2402 = vmatprep.subr.mxu0 %v784
        %2403 = vmatpush1.msra.mxu0 %v783
        %2404 = vmatprep.subr.mxu0 %v780
        %2405 = vmatpush1.msra.mxu0 %v779
        %2406 = vmatprep.subr.mxu0 %v776
        %2407 = vmatpush1.msra.mxu0 %v775
        %2408 = vmatprep.subr.mxu0 0.0
        %2409 = vmatpush2.msra.mxu0 0.0
        %2410 = vmatprep.subr.mxu0 0.0
        %2411 = vmatpush2.msra.mxu0 0.0
        %2412 = vmatprep.subr.mxu0 0.0
        %2413 = vmatpush2.msra.mxu0 0.0
        %2414 = vmatprep.subr.mxu0 0.0
        %2415 = vmatpush2.msra.mxu0 0.0
        %2416 = vmatprep.subr.mxu0 0.0
        %2417 = vmatpush2.msra.mxu0 0.0
        %2418 = vmatprep.subr.mxu0 0.0
        %2419 = vmatpush2.msra.mxu0 0.0
        %2420 = vmatprep.subr.mxu0 0.0
        %2421 = vmatpush2.msra.mxu0 0.0
        %2422 = vmatprep.subr.mxu0 0.0
        %2423 = vmatpush2.msra.mxu0 0.0
        %2424 = vmatprep.subr.mxu0 0.0
        %2425 = vmatpush2.msra.mxu0 0.0
        %2426 = vmatprep.subr.mxu0 0.0
        %2427 = vmatpush2.msra.mxu0 0.0
        %2428 = vmatprep.subr.mxu0 0.0
        %2429 = vmatpush2.msra.mxu0 0.0
        %2430 = vmatprep.subr.mxu0 0.0
        %2431 = vmatpush2.msra.mxu0 0.0
        %2432 = vmatprep.subr.mxu0 0.0
        %2433 = vmatpush2.msra.mxu0 0.0
        %2434 = vmatprep.subr.mxu0 0.0
        %2435 = vmatpush2.msra.mxu0 0.0
        %2436 = vmatprep.subr.mxu0 0.0
        %2437 = vmatpush2.msra.mxu0 0.0
        %2438 = vmatprep.subr.mxu0 0.0
        %2439 = vmatpush2.msra.mxu0 0.0
        %2440 = vmatprep.mubr.f32.mxu0 0.0
        %2441 = vmatmul.mubr.f32.gmra.mxu0 %v2276
        %v2442 = vpop.f32.mrf.mxu0
        %v2443 = vadd.f32 %v2290, %v2442
        %v2444 = vpop.f32.mrf.mxu0
        %v2445 = vadd.f32 %v2294, %v2444
        %2446 = vmatprep.mubr.f32.mxu0 0.0
        %2447 = vmatmul.mubr.f32.gmra.mxu0 %v2277
        %v2448 = vpop.f32.mrf.mxu0
        %v2449 = vadd.f32 %v2290, %v2448
        %v2450 = vpop.f32.mrf.mxu0
        %v2451 = vadd.f32 %v2294, %v2450
        %2452 = vdwg.mxu0
        %v2453 = vmul.f32 %v2366, 0.5
        %v2454 = vmul.f32 %v2368, 0.5
        %v2455 = vmul.f32 %v2443, 0.5
        %v2456 = vmul.f32 %v2445, 0.5
        %v2457 = vmul.f32 %v2372, 0.5
        %v2458 = vmul.f32 %v2374, 0.5
        %v2459 = vmul.f32 %v2449, 0.5
        %v2460 = vmul.f32 %v2451, 0.5
        %v2461 = vmul.f32 %v2366, 0.044715
        %v2462 = vmul.f32 %v2368, 0.044715
        %v2463 = vmul.f32 %v2443, 0.044715
        %v2464 = vmul.f32 %v2445, 0.044715
        %v2465 = vmul.f32 %v2372, 0.044715
        %v2466 = vmul.f32 %v2374, 0.044715
        %v2467 = vmul.f32 %v2449, 0.044715
        %v2468 = vmul.f32 %v2451, 0.044715
        %v2469 = vmul.f32 %v2461, %v2366
        %v2470 = vmul.f32 %v2462, %v2368
        %v2471 = vmul.f32 %v2463, %v2443
        %v2472 = vmul.f32 %v2464, %v2445
        %v2473 = vmul.f32 %v2465, %v2372
        %v2474 = vmul.f32 %v2466, %v2374
        %v2475 = vmul.f32 %v2467, %v2449
        %v2476 = vmul.f32 %v2468, %v2451
        %v2477 = vmul.f32 %v2469, %v2366
        %v2478 = vmul.f32 %v2470, %v2368
        %v2479 = vmul.f32 %v2471, %v2443
        %v2480 = vmul.f32 %v2472, %v2445
        %v2481 = vmul.f32 %v2473, %v2372
        %v2482 = vmul.f32 %v2474, %v2374
        %v2483 = vmul.f32 %v2475, %v2449
        %v2484 = vmul.f32 %v2476, %v2451
        %v2485 = vadd.f32 %v2366, %v2477
        %v2486 = vadd.f32 %v2368, %v2478
        %v2487 = vadd.f32 %v2443, %v2479
        %v2488 = vadd.f32 %v2445, %v2480
        %v2489 = vadd.f32 %v2372, %v2481
        %v2490 = vadd.f32 %v2374, %v2482
        %v2491 = vadd.f32 %v2449, %v2483
        %v2492 = vadd.f32 %v2451, %v2484
        %v2493 = vmul.f32 %v2485, 0.7978846
        %v2494 = vmul.f32 %v2486, 0.7978846
        %v2495 = vmul.f32 %v2487, 0.7978846
        %v2496 = vmul.f32 %v2488, 0.7978846
        %v2497 = vmul.f32 %v2489, 0.7978846
        %v2498 = vmul.f32 %v2490, 0.7978846
        %v2499 = vmul.f32 %v2491, 0.7978846
        %v2500 = vmul.f32 %v2492, 0.7978846
        %v2501 = vtanh.pop %v2493
        %v2502 = vtanh.pop %v2494
        %v2503 = vtanh.pop %v2495
        %v2504 = vtanh.pop %v2496
        %v2505 = vtanh.pop %v2497
        %v2506 = vtanh.pop %v2498
        %v2507 = vtanh.pop %v2499
        %v2508 = vtanh.pop %v2500
        %v2509 = vadd.f32 %v2501, 1.0
        %v2510 = vadd.f32 %v2502, 1.0
        %v2511 = vadd.f32 %v2503, 1.0
        %v2512 = vadd.f32 %v2504, 1.0
        %v2513 = vadd.f32 %v2505, 1.0
        %v2514 = vadd.f32 %v2506, 1.0
        %v2515 = vadd.f32 %v2507, 1.0
        %v2516 = vadd.f32 %v2508, 1.0
        %v2517 = vmul.f32 %v2453, %v2509
        %v2518 = vmul.f32 %v2454, %v2510
        %v2519 = vmul.f32 %v2455, %v2511
        %v2520 = vmul.f32 %v2456, %v2512
        %v2521 = vmul.f32 %v2457, %v2513
        %v2522 = vmul.f32 %v2458, %v2514
        %v2523 = vmul.f32 %v2459, %v2515
        %v2524 = vmul.f32 %v2460, %v2516
        %v2525 = vlaneseq
        %v2526 = vshrl.u32 %v2525, 7
        %v2527 = vsub.s32 0, %v2526
        %v2528 = vrot.slane %v902, %v2527
        %2529 = vmatprep.subr.mxu0 0.0
        %2530 = vmatpush1.msra.mxu0 %v853
        %2531 = vmatprep.subr.mxu0 0.0
        %2532 = vmatpush1.msra.mxu0 %v852
        %2533 = vmatprep.subr.mxu0 0.0
        %2534 = vmatpush1.msra.mxu0 %v851
        %2535 = vmatprep.subr.mxu0 0.0
        %2536 = vmatpush1.msra.mxu0 %v850
        %2537 = vmatprep.subr.mxu0 0.0
        %2538 = vmatpush1.msra.mxu0 %v849
        %2539 = vmatprep.subr.mxu0 0.0
        %2540 = vmatpush1.msra.mxu0 %v848
        %2541 = vmatprep.subr.mxu0 0.0
        %2542 = vmatpush1.msra.mxu0 %v847
        %2543 = vmatprep.subr.mxu0 0.0
        %2544 = vmatpush1.msra.mxu0 %v846
        %2545 = vmatprep.subr.mxu0 0.0
        %2546 = vmatpush1.msra.mxu0 %v845
        %2547 = vmatprep.subr.mxu0 0.0
        %2548 = vmatpush1.msra.mxu0 %v844
        %2549 = vmatprep.subr.mxu0 0.0
        %2550 = vmatpush1.msra.mxu0 %v843
        %2551 = vmatprep.subr.mxu0 0.0
        %2552 = vmatpush1.msra.mxu0 %v842
        %2553 = vmatprep.subr.mxu0 0.0
        %2554 = vmatpush1.msra.mxu0 %v841
        %2555 = vmatprep.subr.mxu0 0.0
        %2556 = vmatpush1.msra.mxu0 %v840
        %2557 = vmatprep.subr.mxu0 0.0
        %2558 = vmatpush1.msra.mxu0 %v839
        %2559 = vmatprep.subr.mxu0 0.0
        %2560 = vmatpush1.msra.mxu0 %v838
        %2561 = vmatprep.subr.mxu0 0.0
        %2562 = vmatpush2.msra.mxu0 %v869
        %2563 = vmatprep.subr.mxu0 0.0
        %2564 = vmatpush2.msra.mxu0 %v868
        %2565 = vmatprep.subr.mxu0 0.0
        %2566 = vmatpush2.msra.mxu0 %v867
        %2567 = vmatprep.subr.mxu0 0.0
        %2568 = vmatpush2.msra.mxu0 %v866
        %2569 = vmatprep.subr.mxu0 0.0
        %2570 = vmatpush2.msra.mxu0 %v865
        %2571 = vmatprep.subr.mxu0 0.0
        %2572 = vmatpush2.msra.mxu0 %v864
        %2573 = vmatprep.subr.mxu0 0.0
        %2574 = vmatpush2.msra.mxu0 %v863
        %2575 = vmatprep.subr.mxu0 0.0
        %2576 = vmatpush2.msra.mxu0 %v862
        %2577 = vmatprep.subr.mxu0 0.0
        %2578 = vmatpush2.msra.mxu0 %v861
        %2579 = vmatprep.subr.mxu0 0.0
        %2580 = vmatpush2.msra.mxu0 %v860
        %2581 = vmatprep.subr.mxu0 0.0
        %2582 = vmatpush2.msra.mxu0 %v859
        %2583 = vmatprep.subr.mxu0 0.0
        %2584 = vmatpush2.msra.mxu0 %v858
        %2585 = vmatprep.subr.mxu0 0.0
        %2586 = vmatpush2.msra.mxu0 %v857
        %2587 = vmatprep.subr.mxu0 0.0
        %2588 = vmatpush2.msra.mxu0 %v856
        %2589 = vmatprep.subr.mxu0 0.0
        %2590 = vmatpush2.msra.mxu0 %v855
        %2591 = vmatprep.subr.mxu0 0.0
        %2592 = vmatpush2.msra.mxu0 %v854
        %2593 = vmatprep.mubr.f32.mxu0 %v2518
        %2594 = vmatmul.mubr.f32.gmra.mxu0 %v2517
        %v2595 = vpop.f32.mrf.mxu0
        %v2596 = vadd.f32 %v2528, %v2595
        %v2597 = vpop.f32.mrf.mxu0
        %2598 = vmatprep.mubr.f32.mxu0 %v2522
        %2599 = vmatmul.mubr.f32.gmra.mxu0 %v2521
        %v2600 = vpop.f32.mrf.mxu0
        %v2601 = vadd.f32 %v2528, %v2600
        %v2602 = vpop.f32.mrf.mxu0
        %2603 = vdwg.mxu0
        %2604 = vmatprep.subr.mxu0 0.0
        %2605 = vmatpush1.msra.mxu0 %v885
        %2606 = vmatprep.subr.mxu0 0.0
        %2607 = vmatpush1.msra.mxu0 %v884
        %2608 = vmatprep.subr.mxu0 0.0
        %2609 = vmatpush1.msra.mxu0 %v883
        %2610 = vmatprep.subr.mxu0 0.0
        %2611 = vmatpush1.msra.mxu0 %v882
        %2612 = vmatprep.subr.mxu0 0.0
        %2613 = vmatpush1.msra.mxu0 %v881
        %2614 = vmatprep.subr.mxu0 0.0
        %2615 = vmatpush1.msra.mxu0 %v880
        %2616 = vmatprep.subr.mxu0 0.0
        %2617 = vmatpush1.msra.mxu0 %v879
        %2618 = vmatprep.subr.mxu0 0.0
        %2619 = vmatpush1.msra.mxu0 %v878
        %2620 = vmatprep.subr.mxu0 0.0
        %2621 = vmatpush1.msra.mxu0 %v877
        %2622 = vmatprep.subr.mxu0 0.0
        %2623 = vmatpush1.msra.mxu0 %v876
        %2624 = vmatprep.subr.mxu0 0.0
        %2625 = vmatpush1.msra.mxu0 %v875
        %2626 = vmatprep.subr.mxu0 0.0
        %2627 = vmatpush1.msra.mxu0 %v874
        %2628 = vmatprep.subr.mxu0 0.0
        %2629 = vmatpush1.msra.mxu0 %v873
        %2630 = vmatprep.subr.mxu0 0.0
        %2631 = vmatpush1.msra.mxu0 %v872
        %2632 = vmatprep.subr.mxu0 0.0
        %2633 = vmatpush1.msra.mxu0 %v871
        %2634 = vmatprep.subr.mxu0 0.0
        %2635 = vmatpush1.msra.mxu0 %v870
        %2636 = vmatprep.subr.mxu0 0.0
        %2637 = vmatpush2.msra.mxu0 %v901
        %2638 = vmatprep.subr.mxu0 0.0
        %2639 = vmatpush2.msra.mxu0 %v900
        %2640 = vmatprep.subr.mxu0 0.0
        %2641 = vmatpush2.msra.mxu0 %v899
        %2642 = vmatprep.subr.mxu0 0.0
        %2643 = vmatpush2.msra.mxu0 %v898
        %2644 = vmatprep.subr.mxu0 0.0
        %2645 = vmatpush2.msra.mxu0 %v897
        %2646 = vmatprep.subr.mxu0 0.0
        %2647 = vmatpush2.msra.mxu0 %v896
        %2648 = vmatprep.subr.mxu0 0.0
        %2649 = vmatpush2.msra.mxu0 %v895
        %2650 = vmatprep.subr.mxu0 0.0
        %2651 = vmatpush2.msra.mxu0 %v894
        %2652 = vmatprep.subr.mxu0 0.0
        %2653 = vmatpush2.msra.mxu0 %v893
        %2654 = vmatprep.subr.mxu0 0.0
        %2655 = vmatpush2.msra.mxu0 %v892
        %2656 = vmatprep.subr.mxu0 0.0
        %2657 = vmatpush2.msra.mxu0 %v891
        %2658 = vmatprep.subr.mxu0 0.0
        %2659 = vmatpush2.msra.mxu0 %v890
        %2660 = vmatprep.subr.mxu0 0.0
        %2661 = vmatpush2.msra.mxu0 %v889
        %2662 = vmatprep.subr.mxu0 0.0
        %2663 = vmatpush2.msra.mxu0 %v888
        %2664 = vmatprep.subr.mxu0 0.0
        %2665 = vmatpush2.msra.mxu0 %v887
        %2666 = vmatprep.subr.mxu0 0.0
        %2667 = vmatpush2.msra.mxu0 %v886
        %2668 = vmatprep.mubr.f32.mxu0 %v2520
        %2669 = vmatmul.mubr.f32.gmra.mxu0 %v2519
        %v2670 = vpop.f32.mrf.mxu0
        %v2671 = vadd.f32 %v2596, %v2670
        %v2672 = vpop.f32.mrf.mxu0
        %2673 = vmatprep.mubr.f32.mxu0 %v2524
        %2674 = vmatmul.mubr.f32.gmra.mxu0 %v2523
        %v2675 = vpop.f32.mrf.mxu0
        %v2676 = vadd.f32 %v2601, %v2675
        %v2677 = vpop.f32.mrf.mxu0
        %2678 = vdwg.mxu0
        %v2679 = vadd.f32 %v2242, %v2671
        %v2680 = vadd.f32 %v2243, %v2676
        %v2681 = vld [vmem:[%s4 + $0x1] sm:$0x1]
        %v2682 = vld [vmem:[%s5 + $0x1] sm:$0x1]
        %s2683 = scalar_lea.vmem [#allocation2], 384
        %v2684 = vld [vmem:[%s2683] sm:$0xff]
        %v2685 = vld [vmem:[%s2683 + $0x8] sm:$0xff]
        %v2686 = vld [vmem:[%s2683 + $0x10] sm:$0xff]
        %v2687 = vld [vmem:[%s2683 + $0x18] sm:$0xff]
        %v2688 = vld [vmem:[%s2683 + $0x20] sm:$0xff]
        %v2689 = vld [vmem:[%s2683 + $0x28] sm:$0xff]
        %v2690 = vld [vmem:[%s2683 + $0x30] sm:$0xff]
        %v2691 = vld [vmem:[%s2683 + $0x38] sm:$0xff]
        %v2692 = vld [vmem:[%s2683 + $0x40] sm:$0xff]
        %v2693 = vld [vmem:[%s2683 + $0x48] sm:$0xff]
        %v2694 = vld [vmem:[%s2683 + $0x50] sm:$0xff]
        %v2695 = vld [vmem:[%s2683 + $0x58] sm:$0xff]
        %v2696 = vld [vmem:[%s2683 + $0x60] sm:$0xff]
        %v2697 = vld [vmem:[%s2683 + $0x68] sm:$0xff]
        %v2698 = vld [vmem:[%s2683 + $0x70] sm:$0xff]
        %v2699 = vld [vmem:[%s2683 + $0x78] sm:$0xff]
        %v2700 = vld [vmem:[%s2683 + $0x80] sm:$0xff]
        %v2701 = vld [vmem:[%s2683 + $0x88] sm:$0xff]
        %v2702 = vld [vmem:[%s2683 + $0x90] sm:$0xff]
        %v2703 = vld [vmem:[%s2683 + $0x98] sm:$0xff]
        %v2704 = vld [vmem:[%s2683 + $0xa0] sm:$0xff]
        %v2705 = vld [vmem:[%s2683 + $0xa8] sm:$0xff]
        %v2706 = vld [vmem:[%s2683 + $0xb0] sm:$0xff]
        %v2707 = vld [vmem:[%s2683 + $0xb8] sm:$0xff]
        %v2708 = vld [vmem:[%s2683 + $0xc0] sm:$0xff]
        %v2709 = vld [vmem:[%s2683 + $0xc8] sm:$0xff]
        %v2710 = vld [vmem:[%s2683 + $0xd0] sm:$0xff]
        %v2711 = vld [vmem:[%s2683 + $0xd8] sm:$0xff]
        %v2712 = vld [vmem:[%s2683 + $0xe0] sm:$0xff]
        %v2713 = vld [vmem:[%s2683 + $0xe8] sm:$0xff]
        %v2714 = vld [vmem:[%s2683 + $0xf0] sm:$0xff]
        %v2715 = vld [vmem:[%s2683 + $0xf8] sm:$0xff]
        %v2716 = vld [vmem:[%s2683 + $0x100] sm:$0xff]
        %v2717 = vld [vmem:[%s2683 + $0x108] sm:$0xff]
        %v2718 = vld [vmem:[%s2683 + $0x110] sm:$0xff]
        %v2719 = vld [vmem:[%s2683 + $0x118] sm:$0xff]
        %v2720 = vld [vmem:[%s2683 + $0x120] sm:$0xff]
        %v2721 = vld [vmem:[%s2683 + $0x128] sm:$0xff]
        %v2722 = vld [vmem:[%s2683 + $0x130] sm:$0xff]
        %v2723 = vld [vmem:[%s2683 + $0x138] sm:$0xff]
        %v2724 = vld [vmem:[%s2683 + $0x140] sm:$0xff]
        %v2725 = vld [vmem:[%s2683 + $0x148] sm:$0xff]
        %v2726 = vld [vmem:[%s2683 + $0x150] sm:$0xff]
        %v2727 = vld [vmem:[%s2683 + $0x158] sm:$0xff]
        %v2728 = vld [vmem:[%s2683 + $0x160] sm:$0xff]
        %v2729 = vld [vmem:[%s2683 + $0x168] sm:$0xff]
        %v2730 = vld [vmem:[%s2683 + $0x170] sm:$0xff]
        %v2731 = vld [vmem:[%s2683 + $0x178] sm:$0xff]
        %s2732 = scalar_lea.vmem %s7, 1
        %v2733 = vld [vmem:[%s2732] ss:$2 sm:$0x7]
        %s2734 = scalar_lea.vmem %s8, 128
        %v2735 = vld [vmem:[%s2734] sm:$0xff]
        %v2736 = vld [vmem:[%s2734 + $0x8] sm:$0xff]
        %v2737 = vld [vmem:[%s2734 + $0x10] sm:$0xff]
        %v2738 = vld [vmem:[%s2734 + $0x18] sm:$0xff]
        %v2739 = vld [vmem:[%s2734 + $0x20] sm:$0xff]
        %v2740 = vld [vmem:[%s2734 + $0x28] sm:$0xff]
        %v2741 = vld [vmem:[%s2734 + $0x30] sm:$0xff]
        %v2742 = vld [vmem:[%s2734 + $0x38] sm:$0xff]
        %v2743 = vld [vmem:[%s2734 + $0x40] sm:$0xff]
        %v2744 = vld [vmem:[%s2734 + $0x48] sm:$0xff]
        %v2745 = vld [vmem:[%s2734 + $0x50] sm:$0xff]
        %v2746 = vld [vmem:[%s2734 + $0x58] sm:$0xff]
        %v2747 = vld [vmem:[%s2734 + $0x60] sm:$0xff]
        %v2748 = vld [vmem:[%s2734 + $0x68] sm:$0xff]
        %v2749 = vld [vmem:[%s2734 + $0x70] sm:$0xff]
        %v2750 = vld [vmem:[%s2734 + $0x78] sm:$0xff]
        %v2751 = vld [vmem:[%s9 + $0x1] sm:$0x1]
        %v2752 = vld [vmem:[%s10 + $0x1] sm:$0x1]
        %v2753 = vld [vmem:[%s11 + $0x1] sm:$0x1]
        %s2754 = scalar_lea.vmem %s12, 512
        %v2755 = vld [vmem:[%s2754] sm:$0xff]
        %v2756 = vld [vmem:[%s2754 + $0x8] sm:$0xff]
        %v2757 = vld [vmem:[%s2754 + $0x10] sm:$0xff]
        %v2758 = vld [vmem:[%s2754 + $0x18] sm:$0xff]
        %v2759 = vld [vmem:[%s2754 + $0x20] sm:$0xff]
        %v2760 = vld [vmem:[%s2754 + $0x28] sm:$0xff]
        %v2761 = vld [vmem:[%s2754 + $0x30] sm:$0xff]
        %v2762 = vld [vmem:[%s2754 + $0x38] sm:$0xff]
        %v2763 = vld [vmem:[%s2754 + $0x40] sm:$0xff]
        %v2764 = vld [vmem:[%s2754 + $0x48] sm:$0xff]
        %v2765 = vld [vmem:[%s2754 + $0x50] sm:$0xff]
        %v2766 = vld [vmem:[%s2754 + $0x58] sm:$0xff]
        %v2767 = vld [vmem:[%s2754 + $0x60] sm:$0xff]
        %v2768 = vld [vmem:[%s2754 + $0x68] sm:$0xff]
        %v2769 = vld [vmem:[%s2754 + $0x70] sm:$0xff]
        %v2770 = vld [vmem:[%s2754 + $0x78] sm:$0xff]
        %v2771 = vld [vmem:[%s2754 + $0x80] sm:$0xff]
        %v2772 = vld [vmem:[%s2754 + $0x88] sm:$0xff]
        %v2773 = vld [vmem:[%s2754 + $0x90] sm:$0xff]
        %v2774 = vld [vmem:[%s2754 + $0x98] sm:$0xff]
        %v2775 = vld [vmem:[%s2754 + $0xa0] sm:$0xff]
        %v2776 = vld [vmem:[%s2754 + $0xa8] sm:$0xff]
        %v2777 = vld [vmem:[%s2754 + $0xb0] sm:$0xff]
        %v2778 = vld [vmem:[%s2754 + $0xb8] sm:$0xff]
        %v2779 = vld [vmem:[%s2754 + $0xc0] sm:$0xff]
        %v2780 = vld [vmem:[%s2754 + $0xc8] sm:$0xff]
        %v2781 = vld [vmem:[%s2754 + $0xd0] sm:$0xff]
        %v2782 = vld [vmem:[%s2754 + $0xd8] sm:$0xff]
        %v2783 = vld [vmem:[%s2754 + $0xe0] sm:$0xff]
        %v2784 = vld [vmem:[%s2754 + $0xe8] sm:$0xff]
        %v2785 = vld [vmem:[%s2754 + $0xf0] sm:$0xff]
        %v2786 = vld [vmem:[%s2754 + $0xf8] sm:$0xff]
        %v2787 = vld [vmem:[%s2754 + $0x100] sm:$0xff]
        %v2788 = vld [vmem:[%s2754 + $0x108] sm:$0xff]
        %v2789 = vld [vmem:[%s2754 + $0x110] sm:$0xff]
        %v2790 = vld [vmem:[%s2754 + $0x118] sm:$0xff]
        %v2791 = vld [vmem:[%s2754 + $0x120] sm:$0xff]
        %v2792 = vld [vmem:[%s2754 + $0x128] sm:$0xff]
        %v2793 = vld [vmem:[%s2754 + $0x130] sm:$0xff]
        %v2794 = vld [vmem:[%s2754 + $0x138] sm:$0xff]
        %v2795 = vld [vmem:[%s2754 + $0x140] sm:$0xff]
        %v2796 = vld [vmem:[%s2754 + $0x148] sm:$0xff]
        %v2797 = vld [vmem:[%s2754 + $0x150] sm:$0xff]
        %v2798 = vld [vmem:[%s2754 + $0x158] sm:$0xff]
        %v2799 = vld [vmem:[%s2754 + $0x160] sm:$0xff]
        %v2800 = vld [vmem:[%s2754 + $0x168] sm:$0xff]
        %v2801 = vld [vmem:[%s2754 + $0x170] sm:$0xff]
        %v2802 = vld [vmem:[%s2754 + $0x178] sm:$0xff]
        %v2803 = vld [vmem:[%s2754 + $0x180] sm:$0xff]
        %v2804 = vld [vmem:[%s2754 + $0x188] sm:$0xff]
        %v2805 = vld [vmem:[%s2754 + $0x190] sm:$0xff]
        %v2806 = vld [vmem:[%s2754 + $0x198] sm:$0xff]
        %v2807 = vld [vmem:[%s2754 + $0x1a0] sm:$0xff]
        %v2808 = vld [vmem:[%s2754 + $0x1a8] sm:$0xff]
        %v2809 = vld [vmem:[%s2754 + $0x1b0] sm:$0xff]
        %v2810 = vld [vmem:[%s2754 + $0x1b8] sm:$0xff]
        %v2811 = vld [vmem:[%s2754 + $0x1c0] sm:$0xff]
        %v2812 = vld [vmem:[%s2754 + $0x1c8] sm:$0xff]
        %v2813 = vld [vmem:[%s2754 + $0x1d0] sm:$0xff]
        %v2814 = vld [vmem:[%s2754 + $0x1d8] sm:$0xff]
        %v2815 = vld [vmem:[%s2754 + $0x1e0] sm:$0xff]
        %v2816 = vld [vmem:[%s2754 + $0x1e8] sm:$0xff]
        %v2817 = vld [vmem:[%s2754 + $0x1f0] sm:$0xff]
        %v2818 = vld [vmem:[%s2754 + $0x1f8] sm:$0xff]
        %s2819 = scalar_lea.vmem %s13, 1
        %v2820 = vld [vmem:[%s2819] ss:$2 sm:$0xf]
        %s2821 = scalar_lea.vmem [#allocation4], 512
        %v2822 = vld [vmem:[%s2821] sm:$0xff]
        %v2823 = vld [vmem:[%s2821 + $0x8] sm:$0xff]
        %v2824 = vld [vmem:[%s2821 + $0x10] sm:$0xff]
        %v2825 = vld [vmem:[%s2821 + $0x18] sm:$0xff]
        %v2826 = vld [vmem:[%s2821 + $0x20] sm:$0xff]
        %v2827 = vld [vmem:[%s2821 + $0x28] sm:$0xff]
        %v2828 = vld [vmem:[%s2821 + $0x30] sm:$0xff]
        %v2829 = vld [vmem:[%s2821 + $0x38] sm:$0xff]
        %v2830 = vld [vmem:[%s2821 + $0x40] sm:$0xff]
        %v2831 = vld [vmem:[%s2821 + $0x48] sm:$0xff]
        %v2832 = vld [vmem:[%s2821 + $0x50] sm:$0xff]
        %v2833 = vld [vmem:[%s2821 + $0x58] sm:$0xff]
        %v2834 = vld [vmem:[%s2821 + $0x60] sm:$0xff]
        %v2835 = vld [vmem:[%s2821 + $0x68] sm:$0xff]
        %v2836 = vld [vmem:[%s2821 + $0x70] sm:$0xff]
        %v2837 = vld [vmem:[%s2821 + $0x78] sm:$0xff]
        %v2838 = vld [vmem:[%s2821 + $0x80] sm:$0xff]
        %v2839 = vld [vmem:[%s2821 + $0x88] sm:$0xff]
        %v2840 = vld [vmem:[%s2821 + $0x90] sm:$0xff]
        %v2841 = vld [vmem:[%s2821 + $0x98] sm:$0xff]
        %v2842 = vld [vmem:[%s2821 + $0xa0] sm:$0xff]
        %v2843 = vld [vmem:[%s2821 + $0xa8] sm:$0xff]
        %v2844 = vld [vmem:[%s2821 + $0xb0] sm:$0xff]
        %v2845 = vld [vmem:[%s2821 + $0xb8] sm:$0xff]
        %v2846 = vld [vmem:[%s2821 + $0xc0] sm:$0xff]
        %v2847 = vld [vmem:[%s2821 + $0xc8] sm:$0xff]
        %v2848 = vld [vmem:[%s2821 + $0xd0] sm:$0xff]
        %v2849 = vld [vmem:[%s2821 + $0xd8] sm:$0xff]
        %v2850 = vld [vmem:[%s2821 + $0xe0] sm:$0xff]
        %v2851 = vld [vmem:[%s2821 + $0xe8] sm:$0xff]
        %v2852 = vld [vmem:[%s2821 + $0xf0] sm:$0xff]
        %v2853 = vld [vmem:[%s2821 + $0xf8] sm:$0xff]
        %v2854 = vld [vmem:[%s2821 + $0x100] sm:$0xff]
        %v2855 = vld [vmem:[%s2821 + $0x108] sm:$0xff]
        %v2856 = vld [vmem:[%s2821 + $0x110] sm:$0xff]
        %v2857 = vld [vmem:[%s2821 + $0x118] sm:$0xff]
        %v2858 = vld [vmem:[%s2821 + $0x120] sm:$0xff]
        %v2859 = vld [vmem:[%s2821 + $0x128] sm:$0xff]
        %v2860 = vld [vmem:[%s2821 + $0x130] sm:$0xff]
        %v2861 = vld [vmem:[%s2821 + $0x138] sm:$0xff]
        %v2862 = vld [vmem:[%s2821 + $0x140] sm:$0xff]
        %v2863 = vld [vmem:[%s2821 + $0x148] sm:$0xff]
        %v2864 = vld [vmem:[%s2821 + $0x150] sm:$0xff]
        %v2865 = vld [vmem:[%s2821 + $0x158] sm:$0xff]
        %v2866 = vld [vmem:[%s2821 + $0x160] sm:$0xff]
        %v2867 = vld [vmem:[%s2821 + $0x168] sm:$0xff]
        %v2868 = vld [vmem:[%s2821 + $0x170] sm:$0xff]
        %v2869 = vld [vmem:[%s2821 + $0x178] sm:$0xff]
        %v2870 = vld [vmem:[%s2821 + $0x180] sm:$0xff]
        %v2871 = vld [vmem:[%s2821 + $0x188] sm:$0xff]
        %v2872 = vld [vmem:[%s2821 + $0x190] sm:$0xff]
        %v2873 = vld [vmem:[%s2821 + $0x198] sm:$0xff]
        %v2874 = vld [vmem:[%s2821 + $0x1a0] sm:$0xff]
        %v2875 = vld [vmem:[%s2821 + $0x1a8] sm:$0xff]
        %v2876 = vld [vmem:[%s2821 + $0x1b0] sm:$0xff]
        %v2877 = vld [vmem:[%s2821 + $0x1b8] sm:$0xff]
        %v2878 = vld [vmem:[%s2821 + $0x1c0] sm:$0xff]
        %v2879 = vld [vmem:[%s2821 + $0x1c8] sm:$0xff]
        %v2880 = vld [vmem:[%s2821 + $0x1d0] sm:$0xff]
        %v2881 = vld [vmem:[%s2821 + $0x1d8] sm:$0xff]
        %v2882 = vld [vmem:[%s2821 + $0x1e0] sm:$0xff]
        %v2883 = vld [vmem:[%s2821 + $0x1e8] sm:$0xff]
        %v2884 = vld [vmem:[%s2821 + $0x1f0] sm:$0xff]
        %v2885 = vld [vmem:[%s2821 + $0x1f8] sm:$0xff]
        %v2886 = vld [vmem:[%s15 + $0x1] sm:$0x1]
        %2887 = vadd.xlane.f32.xlu0 %v2679
        %v2888 = vpop.xlane.xlu0 %2887
        %2889 = vadd.xlane.f32.xlu0 %v2680
        %v2890 = vpop.xlane.xlu0 %2889
        %v2891 = vmul.f32 %v2888, %v907
        %v2892 = vmul.f32 %v2890, %v907
        %v2893 = vsub.f32 %v2679, %v2891
        %v2894 = vsub.f32 %v2680, %v2892
        %v2895 = vmul.f32 %v2893, %v2893
        %v2896 = vmul.f32 %v2894, %v2894
        %2897 = vadd.xlane.f32.xlu0 %v2895
        %v2898 = vpop.xlane.xlu0 %2897
        %2899 = vadd.xlane.f32.xlu0 %v2896
        %v2900 = vpop.xlane.xlu0 %2899
        %v2901 = vmul.f32 %v2898, %v907
        %v2902 = vmul.f32 %v2900, %v907
        %v2903 = vadd.f32 %v2901, 1e-05
        %v2904 = vadd.f32 %v2902, 1e-05
        %v2905 = vrsqrt.pop %v2903
        %v2906 = vrsqrt.pop %v2904
        %v2907 = vmul.f32 %v2893, %v2905
        %v2908 = vmul.f32 %v2894, %v2906
        %v2909 = vlaneseq
        %v2910 = vshrl.u32 %v2909, 7
        %v2911 = vsub.s32 0, %v2910
        %v2912 = vrot.slane %v2681, %v2911
        %v2913 = vmul.f32 %v2907, %v2912
        %v2914 = vmul.f32 %v2908, %v2912
        %v2915 = vlaneseq
        %v2916 = vshrl.u32 %v2915, 7
        %v2917 = vsub.s32 0, %v2916
        %v2918 = vrot.slane %v2682, %v2917
        %v2919 = vadd.f32 %v2913, %v2918
        %v2920 = vadd.f32 %v2914, %v2918
        %v2922 = vlaneseq
        %v2923 = vshrl.u32 %v2922, 7
        %v2924 = vsub.s32 0, %v2923
        %v2925 = vrot.slane %v2733, %v2924
        %v2926 = vlaneseq
        %v2927 = vshrl.u32 %v2926, 7
        %v2928 = vsub.s32 1, %v2927
        %v2929 = vrot.slane %v2733, %v2928
        %v2930 = vlaneseq
        %v2931 = vshrl.u32 %v2930, 7
        %v2932 = vsub.s32 2, %v2931
        %v2933 = vrot.slane %v2733, %v2932
        %2937 = vmatprep.subr.mxu0 %v2730
        %2938 = vmatpush1.msra.mxu0 %v2729
        %2939 = vmatprep.subr.mxu0 %v2727
        %2940 = vmatpush1.msra.mxu0 %v2726
        %2941 = vmatprep.subr.mxu0 %v2724
        %2942 = vmatpush1.msra.mxu0 %v2723
        %2943 = vmatprep.subr.mxu0 %v2721
        %2944 = vmatpush1.msra.mxu0 %v2720
        %2945 = vmatprep.subr.mxu0 %v2718
        %2946 = vmatpush1.msra.mxu0 %v2717
        %2947 = vmatprep.subr.mxu0 %v2715
        %2948 = vmatpush1.msra.mxu0 %v2714
        %2949 = vmatprep.subr.mxu0 %v2712
        %2950 = vmatpush1.msra.mxu0 %v2711
        %2951 = vmatprep.subr.mxu0 %v2709
        %2952 = vmatpush1.msra.mxu0 %v2708
        %2953 = vmatprep.subr.mxu0 %v2706
        %2954 = vmatpush1.msra.mxu0 %v2705
        %2955 = vmatprep.subr.mxu0 %v2703
        %2956 = vmatpush1.msra.mxu0 %v2702
        %2957 = vmatprep.subr.mxu0 %v2700
        %2958 = vmatpush1.msra.mxu0 %v2699
        %2959 = vmatprep.subr.mxu0 %v2697
        %2960 = vmatpush1.msra.mxu0 %v2696
        %2961 = vmatprep.subr.mxu0 %v2694
        %2962 = vmatpush1.msra.mxu0 %v2693
        %2963 = vmatprep.subr.mxu0 %v2691
        %2964 = vmatpush1.msra.mxu0 %v2690
        %2965 = vmatprep.subr.mxu0 %v2688
        %2966 = vmatpush1.msra.mxu0 %v2687
        %2967 = vmatprep.subr.mxu0 %v2685
        %2968 = vmatpush1.msra.mxu0 %v2684
        %2969 = vmatprep.subr.mxu0 0.0
        %2970 = vmatpush2.msra.mxu0 0.0
        %2971 = vmatprep.subr.mxu0 0.0
        %2972 = vmatpush2.msra.mxu0 0.0
        %2973 = vmatprep.subr.mxu0 0.0
        %2974 = vmatpush2.msra.mxu0 0.0
        %2975 = vmatprep.subr.mxu0 0.0
        %2976 = vmatpush2.msra.mxu0 0.0
        %2977 = vmatprep.subr.mxu0 0.0
        %2978 = vmatpush2.msra.mxu0 0.0
        %2979 = vmatprep.subr.mxu0 0.0
        %2980 = vmatpush2.msra.mxu0 0.0
        %2981 = vmatprep.subr.mxu0 0.0
        %2982 = vmatpush2.msra.mxu0 0.0
        %2983 = vmatprep.subr.mxu0 0.0
        %2984 = vmatpush2.msra.mxu0 0.0
        %2985 = vmatprep.subr.mxu0 0.0
        %2986 = vmatpush2.msra.mxu0 0.0
        %2987 = vmatprep.subr.mxu0 0.0
        %2988 = vmatpush2.msra.mxu0 0.0
        %2989 = vmatprep.subr.mxu0 0.0
        %2990 = vmatpush2.msra.mxu0 0.0
        %2991 = vmatprep.subr.mxu0 0.0
        %2992 = vmatpush2.msra.mxu0 0.0
        %2993 = vmatprep.subr.mxu0 0.0
        %2994 = vmatpush2.msra.mxu0 0.0
        %2995 = vmatprep.subr.mxu0 0.0
        %2996 = vmatpush2.msra.mxu0 0.0
        %2997 = vmatprep.subr.mxu0 0.0
        %2998 = vmatpush2.msra.mxu0 0.0
        %2999 = vmatprep.subr.mxu0 0.0
        %3000 = vmatpush2.msra.mxu0 0.0
        %3001 = vmatprep.mubr.f32.mxu0 0.0
        %3002 = vmatmul.mubr.f32.gmra.mxu0 %v2919
        %v3003 = vpop.f32.mrf.mxu0
        %v3004 = vadd.f32 %v2925, %v3003
        %v3005 = vpop.f32.mrf.mxu0
        %v3006 = vadd.f32 %v2929, %v3005
        %3007 = vmatprep.mubr.f32.mxu0 0.0
        %3008 = vmatmul.mubr.f32.gmra.mxu0 %v2920
        %v3009 = vpop.f32.mrf.mxu0
        %v3010 = vadd.f32 %v2925, %v3009
        %v3011 = vpop.f32.mrf.mxu0
        %v3012 = vadd.f32 %v2929, %v3011
        %3013 = vdwg.mxu0
        %3014 = vmatprep.subr.mxu0 0.0
        %3015 = vmatpush1.msra.mxu0 %v2731
        %3016 = vmatprep.subr.mxu0 0.0
        %3017 = vmatpush1.msra.mxu0 %v2728
        %3018 = vmatprep.subr.mxu0 0.0
        %3019 = vmatpush1.msra.mxu0 %v2725
        %3020 = vmatprep.subr.mxu0 0.0
        %3021 = vmatpush1.msra.mxu0 %v2722
        %3022 = vmatprep.subr.mxu0 0.0
        %3023 = vmatpush1.msra.mxu0 %v2719
        %3024 = vmatprep.subr.mxu0 0.0
        %3025 = vmatpush1.msra.mxu0 %v2716
        %3026 = vmatprep.subr.mxu0 0.0
        %3027 = vmatpush1.msra.mxu0 %v2713
        %3028 = vmatprep.subr.mxu0 0.0
        %3029 = vmatpush1.msra.mxu0 %v2710
        %3030 = vmatprep.subr.mxu0 0.0
        %3031 = vmatpush1.msra.mxu0 %v2707
        %3032 = vmatprep.subr.mxu0 0.0
        %3033 = vmatpush1.msra.mxu0 %v2704
        %3034 = vmatprep.subr.mxu0 0.0
        %3035 = vmatpush1.msra.mxu0 %v2701
        %3036 = vmatprep.subr.mxu0 0.0
        %3037 = vmatpush1.msra.mxu0 %v2698
        %3038 = vmatprep.subr.mxu0 0.0
        %3039 = vmatpush1.msra.mxu0 %v2695
        %3040 = vmatprep.subr.mxu0 0.0
        %3041 = vmatpush1.msra.mxu0 %v2692
        %3042 = vmatprep.subr.mxu0 0.0
        %3043 = vmatpush1.msra.mxu0 %v2689
        %3044 = vmatprep.subr.mxu0 0.0
        %3045 = vmatpush1.msra.mxu0 %v2686
        %3046 = vmatprep.subr.mxu0 0.0
        %3047 = vmatpush2.msra.mxu0 0.0
        %3048 = vmatprep.subr.mxu0 0.0
        %3049 = vmatpush2.msra.mxu0 0.0
        %3050 = vmatprep.subr.mxu0 0.0
        %3051 = vmatpush2.msra.mxu0 0.0
        %3052 = vmatprep.subr.mxu0 0.0
        %3053 = vmatpush2.msra.mxu0 0.0
        %3054 = vmatprep.subr.mxu0 0.0
        %3055 = vmatpush2.msra.mxu0 0.0
        %3056 = vmatprep.subr.mxu0 0.0
        %3057 = vmatpush2.msra.mxu0 0.0
        %3058 = vmatprep.subr.mxu0 0.0
        %3059 = vmatpush2.msra.mxu0 0.0
        %3060 = vmatprep.subr.mxu0 0.0
        %3061 = vmatpush2.msra.mxu0 0.0
        %3062 = vmatprep.subr.mxu0 0.0
        %3063 = vmatpush2.msra.mxu0 0.0
        %3064 = vmatprep.subr.mxu0 0.0
        %3065 = vmatpush2.msra.mxu0 0.0
        %3066 = vmatprep.subr.mxu0 0.0
        %3067 = vmatpush2.msra.mxu0 0.0
        %3068 = vmatprep.subr.mxu0 0.0
        %3069 = vmatpush2.msra.mxu0 0.0
        %3070 = vmatprep.subr.mxu0 0.0
        %3071 = vmatpush2.msra.mxu0 0.0
        %3072 = vmatprep.subr.mxu0 0.0
        %3073 = vmatpush2.msra.mxu0 0.0
        %3074 = vmatprep.subr.mxu0 0.0
        %3075 = vmatpush2.msra.mxu0 0.0
        %3076 = vmatprep.subr.mxu0 0.0
        %3077 = vmatpush2.msra.mxu0 0.0
        %3078 = vmatprep.mubr.f32.mxu0 0.0
        %3079 = vmatmul.mubr.f32.gmra.mxu0 %v2919
        %v3080 = vpop.f32.mrf.mxu0
        %v3081 = vadd.f32 %v2933, %v3080
        %v3082 = vpop.f32.mrf.mxu0
        %3083 = vmatprep.mubr.f32.mxu0 0.0
        %3084 = vmatmul.mubr.f32.gmra.mxu0 %v2920
        %v3085 = vpop.f32.mrf.mxu0
        %v3086 = vadd.f32 %v2933, %v3085
        %v3087 = vpop.f32.mrf.mxu0
        %3088 = vdwg.mxu0
        %v3090 = vsel %vm1106, %v3004, 0
        %v3093 = vsel %vm1106, %v3010, 0
        %v3096 = vsel %vm1106, %v3006, 0
        %v3099 = vsel %vm1106, %v3012, 0
        %3101 = vmatprep.subr.mxu0 0.0
        %3102 = vmatpush1.xpose.msra.mxu0 0.0
        %3103 = vmatprep.subr.mxu0 0.0
        %3104 = vmatpush1.xpose.msra.mxu0 0.0
        %3105 = vmatprep.subr.mxu0 0.0
        %3106 = vmatpush1.xpose.msra.mxu0 0.0
        %3107 = vmatprep.subr.mxu0 0.0
        %3108 = vmatpush1.xpose.msra.mxu0 0.0
        %3109 = vmatprep.subr.mxu0 0.0
        %3110 = vmatpush1.xpose.msra.mxu0 0.0
        %3111 = vmatprep.subr.mxu0 0.0
        %3112 = vmatpush1.xpose.msra.mxu0 0.0
        %3113 = vmatprep.subr.mxu0 0.0
        %3114 = vmatpush1.xpose.msra.mxu0 0.0
        %3115 = vmatprep.subr.mxu0 0.0
        %3116 = vmatpush1.xpose.msra.mxu0 0.0
        %3117 = vmatprep.subr.mxu0 0.0
        %3118 = vmatpush1.xpose.msra.mxu0 0.0
        %3119 = vmatprep.subr.mxu0 0.0
        %3120 = vmatpush1.xpose.msra.mxu0 0.0
        %3121 = vmatprep.subr.mxu0 0.0
        %3122 = vmatpush1.xpose.msra.mxu0 0.0
        %3123 = vmatprep.subr.mxu0 0.0
        %3124 = vmatpush1.xpose.msra.mxu0 0.0
        %3125 = vmatprep.subr.mxu0 0.0
        %3126 = vmatpush1.xpose.msra.mxu0 0.0
        %3127 = vmatprep.subr.mxu0 0.0
        %3128 = vmatpush1.xpose.msra.mxu0 0.0
        %3129 = vmatprep.subr.mxu0 0.0
        %3130 = vmatpush1.xpose.msra.mxu0 %v3099
        %3131 = vmatprep.subr.mxu0 0.0
        %3132 = vmatpush1.xpose.msra.mxu0 %v3096
        %3133 = vmatprep.subr.mxu0 0.0
        %3134 = vmatpush2.xpose.msra.mxu0 0.0
        %3135 = vmatprep.subr.mxu0 0.0
        %3136 = vmatpush2.xpose.msra.mxu0 0.0
        %3137 = vmatprep.subr.mxu0 0.0
        %3138 = vmatpush2.xpose.msra.mxu0 0.0
        %3139 = vmatprep.subr.mxu0 0.0
        %3140 = vmatpush2.xpose.msra.mxu0 0.0
        %3141 = vmatprep.subr.mxu0 0.0
        %3142 = vmatpush2.xpose.msra.mxu0 0.0
        %3143 = vmatprep.subr.mxu0 0.0
        %3144 = vmatpush2.xpose.msra.mxu0 0.0
        %3145 = vmatprep.subr.mxu0 0.0
        %3146 = vmatpush2.xpose.msra.mxu0 0.0
        %3147 = vmatprep.subr.mxu0 0.0
        %3148 = vmatpush2.xpose.msra.mxu0 0.0
        %3149 = vmatprep.subr.mxu0 0.0
        %3150 = vmatpush2.xpose.msra.mxu0 0.0
        %3151 = vmatprep.subr.mxu0 0.0
        %3152 = vmatpush2.xpose.msra.mxu0 0.0
        %3153 = vmatprep.subr.mxu0 0.0
        %3154 = vmatpush2.xpose.msra.mxu0 0.0
        %3155 = vmatprep.subr.mxu0 0.0
        %3156 = vmatpush2.xpose.msra.mxu0 0.0
        %3157 = vmatprep.subr.mxu0 0.0
        %3158 = vmatpush2.xpose.msra.mxu0 0.0
        %3159 = vmatprep.subr.mxu0 0.0
        %3160 = vmatpush2.xpose.msra.mxu0 0.0
        %3161 = vmatprep.subr.mxu0 0.0
        %3162 = vmatpush2.xpose.msra.mxu0 0.0
        %3163 = vmatprep.subr.mxu0 0.0
        %3164 = vmatpush2.xpose.msra.mxu0 0.0
        %3165 = vmatprep.mubr.f32.mxu0 0.0
        %3166 = vmatmul.mubr.f32.gmra.mxu0 %v3090
        %v3167 = vpop.f32.mrf.mxu0
        %v3168 = vadd.f32 0.0, %v3167
        %v3169 = vpop.f32.mrf.mxu0
        %3170 = vmatprep.mubr.f32.mxu0 0.0
        %3171 = vmatmul.mubr.f32.gmra.mxu0 %v3093
        %v3172 = vpop.f32.mrf.mxu0
        %v3173 = vadd.f32 0.0, %v3172
        %v3174 = vpop.f32.mrf.mxu0
        %3175 = vdwg.mxu0
        %v3176 = vmul.f32 %v3168, 0.17677669
        %v3177 = vmul.f32 %v3173, 0.17677669
        %v3178 = vsel %vm1196, %v3176, -inf
        %3179 = vmax.xlane.f32.xlu0 %v3178
        %v3180 = vpop.xlane.xlu0 %3179
        %v3181 = vsel %vm1196, %v3177, -inf
        %3182 = vmax.xlane.f32.xlu0 %v3181
        %v3183 = vpop.xlane.xlu0 %3182
        %v3184 = vsub.f32 %v3176, %v3180
        %v3185 = vsub.f32 %v3177, %v3183
        %v3186 = vmul.f32 %v3184, 1.442695
        %v3187 = vpow.pop %v3186
        %v3188 = vmul.f32 %v3185, 1.442695
        %v3189 = vpow.pop %v3188
        %v3190 = vsel %vm1196, %v3187, 0.0
        %3191 = vadd.xlane.f32.xlu0 %v3190
        %v3192 = vpop.xlane.xlu0 %3191
        %v3193 = vsel %vm1196, %v3189, 0.0
        %3194 = vadd.xlane.f32.xlu0 %v3193
        %v3195 = vpop.xlane.xlu0 %3194
        %v3196 = vrcp.pop %v3192
        %v3197 = vrcp.pop %v3195
        %v3198 = vmul.f32 %v3187, %v3196
        %v3199 = vmul.f32 %v3189, %v3197
        %v3201 = vsel %vm1196, %v3198, 0
        %v3204 = vsel %vm1196, %v3199, 0
        %3206 = vmatprep.subr.mxu0 0.0
        %3207 = vmatpush1.msra.mxu0 0.0
        %3208 = vmatprep.subr.mxu0 0.0
        %3209 = vmatpush1.msra.mxu0 0.0
        %3210 = vmatprep.subr.mxu0 0.0
        %3211 = vmatpush1.msra.mxu0 0.0
        %3212 = vmatprep.subr.mxu0 0.0
        %3213 = vmatpush1.msra.mxu0 0.0
        %3214 = vmatprep.subr.mxu0 0.0
        %3215 = vmatpush1.msra.mxu0 0.0
        %3216 = vmatprep.subr.mxu0 0.0
        %3217 = vmatpush1.msra.mxu0 0.0
        %3218 = vmatprep.subr.mxu0 0.0
        %3219 = vmatpush1.msra.mxu0 0.0
        %3220 = vmatprep.subr.mxu0 0.0
        %3221 = vmatpush1.msra.mxu0 0.0
        %3222 = vmatprep.subr.mxu0 0.0
        %3223 = vmatpush1.msra.mxu0 0.0
        %3224 = vmatprep.subr.mxu0 0.0
        %3225 = vmatpush1.msra.mxu0 0.0
        %3226 = vmatprep.subr.mxu0 0.0
        %3227 = vmatpush1.msra.mxu0 0.0
        %3228 = vmatprep.subr.mxu0 0.0
        %3229 = vmatpush1.msra.mxu0 0.0
        %3230 = vmatprep.subr.mxu0 0.0
        %3231 = vmatpush1.msra.mxu0 0.0
        %3232 = vmatprep.subr.mxu0 0.0
        %3233 = vmatpush1.msra.mxu0 0.0
        %3234 = vmatprep.subr.mxu0 0.0
        %3235 = vmatpush1.msra.mxu0 %v3086
        %3236 = vmatprep.subr.mxu0 0.0
        %3237 = vmatpush1.msra.mxu0 %v3081
        %3238 = vmatprep.subr.mxu0 0.0
        %3239 = vmatpush2.msra.mxu0 0.0
        %3240 = vmatprep.subr.mxu0 0.0
        %3241 = vmatpush2.msra.mxu0 0.0
        %3242 = vmatprep.subr.mxu0 0.0
        %3243 = vmatpush2.msra.mxu0 0.0
        %3244 = vmatprep.subr.mxu0 0.0
        %3245 = vmatpush2.msra.mxu0 0.0
        %3246 = vmatprep.subr.mxu0 0.0
        %3247 = vmatpush2.msra.mxu0 0.0
        %3248 = vmatprep.subr.mxu0 0.0
        %3249 = vmatpush2.msra.mxu0 0.0
        %3250 = vmatprep.subr.mxu0 0.0
        %3251 = vmatpush2.msra.mxu0 0.0
        %3252 = vmatprep.subr.mxu0 0.0
        %3253 = vmatpush2.msra.mxu0 0.0
        %3254 = vmatprep.subr.mxu0 0.0
        %3255 = vmatpush2.msra.mxu0 0.0
        %3256 = vmatprep.subr.mxu0 0.0
        %3257 = vmatpush2.msra.mxu0 0.0
        %3258 = vmatprep.subr.mxu0 0.0
        %3259 = vmatpush2.msra.mxu0 0.0
        %3260 = vmatprep.subr.mxu0 0.0
        %3261 = vmatpush2.msra.mxu0 0.0
        %3262 = vmatprep.subr.mxu0 0.0
        %3263 = vmatpush2.msra.mxu0 0.0
        %3264 = vmatprep.subr.mxu0 0.0
        %3265 = vmatpush2.msra.mxu0 0.0
        %3266 = vmatprep.subr.mxu0 0.0
        %3267 = vmatpush2.msra.mxu0 0.0
        %3268 = vmatprep.subr.mxu0 0.0
        %3269 = vmatpush2.msra.mxu0 0.0
        %3270 = vmatprep.mubr.f32.mxu0 0.0
        %3271 = vmatmul.mubr.f32.gmra.mxu0 %v3201
        %v3272 = vpop.f32.mrf.mxu0
        %v3273 = vadd.f32 0.0, %v3272
        %v3274 = vpop.f32.mrf.mxu0
        %3275 = vmatprep.mubr.f32.mxu0 0.0
        %3276 = vmatmul.mubr.f32.gmra.mxu0 %v3204
        %v3277 = vpop.f32.mrf.mxu0
        %v3278 = vadd.f32 0.0, %v3277
        %v3279 = vpop.f32.mrf.mxu0
        %3280 = vdwg.mxu0
        %3281 = vrot.lane.b32.xlu0 %v3004, 96
        %v3282 = vpop.permute.xlu0 %3281
        %3283 = vrot.lane.b32.xlu0 %v3010, 96
        %v3284 = vpop.permute.xlu0 %3283
        %3285 = vrot.lane.b32.xlu0 %v3006, 96
        %v3286 = vpop.permute.xlu0 %3285
        %3287 = vrot.lane.b32.xlu0 %v3012, 96
        %v3288 = vpop.permute.xlu0 %3287
        %v3289 = vsel %vm1106, %v3282, 0
        %v3291 = vsel %vm1106, %v3284, 0
        %v3293 = vsel %vm1106, %v3286, 0
        %v3295 = vsel %vm1106, %v3288, 0
        %3297 = vmatprep.subr.mxu0 0.0
        %3298 = vmatpush1.xpose.msra.mxu0 0.0
        %3299 = vmatprep.subr.mxu0 0.0
        %3300 = vmatpush1.xpose.msra.mxu0 0.0
        %3301 = vmatprep.subr.mxu0 0.0
        %3302 = vmatpush1.xpose.msra.mxu0 0.0
        %3303 = vmatprep.subr.mxu0 0.0
        %3304 = vmatpush1.xpose.msra.mxu0 0.0
        %3305 = vmatprep.subr.mxu0 0.0
        %3306 = vmatpush1.xpose.msra.mxu0 0.0
        %3307 = vmatprep.subr.mxu0 0.0
        %3308 = vmatpush1.xpose.msra.mxu0 0.0
        %3309 = vmatprep.subr.mxu0 0.0
        %3310 = vmatpush1.xpose.msra.mxu0 0.0
        %3311 = vmatprep.subr.mxu0 0.0
        %3312 = vmatpush1.xpose.msra.mxu0 0.0
        %3313 = vmatprep.subr.mxu0 0.0
        %3314 = vmatpush1.xpose.msra.mxu0 0.0
        %3315 = vmatprep.subr.mxu0 0.0
        %3316 = vmatpush1.xpose.msra.mxu0 0.0
        %3317 = vmatprep.subr.mxu0 0.0
        %3318 = vmatpush1.xpose.msra.mxu0 0.0
        %3319 = vmatprep.subr.mxu0 0.0
        %3320 = vmatpush1.xpose.msra.mxu0 0.0
        %3321 = vmatprep.subr.mxu0 0.0
        %3322 = vmatpush1.xpose.msra.mxu0 0.0
        %3323 = vmatprep.subr.mxu0 0.0
        %3324 = vmatpush1.xpose.msra.mxu0 0.0
        %3325 = vmatprep.subr.mxu0 0.0
        %3326 = vmatpush1.xpose.msra.mxu0 %v3295
        %3327 = vmatprep.subr.mxu0 0.0
        %3328 = vmatpush1.xpose.msra.mxu0 %v3293
        %3329 = vmatprep.subr.mxu0 0.0
        %3330 = vmatpush2.xpose.msra.mxu0 0.0
        %3331 = vmatprep.subr.mxu0 0.0
        %3332 = vmatpush2.xpose.msra.mxu0 0.0
        %3333 = vmatprep.subr.mxu0 0.0
        %3334 = vmatpush2.xpose.msra.mxu0 0.0
        %3335 = vmatprep.subr.mxu0 0.0
        %3336 = vmatpush2.xpose.msra.mxu0 0.0
        %3337 = vmatprep.subr.mxu0 0.0
        %3338 = vmatpush2.xpose.msra.mxu0 0.0
        %3339 = vmatprep.subr.mxu0 0.0
        %3340 = vmatpush2.xpose.msra.mxu0 0.0
        %3341 = vmatprep.subr.mxu0 0.0
        %3342 = vmatpush2.xpose.msra.mxu0 0.0
        %3343 = vmatprep.subr.mxu0 0.0
        %3344 = vmatpush2.xpose.msra.mxu0 0.0
        %3345 = vmatprep.subr.mxu0 0.0
        %3346 = vmatpush2.xpose.msra.mxu0 0.0
        %3347 = vmatprep.subr.mxu0 0.0
        %3348 = vmatpush2.xpose.msra.mxu0 0.0
        %3349 = vmatprep.subr.mxu0 0.0
        %3350 = vmatpush2.xpose.msra.mxu0 0.0
        %3351 = vmatprep.subr.mxu0 0.0
        %3352 = vmatpush2.xpose.msra.mxu0 0.0
        %3353 = vmatprep.subr.mxu0 0.0
        %3354 = vmatpush2.xpose.msra.mxu0 0.0
        %3355 = vmatprep.subr.mxu0 0.0
        %3356 = vmatpush2.xpose.msra.mxu0 0.0
        %3357 = vmatprep.subr.mxu0 0.0
        %3358 = vmatpush2.xpose.msra.mxu0 0.0
        %3359 = vmatprep.subr.mxu0 0.0
        %3360 = vmatpush2.xpose.msra.mxu0 0.0
        %3361 = vmatprep.mubr.f32.mxu0 0.0
        %3362 = vmatmul.mubr.f32.gmra.mxu0 %v3289
        %v3363 = vpop.f32.mrf.mxu0
        %v3364 = vadd.f32 0.0, %v3363
        %v3365 = vpop.f32.mrf.mxu0
        %3366 = vmatprep.mubr.f32.mxu0 0.0
        %3367 = vmatmul.mubr.f32.gmra.mxu0 %v3291
        %v3368 = vpop.f32.mrf.mxu0
        %v3369 = vadd.f32 0.0, %v3368
        %v3370 = vpop.f32.mrf.mxu0
        %3371 = vdwg.mxu0
        %v3372 = vmul.f32 %v3364, 0.17677669
        %v3373 = vmul.f32 %v3369, 0.17677669
        %v3374 = vsel %vm1196, %v3372, -inf
        %3375 = vmax.xlane.f32.xlu0 %v3374
        %v3376 = vpop.xlane.xlu0 %3375
        %v3377 = vsel %vm1196, %v3373, -inf
        %3378 = vmax.xlane.f32.xlu0 %v3377
        %v3379 = vpop.xlane.xlu0 %3378
        %v3380 = vsub.f32 %v3372, %v3376
        %v3381 = vsub.f32 %v3373, %v3379
        %v3382 = vmul.f32 %v3380, 1.442695
        %v3383 = vpow.pop %v3382
        %v3384 = vmul.f32 %v3381, 1.442695
        %v3385 = vpow.pop %v3384
        %v3386 = vsel %vm1196, %v3383, 0.0
        %3387 = vadd.xlane.f32.xlu0 %v3386
        %v3388 = vpop.xlane.xlu0 %3387
        %v3389 = vsel %vm1196, %v3385, 0.0
        %3390 = vadd.xlane.f32.xlu0 %v3389
        %v3391 = vpop.xlane.xlu0 %3390
        %v3392 = vrcp.pop %v3388
        %v3393 = vrcp.pop %v3391
        %v3394 = vmul.f32 %v3383, %v3392
        %v3395 = vmul.f32 %v3385, %v3393
        %3398 = vrot.lane.b32.xlu0 %v3081, 96
        %v3399 = vpop.permute.xlu0 %3398
        %3400 = vrot.lane.b32.xlu0 %v3086, 96
        %v3401 = vpop.permute.xlu0 %3400
        %v3405 = vsel %vm1196, %v3394, 0
        %v3408 = vsel %vm1196, %v3395, 0
        %3410 = vmatprep.subr.mxu0 0.0
        %3411 = vmatpush1.msra.mxu0 0.0
        %3412 = vmatprep.subr.mxu0 0.0
        %3413 = vmatpush1.msra.mxu0 0.0
        %3414 = vmatprep.subr.mxu0 0.0
        %3415 = vmatpush1.msra.mxu0 0.0
        %3416 = vmatprep.subr.mxu0 0.0
        %3417 = vmatpush1.msra.mxu0 0.0
        %3418 = vmatprep.subr.mxu0 0.0
        %3419 = vmatpush1.msra.mxu0 0.0
        %3420 = vmatprep.subr.mxu0 0.0
        %3421 = vmatpush1.msra.mxu0 0.0
        %3422 = vmatprep.subr.mxu0 0.0
        %3423 = vmatpush1.msra.mxu0 0.0
        %3424 = vmatprep.subr.mxu0 0.0
        %3425 = vmatpush1.msra.mxu0 0.0
        %3426 = vmatprep.subr.mxu0 0.0
        %3427 = vmatpush1.msra.mxu0 0.0
        %3428 = vmatprep.subr.mxu0 0.0
        %3429 = vmatpush1.msra.mxu0 0.0
        %3430 = vmatprep.subr.mxu0 0.0
        %3431 = vmatpush1.msra.mxu0 0.0
        %3432 = vmatprep.subr.mxu0 0.0
        %3433 = vmatpush1.msra.mxu0 0.0
        %3434 = vmatprep.subr.mxu0 0.0
        %3435 = vmatpush1.msra.mxu0 0.0
        %3436 = vmatprep.subr.mxu0 0.0
        %3437 = vmatpush1.msra.mxu0 0.0
        %3438 = vmatprep.subr.mxu0 0.0
        %3439 = vmatpush1.msra.mxu0 %v3401
        %3440 = vmatprep.subr.mxu0 0.0
        %3441 = vmatpush1.msra.mxu0 %v3399
        %3442 = vmatprep.subr.mxu0 0.0
        %3443 = vmatpush2.msra.mxu0 0.0
        %3444 = vmatprep.subr.mxu0 0.0
        %3445 = vmatpush2.msra.mxu0 0.0
        %3446 = vmatprep.subr.mxu0 0.0
        %3447 = vmatpush2.msra.mxu0 0.0
        %3448 = vmatprep.subr.mxu0 0.0
        %3449 = vmatpush2.msra.mxu0 0.0
        %3450 = vmatprep.subr.mxu0 0.0
        %3451 = vmatpush2.msra.mxu0 0.0
        %3452 = vmatprep.subr.mxu0 0.0
        %3453 = vmatpush2.msra.mxu0 0.0
        %3454 = vmatprep.subr.mxu0 0.0
        %3455 = vmatpush2.msra.mxu0 0.0
        %3456 = vmatprep.subr.mxu0 0.0
        %3457 = vmatpush2.msra.mxu0 0.0
        %3458 = vmatprep.subr.mxu0 0.0
        %3459 = vmatpush2.msra.mxu0 0.0
        %3460 = vmatprep.subr.mxu0 0.0
        %3461 = vmatpush2.msra.mxu0 0.0
        %3462 = vmatprep.subr.mxu0 0.0
        %3463 = vmatpush2.msra.mxu0 0.0
        %3464 = vmatprep.subr.mxu0 0.0
        %3465 = vmatpush2.msra.mxu0 0.0
        %3466 = vmatprep.subr.mxu0 0.0
        %3467 = vmatpush2.msra.mxu0 0.0
        %3468 = vmatprep.subr.mxu0 0.0
        %3469 = vmatpush2.msra.mxu0 0.0
        %3470 = vmatprep.subr.mxu0 0.0
        %3471 = vmatpush2.msra.mxu0 0.0
        %3472 = vmatprep.subr.mxu0 0.0
        %3473 = vmatpush2.msra.mxu0 0.0
        %3474 = vmatprep.mubr.f32.mxu0 0.0
        %3475 = vmatmul.mubr.f32.gmra.mxu0 %v3405
        %v3476 = vpop.f32.mrf.mxu0
        %v3477 = vadd.f32 0.0, %v3476
        %v3478 = vpop.f32.mrf.mxu0
        %3479 = vmatprep.mubr.f32.mxu0 0.0
        %3480 = vmatmul.mubr.f32.gmra.mxu0 %v3408
        %v3481 = vpop.f32.mrf.mxu0
        %v3482 = vadd.f32 0.0, %v3481
        %v3483 = vpop.f32.mrf.mxu0
        %3484 = vdwg.mxu0
        %v3486 = vsel %vm1106, %v3477, 0
        %v3489 = vsel %vm1106, %v3482, 0
        %3491 = vmatprep.subr.mxu0 0.0
        %3492 = vmatpush1.msra.mxu0 0.0
        %3493 = vmatprep.subr.mxu0 0.0
        %3494 = vmatpush1.msra.mxu0 0.0
        %3495 = vmatprep.subr.mxu0 0.0
        %3496 = vmatpush1.msra.mxu0 0.0
        %3497 = vmatprep.subr.mxu0 0.0
        %3498 = vmatpush1.msra.mxu0 0.0
        %3499 = vmatprep.subr.mxu0 0.0
        %3500 = vmatpush1.msra.mxu0 0.0
        %3501 = vmatprep.subr.mxu0 0.0
        %3502 = vmatpush1.msra.mxu0 0.0
        %3503 = vmatprep.subr.mxu0 0.0
        %3504 = vmatpush1.msra.mxu0 0.0
        %3505 = vmatprep.subr.mxu0 0.0
        %3506 = vmatpush1.msra.mxu0 0.0
        %3507 = vmatprep.subr.mxu0 0.0
        %3508 = vmatpush1.msra.mxu0 0.0
        %3509 = vmatprep.subr.mxu0 0.0
        %3510 = vmatpush1.msra.mxu0 0.0
        %3511 = vmatprep.subr.mxu0 0.0
        %3512 = vmatpush1.msra.mxu0 0.0
        %3513 = vmatprep.subr.mxu0 0.0
        %3514 = vmatpush1.msra.mxu0 0.0
        %3515 = vmatprep.subr.mxu0 0.0
        %3516 = vmatpush1.msra.mxu0 %v2742
        %3517 = vmatprep.subr.mxu0 0.0
        %3518 = vmatpush1.msra.mxu0 %v2741
        %3519 = vmatprep.subr.mxu0 0.0
        %3520 = vmatpush1.msra.mxu0 %v2740
        %3521 = vmatprep.subr.mxu0 0.0
        %3522 = vmatpush1.msra.mxu0 %v2739
        %3523 = vmatprep.subr.mxu0 0.0
        %3524 = vmatpush2.msra.mxu0 0.0
        %3525 = vmatprep.subr.mxu0 0.0
        %3526 = vmatpush2.msra.mxu0 0.0
        %3527 = vmatprep.subr.mxu0 0.0
        %3528 = vmatpush2.msra.mxu0 0.0
        %3529 = vmatprep.subr.mxu0 0.0
        %3530 = vmatpush2.msra.mxu0 0.0
        %3531 = vmatprep.subr.mxu0 0.0
        %3532 = vmatpush2.msra.mxu0 0.0
        %3533 = vmatprep.subr.mxu0 0.0
        %3534 = vmatpush2.msra.mxu0 0.0
        %3535 = vmatprep.subr.mxu0 0.0
        %3536 = vmatpush2.msra.mxu0 0.0
        %3537 = vmatprep.subr.mxu0 0.0
        %3538 = vmatpush2.msra.mxu0 0.0
        %3539 = vmatprep.subr.mxu0 0.0
        %3540 = vmatpush2.msra.mxu0 0.0
        %3541 = vmatprep.subr.mxu0 0.0
        %3542 = vmatpush2.msra.mxu0 0.0
        %3543 = vmatprep.subr.mxu0 0.0
        %3544 = vmatpush2.msra.mxu0 0.0
        %3545 = vmatprep.subr.mxu0 0.0
        %3546 = vmatpush2.msra.mxu0 0.0
        %3547 = vmatprep.subr.mxu0 0.0
        %3548 = vmatpush2.msra.mxu0 0.0
        %3549 = vmatprep.subr.mxu0 0.0
        %3550 = vmatpush2.msra.mxu0 0.0
        %3551 = vmatprep.subr.mxu0 0.0
        %3552 = vmatpush2.msra.mxu0 0.0
        %3553 = vmatprep.subr.mxu0 0.0
        %3554 = vmatpush2.msra.mxu0 0.0
        %3555 = vmatprep.mubr.f32.mxu0 0.0
        %3556 = vmatmul.mubr.f32.gmra.mxu0 %v3486
        %v3557 = vpop.f32.mrf.mxu0
        %v3558 = vadd.f32 0.0, %v3557
        %v3559 = vpop.f32.mrf.mxu0
        %3560 = vmatprep.mubr.f32.mxu0 0.0
        %3561 = vmatmul.mubr.f32.gmra.mxu0 %v3489
        %v3562 = vpop.f32.mrf.mxu0
        %v3563 = vadd.f32 0.0, %v3562
        %v3564 = vpop.f32.mrf.mxu0
        %3565 = vdwg.mxu0
        %v3567 = vsel %vm1106, %v3273, 0
        %v3570 = vsel %vm1106, %v3278, 0
        %3572 = vmatprep.subr.mxu0 0.0
        %3573 = vmatpush1.msra.mxu0 0.0
        %3574 = vmatprep.subr.mxu0 0.0
        %3575 = vmatpush1.msra.mxu0 0.0
        %3576 = vmatprep.subr.mxu0 0.0
        %3577 = vmatpush1.msra.mxu0 0.0
        %3578 = vmatprep.subr.mxu0 0.0
        %3579 = vmatpush1.msra.mxu0 0.0
        %3580 = vmatprep.subr.mxu0 0.0
        %3581 = vmatpush1.msra.mxu0 0.0
        %3582 = vmatprep.subr.mxu0 0.0
        %3583 = vmatpush1.msra.mxu0 0.0
        %3584 = vmatprep.subr.mxu0 0.0
        %3585 = vmatpush1.msra.mxu0 0.0
        %3586 = vmatprep.subr.mxu0 0.0
        %3587 = vmatpush1.msra.mxu0 0.0
        %3588 = vmatprep.subr.mxu0 0.0
        %3589 = vmatpush1.msra.mxu0 0.0
        %3590 = vmatprep.subr.mxu0 0.0
        %3591 = vmatpush1.msra.mxu0 0.0
        %3592 = vmatprep.subr.mxu0 0.0
        %3593 = vmatpush1.msra.mxu0 0.0
        %3594 = vmatprep.subr.mxu0 0.0
        %3595 = vmatpush1.msra.mxu0 0.0
        %3596 = vmatprep.subr.mxu0 0.0
        %3597 = vmatpush1.msra.mxu0 %v2738
        %3598 = vmatprep.subr.mxu0 0.0
        %3599 = vmatpush1.msra.mxu0 %v2737
        %3600 = vmatprep.subr.mxu0 0.0
        %3601 = vmatpush1.msra.mxu0 %v2736
        %3602 = vmatprep.subr.mxu0 0.0
        %3603 = vmatpush1.msra.mxu0 %v2735
        %3604 = vmatprep.subr.mxu0 0.0
        %3605 = vmatpush2.msra.mxu0 0.0
        %3606 = vmatprep.subr.mxu0 0.0
        %3607 = vmatpush2.msra.mxu0 0.0
        %3608 = vmatprep.subr.mxu0 0.0
        %3609 = vmatpush2.msra.mxu0 0.0
        %3610 = vmatprep.subr.mxu0 0.0
        %3611 = vmatpush2.msra.mxu0 0.0
        %3612 = vmatprep.subr.mxu0 0.0
        %3613 = vmatpush2.msra.mxu0 0.0
        %3614 = vmatprep.subr.mxu0 0.0
        %3615 = vmatpush2.msra.mxu0 0.0
        %3616 = vmatprep.subr.mxu0 0.0
        %3617 = vmatpush2.msra.mxu0 0.0
        %3618 = vmatprep.subr.mxu0 0.0
        %3619 = vmatpush2.msra.mxu0 0.0
        %3620 = vmatprep.subr.mxu0 0.0
        %3621 = vmatpush2.msra.mxu0 0.0
        %3622 = vmatprep.subr.mxu0 0.0
        %3623 = vmatpush2.msra.mxu0 0.0
        %3624 = vmatprep.subr.mxu0 0.0
        %3625 = vmatpush2.msra.mxu0 0.0
        %3626 = vmatprep.subr.mxu0 0.0
        %3627 = vmatpush2.msra.mxu0 0.0
        %3628 = vmatprep.subr.mxu0 0.0
        %3629 = vmatpush2.msra.mxu0 0.0
        %3630 = vmatprep.subr.mxu0 0.0
        %3631 = vmatpush2.msra.mxu0 0.0
        %3632 = vmatprep.subr.mxu0 0.0
        %3633 = vmatpush2.msra.mxu0 0.0
        %3634 = vmatprep.subr.mxu0 0.0
        %3635 = vmatpush2.msra.mxu0 0.0
        %3636 = vmatprep.mubr.f32.mxu0 0.0
        %3637 = vmatmul.mubr.f32.gmra.mxu0 %v3567
        %v3638 = vpop.f32.mrf.mxu0
        %v3639 = vadd.f32 %v3558, %v3638
        %v3640 = vpop.f32.mrf.mxu0
        %3641 = vmatprep.mubr.f32.mxu0 0.0
        %3642 = vmatmul.mubr.f32.gmra.mxu0 %v3570
        %v3643 = vpop.f32.mrf.mxu0
        %v3644 = vadd.f32 %v3563, %v3643
        %v3645 = vpop.f32.mrf.mxu0
        %3646 = vdwg.mxu0
        %3647 = vrot.lane.b32.xlu0 %v3004, 64
        %v3648 = vpop.permute.xlu0 %3647
        %3649 = vrot.lane.b32.xlu0 %v3010, 64
        %v3650 = vpop.permute.xlu0 %3649
        %3651 = vrot.lane.b32.xlu0 %v3006, 64
        %v3652 = vpop.permute.xlu0 %3651
        %3653 = vrot.lane.b32.xlu0 %v3012, 64
        %v3654 = vpop.permute.xlu0 %3653
        %v3655 = vsel %vm1106, %v3648, 0
        %v3657 = vsel %vm1106, %v3650, 0
        %v3659 = vsel %vm1106, %v3652, 0
        %v3661 = vsel %vm1106, %v3654, 0
        %3663 = vmatprep.subr.mxu0 0.0
        %3664 = vmatpush1.xpose.msra.mxu0 0.0
        %3665 = vmatprep.subr.mxu0 0.0
        %3666 = vmatpush1.xpose.msra.mxu0 0.0
        %3667 = vmatprep.subr.mxu0 0.0
        %3668 = vmatpush1.xpose.msra.mxu0 0.0
        %3669 = vmatprep.subr.mxu0 0.0
        %3670 = vmatpush1.xpose.msra.mxu0 0.0
        %3671 = vmatprep.subr.mxu0 0.0
        %3672 = vmatpush1.xpose.msra.mxu0 0.0
        %3673 = vmatprep.subr.mxu0 0.0
        %3674 = vmatpush1.xpose.msra.mxu0 0.0
        %3675 = vmatprep.subr.mxu0 0.0
        %3676 = vmatpush1.xpose.msra.mxu0 0.0
        %3677 = vmatprep.subr.mxu0 0.0
        %3678 = vmatpush1.xpose.msra.mxu0 0.0
        %3679 = vmatprep.subr.mxu0 0.0
        %3680 = vmatpush1.xpose.msra.mxu0 0.0
        %3681 = vmatprep.subr.mxu0 0.0
        %3682 = vmatpush1.xpose.msra.mxu0 0.0
        %3683 = vmatprep.subr.mxu0 0.0
        %3684 = vmatpush1.xpose.msra.mxu0 0.0
        %3685 = vmatprep.subr.mxu0 0.0
        %3686 = vmatpush1.xpose.msra.mxu0 0.0
        %3687 = vmatprep.subr.mxu0 0.0
        %3688 = vmatpush1.xpose.msra.mxu0 0.0
        %3689 = vmatprep.subr.mxu0 0.0
        %3690 = vmatpush1.xpose.msra.mxu0 0.0
        %3691 = vmatprep.subr.mxu0 0.0
        %3692 = vmatpush1.xpose.msra.mxu0 %v3661
        %3693 = vmatprep.subr.mxu0 0.0
        %3694 = vmatpush1.xpose.msra.mxu0 %v3659
        %3695 = vmatprep.subr.mxu0 0.0
        %3696 = vmatpush2.xpose.msra.mxu0 0.0
        %3697 = vmatprep.subr.mxu0 0.0
        %3698 = vmatpush2.xpose.msra.mxu0 0.0
        %3699 = vmatprep.subr.mxu0 0.0
        %3700 = vmatpush2.xpose.msra.mxu0 0.0
        %3701 = vmatprep.subr.mxu0 0.0
        %3702 = vmatpush2.xpose.msra.mxu0 0.0
        %3703 = vmatprep.subr.mxu0 0.0
        %3704 = vmatpush2.xpose.msra.mxu0 0.0
        %3705 = vmatprep.subr.mxu0 0.0
        %3706 = vmatpush2.xpose.msra.mxu0 0.0
        %3707 = vmatprep.subr.mxu0 0.0
        %3708 = vmatpush2.xpose.msra.mxu0 0.0
        %3709 = vmatprep.subr.mxu0 0.0
        %3710 = vmatpush2.xpose.msra.mxu0 0.0
        %3711 = vmatprep.subr.mxu0 0.0
        %3712 = vmatpush2.xpose.msra.mxu0 0.0
        %3713 = vmatprep.subr.mxu0 0.0
        %3714 = vmatpush2.xpose.msra.mxu0 0.0
        %3715 = vmatprep.subr.mxu0 0.0
        %3716 = vmatpush2.xpose.msra.mxu0 0.0
        %3717 = vmatprep.subr.mxu0 0.0
        %3718 = vmatpush2.xpose.msra.mxu0 0.0
        %3719 = vmatprep.subr.mxu0 0.0
        %3720 = vmatpush2.xpose.msra.mxu0 0.0
        %3721 = vmatprep.subr.mxu0 0.0
        %3722 = vmatpush2.xpose.msra.mxu0 0.0
        %3723 = vmatprep.subr.mxu0 0.0
        %3724 = vmatpush2.xpose.msra.mxu0 0.0
        %3725 = vmatprep.subr.mxu0 0.0
        %3726 = vmatpush2.xpose.msra.mxu0 0.0
        %3727 = vmatprep.mubr.f32.mxu0 0.0
        %3728 = vmatmul.mubr.f32.gmra.mxu0 %v3655
        %v3729 = vpop.f32.mrf.mxu0
        %v3730 = vadd.f32 0.0, %v3729
        %v3731 = vpop.f32.mrf.mxu0
        %3732 = vmatprep.mubr.f32.mxu0 0.0
        %3733 = vmatmul.mubr.f32.gmra.mxu0 %v3657
        %v3734 = vpop.f32.mrf.mxu0
        %v3735 = vadd.f32 0.0, %v3734
        %v3736 = vpop.f32.mrf.mxu0
        %3737 = vdwg.mxu0
        %v3738 = vmul.f32 %v3730, 0.17677669
        %v3739 = vmul.f32 %v3735, 0.17677669
        %v3740 = vsel %vm1196, %v3738, -inf
        %3741 = vmax.xlane.f32.xlu0 %v3740
        %v3742 = vpop.xlane.xlu0 %3741
        %v3743 = vsel %vm1196, %v3739, -inf
        %3744 = vmax.xlane.f32.xlu0 %v3743
        %v3745 = vpop.xlane.xlu0 %3744
        %v3746 = vsub.f32 %v3738, %v3742
        %v3747 = vsub.f32 %v3739, %v3745
        %v3748 = vmul.f32 %v3746, 1.442695
        %v3749 = vpow.pop %v3748
        %v3750 = vmul.f32 %v3747, 1.442695
        %v3751 = vpow.pop %v3750
        %v3752 = vsel %vm1196, %v3749, 0.0
        %3753 = vadd.xlane.f32.xlu0 %v3752
        %v3754 = vpop.xlane.xlu0 %3753
        %v3755 = vsel %vm1196, %v3751, 0.0
        %3756 = vadd.xlane.f32.xlu0 %v3755
        %v3757 = vpop.xlane.xlu0 %3756
        %v3758 = vrcp.pop %v3754
        %v3759 = vrcp.pop %v3757
        %v3760 = vmul.f32 %v3749, %v3758
        %v3761 = vmul.f32 %v3751, %v3759
        %3762 = vrot.lane.b32.xlu0 %v3081, 64
        %v3763 = vpop.permute.xlu0 %3762
        %3764 = vrot.lane.b32.xlu0 %v3086, 64
        %v3765 = vpop.permute.xlu0 %3764
        %v3769 = vsel %vm1196, %v3760, 0
        %v3772 = vsel %vm1196, %v3761, 0
        %3774 = vmatprep.subr.mxu0 0.0
        %3775 = vmatpush1.msra.mxu0 0.0
        %3776 = vmatprep.subr.mxu0 0.0
        %3777 = vmatpush1.msra.mxu0 0.0
        %3778 = vmatprep.subr.mxu0 0.0
        %3779 = vmatpush1.msra.mxu0 0.0
        %3780 = vmatprep.subr.mxu0 0.0
        %3781 = vmatpush1.msra.mxu0 0.0
        %3782 = vmatprep.subr.mxu0 0.0
        %3783 = vmatpush1.msra.mxu0 0.0
        %3784 = vmatprep.subr.mxu0 0.0
        %3785 = vmatpush1.msra.mxu0 0.0
        %3786 = vmatprep.subr.mxu0 0.0
        %3787 = vmatpush1.msra.mxu0 0.0
        %3788 = vmatprep.subr.mxu0 0.0
        %3789 = vmatpush1.msra.mxu0 0.0
        %3790 = vmatprep.subr.mxu0 0.0
        %3791 = vmatpush1.msra.mxu0 0.0
        %3792 = vmatprep.subr.mxu0 0.0
        %3793 = vmatpush1.msra.mxu0 0.0
        %3794 = vmatprep.subr.mxu0 0.0
        %3795 = vmatpush1.msra.mxu0 0.0
        %3796 = vmatprep.subr.mxu0 0.0
        %3797 = vmatpush1.msra.mxu0 0.0
        %3798 = vmatprep.subr.mxu0 0.0
        %3799 = vmatpush1.msra.mxu0 0.0
        %3800 = vmatprep.subr.mxu0 0.0
        %3801 = vmatpush1.msra.mxu0 0.0
        %3802 = vmatprep.subr.mxu0 0.0
        %3803 = vmatpush1.msra.mxu0 %v3765
        %3804 = vmatprep.subr.mxu0 0.0
        %3805 = vmatpush1.msra.mxu0 %v3763
        %3806 = vmatprep.subr.mxu0 0.0
        %3807 = vmatpush2.msra.mxu0 0.0
        %3808 = vmatprep.subr.mxu0 0.0
        %3809 = vmatpush2.msra.mxu0 0.0
        %3810 = vmatprep.subr.mxu0 0.0
        %3811 = vmatpush2.msra.mxu0 0.0
        %3812 = vmatprep.subr.mxu0 0.0
        %3813 = vmatpush2.msra.mxu0 0.0
        %3814 = vmatprep.subr.mxu0 0.0
        %3815 = vmatpush2.msra.mxu0 0.0
        %3816 = vmatprep.subr.mxu0 0.0
        %3817 = vmatpush2.msra.mxu0 0.0
        %3818 = vmatprep.subr.mxu0 0.0
        %3819 = vmatpush2.msra.mxu0 0.0
        %3820 = vmatprep.subr.mxu0 0.0
        %3821 = vmatpush2.msra.mxu0 0.0
        %3822 = vmatprep.subr.mxu0 0.0
        %3823 = vmatpush2.msra.mxu0 0.0
        %3824 = vmatprep.subr.mxu0 0.0
        %3825 = vmatpush2.msra.mxu0 0.0
        %3826 = vmatprep.subr.mxu0 0.0
        %3827 = vmatpush2.msra.mxu0 0.0
        %3828 = vmatprep.subr.mxu0 0.0
        %3829 = vmatpush2.msra.mxu0 0.0
        %3830 = vmatprep.subr.mxu0 0.0
        %3831 = vmatpush2.msra.mxu0 0.0
        %3832 = vmatprep.subr.mxu0 0.0
        %3833 = vmatpush2.msra.mxu0 0.0
        %3834 = vmatprep.subr.mxu0 0.0
        %3835 = vmatpush2.msra.mxu0 0.0
        %3836 = vmatprep.subr.mxu0 0.0
        %3837 = vmatpush2.msra.mxu0 0.0
        %3838 = vmatprep.mubr.f32.mxu0 0.0
        %3839 = vmatmul.mubr.f32.gmra.mxu0 %v3769
        %v3840 = vpop.f32.mrf.mxu0
        %v3841 = vadd.f32 0.0, %v3840
        %v3842 = vpop.f32.mrf.mxu0
        %3843 = vmatprep.mubr.f32.mxu0 0.0
        %3844 = vmatmul.mubr.f32.gmra.mxu0 %v3772
        %v3845 = vpop.f32.mrf.mxu0
        %v3846 = vadd.f32 0.0, %v3845
        %v3847 = vpop.f32.mrf.mxu0
        %3848 = vdwg.mxu0
        %v3850 = vsel %vm1106, %v3841, 0
        %v3853 = vsel %vm1106, %v3846, 0
        %3855 = vmatprep.subr.mxu0 0.0
        %3856 = vmatpush1.msra.mxu0 0.0
        %3857 = vmatprep.subr.mxu0 0.0
        %3858 = vmatpush1.msra.mxu0 0.0
        %3859 = vmatprep.subr.mxu0 0.0
        %3860 = vmatpush1.msra.mxu0 0.0
        %3861 = vmatprep.subr.mxu0 0.0
        %3862 = vmatpush1.msra.mxu0 0.0
        %3863 = vmatprep.subr.mxu0 0.0
        %3864 = vmatpush1.msra.mxu0 0.0
        %3865 = vmatprep.subr.mxu0 0.0
        %3866 = vmatpush1.msra.mxu0 0.0
        %3867 = vmatprep.subr.mxu0 0.0
        %3868 = vmatpush1.msra.mxu0 0.0
        %3869 = vmatprep.subr.mxu0 0.0
        %3870 = vmatpush1.msra.mxu0 0.0
        %3871 = vmatprep.subr.mxu0 0.0
        %3872 = vmatpush1.msra.mxu0 0.0
        %3873 = vmatprep.subr.mxu0 0.0
        %3874 = vmatpush1.msra.mxu0 0.0
        %3875 = vmatprep.subr.mxu0 0.0
        %3876 = vmatpush1.msra.mxu0 0.0
        %3877 = vmatprep.subr.mxu0 0.0
        %3878 = vmatpush1.msra.mxu0 0.0
        %3879 = vmatprep.subr.mxu0 0.0
        %3880 = vmatpush1.msra.mxu0 %v2746
        %3881 = vmatprep.subr.mxu0 0.0
        %3882 = vmatpush1.msra.mxu0 %v2745
        %3883 = vmatprep.subr.mxu0 0.0
        %3884 = vmatpush1.msra.mxu0 %v2744
        %3885 = vmatprep.subr.mxu0 0.0
        %3886 = vmatpush1.msra.mxu0 %v2743
        %3887 = vmatprep.subr.mxu0 0.0
        %3888 = vmatpush2.msra.mxu0 0.0
        %3889 = vmatprep.subr.mxu0 0.0
        %3890 = vmatpush2.msra.mxu0 0.0
        %3891 = vmatprep.subr.mxu0 0.0
        %3892 = vmatpush2.msra.mxu0 0.0
        %3893 = vmatprep.subr.mxu0 0.0
        %3894 = vmatpush2.msra.mxu0 0.0
        %3895 = vmatprep.subr.mxu0 0.0
        %3896 = vmatpush2.msra.mxu0 0.0
        %3897 = vmatprep.subr.mxu0 0.0
        %3898 = vmatpush2.msra.mxu0 0.0
        %3899 = vmatprep.subr.mxu0 0.0
        %3900 = vmatpush2.msra.mxu0 0.0
        %3901 = vmatprep.subr.mxu0 0.0
        %3902 = vmatpush2.msra.mxu0 0.0
        %3903 = vmatprep.subr.mxu0 0.0
        %3904 = vmatpush2.msra.mxu0 0.0
        %3905 = vmatprep.subr.mxu0 0.0
        %3906 = vmatpush2.msra.mxu0 0.0
        %3907 = vmatprep.subr.mxu0 0.0
        %3908 = vmatpush2.msra.mxu0 0.0
        %3909 = vmatprep.subr.mxu0 0.0
        %3910 = vmatpush2.msra.mxu0 0.0
        %3911 = vmatprep.subr.mxu0 0.0
        %3912 = vmatpush2.msra.mxu0 0.0
        %3913 = vmatprep.subr.mxu0 0.0
        %3914 = vmatpush2.msra.mxu0 0.0
        %3915 = vmatprep.subr.mxu0 0.0
        %3916 = vmatpush2.msra.mxu0 0.0
        %3917 = vmatprep.subr.mxu0 0.0
        %3918 = vmatpush2.msra.mxu0 0.0
        %3919 = vmatprep.mubr.f32.mxu0 0.0
        %3920 = vmatmul.mubr.f32.gmra.mxu0 %v3850
        %v3921 = vpop.f32.mrf.mxu0
        %v3922 = vadd.f32 0.0, %v3921
        %v3923 = vpop.f32.mrf.mxu0
        %3924 = vmatprep.mubr.f32.mxu0 0.0
        %3925 = vmatmul.mubr.f32.gmra.mxu0 %v3853
        %v3926 = vpop.f32.mrf.mxu0
        %v3927 = vadd.f32 0.0, %v3926
        %v3928 = vpop.f32.mrf.mxu0
        %3929 = vdwg.mxu0
        %v3930 = vadd.f32 %v3639, %v3922
        %v3931 = vadd.f32 %v3644, %v3927
        %3932 = vrot.lane.b32.xlu0 %v3004, 32
        %v3933 = vpop.permute.xlu0 %3932
        %3934 = vrot.lane.b32.xlu0 %v3010, 32
        %v3935 = vpop.permute.xlu0 %3934
        %3936 = vrot.lane.b32.xlu0 %v3006, 32
        %v3937 = vpop.permute.xlu0 %3936
        %3938 = vrot.lane.b32.xlu0 %v3012, 32
        %v3939 = vpop.permute.xlu0 %3938
        %v3940 = vsel %vm1106, %v3933, 0
        %v3942 = vsel %vm1106, %v3935, 0
        %v3944 = vsel %vm1106, %v3937, 0
        %v3946 = vsel %vm1106, %v3939, 0
        %3948 = vmatprep.subr.mxu0 0.0
        %3949 = vmatpush1.xpose.msra.mxu0 0.0
        %3950 = vmatprep.subr.mxu0 0.0
        %3951 = vmatpush1.xpose.msra.mxu0 0.0
        %3952 = vmatprep.subr.mxu0 0.0
        %3953 = vmatpush1.xpose.msra.mxu0 0.0
        %3954 = vmatprep.subr.mxu0 0.0
        %3955 = vmatpush1.xpose.msra.mxu0 0.0
        %3956 = vmatprep.subr.mxu0 0.0
        %3957 = vmatpush1.xpose.msra.mxu0 0.0
        %3958 = vmatprep.subr.mxu0 0.0
        %3959 = vmatpush1.xpose.msra.mxu0 0.0
        %3960 = vmatprep.subr.mxu0 0.0
        %3961 = vmatpush1.xpose.msra.mxu0 0.0
        %3962 = vmatprep.subr.mxu0 0.0
        %3963 = vmatpush1.xpose.msra.mxu0 0.0
        %3964 = vmatprep.subr.mxu0 0.0
        %3965 = vmatpush1.xpose.msra.mxu0 0.0
        %3966 = vmatprep.subr.mxu0 0.0
        %3967 = vmatpush1.xpose.msra.mxu0 0.0
        %3968 = vmatprep.subr.mxu0 0.0
        %3969 = vmatpush1.xpose.msra.mxu0 0.0
        %3970 = vmatprep.subr.mxu0 0.0
        %3971 = vmatpush1.xpose.msra.mxu0 0.0
        %3972 = vmatprep.subr.mxu0 0.0
        %3973 = vmatpush1.xpose.msra.mxu0 0.0
        %3974 = vmatprep.subr.mxu0 0.0
        %3975 = vmatpush1.xpose.msra.mxu0 0.0
        %3976 = vmatprep.subr.mxu0 0.0
        %3977 = vmatpush1.xpose.msra.mxu0 %v3946
        %3978 = vmatprep.subr.mxu0 0.0
        %3979 = vmatpush1.xpose.msra.mxu0 %v3944
        %3980 = vmatprep.subr.mxu0 0.0
        %3981 = vmatpush2.xpose.msra.mxu0 0.0
        %3982 = vmatprep.subr.mxu0 0.0
        %3983 = vmatpush2.xpose.msra.mxu0 0.0
        %3984 = vmatprep.subr.mxu0 0.0
        %3985 = vmatpush2.xpose.msra.mxu0 0.0
        %3986 = vmatprep.subr.mxu0 0.0
        %3987 = vmatpush2.xpose.msra.mxu0 0.0
        %3988 = vmatprep.subr.mxu0 0.0
        %3989 = vmatpush2.xpose.msra.mxu0 0.0
        %3990 = vmatprep.subr.mxu0 0.0
        %3991 = vmatpush2.xpose.msra.mxu0 0.0
        %3992 = vmatprep.subr.mxu0 0.0
        %3993 = vmatpush2.xpose.msra.mxu0 0.0
        %3994 = vmatprep.subr.mxu0 0.0
        %3995 = vmatpush2.xpose.msra.mxu0 0.0
        %3996 = vmatprep.subr.mxu0 0.0
        %3997 = vmatpush2.xpose.msra.mxu0 0.0
        %3998 = vmatprep.subr.mxu0 0.0
        %3999 = vmatpush2.xpose.msra.mxu0 0.0
        %4000 = vmatprep.subr.mxu0 0.0
        %4001 = vmatpush2.xpose.msra.mxu0 0.0
        %4002 = vmatprep.subr.mxu0 0.0
        %4003 = vmatpush2.xpose.msra.mxu0 0.0
        %4004 = vmatprep.subr.mxu0 0.0
        %4005 = vmatpush2.xpose.msra.mxu0 0.0
        %4006 = vmatprep.subr.mxu0 0.0
        %4007 = vmatpush2.xpose.msra.mxu0 0.0
        %4008 = vmatprep.subr.mxu0 0.0
        %4009 = vmatpush2.xpose.msra.mxu0 0.0
        %4010 = vmatprep.subr.mxu0 0.0
        %4011 = vmatpush2.xpose.msra.mxu0 0.0
        %4012 = vmatprep.mubr.f32.mxu0 0.0
        %4013 = vmatmul.mubr.f32.gmra.mxu0 %v3940
        %v4014 = vpop.f32.mrf.mxu0
        %v4015 = vadd.f32 0.0, %v4014
        %v4016 = vpop.f32.mrf.mxu0
        %4017 = vmatprep.mubr.f32.mxu0 0.0
        %4018 = vmatmul.mubr.f32.gmra.mxu0 %v3942
        %v4019 = vpop.f32.mrf.mxu0
        %v4020 = vadd.f32 0.0, %v4019
        %v4021 = vpop.f32.mrf.mxu0
        %4022 = vdwg.mxu0
        %v4023 = vmul.f32 %v4015, 0.17677669
        %v4024 = vmul.f32 %v4020, 0.17677669
        %v4025 = vsel %vm1196, %v4023, -inf
        %4026 = vmax.xlane.f32.xlu0 %v4025
        %v4027 = vpop.xlane.xlu0 %4026
        %v4028 = vsel %vm1196, %v4024, -inf
        %4029 = vmax.xlane.f32.xlu0 %v4028
        %v4030 = vpop.xlane.xlu0 %4029
        %v4031 = vsub.f32 %v4023, %v4027
        %v4032 = vsub.f32 %v4024, %v4030
        %v4033 = vmul.f32 %v4031, 1.442695
        %v4034 = vpow.pop %v4033
        %v4035 = vmul.f32 %v4032, 1.442695
        %v4036 = vpow.pop %v4035
        %v4037 = vsel %vm1196, %v4034, 0.0
        %4038 = vadd.xlane.f32.xlu0 %v4037
        %v4039 = vpop.xlane.xlu0 %4038
        %v4040 = vsel %vm1196, %v4036, 0.0
        %4041 = vadd.xlane.f32.xlu0 %v4040
        %v4042 = vpop.xlane.xlu0 %4041
        %v4043 = vrcp.pop %v4039
        %v4044 = vrcp.pop %v4042
        %v4045 = vmul.f32 %v4034, %v4043
        %v4046 = vmul.f32 %v4036, %v4044
        %4047 = vrot.lane.b32.xlu0 %v3081, 32
        %v4048 = vpop.permute.xlu0 %4047
        %4049 = vrot.lane.b32.xlu0 %v3086, 32
        %v4050 = vpop.permute.xlu0 %4049
        %v4054 = vsel %vm1196, %v4045, 0
        %v4057 = vsel %vm1196, %v4046, 0
        %4059 = vmatprep.subr.mxu0 0.0
        %4060 = vmatpush1.msra.mxu0 0.0
        %4061 = vmatprep.subr.mxu0 0.0
        %4062 = vmatpush1.msra.mxu0 0.0
        %4063 = vmatprep.subr.mxu0 0.0
        %4064 = vmatpush1.msra.mxu0 0.0
        %4065 = vmatprep.subr.mxu0 0.0
        %4066 = vmatpush1.msra.mxu0 0.0
        %4067 = vmatprep.subr.mxu0 0.0
        %4068 = vmatpush1.msra.mxu0 0.0
        %4069 = vmatprep.subr.mxu0 0.0
        %4070 = vmatpush1.msra.mxu0 0.0
        %4071 = vmatprep.subr.mxu0 0.0
        %4072 = vmatpush1.msra.mxu0 0.0
        %4073 = vmatprep.subr.mxu0 0.0
        %4074 = vmatpush1.msra.mxu0 0.0
        %4075 = vmatprep.subr.mxu0 0.0
        %4076 = vmatpush1.msra.mxu0 0.0
        %4077 = vmatprep.subr.mxu0 0.0
        %4078 = vmatpush1.msra.mxu0 0.0
        %4079 = vmatprep.subr.mxu0 0.0
        %4080 = vmatpush1.msra.mxu0 0.0
        %4081 = vmatprep.subr.mxu0 0.0
        %4082 = vmatpush1.msra.mxu0 0.0
        %4083 = vmatprep.subr.mxu0 0.0
        %4084 = vmatpush1.msra.mxu0 0.0
        %4085 = vmatprep.subr.mxu0 0.0
        %4086 = vmatpush1.msra.mxu0 0.0
        %4087 = vmatprep.subr.mxu0 0.0
        %4088 = vmatpush1.msra.mxu0 %v4050
        %4089 = vmatprep.subr.mxu0 0.0
        %4090 = vmatpush1.msra.mxu0 %v4048
        %4091 = vmatprep.subr.mxu0 0.0
        %4092 = vmatpush2.msra.mxu0 0.0
        %4093 = vmatprep.subr.mxu0 0.0
        %4094 = vmatpush2.msra.mxu0 0.0
        %4095 = vmatprep.subr.mxu0 0.0
        %4096 = vmatpush2.msra.mxu0 0.0
        %4097 = vmatprep.subr.mxu0 0.0
        %4098 = vmatpush2.msra.mxu0 0.0
        %4099 = vmatprep.subr.mxu0 0.0
        %4100 = vmatpush2.msra.mxu0 0.0
        %4101 = vmatprep.subr.mxu0 0.0
        %4102 = vmatpush2.msra.mxu0 0.0
        %4103 = vmatprep.subr.mxu0 0.0
        %4104 = vmatpush2.msra.mxu0 0.0
        %4105 = vmatprep.subr.mxu0 0.0
        %4106 = vmatpush2.msra.mxu0 0.0
        %4107 = vmatprep.subr.mxu0 0.0
        %4108 = vmatpush2.msra.mxu0 0.0
        %4109 = vmatprep.subr.mxu0 0.0
        %4110 = vmatpush2.msra.mxu0 0.0
        %4111 = vmatprep.subr.mxu0 0.0
        %4112 = vmatpush2.msra.mxu0 0.0
        %4113 = vmatprep.subr.mxu0 0.0
        %4114 = vmatpush2.msra.mxu0 0.0
        %4115 = vmatprep.subr.mxu0 0.0
        %4116 = vmatpush2.msra.mxu0 0.0
        %4117 = vmatprep.subr.mxu0 0.0
        %4118 = vmatpush2.msra.mxu0 0.0
        %4119 = vmatprep.subr.mxu0 0.0
        %4120 = vmatpush2.msra.mxu0 0.0
        %4121 = vmatprep.subr.mxu0 0.0
        %4122 = vmatpush2.msra.mxu0 0.0
        %4123 = vmatprep.mubr.f32.mxu0 0.0
        %4124 = vmatmul.mubr.f32.gmra.mxu0 %v4054
        %v4125 = vpop.f32.mrf.mxu0
        %v4126 = vadd.f32 0.0, %v4125
        %v4127 = vpop.f32.mrf.mxu0
        %4128 = vmatprep.mubr.f32.mxu0 0.0
        %4129 = vmatmul.mubr.f32.gmra.mxu0 %v4057
        %v4130 = vpop.f32.mrf.mxu0
        %v4131 = vadd.f32 0.0, %v4130
        %v4132 = vpop.f32.mrf.mxu0
        %4133 = vdwg.mxu0
        %v4135 = vsel %vm1106, %v4126, 0
        %v4138 = vsel %vm1106, %v4131, 0
        %4140 = vmatprep.subr.mxu0 0.0
        %4141 = vmatpush1.msra.mxu0 0.0
        %4142 = vmatprep.subr.mxu0 0.0
        %4143 = vmatpush1.msra.mxu0 0.0
        %4144 = vmatprep.subr.mxu0 0.0
        %4145 = vmatpush1.msra.mxu0 0.0
        %4146 = vmatprep.subr.mxu0 0.0
        %4147 = vmatpush1.msra.mxu0 0.0
        %4148 = vmatprep.subr.mxu0 0.0
        %4149 = vmatpush1.msra.mxu0 0.0
        %4150 = vmatprep.subr.mxu0 0.0
        %4151 = vmatpush1.msra.mxu0 0.0
        %4152 = vmatprep.subr.mxu0 0.0
        %4153 = vmatpush1.msra.mxu0 0.0
        %4154 = vmatprep.subr.mxu0 0.0
        %4155 = vmatpush1.msra.mxu0 0.0
        %4156 = vmatprep.subr.mxu0 0.0
        %4157 = vmatpush1.msra.mxu0 0.0
        %4158 = vmatprep.subr.mxu0 0.0
        %4159 = vmatpush1.msra.mxu0 0.0
        %4160 = vmatprep.subr.mxu0 0.0
        %4161 = vmatpush1.msra.mxu0 0.0
        %4162 = vmatprep.subr.mxu0 0.0
        %4163 = vmatpush1.msra.mxu0 0.0
        %4164 = vmatprep.subr.mxu0 0.0
        %4165 = vmatpush1.msra.mxu0 %v2750
        %4166 = vmatprep.subr.mxu0 0.0
        %4167 = vmatpush1.msra.mxu0 %v2749
        %4168 = vmatprep.subr.mxu0 0.0
        %4169 = vmatpush1.msra.mxu0 %v2748
        %4170 = vmatprep.subr.mxu0 0.0
        %4171 = vmatpush1.msra.mxu0 %v2747
        %4172 = vmatprep.subr.mxu0 0.0
        %4173 = vmatpush2.msra.mxu0 0.0
        %4174 = vmatprep.subr.mxu0 0.0
        %4175 = vmatpush2.msra.mxu0 0.0
        %4176 = vmatprep.subr.mxu0 0.0
        %4177 = vmatpush2.msra.mxu0 0.0
        %4178 = vmatprep.subr.mxu0 0.0
        %4179 = vmatpush2.msra.mxu0 0.0
        %4180 = vmatprep.subr.mxu0 0.0
        %4181 = vmatpush2.msra.mxu0 0.0
        %4182 = vmatprep.subr.mxu0 0.0
        %4183 = vmatpush2.msra.mxu0 0.0
        %4184 = vmatprep.subr.mxu0 0.0
        %4185 = vmatpush2.msra.mxu0 0.0
        %4186 = vmatprep.subr.mxu0 0.0
        %4187 = vmatpush2.msra.mxu0 0.0
        %4188 = vmatprep.subr.mxu0 0.0
        %4189 = vmatpush2.msra.mxu0 0.0
        %4190 = vmatprep.subr.mxu0 0.0
        %4191 = vmatpush2.msra.mxu0 0.0
        %4192 = vmatprep.subr.mxu0 0.0
        %4193 = vmatpush2.msra.mxu0 0.0
        %4194 = vmatprep.subr.mxu0 0.0
        %4195 = vmatpush2.msra.mxu0 0.0
        %4196 = vmatprep.subr.mxu0 0.0
        %4197 = vmatpush2.msra.mxu0 0.0
        %4198 = vmatprep.subr.mxu0 0.0
        %4199 = vmatpush2.msra.mxu0 0.0
        %4200 = vmatprep.subr.mxu0 0.0
        %4201 = vmatpush2.msra.mxu0 0.0
        %4202 = vmatprep.subr.mxu0 0.0
        %4203 = vmatpush2.msra.mxu0 0.0
        %4204 = vmatprep.mubr.f32.mxu0 0.0
        %4205 = vmatmul.mubr.f32.gmra.mxu0 %v4135
        %v4206 = vpop.f32.mrf.mxu0
        %v4207 = vadd.f32 0.0, %v4206
        %v4208 = vpop.f32.mrf.mxu0
        %4209 = vmatprep.mubr.f32.mxu0 0.0
        %4210 = vmatmul.mubr.f32.gmra.mxu0 %v4138
        %v4211 = vpop.f32.mrf.mxu0
        %v4212 = vadd.f32 0.0, %v4211
        %v4213 = vpop.f32.mrf.mxu0
        %4214 = vdwg.mxu0
        %v4215 = vadd.f32 %v3930, %v4207
        %v4216 = vadd.f32 %v3931, %v4212
        %v4217 = vadd.f32 %v2679, %v4215
        %v4218 = vadd.f32 %v2680, %v4216
        %v4219 = vlaneseq
        %v4220 = vshrl.u32 %v4219, 7
        %v4221 = vsub.s32 0, %v4220
        %v4222 = vrot.slane %v2751, %v4221
        %v4223 = vadd.f32 %v4217, %v4222
        %v4224 = vadd.f32 %v4218, %v4222
        %4225 = vadd.xlane.f32.xlu0 %v4223
        %v4226 = vpop.xlane.xlu0 %4225
        %4227 = vadd.xlane.f32.xlu0 %v4224
        %v4228 = vpop.xlane.xlu0 %4227
        %v4229 = vmul.f32 %v4226, %v907
        %v4230 = vmul.f32 %v4228, %v907
        %v4231 = vsub.f32 %v4223, %v4229
        %v4232 = vsub.f32 %v4224, %v4230
        %v4233 = vmul.f32 %v4231, %v4231
        %v4234 = vmul.f32 %v4232, %v4232
        %4235 = vadd.xlane.f32.xlu0 %v4233
        %v4236 = vpop.xlane.xlu0 %4235
        %4237 = vadd.xlane.f32.xlu0 %v4234
        %v4238 = vpop.xlane.xlu0 %4237
        %v4239 = vmul.f32 %v4236, %v907
        %v4240 = vmul.f32 %v4238, %v907
        %v4241 = vadd.f32 %v4239, 1e-05
        %v4242 = vadd.f32 %v4240, 1e-05
        %v4243 = vrsqrt.pop %v4241
        %v4244 = vrsqrt.pop %v4242
        %v4245 = vmul.f32 %v4231, %v4243
        %v4246 = vmul.f32 %v4232, %v4244
        %v4247 = vlaneseq
        %v4248 = vshrl.u32 %v4247, 7
        %v4249 = vsub.s32 0, %v4248
        %v4250 = vrot.slane %v2752, %v4249
        %v4251 = vmul.f32 %v4245, %v4250
        %v4252 = vmul.f32 %v4246, %v4250
        %v4253 = vlaneseq
        %v4254 = vshrl.u32 %v4253, 7
        %v4255 = vsub.s32 0, %v4254
        %v4256 = vrot.slane %v2753, %v4255
        %v4257 = vadd.f32 %v4251, %v4256
        %v4258 = vadd.f32 %v4252, %v4256
        %v4260 = vlaneseq
        %v4261 = vshrl.u32 %v4260, 7
        %v4262 = vsub.s32 0, %v4261
        %v4263 = vrot.slane %v2820, %v4262
        %v4264 = vlaneseq
        %v4265 = vshrl.u32 %v4264, 7
        %v4266 = vsub.s32 1, %v4265
        %v4267 = vrot.slane %v2820, %v4266
        %v4268 = vlaneseq
        %v4269 = vshrl.u32 %v4268, 7
        %v4270 = vsub.s32 2, %v4269
        %v4271 = vrot.slane %v2820, %v4270
        %v4272 = vlaneseq
        %v4273 = vshrl.u32 %v4272, 7
        %v4274 = vsub.s32 3, %v4273
        %v4275 = vrot.slane %v2820, %v4274
        %4280 = vmatprep.subr.mxu0 %v2816
        %4281 = vmatpush1.msra.mxu0 %v2815
        %4282 = vmatprep.subr.mxu0 %v2812
        %4283 = vmatpush1.msra.mxu0 %v2811
        %4284 = vmatprep.subr.mxu0 %v2808
        %4285 = vmatpush1.msra.mxu0 %v2807
        %4286 = vmatprep.subr.mxu0 %v2804
        %4287 = vmatpush1.msra.mxu0 %v2803
        %4288 = vmatprep.subr.mxu0 %v2800
        %4289 = vmatpush1.msra.mxu0 %v2799
        %4290 = vmatprep.subr.mxu0 %v2796
        %4291 = vmatpush1.msra.mxu0 %v2795
        %4292 = vmatprep.subr.mxu0 %v2792
        %4293 = vmatpush1.msra.mxu0 %v2791
        %4294 = vmatprep.subr.mxu0 %v2788
        %4295 = vmatpush1.msra.mxu0 %v2787
        %4296 = vmatprep.subr.mxu0 %v2784
        %4297 = vmatpush1.msra.mxu0 %v2783
        %4298 = vmatprep.subr.mxu0 %v2780
        %4299 = vmatpush1.msra.mxu0 %v2779
        %4300 = vmatprep.subr.mxu0 %v2776
        %4301 = vmatpush1.msra.mxu0 %v2775
        %4302 = vmatprep.subr.mxu0 %v2772
        %4303 = vmatpush1.msra.mxu0 %v2771
        %4304 = vmatprep.subr.mxu0 %v2768
        %4305 = vmatpush1.msra.mxu0 %v2767
        %4306 = vmatprep.subr.mxu0 %v2764
        %4307 = vmatpush1.msra.mxu0 %v2763
        %4308 = vmatprep.subr.mxu0 %v2760
        %4309 = vmatpush1.msra.mxu0 %v2759
        %4310 = vmatprep.subr.mxu0 %v2756
        %4311 = vmatpush1.msra.mxu0 %v2755
        %4312 = vmatprep.subr.mxu0 0.0
        %4313 = vmatpush2.msra.mxu0 0.0
        %4314 = vmatprep.subr.mxu0 0.0
        %4315 = vmatpush2.msra.mxu0 0.0
        %4316 = vmatprep.subr.mxu0 0.0
        %4317 = vmatpush2.msra.mxu0 0.0
        %4318 = vmatprep.subr.mxu0 0.0
        %4319 = vmatpush2.msra.mxu0 0.0
        %4320 = vmatprep.subr.mxu0 0.0
        %4321 = vmatpush2.msra.mxu0 0.0
        %4322 = vmatprep.subr.mxu0 0.0
        %4323 = vmatpush2.msra.mxu0 0.0
        %4324 = vmatprep.subr.mxu0 0.0
        %4325 = vmatpush2.msra.mxu0 0.0
        %4326 = vmatprep.subr.mxu0 0.0
        %4327 = vmatpush2.msra.mxu0 0.0
        %4328 = vmatprep.subr.mxu0 0.0
        %4329 = vmatpush2.msra.mxu0 0.0
        %4330 = vmatprep.subr.mxu0 0.0
        %4331 = vmatpush2.msra.mxu0 0.0
        %4332 = vmatprep.subr.mxu0 0.0
        %4333 = vmatpush2.msra.mxu0 0.0
        %4334 = vmatprep.subr.mxu0 0.0
        %4335 = vmatpush2.msra.mxu0 0.0
        %4336 = vmatprep.subr.mxu0 0.0
        %4337 = vmatpush2.msra.mxu0 0.0
        %4338 = vmatprep.subr.mxu0 0.0
        %4339 = vmatpush2.msra.mxu0 0.0
        %4340 = vmatprep.subr.mxu0 0.0
        %4341 = vmatpush2.msra.mxu0 0.0
        %4342 = vmatprep.subr.mxu0 0.0
        %4343 = vmatpush2.msra.mxu0 0.0
        %4344 = vmatprep.mubr.f32.mxu0 0.0
        %4345 = vmatmul.mubr.f32.gmra.mxu0 %v4257
        %v4346 = vpop.f32.mrf.mxu0
        %v4347 = vadd.f32 %v4263, %v4346
        %v4348 = vpop.f32.mrf.mxu0
        %v4349 = vadd.f32 %v4267, %v4348
        %4350 = vmatprep.mubr.f32.mxu0 0.0
        %4351 = vmatmul.mubr.f32.gmra.mxu0 %v4258
        %v4352 = vpop.f32.mrf.mxu0
        %v4353 = vadd.f32 %v4263, %v4352
        %v4354 = vpop.f32.mrf.mxu0
        %v4355 = vadd.f32 %v4267, %v4354
        %4356 = vdwg.mxu0
        %4357 = vmatprep.subr.mxu0 %v2818
        %4358 = vmatpush1.msra.mxu0 %v2817
        %4359 = vmatprep.subr.mxu0 %v2814
        %4360 = vmatpush1.msra.mxu0 %v2813
        %4361 = vmatprep.subr.mxu0 %v2810
        %4362 = vmatpush1.msra.mxu0 %v2809
        %4363 = vmatprep.subr.mxu0 %v2806
        %4364 = vmatpush1.msra.mxu0 %v2805
        %4365 = vmatprep.subr.mxu0 %v2802
        %4366 = vmatpush1.msra.mxu0 %v2801
        %4367 = vmatprep.subr.mxu0 %v2798
        %4368 = vmatpush1.msra.mxu0 %v2797
        %4369 = vmatprep.subr.mxu0 %v2794
        %4370 = vmatpush1.msra.mxu0 %v2793
        %4371 = vmatprep.subr.mxu0 %v2790
        %4372 = vmatpush1.msra.mxu0 %v2789
        %4373 = vmatprep.subr.mxu0 %v2786
        %4374 = vmatpush1.msra.mxu0 %v2785
        %4375 = vmatprep.subr.mxu0 %v2782
        %4376 = vmatpush1.msra.mxu0 %v2781
        %4377 = vmatprep.subr.mxu0 %v2778
        %4378 = vmatpush1.msra.mxu0 %v2777
        %4379 = vmatprep.subr.mxu0 %v2774
        %4380 = vmatpush1.msra.mxu0 %v2773
        %4381 = vmatprep.subr.mxu0 %v2770
        %4382 = vmatpush1.msra.mxu0 %v2769
        %4383 = vmatprep.subr.mxu0 %v2766
        %4384 = vmatpush1.msra.mxu0 %v2765
        %4385 = vmatprep.subr.mxu0 %v2762
        %4386 = vmatpush1.msra.mxu0 %v2761
        %4387 = vmatprep.subr.mxu0 %v2758
        %4388 = vmatpush1.msra.mxu0 %v2757
        %4389 = vmatprep.subr.mxu0 0.0
        %4390 = vmatpush2.msra.mxu0 0.0
        %4391 = vmatprep.subr.mxu0 0.0
        %4392 = vmatpush2.msra.mxu0 0.0
        %4393 = vmatprep.subr.mxu0 0.0
        %4394 = vmatpush2.msra.mxu0 0.0
        %4395 = vmatprep.subr.mxu0 0.0
        %4396 = vmatpush2.msra.mxu0 0.0
        %4397 = vmatprep.subr.mxu0 0.0
        %4398 = vmatpush2.msra.mxu0 0.0
        %4399 = vmatprep.subr.mxu0 0.0
        %4400 = vmatpush2.msra.mxu0 0.0
        %4401 = vmatprep.subr.mxu0 0.0
        %4402 = vmatpush2.msra.mxu0 0.0
        %4403 = vmatprep.subr.mxu0 0.0
        %4404 = vmatpush2.msra.mxu0 0.0
        %4405 = vmatprep.subr.mxu0 0.0
        %4406 = vmatpush2.msra.mxu0 0.0
        %4407 = vmatprep.subr.mxu0 0.0
        %4408 = vmatpush2.msra.mxu0 0.0
        %4409 = vmatprep.subr.mxu0 0.0
        %4410 = vmatpush2.msra.mxu0 0.0
        %4411 = vmatprep.subr.mxu0 0.0
        %4412 = vmatpush2.msra.mxu0 0.0
        %4413 = vmatprep.subr.mxu0 0.0
        %4414 = vmatpush2.msra.mxu0 0.0
        %4415 = vmatprep.subr.mxu0 0.0
        %4416 = vmatpush2.msra.mxu0 0.0
        %4417 = vmatprep.subr.mxu0 0.0
        %4418 = vmatpush2.msra.mxu0 0.0
        %4419 = vmatprep.subr.mxu0 0.0
        %4420 = vmatpush2.msra.mxu0 0.0
        %4421 = vmatprep.mubr.f32.mxu0 0.0
        %4422 = vmatmul.mubr.f32.gmra.mxu0 %v4257
        %v4423 = vpop.f32.mrf.mxu0
        %v4424 = vadd.f32 %v4271, %v4423
        %v4425 = vpop.f32.mrf.mxu0
        %v4426 = vadd.f32 %v4275, %v4425
        %4427 = vmatprep.mubr.f32.mxu0 0.0
        %4428 = vmatmul.mubr.f32.gmra.mxu0 %v4258
        %v4429 = vpop.f32.mrf.mxu0
        %v4430 = vadd.f32 %v4271, %v4429
        %v4431 = vpop.f32.mrf.mxu0
        %v4432 = vadd.f32 %v4275, %v4431
        %4433 = vdwg.mxu0
        %v4434 = vmul.f32 %v4347, 0.5
        %v4435 = vmul.f32 %v4349, 0.5
        %v4436 = vmul.f32 %v4424, 0.5
        %v4437 = vmul.f32 %v4426, 0.5
        %v4438 = vmul.f32 %v4353, 0.5
        %v4439 = vmul.f32 %v4355, 0.5
        %v4440 = vmul.f32 %v4430, 0.5
        %v4441 = vmul.f32 %v4432, 0.5
        %v4442 = vmul.f32 %v4347, 0.044715
        %v4443 = vmul.f32 %v4349, 0.044715
        %v4444 = vmul.f32 %v4424, 0.044715
        %v4445 = vmul.f32 %v4426, 0.044715
        %v4446 = vmul.f32 %v4353, 0.044715
        %v4447 = vmul.f32 %v4355, 0.044715
        %v4448 = vmul.f32 %v4430, 0.044715
        %v4449 = vmul.f32 %v4432, 0.044715
        %v4450 = vmul.f32 %v4442, %v4347
        %v4451 = vmul.f32 %v4443, %v4349
        %v4452 = vmul.f32 %v4444, %v4424
        %v4453 = vmul.f32 %v4445, %v4426
        %v4454 = vmul.f32 %v4446, %v4353
        %v4455 = vmul.f32 %v4447, %v4355
        %v4456 = vmul.f32 %v4448, %v4430
        %v4457 = vmul.f32 %v4449, %v4432
        %v4458 = vmul.f32 %v4450, %v4347
        %v4459 = vmul.f32 %v4451, %v4349
        %v4460 = vmul.f32 %v4452, %v4424
        %v4461 = vmul.f32 %v4453, %v4426
        %v4462 = vmul.f32 %v4454, %v4353
        %v4463 = vmul.f32 %v4455, %v4355
        %v4464 = vmul.f32 %v4456, %v4430
        %v4465 = vmul.f32 %v4457, %v4432
        %v4466 = vadd.f32 %v4347, %v4458
        %v4467 = vadd.f32 %v4349, %v4459
        %v4468 = vadd.f32 %v4424, %v4460
        %v4469 = vadd.f32 %v4426, %v4461
        %v4470 = vadd.f32 %v4353, %v4462
        %v4471 = vadd.f32 %v4355, %v4463
        %v4472 = vadd.f32 %v4430, %v4464
        %v4473 = vadd.f32 %v4432, %v4465
        %v4474 = vmul.f32 %v4466, 0.7978846
        %v4475 = vmul.f32 %v4467, 0.7978846
        %v4476 = vmul.f32 %v4468, 0.7978846
        %v4477 = vmul.f32 %v4469, 0.7978846
        %v4478 = vmul.f32 %v4470, 0.7978846
        %v4479 = vmul.f32 %v4471, 0.7978846
        %v4480 = vmul.f32 %v4472, 0.7978846
        %v4481 = vmul.f32 %v4473, 0.7978846
        %v4482 = vtanh.pop %v4474
        %v4483 = vtanh.pop %v4475
        %v4484 = vtanh.pop %v4476
        %v4485 = vtanh.pop %v4477
        %v4486 = vtanh.pop %v4478
        %v4487 = vtanh.pop %v4479
        %v4488 = vtanh.pop %v4480
        %v4489 = vtanh.pop %v4481
        %v4490 = vadd.f32 %v4482, 1.0
        %v4491 = vadd.f32 %v4483, 1.0
        %v4492 = vadd.f32 %v4484, 1.0
        %v4493 = vadd.f32 %v4485, 1.0
        %v4494 = vadd.f32 %v4486, 1.0
        %v4495 = vadd.f32 %v4487, 1.0
        %v4496 = vadd.f32 %v4488, 1.0
        %v4497 = vadd.f32 %v4489, 1.0
        %v4498 = vmul.f32 %v4434, %v4490
        %v4499 = vmul.f32 %v4435, %v4491
        %v4500 = vmul.f32 %v4436, %v4492
        %v4501 = vmul.f32 %v4437, %v4493
        %v4502 = vmul.f32 %v4438, %v4494
        %v4503 = vmul.f32 %v4439, %v4495
        %v4504 = vmul.f32 %v4440, %v4496
        %v4505 = vmul.f32 %v4441, %v4497
        %v4506 = vlaneseq
        %v4507 = vshrl.u32 %v4506, 7
        %v4508 = vsub.s32 0, %v4507
        %v4509 = vrot.slane %v2886, %v4508
        %4510 = vmatprep.subr.mxu0 0.0
        %4511 = vmatpush1.msra.mxu0 %v2837
        %4512 = vmatprep.subr.mxu0 0.0
        %4513 = vmatpush1.msra.mxu0 %v2836
        %4514 = vmatprep.subr.mxu0 0.0
        %4515 = vmatpush1.msra.mxu0 %v2835
        %4516 = vmatprep.subr.mxu0 0.0
        %4517 = vmatpush1.msra.mxu0 %v2834
        %4518 = vmatprep.subr.mxu0 0.0
        %4519 = vmatpush1.msra.mxu0 %v2833
        %4520 = vmatprep.subr.mxu0 0.0
        %4521 = vmatpush1.msra.mxu0 %v2832
        %4522 = vmatprep.subr.mxu0 0.0
        %4523 = vmatpush1.msra.mxu0 %v2831
        %4524 = vmatprep.subr.mxu0 0.0
        %4525 = vmatpush1.msra.mxu0 %v2830
        %4526 = vmatprep.subr.mxu0 0.0
        %4527 = vmatpush1.msra.mxu0 %v2829
        %4528 = vmatprep.subr.mxu0 0.0
        %4529 = vmatpush1.msra.mxu0 %v2828
        %4530 = vmatprep.subr.mxu0 0.0
        %4531 = vmatpush1.msra.mxu0 %v2827
        %4532 = vmatprep.subr.mxu0 0.0
        %4533 = vmatpush1.msra.mxu0 %v2826
        %4534 = vmatprep.subr.mxu0 0.0
        %4535 = vmatpush1.msra.mxu0 %v2825
        %4536 = vmatprep.subr.mxu0 0.0
        %4537 = vmatpush1.msra.mxu0 %v2824
        %4538 = vmatprep.subr.mxu0 0.0
        %4539 = vmatpush1.msra.mxu0 %v2823
        %4540 = vmatprep.subr.mxu0 0.0
        %4541 = vmatpush1.msra.mxu0 %v2822
        %4542 = vmatprep.subr.mxu0 0.0
        %4543 = vmatpush2.msra.mxu0 %v2853
        %4544 = vmatprep.subr.mxu0 0.0
        %4545 = vmatpush2.msra.mxu0 %v2852
        %4546 = vmatprep.subr.mxu0 0.0
        %4547 = vmatpush2.msra.mxu0 %v2851
        %4548 = vmatprep.subr.mxu0 0.0
        %4549 = vmatpush2.msra.mxu0 %v2850
        %4550 = vmatprep.subr.mxu0 0.0
        %4551 = vmatpush2.msra.mxu0 %v2849
        %4552 = vmatprep.subr.mxu0 0.0
        %4553 = vmatpush2.msra.mxu0 %v2848
        %4554 = vmatprep.subr.mxu0 0.0
        %4555 = vmatpush2.msra.mxu0 %v2847
        %4556 = vmatprep.subr.mxu0 0.0
        %4557 = vmatpush2.msra.mxu0 %v2846
        %4558 = vmatprep.subr.mxu0 0.0
        %4559 = vmatpush2.msra.mxu0 %v2845
        %4560 = vmatprep.subr.mxu0 0.0
        %4561 = vmatpush2.msra.mxu0 %v2844
        %4562 = vmatprep.subr.mxu0 0.0
        %4563 = vmatpush2.msra.mxu0 %v2843
        %4564 = vmatprep.subr.mxu0 0.0
        %4565 = vmatpush2.msra.mxu0 %v2842
        %4566 = vmatprep.subr.mxu0 0.0
        %4567 = vmatpush2.msra.mxu0 %v2841
        %4568 = vmatprep.subr.mxu0 0.0
        %4569 = vmatpush2.msra.mxu0 %v2840
        %4570 = vmatprep.subr.mxu0 0.0
        %4571 = vmatpush2.msra.mxu0 %v2839
        %4572 = vmatprep.subr.mxu0 0.0
        %4573 = vmatpush2.msra.mxu0 %v2838
        %4574 = vmatprep.mubr.f32.mxu0 %v4499
        %4575 = vmatmul.mubr.f32.gmra.mxu0 %v4498
        %v4576 = vpop.f32.mrf.mxu0
        %v4577 = vadd.f32 %v4509, %v4576
        %v4578 = vpop.f32.mrf.mxu0
        %4579 = vmatprep.mubr.f32.mxu0 %v4503
        %4580 = vmatmul.mubr.f32.gmra.mxu0 %v4502
        %v4581 = vpop.f32.mrf.mxu0
        %v4582 = vadd.f32 %v4509, %v4581
        %v4583 = vpop.f32.mrf.mxu0
        %4584 = vdwg.mxu0
        %4585 = vmatprep.subr.mxu0 0.0
        %4586 = vmatpush1.msra.mxu0 %v2869
        %4587 = vmatprep.subr.mxu0 0.0
        %4588 = vmatpush1.msra.mxu0 %v2868
        %4589 = vmatprep.subr.mxu0 0.0
        %4590 = vmatpush1.msra.mxu0 %v2867
        %4591 = vmatprep.subr.mxu0 0.0
        %4592 = vmatpush1.msra.mxu0 %v2866
        %4593 = vmatprep.subr.mxu0 0.0
        %4594 = vmatpush1.msra.mxu0 %v2865
        %4595 = vmatprep.subr.mxu0 0.0
        %4596 = vmatpush1.msra.mxu0 %v2864
        %4597 = vmatprep.subr.mxu0 0.0
        %4598 = vmatpush1.msra.mxu0 %v2863
        %4599 = vmatprep.subr.mxu0 0.0
        %4600 = vmatpush1.msra.mxu0 %v2862
        %4601 = vmatprep.subr.mxu0 0.0
        %4602 = vmatpush1.msra.mxu0 %v2861
        %4603 = vmatprep.subr.mxu0 0.0
        %4604 = vmatpush1.msra.mxu0 %v2860
        %4605 = vmatprep.subr.mxu0 0.0
        %4606 = vmatpush1.msra.mxu0 %v2859
        %4607 = vmatprep.subr.mxu0 0.0
        %4608 = vmatpush1.msra.mxu0 %v2858
        %4609 = vmatprep.subr.mxu0 0.0
        %4610 = vmatpush1.msra.mxu0 %v2857
        %4611 = vmatprep.subr.mxu0 0.0
        %4612 = vmatpush1.msra.mxu0 %v2856
        %4613 = vmatprep.subr.mxu0 0.0
        %4614 = vmatpush1.msra.mxu0 %v2855
        %4615 = vmatprep.subr.mxu0 0.0
        %4616 = vmatpush1.msra.mxu0 %v2854
        %4617 = vmatprep.subr.mxu0 0.0
        %4618 = vmatpush2.msra.mxu0 %v2885
        %4619 = vmatprep.subr.mxu0 0.0
        %4620 = vmatpush2.msra.mxu0 %v2884
        %4621 = vmatprep.subr.mxu0 0.0
        %4622 = vmatpush2.msra.mxu0 %v2883
        %4623 = vmatprep.subr.mxu0 0.0
        %4624 = vmatpush2.msra.mxu0 %v2882
        %4625 = vmatprep.subr.mxu0 0.0
        %4626 = vmatpush2.msra.mxu0 %v2881
        %4627 = vmatprep.subr.mxu0 0.0
        %4628 = vmatpush2.msra.mxu0 %v2880
        %4629 = vmatprep.subr.mxu0 0.0
        %4630 = vmatpush2.msra.mxu0 %v2879
        %4631 = vmatprep.subr.mxu0 0.0
        %4632 = vmatpush2.msra.mxu0 %v2878
        %4633 = vmatprep.subr.mxu0 0.0
        %4634 = vmatpush2.msra.mxu0 %v2877
        %4635 = vmatprep.subr.mxu0 0.0
        %4636 = vmatpush2.msra.mxu0 %v2876
        %4637 = vmatprep.subr.mxu0 0.0
        %4638 = vmatpush2.msra.mxu0 %v2875
        %4639 = vmatprep.subr.mxu0 0.0
        %4640 = vmatpush2.msra.mxu0 %v2874
        %4641 = vmatprep.subr.mxu0 0.0
        %4642 = vmatpush2.msra.mxu0 %v2873
        %4643 = vmatprep.subr.mxu0 0.0
        %4644 = vmatpush2.msra.mxu0 %v2872
        %4645 = vmatprep.subr.mxu0 0.0
        %4646 = vmatpush2.msra.mxu0 %v2871
        %4647 = vmatprep.subr.mxu0 0.0
        %4648 = vmatpush2.msra.mxu0 %v2870
        %4649 = vmatprep.mubr.f32.mxu0 %v4501
        %4650 = vmatmul.mubr.f32.gmra.mxu0 %v4500
        %v4651 = vpop.f32.mrf.mxu0
        %v4652 = vadd.f32 %v4577, %v4651
        %v4653 = vpop.f32.mrf.mxu0
        %4654 = vmatprep.mubr.f32.mxu0 %v4505
        %4655 = vmatmul.mubr.f32.gmra.mxu0 %v4504
        %v4656 = vpop.f32.mrf.mxu0
        %v4657 = vadd.f32 %v4582, %v4656
        %v4658 = vpop.f32.mrf.mxu0
        %4659 = vdwg.mxu0
        %v4660 = vadd.f32 %v4223, %v4652
        %v4661 = vadd.f32 %v4224, %v4657
        %v4662 = vld [vmem:[%s16] sm:$0xff]
        %v4663 = vld [vmem:[%s16 + $0x8] sm:$0xff]
        %v4664 = vld [vmem:[%s16 + $0x10] sm:$0xff]
        %v4665 = vld [vmem:[%s16 + $0x18] sm:$0xff]
        %v4666 = vld [vmem:[%s16 + $0x20] sm:$0xff]
        %v4667 = vld [vmem:[%s16 + $0x28] sm:$0xff]
        %v4668 = vld [vmem:[%s16 + $0x30] sm:$0xff]
        %v4669 = vld [vmem:[%s16 + $0x38] sm:$0xff]
        %v4670 = vld [vmem:[%s16 + $0x40] sm:$0xff]
        %v4671 = vld [vmem:[%s16 + $0x48] sm:$0xff]
        %v4672 = vld [vmem:[%s16 + $0x50] sm:$0xff]
        %v4673 = vld [vmem:[%s16 + $0x58] sm:$0xff]
        %v4674 = vld [vmem:[%s16 + $0x60] sm:$0xff]
        %v4675 = vld [vmem:[%s16 + $0x68] sm:$0xff]
        %v4676 = vld [vmem:[%s16 + $0x70] sm:$0xff]
        %v4677 = vld [vmem:[%s16 + $0x78] sm:$0xff]
        %v4678 = vld [vmem:[%s17] sm:$0x1]
        %v4680 = vlaneseq
        %v4681 = vshrl.u32 %v4680, 7
        %v4682 = vsub.s32 0, %v4681
        %v4683 = vrot.slane %v4678, %v4682
        %4685 = vmatprep.subr.mxu0 0.0
        %4686 = vmatpush1.msra.mxu0 %v4677
        %4687 = vmatprep.subr.mxu0 0.0
        %4688 = vmatpush1.msra.mxu0 %v4676
        %4689 = vmatprep.subr.mxu0 0.0
        %4690 = vmatpush1.msra.mxu0 %v4675
        %4691 = vmatprep.subr.mxu0 0.0
        %4692 = vmatpush1.msra.mxu0 %v4674
        %4693 = vmatprep.subr.mxu0 0.0
        %4694 = vmatpush1.msra.mxu0 %v4673
        %4695 = vmatprep.subr.mxu0 0.0
        %4696 = vmatpush1.msra.mxu0 %v4672
        %4697 = vmatprep.subr.mxu0 0.0
        %4698 = vmatpush1.msra.mxu0 %v4671
        %4699 = vmatprep.subr.mxu0 0.0
        %4700 = vmatpush1.msra.mxu0 %v4670
        %4701 = vmatprep.subr.mxu0 0.0
        %4702 = vmatpush1.msra.mxu0 %v4669
        %4703 = vmatprep.subr.mxu0 0.0
        %4704 = vmatpush1.msra.mxu0 %v4668
        %4705 = vmatprep.subr.mxu0 0.0
        %4706 = vmatpush1.msra.mxu0 %v4667
        %4707 = vmatprep.subr.mxu0 0.0
        %4708 = vmatpush1.msra.mxu0 %v4666
        %4709 = vmatprep.subr.mxu0 0.0
        %4710 = vmatpush1.msra.mxu0 %v4665
        %4711 = vmatprep.subr.mxu0 0.0
        %4712 = vmatpush1.msra.mxu0 %v4664
        %4713 = vmatprep.subr.mxu0 0.0
        %4714 = vmatpush1.msra.mxu0 %v4663
        %4715 = vmatprep.subr.mxu0 0.0
        %4716 = vmatpush1.msra.mxu0 %v4662
        %4717 = vmatprep.subr.mxu0 0.0
        %4718 = vmatpush2.msra.mxu0 0.0
        %4719 = vmatprep.subr.mxu0 0.0
        %4720 = vmatpush2.msra.mxu0 0.0
        %4721 = vmatprep.subr.mxu0 0.0
        %4722 = vmatpush2.msra.mxu0 0.0
        %4723 = vmatprep.subr.mxu0 0.0
        %4724 = vmatpush2.msra.mxu0 0.0
        %4725 = vmatprep.subr.mxu0 0.0
        %4726 = vmatpush2.msra.mxu0 0.0
        %4727 = vmatprep.subr.mxu0 0.0
        %4728 = vmatpush2.msra.mxu0 0.0
        %4729 = vmatprep.subr.mxu0 0.0
        %4730 = vmatpush2.msra.mxu0 0.0
        %4731 = vmatprep.subr.mxu0 0.0
        %4732 = vmatpush2.msra.mxu0 0.0
        %4733 = vmatprep.subr.mxu0 0.0
        %4734 = vmatpush2.msra.mxu0 0.0
        %4735 = vmatprep.subr.mxu0 0.0
        %4736 = vmatpush2.msra.mxu0 0.0
        %4737 = vmatprep.subr.mxu0 0.0
        %4738 = vmatpush2.msra.mxu0 0.0
        %4739 = vmatprep.subr.mxu0 0.0
        %4740 = vmatpush2.msra.mxu0 0.0
        %4741 = vmatprep.subr.mxu0 0.0
        %4742 = vmatpush2.msra.mxu0 0.0
        %4743 = vmatprep.subr.mxu0 0.0
        %4744 = vmatpush2.msra.mxu0 0.0
        %4745 = vmatprep.subr.mxu0 0.0
        %4746 = vmatpush2.msra.mxu0 0.0
        %4747 = vmatprep.subr.mxu0 0.0
        %4748 = vmatpush2.msra.mxu0 0.0
        %4749 = vmatprep.mubr.f32.mxu0 0.0
        %4750 = vmatmul.mubr.f32.gmra.mxu0 %v4660
        %v4751 = vpop.f32.mrf.mxu0
        %v4752 = vadd.f32 %v4683, %v4751
        %v4753 = vpop.f32.mrf.mxu0
        %4754 = vmatprep.mubr.f32.mxu0 0.0
        %4755 = vmatmul.mubr.f32.gmra.mxu0 %v4661
        %v4756 = vpop.f32.mrf.mxu0
        %v4757 = vadd.f32 %v4683, %v4756
        %v4758 = vpop.f32.mrf.mxu0
        %4759 = vdwg.mxu0
        %v4760 = vadd.f32 %v4752, %v4757
        %v4761 = vrot.slane %v4760, 4
        %v4762 = vadd.f32 %v4760, %v4761
        %v4763 = vrot.slane %v4762, 2
        %v4764 = vadd.f32 %v4762, %v4763
        %v4765 = vrot.slane %v4764, 1
        %v4766 = vadd.f32 %v4764, %v4765
        %v4767 = vrcp.pop 16.0
        %v4768 = vmul.f32 %v4766, %v4767
        %4769 = vst [vmem:[%s601] sm:$0x1] %v4768
        %p4770 = scmp.lt.s32.totalorder %s31, 1
        %s4771 = scalar_select %p4770, %s31, 1
        %s4772 = scalar_lea.vmem %s18, %s4771
        // Predicated region
        $region101: #{tagalign_forward.2} parent=91 // pred_check
          %p4773 = pneg %p432
        $region102: #{tagalign_forward.2} parent=91 // pred_check_branch
          %4775 = sbr.rel (%p4773) target = $region104
        $region103: #{tagalign_forward.2} parent=91 // pred_region
          _
        $region104: #{tagalign_forward.2} parent=91 // pred_fallthru
          _
      $region92: #{tagalign_forward.2} parent=5 // pred_fallthru
        _
      %p4776 = scmp.le.s32.totalorder 2, %s26
      // Predicated region
      $region105: #{tagalign_forward.2} parent=5 // pred_check
        %p4777 = pneg %p4776
      $region106: #{tagalign_forward.2} parent=5 // pred_check_branch
        %4779 = sbr.rel (%p4777) target = $region108
      $region107: #{tagalign_forward.2} parent=5 // pred_region
        %s4780 = ssub.s32 %s26, 2
        // Predicated region
        $region109: #{tagalign_forward.2} parent=107 // pred_check
          %p4781 = pneg %p438
        $region110: #{tagalign_forward.2} parent=107 // pred_check_branch
          %4783 = sbr.rel (%p4781) target = $region112
        $region111: #{tagalign_forward.2} parent=107 // pred_region
          %p4784 = scmp.lt.s32.totalorder %s32, 1
          %s4785 = scalar_select %p4784, %s32, 1
          %s4786 = scalar_lea.vmem %s18, %s4785
        $region112: #{tagalign_forward.2} parent=107 // pred_fallthru
          _
      $region108: #{tagalign_forward.2} parent=5 // pred_fallthru
        _
    $region6: #{tagalign_forward.2} parent=1 // loop_footer
      %s30 = sadd.s32 1, %s26
    $region7: #{tagalign_forward.2} parent=1 // loop_footer_branch
      %25 = sbr.rel target = $region3
    $region8: #{tagalign_forward.2} parent=1 // loop_exit
      _
    %4787 = vsyncpa [#allocation3], 1
    %s4788 = scalar_lea.sflag [#allocation3], 1
    %4789 = vsyncpa %s4788, 1
    %4790 = vsyncpa [#allocation5], 1

</llo_original>
